<compile_context>
chip_gen: v7x
topology: tpu7x:2x2x1
jax: 0.10.0
libtpu: 0.0.40
codegen_flags: <defaults>
</compile_context>

<pallas_src>
import functools

import jax
import jax.numpy as jnp
from jax.experimental import pallas as pl
from jax.experimental.pallas import tpu as pltpu

_LANE = 128
_SUBLANE = 8


def _round_up(x, m):
    return ((x + m - 1) // m) * m


def _tlstm_kernel(x_ref, tm1_ref, u_ref, wall_ref, wd_ref, bg_ref, bd_ref,
                  out_ref, hcN_ref, hc_sc, gx_sc,
                  *, t_seq, hp, nb, seq_len):
    sb = pl.program_id(0)                                    # time-block index

    @pl.when(sb == 0)
    def _():
        hc_sc[...] = jnp.zeros_like(hc_sc)

    # ---- Block-level input projection: one (t_seq*nb, Ip) @ (Ip, 4Hp) MXU
    # matmul per t_seq timesteps.  Gate biases (W_all_b + U_all_b) are folded
    # into bg; result stays in VMEM scratch (no gx HBM round-trip).
    gx_sc[...] = (jnp.dot(x_ref[...], u_ref[...],
                          preferred_element_type=jnp.float32)
                  + bg_ref[...])                             # (t_seq*nb, 4Hp) f32

    hc = hc_sc[...]                                          # (nb, 2*Hp) f32, [h | c]
    wall = wall_ref[...]                                     # (Hp, 4Hp) compute dtype
    wd = wd_ref[...]                                         # (Hp, Hp)  compute dtype
    bd = bd_ref[...]                                         # (1, Hp)   f32 decay bias

    partial_tail = (seq_len % t_seq) != 0                    # static python bool

    for j in range(t_seq):                                   # statically unrolled
        hm = hc.astype(wall.dtype)                           # matmul operands in compute dtype
        # Split recurrent matmuls: only non-zero weight blocks hit the MXU.
        z_g = jnp.dot(hm[:, :hp], wall, preferred_element_type=jnp.float32)
        z_d = jnp.dot(hm[:, hp:], wd, preferred_element_type=jnp.float32)

        c = hc[:, hp:]
        c_s1 = jnp.tanh(z_d + bd)                            # tanh(W_d c + b_d)
        c_adj = c + c_s1 * tm1_ref[j]                        # == (c - c_s1) + c_s1 * t

        # All four "gates" use sigmoid (candidate included), as in the
        # PyTorch reference.  Gate blocks are 128-lane aligned -> free slices.
        g = jax.nn.sigmoid(gx_sc[pl.ds(j * nb, nb), :] + z_g)
        f = g[:, 0 * hp:1 * hp]
        i = g[:, 1 * hp:2 * hp]
        o = g[:, 2 * hp:3 * hp]
        ct = g[:, 3 * hp:4 * hp]

        c_new = f * c_adj + i * ct
        h_new = o * jnp.tanh(c_new)

        out_ref[pl.ds(j * nb, nb), :] = h_new.astype(out_ref.dtype)   # dense store

        hc_new = jnp.concatenate([h_new, c_new], axis=1)
        if partial_tail:
            # Don't advance the state on seq-padding steps (only the last
            # block can contain them); their outputs are discarded anyway.
            valid = (sb * t_seq + j) < seq_len
            hc = jnp.where(valid, hc_new, hc)
        else:
            hc = hc_new

    hc_sc[...] = hc

    @pl.when(sb == pl.num_programs(0) - 1)
    def _():
        hcN_ref[...] = hc.astype(hcN_ref.dtype)


def time_lstm_forward(inputs, timestamps, params, *, reverse=False, t_seq=16,
                      compute_dtype=jnp.bfloat16, out_dtype=None):
    """inputs: (b, seq, input_size), timestamps: (b, seq).

    Returns (outputs, (h, c)) matching PyTorch TimeLSTM.forward with
    state=None, dropout=False.
    """
    b, seq, in_size = inputs.shape
    H = params["W_d_w"].shape[0]
    Hp = _round_up(H, _LANE)
    Ip = _round_up(in_size, _LANE)
    out_dtype = inputs.dtype if out_dtype is None else out_dtype

    bp = _round_up(b, _SUBLANE)                            # sublane-aligned batch
    t_seq = max(1, min(int(t_seq), seq))
    seq_p = _round_up(seq, t_seq)
    n_sblocks = seq_p // t_seq

    f32 = jnp.float32
    # nn.Linear stores weight as (out, in); kernel math wants (in, out).
    W_all_t = params["W_all_w"].T.astype(f32)              # (H, 4H)
    U_all_t = params["U_all_w"].T.astype(f32)              # (I, 4H)
    W_d_t = params["W_d_w"].T.astype(f32)                  # (H, H)
    b_gate = (params["W_all_b"] + params["U_all_b"]).astype(f32)   # (4H,) folded
    b_d = params["W_d_b"].astype(f32)                      # (H,)

    def pad_gate_cols(w):                                  # (rows, 4H) -> (rows, 4Hp)
        rows = w.shape[0]
        out = jnp.zeros((rows, 4 * Hp), f32)
        for g in range(4):
            out = out.at[:, g * Hp:g * Hp + H].set(w[:, g * H:(g + 1) * H])
        return out

    # Pad rows of every weight are zero, so padded h/c/x lanes never leak into
    # valid lanes (see header comment).
    Wall_pad = jnp.zeros((Hp, 4 * Hp), f32).at[:H].set(
        pad_gate_cols(W_all_t)).astype(compute_dtype)                  # (Hp, 4Hp)
    U_pad = jnp.zeros((Ip, 4 * Hp), f32).at[:in_size].set(
        pad_gate_cols(U_all_t)).astype(compute_dtype)                  # (Ip, 4Hp)
    Wd_pad = jnp.zeros((Hp, Hp), f32).at[:H, :H].set(
        W_d_t).astype(compute_dtype)                                   # (Hp, Hp)
    bg_pad = pad_gate_cols(b_gate[None, :])                            # (1, 4Hp) f32
    bd_pad = jnp.zeros((1, Hp), f32).at[0, :H].set(b_d)                # (1, Hp)  f32

    # Row-flattened, padded inputs: rows ordered (timestep-major, batch-minor).
    x_t = jnp.transpose(inputs, (1, 0, 2)).astype(f32)                 # (seq, b, I)
    x_t = jnp.pad(x_t, ((0, seq_p - seq), (0, bp - b), (0, Ip - in_size)))
    x2 = x_t.reshape(seq_p * bp, Ip).astype(compute_dtype)             # (seq_p*bp, Ip)

    tm1 = (timestamps.astype(f32) - 1.0).T[:, :, None]                 # (seq, b, 1)
    tm1 = jnp.pad(tm1, ((0, seq_p - seq), (0, bp - b), (0, 0)))        # (seq_p, bp, 1)

    kernel = functools.partial(_tlstm_kernel, t_seq=t_seq, hp=Hp, nb=bp,
                               seq_len=seq)

    outs, hcN = pl.pallas_call(
        kernel,
        out_shape=(
            jax.ShapeDtypeStruct((seq_p * bp, Hp), out_dtype),
            jax.ShapeDtypeStruct((bp, 2 * Hp), jnp.float32),
        ),
        grid_spec=pltpu.PrefetchScalarGridSpec(
            num_scalar_prefetch=0,
            grid=(n_sblocks,),
            in_specs=[
                pl.BlockSpec((t_seq * bp, Ip), lambda s: (s, 0)),      # x rows
                pl.BlockSpec((t_seq, bp, 1), lambda s: (s, 0, 0)),     # timestamps-1
                pl.BlockSpec((Ip, 4 * Hp), lambda s: (0, 0)),          # U_all (padded)
                pl.BlockSpec((Hp, 4 * Hp), lambda s: (0, 0)),          # W_all (padded)
                pl.BlockSpec((Hp, Hp), lambda s: (0, 0)),              # W_d   (padded)
                pl.BlockSpec((1, 4 * Hp), lambda s: (0, 0)),           # folded gate bias
                pl.BlockSpec((1, Hp), lambda s: (0, 0)),               # decay bias
            ],
            out_specs=[
                pl.BlockSpec((t_seq * bp, Hp), lambda s: (s, 0)),      # hidden states
                pl.BlockSpec((bp, 2 * Hp), lambda s: (0, 0)),          # final [h | c]
            ],
            scratch_shapes=[
                pltpu.VMEM((bp, 2 * Hp), jnp.float32),                 # [h | c] carry
                pltpu.VMEM((t_seq * bp, 4 * Hp), jnp.float32),         # block gx
            ],
        ),
        compiler_params=pltpu.CompilerParams(
            dimension_semantics=("arbitrary",),
            vmem_limit_bytes=64 * 1024 * 1024),
    )(x2, tm1, U_pad, Wall_pad, Wd_pad, bg_pad, bd_pad)

    outs = outs.reshape(seq_p, bp, Hp)
    outputs = jnp.transpose(outs[:seq, :b, :H], (1, 0, 2))             # (b, seq, H)
    if reverse:
        # PyTorch reference iterates forward and only reverses the output list.
        outputs = outputs[:, ::-1, :]
    hN = hcN[:b, :H]
    cN = hcN[:b, Hp:Hp + H]
    return outputs, (hN, cN)


def _reference_forward(inputs, timestamps, params):
    """Pure-JAX reference mirroring the PyTorch loop, for verification."""
    b, seq, _ = inputs.shape
    H = params["W_d_w"].shape[0]
    h = jnp.zeros((b, H), jnp.float32)
    c = jnp.zeros((b, H), jnp.float32)
    wd, bd = params["W_d_w"], params["W_d_b"]
    wa, ba = params["W_all_w"], params["W_all_b"]
    ua, bu = params["U_all_w"], params["U_all_b"]
    outs_list = []
    for s in range(seq):
        c_s1 = jnp.tanh(c @ wd.T + bd)
        c_s2 = c_s1 * timestamps[:, s:s + 1]
        c_adj = (c - c_s1) + c_s2
        g = h @ wa.T + ba + inputs[:, s].astype(jnp.float32) @ ua.T + bu
        f = jax.nn.sigmoid(g[:, 0 * H:1 * H])
        i = jax.nn.sigmoid(g[:, 1 * H:2 * H])
        o = jax.nn.sigmoid(g[:, 2 * H:3 * H])
        ct = jax.nn.sigmoid(g[:, 3 * H:4 * H])
        c = f * c_adj + i * ct
        h = o * jnp.tanh(c)
        outs_list.append(h)
    return jnp.stack(outs_list, 1), (h, c)


def _init_params(key, input_size, hidden_size):
    """Deterministic init mimicking nn.Linear (uniform +/- 1/sqrt(fan_in))."""
    ks = jax.random.split(key, 6)

    def lin(kw, kb, out_f, in_f):
        bound = 1.0 / jnp.sqrt(jnp.float32(in_f))
        w = jax.random.uniform(kw, (out_f, in_f), jnp.float32, -bound, bound)
        b = jax.random.uniform(kb, (out_f,), jnp.float32, -bound, bound)
        return w, b

    W_all_w, W_all_b = lin(ks[0], ks[1], 4 * hidden_size, hidden_size)
    U_all_w, U_all_b = lin(ks[2], ks[3], 4 * hidden_size, input_size)
    W_d_w, W_d_b = lin(ks[4], ks[5], hidden_size, hidden_size)
    return dict(W_all_w=W_all_w, W_all_b=W_all_b,
                U_all_w=U_all_w, U_all_b=U_all_b,
                W_d_w=W_d_w, W_d_b=W_d_b)


if __name__ == "__main__":
    # B=5 exercises batch padding; SEQ=20 with t_seq=16 exercises tail masking.
    B, SEQ, IN, HID = 5, 20, 16, 32
    key = jax.random.PRNGKey(0)
    k_x, k_t, k_p = jax.random.split(key, 3)

    inputs = jax.random.normal(k_x, (B, SEQ, IN), jnp.float32)
    timestamps = jax.random.uniform(k_t, (B, SEQ), jnp.float32, 0.0, 2.0)
    params = _init_params(k_p, IN, HID)

    ref_out, (ref_h, ref_c) = _reference_forward(inputs, timestamps, params)

    # 1) f32 compute path: tight semantic check against the reference loop.
    out32, (h32, c32) = time_lstm_forward(inputs, timestamps, params,
                                          t_seq=16, compute_dtype=jnp.float32)
    jax.block_until_ready(out32)
    assert out32.shape == (B, SEQ, HID)
    assert h32.shape == (B, HID) and c32.shape == (B, HID)
    assert jnp.allclose(out32, ref_out, atol=1e-3, rtol=1e-3), \
        float(jnp.max(jnp.abs(out32 - ref_out)))
    assert jnp.allclose(h32, ref_h, atol=1e-3, rtol=1e-3)
    assert jnp.allclose(c32, ref_c, atol=1e-3, rtol=1e-3)

    # 2) bf16 compute path (default / production): loose sanity tolerance.
    out16, (h16, c16) = time_lstm_forward(inputs, timestamps, params, t_seq=16)
    jax.block_until_ready(out16)
    jax.block_until_ready(h16)
    jax.block_until_ready(c16)
    assert out16.shape == (B, SEQ, HID)
    assert float(jnp.max(jnp.abs(out16.astype(jnp.float32) - ref_out))) < 0.15
    assert float(jnp.max(jnp.abs(h16.astype(jnp.float32) - ref_h))) < 0.15
    assert float(jnp.max(jnp.abs(c16.astype(jnp.float32) - ref_c))) < 0.30

    print("KERNEL_OK")
</pallas_src>

<mosaic_0001>
module attributes {stable_mosaic.version = 11 : i64} {
  func.func @_tlstm_kernel(%arg0: i32, %arg1: memref<128x128xf32, #tpu.memory_space<vmem>>, %arg2: memref<16x8x1xf32, #tpu.memory_space<vmem>>, %arg3: memref<128x512xf32, #tpu.memory_space<vmem>>, %arg4: memref<128x512xf32, #tpu.memory_space<vmem>>, %arg5: memref<128x128xf32, #tpu.memory_space<vmem>>, %arg6: memref<1x512xf32, #tpu.memory_space<vmem>>, %arg7: memref<1x128xf32, #tpu.memory_space<vmem>>, %arg8: memref<128x128xf32, #tpu.memory_space<vmem>>, %arg9: memref<8x256xf32, #tpu.memory_space<vmem>>, %arg10: memref<8x256xf32, #tpu.memory_space<vmem>>, %arg11: memref<128x512xf32, #tpu.memory_space<vmem>>) attributes {dimension_semantics = [#tpu.dimension_semantics<arbitrary>], iteration_bounds = array<i64: 2>, scalar_prefetch = 0 : i64, scratch_operands = 2 : i64, tpu.core_type = #tpu.core_type<tc>, window_params = [{transform_indices = @transform_0, window_bounds = array<i64: 128, 128>}, {transform_indices = @transform_1, window_bounds = array<i64: 16, 8, 1>}, {pipeline_mode = #tpu.pipeline_mode<synchronous>, transform_indices = @transform_2, window_bounds = array<i64: 128, 512>}, {pipeline_mode = #tpu.pipeline_mode<synchronous>, transform_indices = @transform_3, window_bounds = array<i64: 128, 512>}, {pipeline_mode = #tpu.pipeline_mode<synchronous>, transform_indices = @transform_4, window_bounds = array<i64: 128, 128>}, {pipeline_mode = #tpu.pipeline_mode<synchronous>, transform_indices = @transform_5, window_bounds = array<i64: 1, 512>}, {pipeline_mode = #tpu.pipeline_mode<synchronous>, transform_indices = @transform_6, window_bounds = array<i64: 1, 128>}, {transform_indices = @transform_7, window_bounds = array<i64: 128, 128>}, {pipeline_mode = #tpu.pipeline_mode<synchronous>, transform_indices = @transform_8, window_bounds = array<i64: 8, 256>}]} {
    %c0_i32 = arith.constant 0 : i32
    %0 = arith.cmpi eq, %arg0, %c0_i32 : i32
    %1 = arith.extui %0 : i1 to i32
    %c0_i32_0 = arith.constant 0 : i32
    %2 = arith.cmpi ne, %1, %c0_i32_0 : i32
    scf.if %2 {
      %cst_182 = arith.constant 0.000000e+00 : f32
      %578 = vector.broadcast %cst_182 : f32 to vector<8x256xf32>
      %c0_183 = arith.constant 0 : index
      %c0_184 = arith.constant 0 : index
      %579 = vector.load %arg10[%c0_183, %c0_184] : memref<8x256xf32, #tpu.memory_space<vmem>>, vector<8x256xf32>
      tpu.vector_store %arg10[%c0_183, %c0_184], %578 {strides = array<i32>} : memref<8x256xf32, #tpu.memory_space<vmem>>, vector<8x256xf32>,
    } else {
    }
    %c0 = arith.constant 0 : index
    %c0_1 = arith.constant 0 : index
    %3 = vector.load %arg1[%c0, %c0_1] : memref<128x128xf32, #tpu.memory_space<vmem>>, vector<128x128xf32>
    %c0_2 = arith.constant 0 : index
    %c0_3 = arith.constant 0 : index
    %4 = vector.load %arg3[%c0_2, %c0_3] : memref<128x512xf32, #tpu.memory_space<vmem>>, vector<128x512xf32>
    %cst = arith.constant dense<0.000000e+00> : vector<128x512xf32>
    %5 = tpu.matmul %3, %4, %cst {dimension_numbers = #tpu.dot_dimension_numbers<[1], [0], [0], [1], [0, 0, 1, 1], [], []>} : vector<128x128xf32>, vector<128x512xf32>, vector<128x512xf32> -> vector<128x512xf32>
    %c0_4 = arith.constant 0 : index
    %c0_5 = arith.constant 0 : index
    %6 = vector.load %arg6[%c0_4, %c0_5] : memref<1x512xf32, #tpu.memory_space<vmem>>, vector<1x512xf32>
    %7 = vector.broadcast %6 : vector<1x512xf32> to vector<128x512xf32>
    %8 = arith.addf %5, %7 : vector<128x512xf32>
    %c0_6 = arith.constant 0 : index
    %c0_7 = arith.constant 0 : index
    %9 = vector.load %arg11[%c0_6, %c0_7] : memref<128x512xf32, #tpu.memory_space<vmem>>, vector<128x512xf32>
    tpu.vector_store %arg11[%c0_6, %c0_7], %8 {strides = array<i32>} : memref<128x512xf32, #tpu.memory_space<vmem>>, vector<128x512xf32>,
    %c0_8 = arith.constant 0 : index
    %c0_9 = arith.constant 0 : index
    %10 = vector.load %arg10[%c0_8, %c0_9] : memref<8x256xf32, #tpu.memory_space<vmem>>, vector<8x256xf32>
    %c0_10 = arith.constant 0 : index
    %c0_11 = arith.constant 0 : index
    %11 = vector.load %arg4[%c0_10, %c0_11] : memref<128x512xf32, #tpu.memory_space<vmem>>, vector<128x512xf32>
    %c0_12 = arith.constant 0 : index
    %c0_13 = arith.constant 0 : index
    %12 = vector.load %arg5[%c0_12, %c0_13] : memref<128x128xf32, #tpu.memory_space<vmem>>, vector<128x128xf32>
    %c0_14 = arith.constant 0 : index
    %c0_15 = arith.constant 0 : index
    %13 = vector.load %arg7[%c0_14, %c0_15] : memref<1x128xf32, #tpu.memory_space<vmem>>, vector<1x128xf32>
    %14 = vector.extract_strided_slice %10 {offsets = [0, 0], sizes = [8, 128], strides = [1, 1]} : vector<8x256xf32> to vector<8x128xf32>
    %cst_16 = arith.constant dense<0.000000e+00> : vector<8x512xf32>
    %15 = tpu.matmul %14, %11, %cst_16 {dimension_numbers = #tpu.dot_dimension_numbers<[1], [0], [0], [1], [0, 0, 1, 1], [], []>} : vector<8x128xf32>, vector<128x512xf32>, vector<8x512xf32> -> vector<8x512xf32>
    %16 = vector.extract_strided_slice %10 {offsets = [0, 128], sizes = [8, 128], strides = [1, 1]} : vector<8x256xf32> to vector<8x128xf32>
    %cst_17 = arith.constant dense<0.000000e+00> : vector<8x128xf32>
    %17 = tpu.matmul %16, %12, %cst_17 {dimension_numbers = #tpu.dot_dimension_numbers<[1], [0], [0], [1], [0, 0, 1, 1], [], []>} : vector<8x128xf32>, vector<128x128xf32>, vector<8x128xf32> -> vector<8x128xf32>
    %18 = vector.extract_strided_slice %10 {offsets = [0, 128], sizes = [8, 128], strides = [1, 1]} : vector<8x256xf32> to vector<8x128xf32>
    %19 = vector.broadcast %13 : vector<1x128xf32> to vector<8x128xf32>
    %20 = arith.addf %17, %19 : vector<8x128xf32>
    %21 = math.tanh %20 : vector<8x128xf32>
    %c0_18 = arith.constant 0 : index
    %c0_19 = arith.constant 0 : index
    %c0_20 = arith.constant 0 : index
    %22 = vector.load %arg2[%c0_18, %c0_19, %c0_20] : memref<16x8x1xf32, #tpu.memory_space<vmem>>, vector<1x8x1xf32>
    %23 = vector.shape_cast %22 : vector<1x8x1xf32> to vector<8x1xf32>
    %24 = vector.broadcast %23 : vector<8x1xf32> to vector<8x128xf32>
    %25 = arith.mulf %21, %24 : vector<8x128xf32>
    %26 = arith.addf %18, %25 : vector<8x128xf32>
    %c0_21 = arith.constant 0 : index
    %c0_22 = arith.constant 0 : index
    %27 = vector.load %arg11[%c0_21, %c0_22] : memref<128x512xf32, #tpu.memory_space<vmem>>, vector<8x512xf32>
    %28 = arith.addf %27, %15 : vector<8x512xf32>
    %29 = arith.negf %28 : vector<8x512xf32>
    %30 = math.exp %29 : vector<8x512xf32>
    %cst_23 = arith.constant 1.000000e+00 : f32
    %31 = vector.broadcast %cst_23 : f32 to vector<8x512xf32>
    %32 = arith.addf %31, %30 : vector<8x512xf32>
    %33 = arith.divf %31, %32 : vector<8x512xf32>
    %34 = vector.extract_strided_slice %33 {offsets = [0, 0], sizes = [8, 128], strides = [1, 1]} : vector<8x512xf32> to vector<8x128xf32>
    %35 = vector.extract_strided_slice %33 {offsets = [0, 128], sizes = [8, 128], strides = [1, 1]} : vector<8x512xf32> to vector<8x128xf32>
    %36 = vector.extract_strided_slice %33 {offsets = [0, 256], sizes = [8, 128], strides = [1, 1]} : vector<8x512xf32> to vector<8x128xf32>
    %37 = vector.extract_strided_slice %33 {offsets = [0, 384], sizes = [8, 128], strides = [1, 1]} : vector<8x512xf32> to vector<8x128xf32>
    %38 = arith.mulf %34, %26 : vector<8x128xf32>
    %39 = arith.mulf %35, %37 : vector<8x128xf32>
    %40 = arith.addf %38, %39 : vector<8x128xf32>
    %41 = math.tanh %40 : vector<8x128xf32>
    %42 = arith.mulf %36, %41 : vector<8x128xf32>
    %c0_24 = arith.constant 0 : index
    %c0_25 = arith.constant 0 : index
    %43 = vector.load %arg8[%c0_24, %c0_25] : memref<128x128xf32, #tpu.memory_space<vmem>>, vector<8x128xf32>
    tpu.vector_store %arg8[%c0_24, %c0_25], %42 {strides = array<i32>} : memref<128x128xf32, #tpu.memory_space<vmem>>, vector<8x128xf32>,
    %44 = tpu.concatenate %42, %40 in 1 : vector<8x128xf32>, vector<8x128xf32> -> vector<8x256xf32>
    %c16_i32 = arith.constant 16 : i32
    %45 = arith.muli %arg0, %c16_i32 : i32
    %c0_i32_26 = arith.constant 0 : i32
    %46 = arith.addi %45, %c0_i32_26 : i32
    %c20_i32 = arith.constant 20 : i32
    %47 = arith.cmpi slt, %46, %c20_i32 : i32
    %48 = arith.select %47, %44, %10 : vector<8x256xf32>
    %49 = vector.extract_strided_slice %48 {offsets = [0, 0], sizes = [8, 128], strides = [1, 1]} : vector<8x256xf32> to vector<8x128xf32>
    %cst_27 = arith.constant dense<0.000000e+00> : vector<8x512xf32>
    %50 = tpu.matmul %49, %11, %cst_27 {dimension_numbers = #tpu.dot_dimension_numbers<[1], [0], [0], [1], [0, 0, 1, 1], [], []>} : vector<8x128xf32>, vector<128x512xf32>, vector<8x512xf32> -> vector<8x512xf32>
    %51 = vector.extract_strided_slice %48 {offsets = [0, 128], sizes = [8, 128], strides = [1, 1]} : vector<8x256xf32> to vector<8x128xf32>
    %cst_28 = arith.constant dense<0.000000e+00> : vector<8x128xf32>
    %52 = tpu.matmul %51, %12, %cst_28 {dimension_numbers = #tpu.dot_dimension_numbers<[1], [0], [0], [1], [0, 0, 1, 1], [], []>} : vector<8x128xf32>, vector<128x128xf32>, vector<8x128xf32> -> vector<8x128xf32>
    %53 = vector.extract_strided_slice %48 {offsets = [0, 128], sizes = [8, 128], strides = [1, 1]} : vector<8x256xf32> to vector<8x128xf32>
    %54 = vector.broadcast %13 : vector<1x128xf32> to vector<8x128xf32>
    %55 = arith.addf %52, %54 : vector<8x128xf32>
    %56 = math.tanh %55 : vector<8x128xf32>
    %c1 = arith.constant 1 : index
    %c0_29 = arith.constant 0 : index
    %c0_30 = arith.constant 0 : index
    %57 = vector.load %arg2[%c1, %c0_29, %c0_30] : memref<16x8x1xf32, #tpu.memory_space<vmem>>, vector<1x8x1xf32>
    %58 = vector.shape_cast %57 : vector<1x8x1xf32> to vector<8x1xf32>
    %59 = vector.broadcast %58 : vector<8x1xf32> to vector<8x128xf32>
    %60 = arith.mulf %56, %59 : vector<8x128xf32>
    %61 = arith.addf %53, %60 : vector<8x128xf32>
    %c8 = arith.constant 8 : index
    %c0_31 = arith.constant 0 : index
    %62 = vector.load %arg11[%c8, %c0_31] : memref<128x512xf32, #tpu.memory_space<vmem>>, vector<8x512xf32>
    %63 = arith.addf %62, %50 : vector<8x512xf32>
    %64 = arith.negf %63 : vector<8x512xf32>
    %65 = math.exp %64 : vector<8x512xf32>
    %cst_32 = arith.constant 1.000000e+00 : f32
    %66 = vector.broadcast %cst_32 : f32 to vector<8x512xf32>
    %67 = arith.addf %66, %65 : vector<8x512xf32>
    %68 = arith.divf %66, %67 : vector<8x512xf32>
    %69 = vector.extract_strided_slice %68 {offsets = [0, 0], sizes = [8, 128], strides = [1, 1]} : vector<8x512xf32> to vector<8x128xf32>
    %70 = vector.extract_strided_slice %68 {offsets = [0, 128], sizes = [8, 128], strides = [1, 1]} : vector<8x512xf32> to vector<8x128xf32>
    %71 = vector.extract_strided_slice %68 {offsets = [0, 256], sizes = [8, 128], strides = [1, 1]} : vector<8x512xf32> to vector<8x128xf32>
    %72 = vector.extract_strided_slice %68 {offsets = [0, 384], sizes = [8, 128], strides = [1, 1]} : vector<8x512xf32> to vector<8x128xf32>
    %73 = arith.mulf %69, %61 : vector<8x128xf32>
    %74 = arith.mulf %70, %72 : vector<8x128xf32>
    %75 = arith.addf %73, %74 : vector<8x128xf32>
    %76 = math.tanh %75 : vector<8x128xf32>
    %77 = arith.mulf %71, %76 : vector<8x128xf32>
    %c8_33 = arith.constant 8 : index
    %c0_34 = arith.constant 0 : index
    %78 = vector.load %arg8[%c8_33, %c0_34] : memref<128x128xf32, #tpu.memory_space<vmem>>, vector<8x128xf32>
    tpu.vector_store %arg8[%c8_33, %c0_34], %77 {strides = array<i32>} : memref<128x128xf32, #tpu.memory_space<vmem>>, vector<8x128xf32>,
    %79 = tpu.concatenate %77, %75 in 1 : vector<8x128xf32>, vector<8x128xf32> -> vector<8x256xf32>
    %c16_i32_35 = arith.constant 16 : i32
    %80 = arith.muli %arg0, %c16_i32_35 : i32
    %c1_i32 = arith.constant 1 : i32
    %81 = arith.addi %80, %c1_i32 : i32
    %c20_i32_36 = arith.constant 20 : i32
    %82 = arith.cmpi slt, %81, %c20_i32_36 : i32
    %83 = arith.select %82, %79, %48 : vector<8x256xf32>
    %84 = vector.extract_strided_slice %83 {offsets = [0, 0], sizes = [8, 128], strides = [1, 1]} : vector<8x256xf32> to vector<8x128xf32>
    %cst_37 = arith.constant dense<0.000000e+00> : vector<8x512xf32>
    %85 = tpu.matmul %84, %11, %cst_37 {dimension_numbers = #tpu.dot_dimension_numbers<[1], [0], [0], [1], [0, 0, 1, 1], [], []>} : vector<8x128xf32>, vector<128x512xf32>, vector<8x512xf32> -> vector<8x512xf32>
    %86 = vector.extract_strided_slice %83 {offsets = [0, 128], sizes = [8, 128], strides = [1, 1]} : vector<8x256xf32> to vector<8x128xf32>
    %cst_38 = arith.constant dense<0.000000e+00> : vector<8x128xf32>
    %87 = tpu.matmul %86, %12, %cst_38 {dimension_numbers = #tpu.dot_dimension_numbers<[1], [0], [0], [1], [0, 0, 1, 1], [], []>} : vector<8x128xf32>, vector<128x128xf32>, vector<8x128xf32> -> vector<8x128xf32>
    %88 = vector.extract_strided_slice %83 {offsets = [0, 128], sizes = [8, 128], strides = [1, 1]} : vector<8x256xf32> to vector<8x128xf32>
    %89 = vector.broadcast %13 : vector<1x128xf32> to vector<8x128xf32>
    %90 = arith.addf %87, %89 : vector<8x128xf32>
    %91 = math.tanh %90 : vector<8x128xf32>
    %c2 = arith.constant 2 : index
    %c0_39 = arith.constant 0 : index
    %c0_40 = arith.constant 0 : index
    %92 = vector.load %arg2[%c2, %c0_39, %c0_40] : memref<16x8x1xf32, #tpu.memory_space<vmem>>, vector<1x8x1xf32>
    %93 = vector.shape_cast %92 : vector<1x8x1xf32> to vector<8x1xf32>
    %94 = vector.broadcast %93 : vector<8x1xf32> to vector<8x128xf32>
    %95 = arith.mulf %91, %94 : vector<8x128xf32>
    %96 = arith.addf %88, %95 : vector<8x128xf32>
    %c16 = arith.constant 16 : index
    %c0_41 = arith.constant 0 : index
    %97 = vector.load %arg11[%c16, %c0_41] : memref<128x512xf32, #tpu.memory_space<vmem>>, vector<8x512xf32>
    %98 = arith.addf %97, %85 : vector<8x512xf32>
    %99 = arith.negf %98 : vector<8x512xf32>
    %100 = math.exp %99 : vector<8x512xf32>
    %cst_42 = arith.constant 1.000000e+00 : f32
    %101 = vector.broadcast %cst_42 : f32 to vector<8x512xf32>
    %102 = arith.addf %101, %100 : vector<8x512xf32>
    %103 = arith.divf %101, %102 : vector<8x512xf32>
    %104 = vector.extract_strided_slice %103 {offsets = [0, 0], sizes = [8, 128], strides = [1, 1]} : vector<8x512xf32> to vector<8x128xf32>
    %105 = vector.extract_strided_slice %103 {offsets = [0, 128], sizes = [8, 128], strides = [1, 1]} : vector<8x512xf32> to vector<8x128xf32>
    %106 = vector.extract_strided_slice %103 {offsets = [0, 256], sizes = [8, 128], strides = [1, 1]} : vector<8x512xf32> to vector<8x128xf32>
    %107 = vector.extract_strided_slice %103 {offsets = [0, 384], sizes = [8, 128], strides = [1, 1]} : vector<8x512xf32> to vector<8x128xf32>
    %108 = arith.mulf %104, %96 : vector<8x128xf32>
    %109 = arith.mulf %105, %107 : vector<8x128xf32>
    %110 = arith.addf %108, %109 : vector<8x128xf32>
    %111 = math.tanh %110 : vector<8x128xf32>
    %112 = arith.mulf %106, %111 : vector<8x128xf32>
    %c16_43 = arith.constant 16 : index
    %c0_44 = arith.constant 0 : index
    %113 = vector.load %arg8[%c16_43, %c0_44] : memref<128x128xf32, #tpu.memory_space<vmem>>, vector<8x128xf32>
    tpu.vector_store %arg8[%c16_43, %c0_44], %112 {strides = array<i32>} : memref<128x128xf32, #tpu.memory_space<vmem>>, vector<8x128xf32>,
    %114 = tpu.concatenate %112, %110 in 1 : vector<8x128xf32>, vector<8x128xf32> -> vector<8x256xf32>
    %c16_i32_45 = arith.constant 16 : i32
    %115 = arith.muli %arg0, %c16_i32_45 : i32
    %c2_i32 = arith.constant 2 : i32
    %116 = arith.addi %115, %c2_i32 : i32
    %c20_i32_46 = arith.constant 20 : i32
    %117 = arith.cmpi slt, %116, %c20_i32_46 : i32
    %118 = arith.select %117, %114, %83 : vector<8x256xf32>
    %119 = vector.extract_strided_slice %118 {offsets = [0, 0], sizes = [8, 128], strides = [1, 1]} : vector<8x256xf32> to vector<8x128xf32>
    %cst_47 = arith.constant dense<0.000000e+00> : vector<8x512xf32>
    %120 = tpu.matmul %119, %11, %cst_47 {dimension_numbers = #tpu.dot_dimension_numbers<[1], [0], [0], [1], [0, 0, 1, 1], [], []>} : vector<8x128xf32>, vector<128x512xf32>, vector<8x512xf32> -> vector<8x512xf32>
    %121 = vector.extract_strided_slice %118 {offsets = [0, 128], sizes = [8, 128], strides = [1, 1]} : vector<8x256xf32> to vector<8x128xf32>
    %cst_48 = arith.constant dense<0.000000e+00> : vector<8x128xf32>
    %122 = tpu.matmul %121, %12, %cst_48 {dimension_numbers = #tpu.dot_dimension_numbers<[1], [0], [0], [1], [0, 0, 1, 1], [], []>} : vector<8x128xf32>, vector<128x128xf32>, vector<8x128xf32> -> vector<8x128xf32>
    %123 = vector.extract_strided_slice %118 {offsets = [0, 128], sizes = [8, 128], strides = [1, 1]} : vector<8x256xf32> to vector<8x128xf32>
    %124 = vector.broadcast %13 : vector<1x128xf32> to vector<8x128xf32>
    %125 = arith.addf %122, %124 : vector<8x128xf32>
    %126 = math.tanh %125 : vector<8x128xf32>
    %c3 = arith.constant 3 : index
    %c0_49 = arith.constant 0 : index
    %c0_50 = arith.constant 0 : index
    %127 = vector.load %arg2[%c3, %c0_49, %c0_50] : memref<16x8x1xf32, #tpu.memory_space<vmem>>, vector<1x8x1xf32>
    %128 = vector.shape_cast %127 : vector<1x8x1xf32> to vector<8x1xf32>
    %129 = vector.broadcast %128 : vector<8x1xf32> to vector<8x128xf32>
    %130 = arith.mulf %126, %129 : vector<8x128xf32>
    %131 = arith.addf %123, %130 : vector<8x128xf32>
    %c24 = arith.constant 24 : index
    %c0_51 = arith.constant 0 : index
    %132 = vector.load %arg11[%c24, %c0_51] : memref<128x512xf32, #tpu.memory_space<vmem>>, vector<8x512xf32>
    %133 = arith.addf %132, %120 : vector<8x512xf32>
    %134 = arith.negf %133 : vector<8x512xf32>
    %135 = math.exp %134 : vector<8x512xf32>
    %cst_52 = arith.constant 1.000000e+00 : f32
    %136 = vector.broadcast %cst_52 : f32 to vector<8x512xf32>
    %137 = arith.addf %136, %135 : vector<8x512xf32>
    %138 = arith.divf %136, %137 : vector<8x512xf32>
    %139 = vector.extract_strided_slice %138 {offsets = [0, 0], sizes = [8, 128], strides = [1, 1]} : vector<8x512xf32> to vector<8x128xf32>
    %140 = vector.extract_strided_slice %138 {offsets = [0, 128], sizes = [8, 128], strides = [1, 1]} : vector<8x512xf32> to vector<8x128xf32>
    %141 = vector.extract_strided_slice %138 {offsets = [0, 256], sizes = [8, 128], strides = [1, 1]} : vector<8x512xf32> to vector<8x128xf32>
    %142 = vector.extract_strided_slice %138 {offsets = [0, 384], sizes = [8, 128], strides = [1, 1]} : vector<8x512xf32> to vector<8x128xf32>
    %143 = arith.mulf %139, %131 : vector<8x128xf32>
    %144 = arith.mulf %140, %142 : vector<8x128xf32>
    %145 = arith.addf %143, %144 : vector<8x128xf32>
    %146 = math.tanh %145 : vector<8x128xf32>
    %147 = arith.mulf %141, %146 : vector<8x128xf32>
    %c24_53 = arith.constant 24 : index
    %c0_54 = arith.constant 0 : index
    %148 = vector.load %arg8[%c24_53, %c0_54] : memref<128x128xf32, #tpu.memory_space<vmem>>, vector<8x128xf32>
    tpu.vector_store %arg8[%c24_53, %c0_54], %147 {strides = array<i32>} : memref<128x128xf32, #tpu.memory_space<vmem>>, vector<8x128xf32>,
    %149 = tpu.concatenate %147, %145 in 1 : vector<8x128xf32>, vector<8x128xf32> -> vector<8x256xf32>
    %c16_i32_55 = arith.constant 16 : i32
    %150 = arith.muli %arg0, %c16_i32_55 : i32
    %c3_i32 = arith.constant 3 : i32
    %151 = arith.addi %150, %c3_i32 : i32
    %c20_i32_56 = arith.constant 20 : i32
    %152 = arith.cmpi slt, %151, %c20_i32_56 : i32
    %153 = arith.select %152, %149, %118 : vector<8x256xf32>
    %154 = vector.extract_strided_slice %153 {offsets = [0, 0], sizes = [8, 128], strides = [1, 1]} : vector<8x256xf32> to vector<8x128xf32>
    %cst_57 = arith.constant dense<0.000000e+00> : vector<8x512xf32>
    %155 = tpu.matmul %154, %11, %cst_57 {dimension_numbers = #tpu.dot_dimension_numbers<[1], [0], [0], [1], [0, 0, 1, 1], [], []>} : vector<8x128xf32>, vector<128x512xf32>, vector<8x512xf32> -> vector<8x512xf32>
    %156 = vector.extract_strided_slice %153 {offsets = [0, 128], sizes = [8, 128], strides = [1, 1]} : vector<8x256xf32> to vector<8x128xf32>
    %cst_58 = arith.constant dense<0.000000e+00> : vector<8x128xf32>
    %157 = tpu.matmul %156, %12, %cst_58 {dimension_numbers = #tpu.dot_dimension_numbers<[1], [0], [0], [1], [0, 0, 1, 1], [], []>} : vector<8x128xf32>, vector<128x128xf32>, vector<8x128xf32> -> vector<8x128xf32>
    %158 = vector.extract_strided_slice %153 {offsets = [0, 128], sizes = [8, 128], strides = [1, 1]} : vector<8x256xf32> to vector<8x128xf32>
    %159 = vector.broadcast %13 : vector<1x128xf32> to vector<8x128xf32>
    %160 = arith.addf %157, %159 : vector<8x128xf32>
    %161 = math.tanh %160 : vector<8x128xf32>
    %c4 = arith.constant 4 : index
    %c0_59 = arith.constant 0 : index
    %c0_60 = arith.constant 0 : index
    %162 = vector.load %arg2[%c4, %c0_59, %c0_60] : memref<16x8x1xf32, #tpu.memory_space<vmem>>, vector<1x8x1xf32>
    %163 = vector.shape_cast %162 : vector<1x8x1xf32> to vector<8x1xf32>
    %164 = vector.broadcast %163 : vector<8x1xf32> to vector<8x128xf32>
    %165 = arith.mulf %161, %164 : vector<8x128xf32>
    %166 = arith.addf %158, %165 : vector<8x128xf32>
    %c32 = arith.constant 32 : index
    %c0_61 = arith.constant 0 : index
    %167 = vector.load %arg11[%c32, %c0_61] : memref<128x512xf32, #tpu.memory_space<vmem>>, vector<8x512xf32>
    %168 = arith.addf %167, %155 : vector<8x512xf32>
    %169 = arith.negf %168 : vector<8x512xf32>
    %170 = math.exp %169 : vector<8x512xf32>
    %cst_62 = arith.constant 1.000000e+00 : f32
    %171 = vector.broadcast %cst_62 : f32 to vector<8x512xf32>
    %172 = arith.addf %171, %170 : vector<8x512xf32>
    %173 = arith.divf %171, %172 : vector<8x512xf32>
    %174 = vector.extract_strided_slice %173 {offsets = [0, 0], sizes = [8, 128], strides = [1, 1]} : vector<8x512xf32> to vector<8x128xf32>
    %175 = vector.extract_strided_slice %173 {offsets = [0, 128], sizes = [8, 128], strides = [1, 1]} : vector<8x512xf32> to vector<8x128xf32>
    %176 = vector.extract_strided_slice %173 {offsets = [0, 256], sizes = [8, 128], strides = [1, 1]} : vector<8x512xf32> to vector<8x128xf32>
    %177 = vector.extract_strided_slice %173 {offsets = [0, 384], sizes = [8, 128], strides = [1, 1]} : vector<8x512xf32> to vector<8x128xf32>
    %178 = arith.mulf %174, %166 : vector<8x128xf32>
    %179 = arith.mulf %175, %177 : vector<8x128xf32>
    %180 = arith.addf %178, %179 : vector<8x128xf32>
    %181 = math.tanh %180 : vector<8x128xf32>
    %182 = arith.mulf %176, %181 : vector<8x128xf32>
    %c32_63 = arith.constant 32 : index
    %c0_64 = arith.constant 0 : index
    %183 = vector.load %arg8[%c32_63, %c0_64] : memref<128x128xf32, #tpu.memory_space<vmem>>, vector<8x128xf32>
    tpu.vector_store %arg8[%c32_63, %c0_64], %182 {strides = array<i32>} : memref<128x128xf32, #tpu.memory_space<vmem>>, vector<8x128xf32>,
    %184 = tpu.concatenate %182, %180 in 1 : vector<8x128xf32>, vector<8x128xf32> -> vector<8x256xf32>
    %c16_i32_65 = arith.constant 16 : i32
    %185 = arith.muli %arg0, %c16_i32_65 : i32
    %c4_i32 = arith.constant 4 : i32
    %186 = arith.addi %185, %c4_i32 : i32
    %c20_i32_66 = arith.constant 20 : i32
    %187 = arith.cmpi slt, %186, %c20_i32_66 : i32
    %188 = arith.select %187, %184, %153 : vector<8x256xf32>
    %189 = vector.extract_strided_slice %188 {offsets = [0, 0], sizes = [8, 128], strides = [1, 1]} : vector<8x256xf32> to vector<8x128xf32>
    %cst_67 = arith.constant dense<0.000000e+00> : vector<8x512xf32>
    %190 = tpu.matmul %189, %11, %cst_67 {dimension_numbers = #tpu.dot_dimension_numbers<[1], [0], [0], [1], [0, 0, 1, 1], [], []>} : vector<8x128xf32>, vector<128x512xf32>, vector<8x512xf32> -> vector<8x512xf32>
    %191 = vector.extract_strided_slice %188 {offsets = [0, 128], sizes = [8, 128], strides = [1, 1]} : vector<8x256xf32> to vector<8x128xf32>
    %cst_68 = arith.constant dense<0.000000e+00> : vector<8x128xf32>
    %192 = tpu.matmul %191, %12, %cst_68 {dimension_numbers = #tpu.dot_dimension_numbers<[1], [0], [0], [1], [0, 0, 1, 1], [], []>} : vector<8x128xf32>, vector<128x128xf32>, vector<8x128xf32> -> vector<8x128xf32>
    %193 = vector.extract_strided_slice %188 {offsets = [0, 128], sizes = [8, 128], strides = [1, 1]} : vector<8x256xf32> to vector<8x128xf32>
    %194 = vector.broadcast %13 : vector<1x128xf32> to vector<8x128xf32>
    %195 = arith.addf %192, %194 : vector<8x128xf32>
    %196 = math.tanh %195 : vector<8x128xf32>
    %c5 = arith.constant 5 : index
    %c0_69 = arith.constant 0 : index
    %c0_70 = arith.constant 0 : index
    %197 = vector.load %arg2[%c5, %c0_69, %c0_70] : memref<16x8x1xf32, #tpu.memory_space<vmem>>, vector<1x8x1xf32>
    %198 = vector.shape_cast %197 : vector<1x8x1xf32> to vector<8x1xf32>
    %199 = vector.broadcast %198 : vector<8x1xf32> to vector<8x128xf32>
    %200 = arith.mulf %196, %199 : vector<8x128xf32>
    %201 = arith.addf %193, %200 : vector<8x128xf32>
    %c40 = arith.constant 40 : index
    %c0_71 = arith.constant 0 : index
    %202 = vector.load %arg11[%c40, %c0_71] : memref<128x512xf32, #tpu.memory_space<vmem>>, vector<8x512xf32>
    %203 = arith.addf %202, %190 : vector<8x512xf32>
    %204 = arith.negf %203 : vector<8x512xf32>
    %205 = math.exp %204 : vector<8x512xf32>
    %cst_72 = arith.constant 1.000000e+00 : f32
    %206 = vector.broadcast %cst_72 : f32 to vector<8x512xf32>
    %207 = arith.addf %206, %205 : vector<8x512xf32>
    %208 = arith.divf %206, %207 : vector<8x512xf32>
    %209 = vector.extract_strided_slice %208 {offsets = [0, 0], sizes = [8, 128], strides = [1, 1]} : vector<8x512xf32> to vector<8x128xf32>
    %210 = vector.extract_strided_slice %208 {offsets = [0, 128], sizes = [8, 128], strides = [1, 1]} : vector<8x512xf32> to vector<8x128xf32>
    %211 = vector.extract_strided_slice %208 {offsets = [0, 256], sizes = [8, 128], strides = [1, 1]} : vector<8x512xf32> to vector<8x128xf32>
    %212 = vector.extract_strided_slice %208 {offsets = [0, 384], sizes = [8, 128], strides = [1, 1]} : vector<8x512xf32> to vector<8x128xf32>
    %213 = arith.mulf %209, %201 : vector<8x128xf32>
    %214 = arith.mulf %210, %212 : vector<8x128xf32>
    %215 = arith.addf %213, %214 : vector<8x128xf32>
    %216 = math.tanh %215 : vector<8x128xf32>
    %217 = arith.mulf %211, %216 : vector<8x128xf32>
    %c40_73 = arith.constant 40 : index
    %c0_74 = arith.constant 0 : index
    %218 = vector.load %arg8[%c40_73, %c0_74] : memref<128x128xf32, #tpu.memory_space<vmem>>, vector<8x128xf32>
    tpu.vector_store %arg8[%c40_73, %c0_74], %217 {strides = array<i32>} : memref<128x128xf32, #tpu.memory_space<vmem>>, vector<8x128xf32>,
    %219 = tpu.concatenate %217, %215 in 1 : vector<8x128xf32>, vector<8x128xf32> -> vector<8x256xf32>
    %c16_i32_75 = arith.constant 16 : i32
    %220 = arith.muli %arg0, %c16_i32_75 : i32
    %c5_i32 = arith.constant 5 : i32
    %221 = arith.addi %220, %c5_i32 : i32
    %c20_i32_76 = arith.constant 20 : i32
    %222 = arith.cmpi slt, %221, %c20_i32_76 : i32
    %223 = arith.select %222, %219, %188 : vector<8x256xf32>
    %224 = vector.extract_strided_slice %223 {offsets = [0, 0], sizes = [8, 128], strides = [1, 1]} : vector<8x256xf32> to vector<8x128xf32>
    %cst_77 = arith.constant dense<0.000000e+00> : vector<8x512xf32>
    %225 = tpu.matmul %224, %11, %cst_77 {dimension_numbers = #tpu.dot_dimension_numbers<[1], [0], [0], [1], [0, 0, 1, 1], [], []>} : vector<8x128xf32>, vector<128x512xf32>, vector<8x512xf32> -> vector<8x512xf32>
    %226 = vector.extract_strided_slice %223 {offsets = [0, 128], sizes = [8, 128], strides = [1, 1]} : vector<8x256xf32> to vector<8x128xf32>
    %cst_78 = arith.constant dense<0.000000e+00> : vector<8x128xf32>
    %227 = tpu.matmul %226, %12, %cst_78 {dimension_numbers = #tpu.dot_dimension_numbers<[1], [0], [0], [1], [0, 0, 1, 1], [], []>} : vector<8x128xf32>, vector<128x128xf32>, vector<8x128xf32> -> vector<8x128xf32>
    %228 = vector.extract_strided_slice %223 {offsets = [0, 128], sizes = [8, 128], strides = [1, 1]} : vector<8x256xf32> to vector<8x128xf32>
    %229 = vector.broadcast %13 : vector<1x128xf32> to vector<8x128xf32>
    %230 = arith.addf %227, %229 : vector<8x128xf32>
    %231 = math.tanh %230 : vector<8x128xf32>
    %c6 = arith.constant 6 : index
    %c0_79 = arith.constant 0 : index
    %c0_80 = arith.constant 0 : index
    %232 = vector.load %arg2[%c6, %c0_79, %c0_80] : memref<16x8x1xf32, #tpu.memory_space<vmem>>, vector<1x8x1xf32>
    %233 = vector.shape_cast %232 : vector<1x8x1xf32> to vector<8x1xf32>
    %234 = vector.broadcast %233 : vector<8x1xf32> to vector<8x128xf32>
    %235 = arith.mulf %231, %234 : vector<8x128xf32>
    %236 = arith.addf %228, %235 : vector<8x128xf32>
    %c48 = arith.constant 48 : index
    %c0_81 = arith.constant 0 : index
    %237 = vector.load %arg11[%c48, %c0_81] : memref<128x512xf32, #tpu.memory_space<vmem>>, vector<8x512xf32>
    %238 = arith.addf %237, %225 : vector<8x512xf32>
    %239 = arith.negf %238 : vector<8x512xf32>
    %240 = math.exp %239 : vector<8x512xf32>
    %cst_82 = arith.constant 1.000000e+00 : f32
    %241 = vector.broadcast %cst_82 : f32 to vector<8x512xf32>
    %242 = arith.addf %241, %240 : vector<8x512xf32>
    %243 = arith.divf %241, %242 : vector<8x512xf32>
    %244 = vector.extract_strided_slice %243 {offsets = [0, 0], sizes = [8, 128], strides = [1, 1]} : vector<8x512xf32> to vector<8x128xf32>
    %245 = vector.extract_strided_slice %243 {offsets = [0, 128], sizes = [8, 128], strides = [1, 1]} : vector<8x512xf32> to vector<8x128xf32>
    %246 = vector.extract_strided_slice %243 {offsets = [0, 256], sizes = [8, 128], strides = [1, 1]} : vector<8x512xf32> to vector<8x128xf32>
    %247 = vector.extract_strided_slice %243 {offsets = [0, 384], sizes = [8, 128], strides = [1, 1]} : vector<8x512xf32> to vector<8x128xf32>
    %248 = arith.mulf %244, %236 : vector<8x128xf32>
    %249 = arith.mulf %245, %247 : vector<8x128xf32>
    %250 = arith.addf %248, %249 : vector<8x128xf32>
    %251 = math.tanh %250 : vector<8x128xf32>
    %252 = arith.mulf %246, %251 : vector<8x128xf32>
    %c48_83 = arith.constant 48 : index
    %c0_84 = arith.constant 0 : index
    %253 = vector.load %arg8[%c48_83, %c0_84] : memref<128x128xf32, #tpu.memory_space<vmem>>, vector<8x128xf32>
    tpu.vector_store %arg8[%c48_83, %c0_84], %252 {strides = array<i32>} : memref<128x128xf32, #tpu.memory_space<vmem>>, vector<8x128xf32>,
    %254 = tpu.concatenate %252, %250 in 1 : vector<8x128xf32>, vector<8x128xf32> -> vector<8x256xf32>
    %c16_i32_85 = arith.constant 16 : i32
    %255 = arith.muli %arg0, %c16_i32_85 : i32
    %c6_i32 = arith.constant 6 : i32
    %256 = arith.addi %255, %c6_i32 : i32
    %c20_i32_86 = arith.constant 20 : i32
    %257 = arith.cmpi slt, %256, %c20_i32_86 : i32
    %258 = arith.select %257, %254, %223 : vector<8x256xf32>
    %259 = vector.extract_strided_slice %258 {offsets = [0, 0], sizes = [8, 128], strides = [1, 1]} : vector<8x256xf32> to vector<8x128xf32>
    %cst_87 = arith.constant dense<0.000000e+00> : vector<8x512xf32>
    %260 = tpu.matmul %259, %11, %cst_87 {dimension_numbers = #tpu.dot_dimension_numbers<[1], [0], [0], [1], [0, 0, 1, 1], [], []>} : vector<8x128xf32>, vector<128x512xf32>, vector<8x512xf32> -> vector<8x512xf32>
    %261 = vector.extract_strided_slice %258 {offsets = [0, 128], sizes = [8, 128], strides = [1, 1]} : vector<8x256xf32> to vector<8x128xf32>
    %cst_88 = arith.constant dense<0.000000e+00> : vector<8x128xf32>
    %262 = tpu.matmul %261, %12, %cst_88 {dimension_numbers = #tpu.dot_dimension_numbers<[1], [0], [0], [1], [0, 0, 1, 1], [], []>} : vector<8x128xf32>, vector<128x128xf32>, vector<8x128xf32> -> vector<8x128xf32>
    %263 = vector.extract_strided_slice %258 {offsets = [0, 128], sizes = [8, 128], strides = [1, 1]} : vector<8x256xf32> to vector<8x128xf32>
    %264 = vector.broadcast %13 : vector<1x128xf32> to vector<8x128xf32>
    %265 = arith.addf %262, %264 : vector<8x128xf32>
    %266 = math.tanh %265 : vector<8x128xf32>
    %c7 = arith.constant 7 : index
    %c0_89 = arith.constant 0 : index
    %c0_90 = arith.constant 0 : index
    %267 = vector.load %arg2[%c7, %c0_89, %c0_90] : memref<16x8x1xf32, #tpu.memory_space<vmem>>, vector<1x8x1xf32>
    %268 = vector.shape_cast %267 : vector<1x8x1xf32> to vector<8x1xf32>
    %269 = vector.broadcast %268 : vector<8x1xf32> to vector<8x128xf32>
    %270 = arith.mulf %266, %269 : vector<8x128xf32>
    %271 = arith.addf %263, %270 : vector<8x128xf32>
    %c56 = arith.constant 56 : index
    %c0_91 = arith.constant 0 : index
    %272 = vector.load %arg11[%c56, %c0_91] : memref<128x512xf32, #tpu.memory_space<vmem>>, vector<8x512xf32>
    %273 = arith.addf %272, %260 : vector<8x512xf32>
    %274 = arith.negf %273 : vector<8x512xf32>
    %275 = math.exp %274 : vector<8x512xf32>
    %cst_92 = arith.constant 1.000000e+00 : f32
    %276 = vector.broadcast %cst_92 : f32 to vector<8x512xf32>
    %277 = arith.addf %276, %275 : vector<8x512xf32>
    %278 = arith.divf %276, %277 : vector<8x512xf32>
    %279 = vector.extract_strided_slice %278 {offsets = [0, 0], sizes = [8, 128], strides = [1, 1]} : vector<8x512xf32> to vector<8x128xf32>
    %280 = vector.extract_strided_slice %278 {offsets = [0, 128], sizes = [8, 128], strides = [1, 1]} : vector<8x512xf32> to vector<8x128xf32>
    %281 = vector.extract_strided_slice %278 {offsets = [0, 256], sizes = [8, 128], strides = [1, 1]} : vector<8x512xf32> to vector<8x128xf32>
    %282 = vector.extract_strided_slice %278 {offsets = [0, 384], sizes = [8, 128], strides = [1, 1]} : vector<8x512xf32> to vector<8x128xf32>
    %283 = arith.mulf %279, %271 : vector<8x128xf32>
    %284 = arith.mulf %280, %282 : vector<8x128xf32>
    %285 = arith.addf %283, %284 : vector<8x128xf32>
    %286 = math.tanh %285 : vector<8x128xf32>
    %287 = arith.mulf %281, %286 : vector<8x128xf32>
    %c56_93 = arith.constant 56 : index
    %c0_94 = arith.constant 0 : index
    %288 = vector.load %arg8[%c56_93, %c0_94] : memref<128x128xf32, #tpu.memory_space<vmem>>, vector<8x128xf32>
    tpu.vector_store %arg8[%c56_93, %c0_94], %287 {strides = array<i32>} : memref<128x128xf32, #tpu.memory_space<vmem>>, vector<8x128xf32>,
    %289 = tpu.concatenate %287, %285 in 1 : vector<8x128xf32>, vector<8x128xf32> -> vector<8x256xf32>
    %c16_i32_95 = arith.constant 16 : i32
    %290 = arith.muli %arg0, %c16_i32_95 : i32
    %c7_i32 = arith.constant 7 : i32
    %291 = arith.addi %290, %c7_i32 : i32
    %c20_i32_96 = arith.constant 20 : i32
    %292 = arith.cmpi slt, %291, %c20_i32_96 : i32
    %293 = arith.select %292, %289, %258 : vector<8x256xf32>
    %294 = vector.extract_strided_slice %293 {offsets = [0, 0], sizes = [8, 128], strides = [1, 1]} : vector<8x256xf32> to vector<8x128xf32>
    %cst_97 = arith.constant dense<0.000000e+00> : vector<8x512xf32>
    %295 = tpu.matmul %294, %11, %cst_97 {dimension_numbers = #tpu.dot_dimension_numbers<[1], [0], [0], [1], [0, 0, 1, 1], [], []>} : vector<8x128xf32>, vector<128x512xf32>, vector<8x512xf32> -> vector<8x512xf32>
    %296 = vector.extract_strided_slice %293 {offsets = [0, 128], sizes = [8, 128], strides = [1, 1]} : vector<8x256xf32> to vector<8x128xf32>
    %cst_98 = arith.constant dense<0.000000e+00> : vector<8x128xf32>
    %297 = tpu.matmul %296, %12, %cst_98 {dimension_numbers = #tpu.dot_dimension_numbers<[1], [0], [0], [1], [0, 0, 1, 1], [], []>} : vector<8x128xf32>, vector<128x128xf32>, vector<8x128xf32> -> vector<8x128xf32>
    %298 = vector.extract_strided_slice %293 {offsets = [0, 128], sizes = [8, 128], strides = [1, 1]} : vector<8x256xf32> to vector<8x128xf32>
    %299 = vector.broadcast %13 : vector<1x128xf32> to vector<8x128xf32>
    %300 = arith.addf %297, %299 : vector<8x128xf32>
    %301 = math.tanh %300 : vector<8x128xf32>
    %c8_99 = arith.constant 8 : index
    %c0_100 = arith.constant 0 : index
    %c0_101 = arith.constant 0 : index
    %302 = vector.load %arg2[%c8_99, %c0_100, %c0_101] : memref<16x8x1xf32, #tpu.memory_space<vmem>>, vector<1x8x1xf32>
    %303 = vector.shape_cast %302 : vector<1x8x1xf32> to vector<8x1xf32>
    %304 = vector.broadcast %303 : vector<8x1xf32> to vector<8x128xf32>
    %305 = arith.mulf %301, %304 : vector<8x128xf32>
    %306 = arith.addf %298, %305 : vector<8x128xf32>
    %c64 = arith.constant 64 : index
    %c0_102 = arith.constant 0 : index
    %307 = vector.load %arg11[%c64, %c0_102] : memref<128x512xf32, #tpu.memory_space<vmem>>, vector<8x512xf32>
    %308 = arith.addf %307, %295 : vector<8x512xf32>
    %309 = arith.negf %308 : vector<8x512xf32>
    %310 = math.exp %309 : vector<8x512xf32>
    %cst_103 = arith.constant 1.000000e+00 : f32
    %311 = vector.broadcast %cst_103 : f32 to vector<8x512xf32>
    %312 = arith.addf %311, %310 : vector<8x512xf32>
    %313 = arith.divf %311, %312 : vector<8x512xf32>
    %314 = vector.extract_strided_slice %313 {offsets = [0, 0], sizes = [8, 128], strides = [1, 1]} : vector<8x512xf32> to vector<8x128xf32>
    %315 = vector.extract_strided_slice %313 {offsets = [0, 128], sizes = [8, 128], strides = [1, 1]} : vector<8x512xf32> to vector<8x128xf32>
    %316 = vector.extract_strided_slice %313 {offsets = [0, 256], sizes = [8, 128], strides = [1, 1]} : vector<8x512xf32> to vector<8x128xf32>
    %317 = vector.extract_strided_slice %313 {offsets = [0, 384], sizes = [8, 128], strides = [1, 1]} : vector<8x512xf32> to vector<8x128xf32>
    %318 = arith.mulf %314, %306 : vector<8x128xf32>
    %319 = arith.mulf %315, %317 : vector<8x128xf32>
    %320 = arith.addf %318, %319 : vector<8x128xf32>
    %321 = math.tanh %320 : vector<8x128xf32>
    %322 = arith.mulf %316, %321 : vector<8x128xf32>
    %c64_104 = arith.constant 64 : index
    %c0_105 = arith.constant 0 : index
    %323 = vector.load %arg8[%c64_104, %c0_105] : memref<128x128xf32, #tpu.memory_space<vmem>>, vector<8x128xf32>
    tpu.vector_store %arg8[%c64_104, %c0_105], %322 {strides = array<i32>} : memref<128x128xf32, #tpu.memory_space<vmem>>, vector<8x128xf32>,
    %324 = tpu.concatenate %322, %320 in 1 : vector<8x128xf32>, vector<8x128xf32> -> vector<8x256xf32>
    %c16_i32_106 = arith.constant 16 : i32
    %325 = arith.muli %arg0, %c16_i32_106 : i32
    %c8_i32 = arith.constant 8 : i32
    %326 = arith.addi %325, %c8_i32 : i32
    %c20_i32_107 = arith.constant 20 : i32
    %327 = arith.cmpi slt, %326, %c20_i32_107 : i32
    %328 = arith.select %327, %324, %293 : vector<8x256xf32>
    %329 = vector.extract_strided_slice %328 {offsets = [0, 0], sizes = [8, 128], strides = [1, 1]} : vector<8x256xf32> to vector<8x128xf32>
    %cst_108 = arith.constant dense<0.000000e+00> : vector<8x512xf32>
    %330 = tpu.matmul %329, %11, %cst_108 {dimension_numbers = #tpu.dot_dimension_numbers<[1], [0], [0], [1], [0, 0, 1, 1], [], []>} : vector<8x128xf32>, vector<128x512xf32>, vector<8x512xf32> -> vector<8x512xf32>
    %331 = vector.extract_strided_slice %328 {offsets = [0, 128], sizes = [8, 128], strides = [1, 1]} : vector<8x256xf32> to vector<8x128xf32>
    %cst_109 = arith.constant dense<0.000000e+00> : vector<8x128xf32>
    %332 = tpu.matmul %331, %12, %cst_109 {dimension_numbers = #tpu.dot_dimension_numbers<[1], [0], [0], [1], [0, 0, 1, 1], [], []>} : vector<8x128xf32>, vector<128x128xf32>, vector<8x128xf32> -> vector<8x128xf32>
    %333 = vector.extract_strided_slice %328 {offsets = [0, 128], sizes = [8, 128], strides = [1, 1]} : vector<8x256xf32> to vector<8x128xf32>
    %334 = vector.broadcast %13 : vector<1x128xf32> to vector<8x128xf32>
    %335 = arith.addf %332, %334 : vector<8x128xf32>
    %336 = math.tanh %335 : vector<8x128xf32>
    %c9 = arith.constant 9 : index
    %c0_110 = arith.constant 0 : index
    %c0_111 = arith.constant 0 : index
    %337 = vector.load %arg2[%c9, %c0_110, %c0_111] : memref<16x8x1xf32, #tpu.memory_space<vmem>>, vector<1x8x1xf32>
    %338 = vector.shape_cast %337 : vector<1x8x1xf32> to vector<8x1xf32>
    %339 = vector.broadcast %338 : vector<8x1xf32> to vector<8x128xf32>
    %340 = arith.mulf %336, %339 : vector<8x128xf32>
    %341 = arith.addf %333, %340 : vector<8x128xf32>
    %c72 = arith.constant 72 : index
    %c0_112 = arith.constant 0 : index
    %342 = vector.load %arg11[%c72, %c0_112] : memref<128x512xf32, #tpu.memory_space<vmem>>, vector<8x512xf32>
    %343 = arith.addf %342, %330 : vector<8x512xf32>
    %344 = arith.negf %343 : vector<8x512xf32>
    %345 = math.exp %344 : vector<8x512xf32>
    %cst_113 = arith.constant 1.000000e+00 : f32
    %346 = vector.broadcast %cst_113 : f32 to vector<8x512xf32>
    %347 = arith.addf %346, %345 : vector<8x512xf32>
    %348 = arith.divf %346, %347 : vector<8x512xf32>
    %349 = vector.extract_strided_slice %348 {offsets = [0, 0], sizes = [8, 128], strides = [1, 1]} : vector<8x512xf32> to vector<8x128xf32>
    %350 = vector.extract_strided_slice %348 {offsets = [0, 128], sizes = [8, 128], strides = [1, 1]} : vector<8x512xf32> to vector<8x128xf32>
    %351 = vector.extract_strided_slice %348 {offsets = [0, 256], sizes = [8, 128], strides = [1, 1]} : vector<8x512xf32> to vector<8x128xf32>
    %352 = vector.extract_strided_slice %348 {offsets = [0, 384], sizes = [8, 128], strides = [1, 1]} : vector<8x512xf32> to vector<8x128xf32>
    %353 = arith.mulf %349, %341 : vector<8x128xf32>
    %354 = arith.mulf %350, %352 : vector<8x128xf32>
    %355 = arith.addf %353, %354 : vector<8x128xf32>
    %356 = math.tanh %355 : vector<8x128xf32>
    %357 = arith.mulf %351, %356 : vector<8x128xf32>
    %c72_114 = arith.constant 72 : index
    %c0_115 = arith.constant 0 : index
    %358 = vector.load %arg8[%c72_114, %c0_115] : memref<128x128xf32, #tpu.memory_space<vmem>>, vector<8x128xf32>
    tpu.vector_store %arg8[%c72_114, %c0_115], %357 {strides = array<i32>} : memref<128x128xf32, #tpu.memory_space<vmem>>, vector<8x128xf32>,
    %359 = tpu.concatenate %357, %355 in 1 : vector<8x128xf32>, vector<8x128xf32> -> vector<8x256xf32>
    %c16_i32_116 = arith.constant 16 : i32
    %360 = arith.muli %arg0, %c16_i32_116 : i32
    %c9_i32 = arith.constant 9 : i32
    %361 = arith.addi %360, %c9_i32 : i32
    %c20_i32_117 = arith.constant 20 : i32
    %362 = arith.cmpi slt, %361, %c20_i32_117 : i32
    %363 = arith.select %362, %359, %328 : vector<8x256xf32>
    %364 = vector.extract_strided_slice %363 {offsets = [0, 0], sizes = [8, 128], strides = [1, 1]} : vector<8x256xf32> to vector<8x128xf32>
    %cst_118 = arith.constant dense<0.000000e+00> : vector<8x512xf32>
    %365 = tpu.matmul %364, %11, %cst_118 {dimension_numbers = #tpu.dot_dimension_numbers<[1], [0], [0], [1], [0, 0, 1, 1], [], []>} : vector<8x128xf32>, vector<128x512xf32>, vector<8x512xf32> -> vector<8x512xf32>
    %366 = vector.extract_strided_slice %363 {offsets = [0, 128], sizes = [8, 128], strides = [1, 1]} : vector<8x256xf32> to vector<8x128xf32>
    %cst_119 = arith.constant dense<0.000000e+00> : vector<8x128xf32>
    %367 = tpu.matmul %366, %12, %cst_119 {dimension_numbers = #tpu.dot_dimension_numbers<[1], [0], [0], [1], [0, 0, 1, 1], [], []>} : vector<8x128xf32>, vector<128x128xf32>, vector<8x128xf32> -> vector<8x128xf32>
    %368 = vector.extract_strided_slice %363 {offsets = [0, 128], sizes = [8, 128], strides = [1, 1]} : vector<8x256xf32> to vector<8x128xf32>
    %369 = vector.broadcast %13 : vector<1x128xf32> to vector<8x128xf32>
    %370 = arith.addf %367, %369 : vector<8x128xf32>
    %371 = math.tanh %370 : vector<8x128xf32>
    %c10 = arith.constant 10 : index
    %c0_120 = arith.constant 0 : index
    %c0_121 = arith.constant 0 : index
    %372 = vector.load %arg2[%c10, %c0_120, %c0_121] : memref<16x8x1xf32, #tpu.memory_space<vmem>>, vector<1x8x1xf32>
    %373 = vector.shape_cast %372 : vector<1x8x1xf32> to vector<8x1xf32>
    %374 = vector.broadcast %373 : vector<8x1xf32> to vector<8x128xf32>
    %375 = arith.mulf %371, %374 : vector<8x128xf32>
    %376 = arith.addf %368, %375 : vector<8x128xf32>
    %c80 = arith.constant 80 : index
    %c0_122 = arith.constant 0 : index
    %377 = vector.load %arg11[%c80, %c0_122] : memref<128x512xf32, #tpu.memory_space<vmem>>, vector<8x512xf32>
    %378 = arith.addf %377, %365 : vector<8x512xf32>
    %379 = arith.negf %378 : vector<8x512xf32>
    %380 = math.exp %379 : vector<8x512xf32>
    %cst_123 = arith.constant 1.000000e+00 : f32
    %381 = vector.broadcast %cst_123 : f32 to vector<8x512xf32>
    %382 = arith.addf %381, %380 : vector<8x512xf32>
    %383 = arith.divf %381, %382 : vector<8x512xf32>
    %384 = vector.extract_strided_slice %383 {offsets = [0, 0], sizes = [8, 128], strides = [1, 1]} : vector<8x512xf32> to vector<8x128xf32>
    %385 = vector.extract_strided_slice %383 {offsets = [0, 128], sizes = [8, 128], strides = [1, 1]} : vector<8x512xf32> to vector<8x128xf32>
    %386 = vector.extract_strided_slice %383 {offsets = [0, 256], sizes = [8, 128], strides = [1, 1]} : vector<8x512xf32> to vector<8x128xf32>
    %387 = vector.extract_strided_slice %383 {offsets = [0, 384], sizes = [8, 128], strides = [1, 1]} : vector<8x512xf32> to vector<8x128xf32>
    %388 = arith.mulf %384, %376 : vector<8x128xf32>
    %389 = arith.mulf %385, %387 : vector<8x128xf32>
    %390 = arith.addf %388, %389 : vector<8x128xf32>
    %391 = math.tanh %390 : vector<8x128xf32>
    %392 = arith.mulf %386, %391 : vector<8x128xf32>
    %c80_124 = arith.constant 80 : index
    %c0_125 = arith.constant 0 : index
    %393 = vector.load %arg8[%c80_124, %c0_125] : memref<128x128xf32, #tpu.memory_space<vmem>>, vector<8x128xf32>
    tpu.vector_store %arg8[%c80_124, %c0_125], %392 {strides = array<i32>} : memref<128x128xf32, #tpu.memory_space<vmem>>, vector<8x128xf32>,
    %394 = tpu.concatenate %392, %390 in 1 : vector<8x128xf32>, vector<8x128xf32> -> vector<8x256xf32>
    %c16_i32_126 = arith.constant 16 : i32
    %395 = arith.muli %arg0, %c16_i32_126 : i32
    %c10_i32 = arith.constant 10 : i32
    %396 = arith.addi %395, %c10_i32 : i32
    %c20_i32_127 = arith.constant 20 : i32
    %397 = arith.cmpi slt, %396, %c20_i32_127 : i32
    %398 = arith.select %397, %394, %363 : vector<8x256xf32>
    %399 = vector.extract_strided_slice %398 {offsets = [0, 0], sizes = [8, 128], strides = [1, 1]} : vector<8x256xf32> to vector<8x128xf32>
    %cst_128 = arith.constant dense<0.000000e+00> : vector<8x512xf32>
    %400 = tpu.matmul %399, %11, %cst_128 {dimension_numbers = #tpu.dot_dimension_numbers<[1], [0], [0], [1], [0, 0, 1, 1], [], []>} : vector<8x128xf32>, vector<128x512xf32>, vector<8x512xf32> -> vector<8x512xf32>
    %401 = vector.extract_strided_slice %398 {offsets = [0, 128], sizes = [8, 128], strides = [1, 1]} : vector<8x256xf32> to vector<8x128xf32>
    %cst_129 = arith.constant dense<0.000000e+00> : vector<8x128xf32>
    %402 = tpu.matmul %401, %12, %cst_129 {dimension_numbers = #tpu.dot_dimension_numbers<[1], [0], [0], [1], [0, 0, 1, 1], [], []>} : vector<8x128xf32>, vector<128x128xf32>, vector<8x128xf32> -> vector<8x128xf32>
    %403 = vector.extract_strided_slice %398 {offsets = [0, 128], sizes = [8, 128], strides = [1, 1]} : vector<8x256xf32> to vector<8x128xf32>
    %404 = vector.broadcast %13 : vector<1x128xf32> to vector<8x128xf32>
    %405 = arith.addf %402, %404 : vector<8x128xf32>
    %406 = math.tanh %405 : vector<8x128xf32>
    %c11 = arith.constant 11 : index
    %c0_130 = arith.constant 0 : index
    %c0_131 = arith.constant 0 : index
    %407 = vector.load %arg2[%c11, %c0_130, %c0_131] : memref<16x8x1xf32, #tpu.memory_space<vmem>>, vector<1x8x1xf32>
    %408 = vector.shape_cast %407 : vector<1x8x1xf32> to vector<8x1xf32>
    %409 = vector.broadcast %408 : vector<8x1xf32> to vector<8x128xf32>
    %410 = arith.mulf %406, %409 : vector<8x128xf32>
    %411 = arith.addf %403, %410 : vector<8x128xf32>
    %c88 = arith.constant 88 : index
    %c0_132 = arith.constant 0 : index
    %412 = vector.load %arg11[%c88, %c0_132] : memref<128x512xf32, #tpu.memory_space<vmem>>, vector<8x512xf32>
    %413 = arith.addf %412, %400 : vector<8x512xf32>
    %414 = arith.negf %413 : vector<8x512xf32>
    %415 = math.exp %414 : vector<8x512xf32>
    %cst_133 = arith.constant 1.000000e+00 : f32
    %416 = vector.broadcast %cst_133 : f32 to vector<8x512xf32>
    %417 = arith.addf %416, %415 : vector<8x512xf32>
    %418 = arith.divf %416, %417 : vector<8x512xf32>
    %419 = vector.extract_strided_slice %418 {offsets = [0, 0], sizes = [8, 128], strides = [1, 1]} : vector<8x512xf32> to vector<8x128xf32>
    %420 = vector.extract_strided_slice %418 {offsets = [0, 128], sizes = [8, 128], strides = [1, 1]} : vector<8x512xf32> to vector<8x128xf32>
    %421 = vector.extract_strided_slice %418 {offsets = [0, 256], sizes = [8, 128], strides = [1, 1]} : vector<8x512xf32> to vector<8x128xf32>
    %422 = vector.extract_strided_slice %418 {offsets = [0, 384], sizes = [8, 128], strides = [1, 1]} : vector<8x512xf32> to vector<8x128xf32>
    %423 = arith.mulf %419, %411 : vector<8x128xf32>
    %424 = arith.mulf %420, %422 : vector<8x128xf32>
    %425 = arith.addf %423, %424 : vector<8x128xf32>
    %426 = math.tanh %425 : vector<8x128xf32>
    %427 = arith.mulf %421, %426 : vector<8x128xf32>
    %c88_134 = arith.constant 88 : index
    %c0_135 = arith.constant 0 : index
    %428 = vector.load %arg8[%c88_134, %c0_135] : memref<128x128xf32, #tpu.memory_space<vmem>>, vector<8x128xf32>
    tpu.vector_store %arg8[%c88_134, %c0_135], %427 {strides = array<i32>} : memref<128x128xf32, #tpu.memory_space<vmem>>, vector<8x128xf32>,
    %429 = tpu.concatenate %427, %425 in 1 : vector<8x128xf32>, vector<8x128xf32> -> vector<8x256xf32>
    %c16_i32_136 = arith.constant 16 : i32
    %430 = arith.muli %arg0, %c16_i32_136 : i32
    %c11_i32 = arith.constant 11 : i32
    %431 = arith.addi %430, %c11_i32 : i32
    %c20_i32_137 = arith.constant 20 : i32
    %432 = arith.cmpi slt, %431, %c20_i32_137 : i32
    %433 = arith.select %432, %429, %398 : vector<8x256xf32>
    %434 = vector.extract_strided_slice %433 {offsets = [0, 0], sizes = [8, 128], strides = [1, 1]} : vector<8x256xf32> to vector<8x128xf32>
    %cst_138 = arith.constant dense<0.000000e+00> : vector<8x512xf32>
    %435 = tpu.matmul %434, %11, %cst_138 {dimension_numbers = #tpu.dot_dimension_numbers<[1], [0], [0], [1], [0, 0, 1, 1], [], []>} : vector<8x128xf32>, vector<128x512xf32>, vector<8x512xf32> -> vector<8x512xf32>
    %436 = vector.extract_strided_slice %433 {offsets = [0, 128], sizes = [8, 128], strides = [1, 1]} : vector<8x256xf32> to vector<8x128xf32>
    %cst_139 = arith.constant dense<0.000000e+00> : vector<8x128xf32>
    %437 = tpu.matmul %436, %12, %cst_139 {dimension_numbers = #tpu.dot_dimension_numbers<[1], [0], [0], [1], [0, 0, 1, 1], [], []>} : vector<8x128xf32>, vector<128x128xf32>, vector<8x128xf32> -> vector<8x128xf32>
    %438 = vector.extract_strided_slice %433 {offsets = [0, 128], sizes = [8, 128], strides = [1, 1]} : vector<8x256xf32> to vector<8x128xf32>
    %439 = vector.broadcast %13 : vector<1x128xf32> to vector<8x128xf32>
    %440 = arith.addf %437, %439 : vector<8x128xf32>
    %441 = math.tanh %440 : vector<8x128xf32>
    %c12 = arith.constant 12 : index
    %c0_140 = arith.constant 0 : index
    %c0_141 = arith.constant 0 : index
    %442 = vector.load %arg2[%c12, %c0_140, %c0_141] : memref<16x8x1xf32, #tpu.memory_space<vmem>>, vector<1x8x1xf32>
    %443 = vector.shape_cast %442 : vector<1x8x1xf32> to vector<8x1xf32>
    %444 = vector.broadcast %443 : vector<8x1xf32> to vector<8x128xf32>
    %445 = arith.mulf %441, %444 : vector<8x128xf32>
    %446 = arith.addf %438, %445 : vector<8x128xf32>
    %c96 = arith.constant 96 : index
    %c0_142 = arith.constant 0 : index
    %447 = vector.load %arg11[%c96, %c0_142] : memref<128x512xf32, #tpu.memory_space<vmem>>, vector<8x512xf32>
    %448 = arith.addf %447, %435 : vector<8x512xf32>
    %449 = arith.negf %448 : vector<8x512xf32>
    %450 = math.exp %449 : vector<8x512xf32>
    %cst_143 = arith.constant 1.000000e+00 : f32
    %451 = vector.broadcast %cst_143 : f32 to vector<8x512xf32>
    %452 = arith.addf %451, %450 : vector<8x512xf32>
    %453 = arith.divf %451, %452 : vector<8x512xf32>
    %454 = vector.extract_strided_slice %453 {offsets = [0, 0], sizes = [8, 128], strides = [1, 1]} : vector<8x512xf32> to vector<8x128xf32>
    %455 = vector.extract_strided_slice %453 {offsets = [0, 128], sizes = [8, 128], strides = [1, 1]} : vector<8x512xf32> to vector<8x128xf32>
    %456 = vector.extract_strided_slice %453 {offsets = [0, 256], sizes = [8, 128], strides = [1, 1]} : vector<8x512xf32> to vector<8x128xf32>
    %457 = vector.extract_strided_slice %453 {offsets = [0, 384], sizes = [8, 128], strides = [1, 1]} : vector<8x512xf32> to vector<8x128xf32>
    %458 = arith.mulf %454, %446 : vector<8x128xf32>
    %459 = arith.mulf %455, %457 : vector<8x128xf32>
    %460 = arith.addf %458, %459 : vector<8x128xf32>
    %461 = math.tanh %460 : vector<8x128xf32>
    %462 = arith.mulf %456, %461 : vector<8x128xf32>
    %c96_144 = arith.constant 96 : index
    %c0_145 = arith.constant 0 : index
    %463 = vector.load %arg8[%c96_144, %c0_145] : memref<128x128xf32, #tpu.memory_space<vmem>>, vector<8x128xf32>
    tpu.vector_store %arg8[%c96_144, %c0_145], %462 {strides = array<i32>} : memref<128x128xf32, #tpu.memory_space<vmem>>, vector<8x128xf32>,
    %464 = tpu.concatenate %462, %460 in 1 : vector<8x128xf32>, vector<8x128xf32> -> vector<8x256xf32>
    %c16_i32_146 = arith.constant 16 : i32
    %465 = arith.muli %arg0, %c16_i32_146 : i32
    %c12_i32 = arith.constant 12 : i32
    %466 = arith.addi %465, %c12_i32 : i32
    %c20_i32_147 = arith.constant 20 : i32
    %467 = arith.cmpi slt, %466, %c20_i32_147 : i32
    %468 = arith.select %467, %464, %433 : vector<8x256xf32>
    %469 = vector.extract_strided_slice %468 {offsets = [0, 0], sizes = [8, 128], strides = [1, 1]} : vector<8x256xf32> to vector<8x128xf32>
    %cst_148 = arith.constant dense<0.000000e+00> : vector<8x512xf32>
    %470 = tpu.matmul %469, %11, %cst_148 {dimension_numbers = #tpu.dot_dimension_numbers<[1], [0], [0], [1], [0, 0, 1, 1], [], []>} : vector<8x128xf32>, vector<128x512xf32>, vector<8x512xf32> -> vector<8x512xf32>
    %471 = vector.extract_strided_slice %468 {offsets = [0, 128], sizes = [8, 128], strides = [1, 1]} : vector<8x256xf32> to vector<8x128xf32>
    %cst_149 = arith.constant dense<0.000000e+00> : vector<8x128xf32>
    %472 = tpu.matmul %471, %12, %cst_149 {dimension_numbers = #tpu.dot_dimension_numbers<[1], [0], [0], [1], [0, 0, 1, 1], [], []>} : vector<8x128xf32>, vector<128x128xf32>, vector<8x128xf32> -> vector<8x128xf32>
    %473 = vector.extract_strided_slice %468 {offsets = [0, 128], sizes = [8, 128], strides = [1, 1]} : vector<8x256xf32> to vector<8x128xf32>
    %474 = vector.broadcast %13 : vector<1x128xf32> to vector<8x128xf32>
    %475 = arith.addf %472, %474 : vector<8x128xf32>
    %476 = math.tanh %475 : vector<8x128xf32>
    %c13 = arith.constant 13 : index
    %c0_150 = arith.constant 0 : index
    %c0_151 = arith.constant 0 : index
    %477 = vector.load %arg2[%c13, %c0_150, %c0_151] : memref<16x8x1xf32, #tpu.memory_space<vmem>>, vector<1x8x1xf32>
    %478 = vector.shape_cast %477 : vector<1x8x1xf32> to vector<8x1xf32>
    %479 = vector.broadcast %478 : vector<8x1xf32> to vector<8x128xf32>
    %480 = arith.mulf %476, %479 : vector<8x128xf32>
    %481 = arith.addf %473, %480 : vector<8x128xf32>
    %c104 = arith.constant 104 : index
    %c0_152 = arith.constant 0 : index
    %482 = vector.load %arg11[%c104, %c0_152] : memref<128x512xf32, #tpu.memory_space<vmem>>, vector<8x512xf32>
    %483 = arith.addf %482, %470 : vector<8x512xf32>
    %484 = arith.negf %483 : vector<8x512xf32>
    %485 = math.exp %484 : vector<8x512xf32>
    %cst_153 = arith.constant 1.000000e+00 : f32
    %486 = vector.broadcast %cst_153 : f32 to vector<8x512xf32>
    %487 = arith.addf %486, %485 : vector<8x512xf32>
    %488 = arith.divf %486, %487 : vector<8x512xf32>
    %489 = vector.extract_strided_slice %488 {offsets = [0, 0], sizes = [8, 128], strides = [1, 1]} : vector<8x512xf32> to vector<8x128xf32>
    %490 = vector.extract_strided_slice %488 {offsets = [0, 128], sizes = [8, 128], strides = [1, 1]} : vector<8x512xf32> to vector<8x128xf32>
    %491 = vector.extract_strided_slice %488 {offsets = [0, 256], sizes = [8, 128], strides = [1, 1]} : vector<8x512xf32> to vector<8x128xf32>
    %492 = vector.extract_strided_slice %488 {offsets = [0, 384], sizes = [8, 128], strides = [1, 1]} : vector<8x512xf32> to vector<8x128xf32>
    %493 = arith.mulf %489, %481 : vector<8x128xf32>
    %494 = arith.mulf %490, %492 : vector<8x128xf32>
    %495 = arith.addf %493, %494 : vector<8x128xf32>
    %496 = math.tanh %495 : vector<8x128xf32>
    %497 = arith.mulf %491, %496 : vector<8x128xf32>
    %c104_154 = arith.constant 104 : index
    %c0_155 = arith.constant 0 : index
    %498 = vector.load %arg8[%c104_154, %c0_155] : memref<128x128xf32, #tpu.memory_space<vmem>>, vector<8x128xf32>
    tpu.vector_store %arg8[%c104_154, %c0_155], %497 {strides = array<i32>} : memref<128x128xf32, #tpu.memory_space<vmem>>, vector<8x128xf32>,
    %499 = tpu.concatenate %497, %495 in 1 : vector<8x128xf32>, vector<8x128xf32> -> vector<8x256xf32>
    %c16_i32_156 = arith.constant 16 : i32
    %500 = arith.muli %arg0, %c16_i32_156 : i32
    %c13_i32 = arith.constant 13 : i32
    %501 = arith.addi %500, %c13_i32 : i32
    %c20_i32_157 = arith.constant 20 : i32
    %502 = arith.cmpi slt, %501, %c20_i32_157 : i32
    %503 = arith.select %502, %499, %468 : vector<8x256xf32>
    %504 = vector.extract_strided_slice %503 {offsets = [0, 0], sizes = [8, 128], strides = [1, 1]} : vector<8x256xf32> to vector<8x128xf32>
    %cst_158 = arith.constant dense<0.000000e+00> : vector<8x512xf32>
    %505 = tpu.matmul %504, %11, %cst_158 {dimension_numbers = #tpu.dot_dimension_numbers<[1], [0], [0], [1], [0, 0, 1, 1], [], []>} : vector<8x128xf32>, vector<128x512xf32>, vector<8x512xf32> -> vector<8x512xf32>
    %506 = vector.extract_strided_slice %503 {offsets = [0, 128], sizes = [8, 128], strides = [1, 1]} : vector<8x256xf32> to vector<8x128xf32>
    %cst_159 = arith.constant dense<0.000000e+00> : vector<8x128xf32>
    %507 = tpu.matmul %506, %12, %cst_159 {dimension_numbers = #tpu.dot_dimension_numbers<[1], [0], [0], [1], [0, 0, 1, 1], [], []>} : vector<8x128xf32>, vector<128x128xf32>, vector<8x128xf32> -> vector<8x128xf32>
    %508 = vector.extract_strided_slice %503 {offsets = [0, 128], sizes = [8, 128], strides = [1, 1]} : vector<8x256xf32> to vector<8x128xf32>
    %509 = vector.broadcast %13 : vector<1x128xf32> to vector<8x128xf32>
    %510 = arith.addf %507, %509 : vector<8x128xf32>
    %511 = math.tanh %510 : vector<8x128xf32>
    %c14 = arith.constant 14 : index
    %c0_160 = arith.constant 0 : index
    %c0_161 = arith.constant 0 : index
    %512 = vector.load %arg2[%c14, %c0_160, %c0_161] : memref<16x8x1xf32, #tpu.memory_space<vmem>>, vector<1x8x1xf32>
    %513 = vector.shape_cast %512 : vector<1x8x1xf32> to vector<8x1xf32>
    %514 = vector.broadcast %513 : vector<8x1xf32> to vector<8x128xf32>
    %515 = arith.mulf %511, %514 : vector<8x128xf32>
    %516 = arith.addf %508, %515 : vector<8x128xf32>
    %c112 = arith.constant 112 : index
    %c0_162 = arith.constant 0 : index
    %517 = vector.load %arg11[%c112, %c0_162] : memref<128x512xf32, #tpu.memory_space<vmem>>, vector<8x512xf32>
    %518 = arith.addf %517, %505 : vector<8x512xf32>
    %519 = arith.negf %518 : vector<8x512xf32>
    %520 = math.exp %519 : vector<8x512xf32>
    %cst_163 = arith.constant 1.000000e+00 : f32
    %521 = vector.broadcast %cst_163 : f32 to vector<8x512xf32>
    %522 = arith.addf %521, %520 : vector<8x512xf32>
    %523 = arith.divf %521, %522 : vector<8x512xf32>
    %524 = vector.extract_strided_slice %523 {offsets = [0, 0], sizes = [8, 128], strides = [1, 1]} : vector<8x512xf32> to vector<8x128xf32>
    %525 = vector.extract_strided_slice %523 {offsets = [0, 128], sizes = [8, 128], strides = [1, 1]} : vector<8x512xf32> to vector<8x128xf32>
    %526 = vector.extract_strided_slice %523 {offsets = [0, 256], sizes = [8, 128], strides = [1, 1]} : vector<8x512xf32> to vector<8x128xf32>
    %527 = vector.extract_strided_slice %523 {offsets = [0, 384], sizes = [8, 128], strides = [1, 1]} : vector<8x512xf32> to vector<8x128xf32>
    %528 = arith.mulf %524, %516 : vector<8x128xf32>
    %529 = arith.mulf %525, %527 : vector<8x128xf32>
    %530 = arith.addf %528, %529 : vector<8x128xf32>
    %531 = math.tanh %530 : vector<8x128xf32>
    %532 = arith.mulf %526, %531 : vector<8x128xf32>
    %c112_164 = arith.constant 112 : index
    %c0_165 = arith.constant 0 : index
    %533 = vector.load %arg8[%c112_164, %c0_165] : memref<128x128xf32, #tpu.memory_space<vmem>>, vector<8x128xf32>
    tpu.vector_store %arg8[%c112_164, %c0_165], %532 {strides = array<i32>} : memref<128x128xf32, #tpu.memory_space<vmem>>, vector<8x128xf32>,
    %534 = tpu.concatenate %532, %530 in 1 : vector<8x128xf32>, vector<8x128xf32> -> vector<8x256xf32>
    %c16_i32_166 = arith.constant 16 : i32
    %535 = arith.muli %arg0, %c16_i32_166 : i32
    %c14_i32 = arith.constant 14 : i32
    %536 = arith.addi %535, %c14_i32 : i32
    %c20_i32_167 = arith.constant 20 : i32
    %537 = arith.cmpi slt, %536, %c20_i32_167 : i32
    %538 = arith.select %537, %534, %503 : vector<8x256xf32>
    %539 = vector.extract_strided_slice %538 {offsets = [0, 0], sizes = [8, 128], strides = [1, 1]} : vector<8x256xf32> to vector<8x128xf32>
    %cst_168 = arith.constant dense<0.000000e+00> : vector<8x512xf32>
    %540 = tpu.matmul %539, %11, %cst_168 {dimension_numbers = #tpu.dot_dimension_numbers<[1], [0], [0], [1], [0, 0, 1, 1], [], []>} : vector<8x128xf32>, vector<128x512xf32>, vector<8x512xf32> -> vector<8x512xf32>
    %541 = vector.extract_strided_slice %538 {offsets = [0, 128], sizes = [8, 128], strides = [1, 1]} : vector<8x256xf32> to vector<8x128xf32>
    %cst_169 = arith.constant dense<0.000000e+00> : vector<8x128xf32>
    %542 = tpu.matmul %541, %12, %cst_169 {dimension_numbers = #tpu.dot_dimension_numbers<[1], [0], [0], [1], [0, 0, 1, 1], [], []>} : vector<8x128xf32>, vector<128x128xf32>, vector<8x128xf32> -> vector<8x128xf32>
    %543 = vector.extract_strided_slice %538 {offsets = [0, 128], sizes = [8, 128], strides = [1, 1]} : vector<8x256xf32> to vector<8x128xf32>
    %544 = vector.broadcast %13 : vector<1x128xf32> to vector<8x128xf32>
    %545 = arith.addf %542, %544 : vector<8x128xf32>
    %546 = math.tanh %545 : vector<8x128xf32>
    %c15 = arith.constant 15 : index
    %c0_170 = arith.constant 0 : index
    %c0_171 = arith.constant 0 : index
    %547 = vector.load %arg2[%c15, %c0_170, %c0_171] : memref<16x8x1xf32, #tpu.memory_space<vmem>>, vector<1x8x1xf32>
    %548 = vector.shape_cast %547 : vector<1x8x1xf32> to vector<8x1xf32>
    %549 = vector.broadcast %548 : vector<8x1xf32> to vector<8x128xf32>
    %550 = arith.mulf %546, %549 : vector<8x128xf32>
    %551 = arith.addf %543, %550 : vector<8x128xf32>
    %c120 = arith.constant 120 : index
    %c0_172 = arith.constant 0 : index
    %552 = vector.load %arg11[%c120, %c0_172] : memref<128x512xf32, #tpu.memory_space<vmem>>, vector<8x512xf32>
    %553 = arith.addf %552, %540 : vector<8x512xf32>
    %554 = arith.negf %553 : vector<8x512xf32>
    %555 = math.exp %554 : vector<8x512xf32>
    %cst_173 = arith.constant 1.000000e+00 : f32
    %556 = vector.broadcast %cst_173 : f32 to vector<8x512xf32>
    %557 = arith.addf %556, %555 : vector<8x512xf32>
    %558 = arith.divf %556, %557 : vector<8x512xf32>
    %559 = vector.extract_strided_slice %558 {offsets = [0, 0], sizes = [8, 128], strides = [1, 1]} : vector<8x512xf32> to vector<8x128xf32>
    %560 = vector.extract_strided_slice %558 {offsets = [0, 128], sizes = [8, 128], strides = [1, 1]} : vector<8x512xf32> to vector<8x128xf32>
    %561 = vector.extract_strided_slice %558 {offsets = [0, 256], sizes = [8, 128], strides = [1, 1]} : vector<8x512xf32> to vector<8x128xf32>
    %562 = vector.extract_strided_slice %558 {offsets = [0, 384], sizes = [8, 128], strides = [1, 1]} : vector<8x512xf32> to vector<8x128xf32>
    %563 = arith.mulf %559, %551 : vector<8x128xf32>
    %564 = arith.mulf %560, %562 : vector<8x128xf32>
    %565 = arith.addf %563, %564 : vector<8x128xf32>
    %566 = math.tanh %565 : vector<8x128xf32>
    %567 = arith.mulf %561, %566 : vector<8x128xf32>
    %c120_174 = arith.constant 120 : index
    %c0_175 = arith.constant 0 : index
    %568 = vector.load %arg8[%c120_174, %c0_175] : memref<128x128xf32, #tpu.memory_space<vmem>>, vector<8x128xf32>
    tpu.vector_store %arg8[%c120_174, %c0_175], %567 {strides = array<i32>} : memref<128x128xf32, #tpu.memory_space<vmem>>, vector<8x128xf32>,
    %569 = tpu.concatenate %567, %565 in 1 : vector<8x128xf32>, vector<8x128xf32> -> vector<8x256xf32>
    %c16_i32_176 = arith.constant 16 : i32
    %570 = arith.muli %arg0, %c16_i32_176 : i32
    %c15_i32 = arith.constant 15 : i32
    %571 = arith.addi %570, %c15_i32 : i32
    %c20_i32_177 = arith.constant 20 : i32
    %572 = arith.cmpi slt, %571, %c20_i32_177 : i32
    %573 = arith.select %572, %569, %538 : vector<8x256xf32>
    %c0_178 = arith.constant 0 : index
    %c0_179 = arith.constant 0 : index
    %574 = vector.load %arg10[%c0_178, %c0_179] : memref<8x256xf32, #tpu.memory_space<vmem>>, vector<8x256xf32>
    tpu.vector_store %arg10[%c0_178, %c0_179], %573 {strides = array<i32>} : memref<8x256xf32, #tpu.memory_space<vmem>>, vector<8x256xf32>,
    %c1_i32_180 = arith.constant 1 : i32
    %575 = arith.cmpi eq, %arg0, %c1_i32_180 : i32
    %576 = arith.extui %575 : i1 to i32
    %c0_i32_181 = arith.constant 0 : i32
    %577 = arith.cmpi ne, %576, %c0_i32_181 : i32
    scf.if %577 {
      %c0_182 = arith.constant 0 : index
      %c0_183 = arith.constant 0 : index
      %578 = vector.load %arg9[%c0_182, %c0_183] : memref<8x256xf32, #tpu.memory_space<vmem>>, vector<8x256xf32>
      tpu.vector_store %arg9[%c0_182, %c0_183], %573 {strides = array<i32>} : memref<8x256xf32, #tpu.memory_space<vmem>>, vector<8x256xf32>,
    } else {
    }
    return
  }
  func.func @transform_0(%arg0: i32) -> (i32, i32) {
    %c0_i32 = arith.constant 0 : i32
    %c0_i32_0 = arith.constant 0 : i32
    return %arg0, %c0_i32 : i32, i32
  }
  func.func @transform_1(%arg0: i32) -> (i32, i32, i32) {
    %c0_i32 = arith.constant 0 : i32
    %c0_i32_0 = arith.constant 0 : i32
    %c0_i32_1 = arith.constant 0 : i32
    return %arg0, %c0_i32, %c0_i32_0 : i32, i32, i32
  }
  func.func @transform_2(%arg0: i32) -> (i32, i32) {
    %c0_i32 = arith.constant 0 : i32
    %c0_i32_0 = arith.constant 0 : i32
    %c0_i32_1 = arith.constant 0 : i32
    return %c0_i32, %c0_i32_0 : i32, i32
  }
  func.func @transform_3(%arg0: i32) -> (i32, i32) {
    %c0_i32 = arith.constant 0 : i32
    %c0_i32_0 = arith.constant 0 : i32
    %c0_i32_1 = arith.constant 0 : i32
    return %c0_i32, %c0_i32_0 : i32, i32
  }
  func.func @transform_4(%arg0: i32) -> (i32, i32) {
    %c0_i32 = arith.constant 0 : i32
    %c0_i32_0 = arith.constant 0 : i32
    %c0_i32_1 = arith.constant 0 : i32
    return %c0_i32, %c0_i32_0 : i32, i32
  }
  func.func @transform_5(%arg0: i32) -> (i32, i32) {
    %c0_i32 = arith.constant 0 : i32
    %c0_i32_0 = arith.constant 0 : i32
    %c0_i32_1 = arith.constant 0 : i32
    return %c0_i32, %c0_i32_0 : i32, i32
  }
  func.func @transform_6(%arg0: i32) -> (i32, i32) {
    %c0_i32 = arith.constant 0 : i32
    %c0_i32_0 = arith.constant 0 : i32
    %c0_i32_1 = arith.constant 0 : i32
    return %c0_i32, %c0_i32_0 : i32, i32
  }
  func.func @transform_7(%arg0: i32) -> (i32, i32) {
    %c0_i32 = arith.constant 0 : i32
    %c0_i32_0 = arith.constant 0 : i32
    return %arg0, %c0_i32 : i32, i32
  }
  func.func @transform_8(%arg0: i32) -> (i32, i32) {
    %c0_i32 = arith.constant 0 : i32
    %c0_i32_0 = arith.constant 0 : i32
    %c0_i32_1 = arith.constant 0 : i32
    return %c0_i32, %c0_i32_0 : i32, i32
  }
}

</mosaic_0001>

<llo_original>
// kernel: tpu_custom_call.1
$region0: #{tpu_custom_call.1}
  #allocation0 [shape = 'u32[]', space=smem, size = 0x4, offset = 0x4, fixed_abs, tag = 'smem constant byte address 0x4 - core index']
  #allocation1 [shape = 'u32[144,128]{1,0:T(1,128)}', space=vmem, size = 0x12000, scoped, tag = 'internal scratch']
  #allocation2 [shape = 'f32[8,256]{1,0:T(8,128)}', space=vmem, size = 0x2000, scoped, tag = 'scratch operand']
  #allocation3 [shape = 'f32[128,512]{1,0:T(8,128)}', space=vmem, size = 0x40000, scoped, tag = 'scratch operand']
  %s0 = inlined_call_operand.hbm [shape: f32[256,128], index: 0, kind: input, shape index: {}]
  %s1 = inlined_call_operand.hbm [shape: f32[32,8,1], index: 1, kind: input, shape index: {}]
  %s2 = inlined_call_operand.hbm [shape: f32[128,512], index: 2, kind: input, shape index: {}]
  %s3 = inlined_call_operand.hbm [shape: f32[128,512], index: 3, kind: input, shape index: {}]
  %s4 = inlined_call_operand.hbm [shape: f32[128,128], index: 4, kind: input, shape index: {}]
  %s5 = inlined_call_operand.hbm [shape: f32[1,512], index: 5, kind: input, shape index: {}]
  %s6 = inlined_call_operand.hbm [shape: f32[1,128], index: 6, kind: input, shape index: {}]
  %s7 = inlined_call_operand.hbm [shape: f32[256,128], index: 7, kind: output, shape index: {0}]
  %s8 = inlined_call_operand.hbm [shape: f32[8,256], index: 8, kind: output, shape index: {1}]
  %9 = xla_tuple %s7, %s8
  %s10 = sld [smem:[#allocation0]]
  $region105: #{tpu_custom_call.1} parent=0
    _
  %s12 = ssub.s32 1, %s10
  %s13 = scalar_select 0, %s12, %s10
  $region1: #{tpu_custom_call.1} parent=0
    #allocation4 [shape = 'u8[131072]{0}', space=vmem, size = 0x20000, scoped, tag = 'input window, operand 0']
    #allocation5 [shape = 's32[2]{0}', space=sflag, size = 0x8, scoped, tag = 'scoped memory for tpu_custom_call.1']
    #allocation6 [shape = 's32[2]{0}', space=sflag, size = 0x8, scoped, tag = 'scoped memory for tpu_custom_call.1']
    #allocation7 [shape = 'u8[131072]{0}', space=vmem, size = 0x20000, scoped, tag = 'input window, operand 1']
    #allocation8 [shape = 's32[2]{0}', space=sflag, size = 0x8, scoped, tag = 'scoped memory for tpu_custom_call.1']
    #allocation9 [shape = 'u8[262144]{0}', space=vmem, size = 0x40000, scoped, tag = 'input window, operand 2, single buffered']
    #allocation10 [shape = 'u8[262144]{0}', space=vmem, size = 0x40000, scoped, tag = 'input window, operand 3, single buffered']
    #allocation11 [shape = 's32[1]{0}', space=sflag, size = 0x4, scoped, tag = 'scoped memory for tpu_custom_call.1']
    #allocation12 [shape = 'u8[65536]{0}', space=vmem, size = 0x10000, scoped, tag = 'input window, operand 4, single buffered']
    #allocation13 [shape = 'u8[2048]{0}', space=vmem, size = 0x800, scoped, tag = 'input window, operand 5, single buffered']
    #allocation14 [shape = 's32[1]{0}', space=sflag, size = 0x4, scoped, tag = 'scoped memory for tpu_custom_call.1']
    #allocation15 [shape = 'u8[512]{0}', space=vmem, size = 0x400, scoped, tag = 'input window, operand 6, single buffered']
    #allocation16 [shape = 'u8[131072]{0}', space=vmem, size = 0x20000, scoped, tag = 'output window, operand 0']
    #allocation17 [shape = 'u8[8192]{0}', space=vmem, size = 0x2000, scoped, tag = 'output window, operand 1, single buffered']
    #allocation18 [shape = 's32[1]{0}', space=sflag, size = 0x4, scoped, tag = 'scoped memory for tpu_custom_call.1']
    %14 = vsyncpa [#allocation5], 0
    %s15 = scalar_lea.sflag [#allocation5], 1
    %16 = vsyncpa %s15, 0
    %17 = vsyncpa [#allocation8], 0
    %s18 = scalar_lea.sflag [#allocation8], 1
    %19 = vsyncpa %s18, 0
    %20 = vsyncpa [#allocation11], 0
    %21 = vsyncpa [#allocation14], 0
    %22 = vsyncpa [#allocation6], 0
    %s23 = scalar_lea.sflag [#allocation6], 1
    %24 = vsyncpa %s23, 0
    %25 = vsyncpa [#allocation18], 0
    loop: start=0, step=1, limit=4
    $region2: #{tpu_custom_call.1} parent=1 // loop_pre_header
      _
    $region3: #{tpu_custom_call.1} parent=1 // loop_header
      %s27 = sphi 0, %s31
      %p28 = scmp.ge.s32.totalorder %s27, 4
      %s37 = sphi 0, %s39
      %s40 = sphi 0, %s37
      %s41 = sphi 0, %s40
      %s57 = sphi 0, %s41
      %s63 = sphi 0, %s65
      %s66 = sphi 0, %s63
      %s67 = sphi 0, %s66
      %s83 = sphi 0, %s67
      %s87 = sphi 0, %s87
      %s89 = sphi 0, %s87
      %s90 = sphi 0, %s89
      %s104 = sphi 0, %s90
      %s108 = sphi 0, %s108
      %s110 = sphi 0, %s108
      %s111 = sphi 0, %s110
      %s125 = sphi 0, %s111
      %s129 = sphi 0, %s129
      %s131 = sphi 0, %s129
      %s132 = sphi 0, %s131
      %s146 = sphi 0, %s132
      %s150 = sphi 0, %s150
      %s152 = sphi 0, %s150
      %s153 = sphi 0, %s152
      %s167 = sphi 0, %s153
      %s171 = sphi 0, %s171
      %s173 = sphi 0, %s171
      %s174 = sphi 0, %s173
      %s188 = sphi 0, %s174
      %s194 = sphi 0, %s196
      %s197 = sphi 0, %s194
      %s198 = sphi 0, %s197
      %s214 = sphi 0, %s198
      %s218 = sphi 0, %s218
      %s220 = sphi 0, %s218
      %s221 = sphi 0, %s220
      %s235 = sphi 0, %s221
    $region4: #{tpu_custom_call.1} parent=1 // loop_header_branch
      %30 = sbr.rel (%p28) target = $region8
    $region5: #{tpu_custom_call.1} parent=1 // loop_body
      %s32 = ssub.s32 %s27, 1
      %s33 = ssub.s32 %s27, 2
      %s34 = sadd.s32 %s27, 1
      %s35 = ssub.s32 %s27, %s34
      %p36 = scmp.eq.s32.totalorder %s35, 0
      %s38 = sadd.s32 %s37, 1
      %s39 = scalar_select %p36, %s37, %s38
      %p42 = pneg %p36
      %p43 = scmp.eq.s32.totalorder %s27, 1
      %p44 = por %p42, %p43
      %p45 = scmp.ne.s32.totalorder %s37, %s40
      %p46 = scmp.eq.s32.totalorder %s27, 0
      %p47 = por %p45, %p46
      %p48 = scmp.ne.s32.totalorder %s37, %s40
      %p49 = scmp.eq.s32.totalorder %s32, 1
      %p50 = por %p48, %p49
      %p51 = scmp.ne.s32.totalorder %s40, %s41
      %p52 = scmp.eq.s32.totalorder %s32, 0
      %p53 = por %p51, %p52
      %p54 = scmp.ne.s32.totalorder %s40, %s41
      %p55 = scmp.eq.s32.totalorder %s33, 1
      %p56 = por %p54, %p55
      %p58 = scmp.ne.s32.totalorder %s41, %s57
      %p59 = scmp.eq.s32.totalorder %s33, 0
      %p60 = por %p58, %p59
      %s61 = ssub.s32 %s27, %s34
      %p62 = scmp.eq.s32.totalorder %s61, 0
      %s64 = sadd.s32 %s63, 1
      %s65 = scalar_select %p62, %s63, %s64
      %p68 = pneg %p62
      %p69 = scmp.eq.s32.totalorder %s27, 1
      %p70 = por %p68, %p69
      %p71 = scmp.ne.s32.totalorder %s63, %s66
      %p72 = scmp.eq.s32.totalorder %s27, 0
      %p73 = por %p71, %p72
      %p74 = scmp.ne.s32.totalorder %s63, %s66
      %p75 = scmp.eq.s32.totalorder %s32, 1
      %p76 = por %p74, %p75
      %p77 = scmp.ne.s32.totalorder %s66, %s67
      %p78 = scmp.eq.s32.totalorder %s32, 0
      %p79 = por %p77, %p78
      %p80 = scmp.ne.s32.totalorder %s66, %s67
      %p81 = scmp.eq.s32.totalorder %s33, 1
      %p82 = por %p80, %p81
      %p84 = scmp.ne.s32.totalorder %s67, %s83
      %p85 = scmp.eq.s32.totalorder %s33, 0
      %p86 = por %p84, %p85
      %s88 = sadd.s32 %s87, 1
      %p91 = scmp.eq.s32.totalorder %s27, 1
      %p92 = scmp.ne.s32.totalorder %s87, %s89
      %p93 = scmp.eq.s32.totalorder %s27, 0
      %p94 = por %p92, %p93
      %p95 = scmp.ne.s32.totalorder %s87, %s89
      %p96 = scmp.eq.s32.totalorder %s32, 1
      %p97 = por %p95, %p96
      %p98 = scmp.ne.s32.totalorder %s89, %s90
      %p99 = scmp.eq.s32.totalorder %s32, 0
      %p100 = por %p98, %p99
      %p101 = scmp.ne.s32.totalorder %s89, %s90
      %p102 = scmp.eq.s32.totalorder %s33, 1
      %p103 = por %p101, %p102
      %p105 = scmp.ne.s32.totalorder %s90, %s104
      %p106 = scmp.eq.s32.totalorder %s33, 0
      %p107 = por %p105, %p106
      %s109 = sadd.s32 %s108, 1
      %p112 = scmp.eq.s32.totalorder %s27, 1
      %p113 = scmp.ne.s32.totalorder %s108, %s110
      %p114 = scmp.eq.s32.totalorder %s27, 0
      %p115 = por %p113, %p114
      %p116 = scmp.ne.s32.totalorder %s108, %s110
      %p117 = scmp.eq.s32.totalorder %s32, 1
      %p118 = por %p116, %p117
      %p119 = scmp.ne.s32.totalorder %s110, %s111
      %p120 = scmp.eq.s32.totalorder %s32, 0
      %p121 = por %p119, %p120
      %p122 = scmp.ne.s32.totalorder %s110, %s111
      %p123 = scmp.eq.s32.totalorder %s33, 1
      %p124 = por %p122, %p123
      %p126 = scmp.ne.s32.totalorder %s111, %s125
      %p127 = scmp.eq.s32.totalorder %s33, 0
      %p128 = por %p126, %p127
      %s130 = sadd.s32 %s129, 1
      %p133 = scmp.eq.s32.totalorder %s27, 1
      %p134 = scmp.ne.s32.totalorder %s129, %s131
      %p135 = scmp.eq.s32.totalorder %s27, 0
      %p136 = por %p134, %p135
      %p137 = scmp.ne.s32.totalorder %s129, %s131
      %p138 = scmp.eq.s32.totalorder %s32, 1
      %p139 = por %p137, %p138
      %p140 = scmp.ne.s32.totalorder %s131, %s132
      %p141 = scmp.eq.s32.totalorder %s32, 0
      %p142 = por %p140, %p141
      %p143 = scmp.ne.s32.totalorder %s131, %s132
      %p144 = scmp.eq.s32.totalorder %s33, 1
      %p145 = por %p143, %p144
      %p147 = scmp.ne.s32.totalorder %s132, %s146
      %p148 = scmp.eq.s32.totalorder %s33, 0
      %p149 = por %p147, %p148
      %s151 = sadd.s32 %s150, 1
      %p154 = scmp.eq.s32.totalorder %s27, 1
      %p155 = scmp.ne.s32.totalorder %s150, %s152
      %p156 = scmp.eq.s32.totalorder %s27, 0
      %p157 = por %p155, %p156
      %p158 = scmp.ne.s32.totalorder %s150, %s152
      %p159 = scmp.eq.s32.totalorder %s32, 1
      %p160 = por %p158, %p159
      %p161 = scmp.ne.s32.totalorder %s152, %s153
      %p162 = scmp.eq.s32.totalorder %s32, 0
      %p163 = por %p161, %p162
      %p164 = scmp.ne.s32.totalorder %s152, %s153
      %p165 = scmp.eq.s32.totalorder %s33, 1
      %p166 = por %p164, %p165
      %p168 = scmp.ne.s32.totalorder %s153, %s167
      %p169 = scmp.eq.s32.totalorder %s33, 0
      %p170 = por %p168, %p169
      %s172 = sadd.s32 %s171, 1
      %p175 = scmp.eq.s32.totalorder %s27, 1
      %p176 = scmp.ne.s32.totalorder %s171, %s173
      %p177 = scmp.eq.s32.totalorder %s27, 0
      %p178 = por %p176, %p177
      %p179 = scmp.ne.s32.totalorder %s171, %s173
      %p180 = scmp.eq.s32.totalorder %s32, 1
      %p181 = por %p179, %p180
      %p182 = scmp.ne.s32.totalorder %s173, %s174
      %p183 = scmp.eq.s32.totalorder %s32, 0
      %p184 = por %p182, %p183
      %p185 = scmp.ne.s32.totalorder %s173, %s174
      %p186 = scmp.eq.s32.totalorder %s33, 1
      %p187 = por %p185, %p186
      %p189 = scmp.ne.s32.totalorder %s174, %s188
      %p190 = scmp.eq.s32.totalorder %s33, 0
      %p191 = por %p189, %p190
      %s192 = ssub.s32 %s27, %s34
      %p193 = scmp.eq.s32.totalorder %s192, 0
      %s195 = sadd.s32 %s194, 1
      %s196 = scalar_select %p193, %s194, %s195
      %p199 = pneg %p193
      %p200 = scmp.eq.s32.totalorder %s27, 1
      %p201 = por %p199, %p200
      %p202 = scmp.ne.s32.totalorder %s194, %s197
      %p203 = scmp.eq.s32.totalorder %s27, 0
      %p204 = por %p202, %p203
      %p205 = scmp.ne.s32.totalorder %s194, %s197
      %p206 = scmp.eq.s32.totalorder %s32, 1
      %p207 = por %p205, %p206
      %p208 = scmp.ne.s32.totalorder %s197, %s198
      %p209 = scmp.eq.s32.totalorder %s32, 0
      %p210 = por %p208, %p209
      %p211 = scmp.ne.s32.totalorder %s197, %s198
      %p212 = scmp.eq.s32.totalorder %s33, 1
      %p213 = por %p211, %p212
      %p215 = scmp.ne.s32.totalorder %s198, %s214
      %p216 = scmp.eq.s32.totalorder %s33, 0
      %p217 = por %p215, %p216
      %s219 = sadd.s32 %s218, 1
      %p222 = scmp.eq.s32.totalorder %s27, 1
      %p223 = scmp.ne.s32.totalorder %s218, %s220
      %p224 = scmp.eq.s32.totalorder %s27, 0
      %p225 = por %p223, %p224
      %p226 = scmp.ne.s32.totalorder %s218, %s220
      %p227 = scmp.eq.s32.totalorder %s32, 1
      %p228 = por %p226, %p227
      %p229 = scmp.ne.s32.totalorder %s220, %s221
      %p230 = scmp.eq.s32.totalorder %s32, 0
      %p231 = por %p229, %p230
      %p232 = scmp.ne.s32.totalorder %s220, %s221
      %p233 = scmp.eq.s32.totalorder %s33, 1
      %p234 = por %p232, %p233
      %p236 = scmp.ne.s32.totalorder %s221, %s235
      %p237 = scmp.eq.s32.totalorder %s33, 0
      %p238 = por %p236, %p237
      %p239 = scmp.le.s32.totalorder 1, %s27
      %p240 = scmp.lt.s32.totalorder %s27, 3
      %p241 = pnand %p239, %p240
      %p242 = pneg %p241
      // Predicated region
      $region9: #{tpu_custom_call.1} parent=5 // pred_check
        _
      $region10: #{tpu_custom_call.1} parent=5 // pred_check_branch
        %244 = sbr.rel (%p241) target = $region12
      $region11: #{tpu_custom_call.1} parent=5 // pred_region
        %s245 = ssub.s32 %s27, 1
        // Predicated region
        $region13: #{tpu_custom_call.1} parent=11 // pred_check
          %p246 = pneg %p100
        $region14: #{tpu_custom_call.1} parent=11 // pred_check_branch
          %248 = sbr.rel (%p246) target = $region16
        $region15: #{tpu_custom_call.1} parent=11 // pred_region
          %s250 = ssub.s32 8192, 8192
          %251 = vsyncadd [#allocation8], %s250
          %s252 = sshll.u32 [#allocation9], 4
          %s253 = int_to_ptr.vmem [resolvable:$true] %s252
          %258 = dma.hbm_to_vmem [thread:$0]  %s2, 8192, %s253, [#allocation8], 512, 512, 32
        $region16: #{tpu_custom_call.1} parent=11 // pred_fallthru
          _
        // Predicated region
        $region17: #{tpu_custom_call.1} parent=11 // pred_check
          %p259 = pneg %p121
        $region18: #{tpu_custom_call.1} parent=11 // pred_check_branch
          %261 = sbr.rel (%p259) target = $region20
        $region19: #{tpu_custom_call.1} parent=11 // pred_region
          %s263 = ssub.s32 8192, 8192
          %264 = vsyncadd [#allocation11], %s263
          %s265 = sshll.u32 [#allocation10], 4
          %s266 = int_to_ptr.vmem [resolvable:$true] %s265
          %271 = dma.hbm_to_vmem [thread:$0]  %s3, 8192, %s266, [#allocation11], 512, 512, 32
        $region20: #{tpu_custom_call.1} parent=11 // pred_fallthru
          _
        // Predicated region
        $region21: #{tpu_custom_call.1} parent=11 // pred_check
          %p272 = pneg %p142
        $region22: #{tpu_custom_call.1} parent=11 // pred_check_branch
          %274 = sbr.rel (%p272) target = $region24
        $region23: #{tpu_custom_call.1} parent=11 // pred_region
          %s276 = ssub.s32 2048, 2048
          %277 = vsyncadd [#allocation11], %s276
          %s278 = sshll.u32 [#allocation12], 4
          %s279 = int_to_ptr.vmem [resolvable:$true] %s278
          %284 = dma.hbm_to_vmem [thread:$0]  %s4, 2048, %s279, [#allocation11], 128, 128, 8
        $region24: #{tpu_custom_call.1} parent=11 // pred_fallthru
          _
        // Predicated region
        $region25: #{tpu_custom_call.1} parent=11 // pred_check
          %p285 = pneg %p163
        $region26: #{tpu_custom_call.1} parent=11 // pred_check_branch
          %287 = sbr.rel (%p285) target = $region28
        $region27: #{tpu_custom_call.1} parent=11 // pred_region
          %s289 = ssub.s32 64, 64
          %290 = vsyncadd [#allocation14], %s289
          %s292 = sshll.u32 [#allocation13], 4
          %s293 = int_to_ptr.vmem [resolvable:$true] %s292
          %295 = dma.hbm_to_vmem [thread:$0]  %s5, 64, %s293, [#allocation14]
        $region28: #{tpu_custom_call.1} parent=11 // pred_fallthru
          _
        // Predicated region
        $region29: #{tpu_custom_call.1} parent=11 // pred_check
          %p296 = pneg %p184
        $region30: #{tpu_custom_call.1} parent=11 // pred_check_branch
          %298 = sbr.rel (%p296) target = $region32
        $region31: #{tpu_custom_call.1} parent=11 // pred_region
          %s300 = ssub.s32 16, 16
          %301 = vsyncadd [#allocation14], %s300
          %s303 = sshll.u32 [#allocation15], 4
          %s304 = int_to_ptr.vmem [resolvable:$true] %s303
          %306 = dma.hbm_to_vmem [thread:$0]  %s6, 16, %s304, [#allocation14]
        $region32: #{tpu_custom_call.1} parent=11 // pred_fallthru
          _
      $region12: #{tpu_custom_call.1} parent=5 // pred_fallthru
        _
      %p307 = scmp.lt.s32.totalorder %s27, 2
      // Predicated region
      $region33: #{tpu_custom_call.1} parent=5 // pred_check
        %p308 = pneg %p307
      $region34: #{tpu_custom_call.1} parent=5 // pred_check_branch
        %310 = sbr.rel (%p308) target = $region36
      $region35: #{tpu_custom_call.1} parent=5 // pred_region
        // Predicated region
        $region37: #{tpu_custom_call.1} parent=35 // pred_check
          %p311 = pneg %p47
        $region38: #{tpu_custom_call.1} parent=35 // pred_check_branch
          %313 = sbr.rel (%p311) target = $region40
        $region39: #{tpu_custom_call.1} parent=35 // pred_region
          %s314 = sand.u32 %s37, 1
          %s315 = scalar_lea.sflag [#allocation5], %s314
          %s316 = sand.u32 %s37, 1
          %s317 = smul.addr %s316, 128
          %s318 = scalar_lea.vmem [#allocation4], %s317
          %s319 = smul.u32 16, %s27
          %s321 = ssub.s32 2048, 2048
          %322 = vsyncadd %s315, %s321
          %s323 = smul.addr %s319, 128
          %s324 = scalar_lea.hbm %s0, %s323
          %s325 = sshll.u32 %s318, 4
          %s326 = int_to_ptr.vmem [resolvable:$true] %s325
          %331 = dma.hbm_to_vmem [thread:$0]  %s324, 2048, %s326, %s315, 128, 128, 8
        $region40: #{tpu_custom_call.1} parent=35 // pred_fallthru
          _
        // Predicated region
        $region41: #{tpu_custom_call.1} parent=35 // pred_check
          %p332 = pneg %p73
        $region42: #{tpu_custom_call.1} parent=35 // pred_check_branch
          %334 = sbr.rel (%p332) target = $region44
        $region43: #{tpu_custom_call.1} parent=35 // pred_region
          %s335 = sand.u32 %s27, 1
          %s336 = scalar_lea.sflag [#allocation8], %s335
          %s337 = sand.u32 %s63, 1
          %s338 = smul.addr %s337, 128
          %s339 = scalar_lea.vmem [#allocation7], %s338
          %s340 = smul.u32 16, %s27
          %s342 = ssub.s32 2048, 2048
          %343 = vsyncadd %s336, %s342
          %s344 = smul.addr %s340, 128
          %s345 = scalar_lea.hbm %s1, %s344
          %s346 = sshll.u32 %s339, 4
          %s347 = int_to_ptr.vmem [resolvable:$true] %s346
          %352 = dma.hbm_to_vmem [thread:$0]  %s345, 2048, %s347, %s336, 128, 128, 8
        $region44: #{tpu_custom_call.1} parent=35 // pred_fallthru
          _
      $region36: #{tpu_custom_call.1} parent=5 // pred_fallthru
        _
      %p353 = scmp.le.s32.totalorder 1, %s27
      %p354 = scmp.lt.s32.totalorder %s27, 3
      %p355 = pnand %p353, %p354
      %p356 = pneg %p355
      // Predicated region
      $region45: #{tpu_custom_call.1} parent=5 // pred_check
        _
      $region46: #{tpu_custom_call.1} parent=5 // pred_check_branch
        %358 = sbr.rel (%p355) target = $region48
      $region47: #{tpu_custom_call.1} parent=5 // pred_region
        %s359 = ssub.s32 %s27, 1
        %s360 = sand.u32 %s40, 1
        %s361 = scalar_lea.sflag [#allocation5], %s360
        %s362 = sand.u32 %s40, 1
        %s363 = smul.addr %s362, 128
        %s364 = scalar_lea.vmem [#allocation4], %s363
        // Predicated region
        $region49: #{tpu_custom_call.1} parent=47 // pred_check
          %p365 = pneg %p53
        $region50: #{tpu_custom_call.1} parent=47 // pred_check_branch
          %367 = sbr.rel (%p365) target = $region52
        $region51: #{tpu_custom_call.1} parent=47 // pred_region
          %368 = dma.done %s361, 2048
        $region52: #{tpu_custom_call.1} parent=47 // pred_fallthru
          _
        %s369 = sand.u32 %s32, 1
        %s370 = scalar_lea.sflag [#allocation8], %s369
        %s371 = sand.u32 %s66, 1
        %s372 = smul.addr %s371, 128
        %s373 = scalar_lea.vmem [#allocation7], %s372
        // Predicated region
        $region53: #{tpu_custom_call.1} parent=47 // pred_check
          %p374 = pneg %p79
        $region54: #{tpu_custom_call.1} parent=47 // pred_check_branch
          %376 = sbr.rel (%p374) target = $region56
        $region55: #{tpu_custom_call.1} parent=47 // pred_region
          %377 = dma.done %s370, 2048
        $region56: #{tpu_custom_call.1} parent=47 // pred_fallthru
          _
        // Predicated region
        $region57: #{tpu_custom_call.1} parent=47 // pred_check
          %p378 = pneg %p100
        $region58: #{tpu_custom_call.1} parent=47 // pred_check_branch
          %380 = sbr.rel (%p378) target = $region60
        $region59: #{tpu_custom_call.1} parent=47 // pred_region
          %381 = dma.done [#allocation8], 8192
        $region60: #{tpu_custom_call.1} parent=47 // pred_fallthru
          _
        // Predicated region
        $region61: #{tpu_custom_call.1} parent=47 // pred_check
          %p382 = pneg %p121
        $region62: #{tpu_custom_call.1} parent=47 // pred_check_branch
          %384 = sbr.rel (%p382) target = $region64
        $region63: #{tpu_custom_call.1} parent=47 // pred_region
          %385 = dma.done [#allocation11], 8192
        $region64: #{tpu_custom_call.1} parent=47 // pred_fallthru
          _
        // Predicated region
        $region65: #{tpu_custom_call.1} parent=47 // pred_check
          %p386 = pneg %p142
        $region66: #{tpu_custom_call.1} parent=47 // pred_check_branch
          %388 = sbr.rel (%p386) target = $region68
        $region67: #{tpu_custom_call.1} parent=47 // pred_region
          %389 = dma.done [#allocation11], 2048
        $region68: #{tpu_custom_call.1} parent=47 // pred_fallthru
          _
        // Predicated region
        $region69: #{tpu_custom_call.1} parent=47 // pred_check
          %p390 = pneg %p163
        $region70: #{tpu_custom_call.1} parent=47 // pred_check_branch
          %392 = sbr.rel (%p390) target = $region72
        $region71: #{tpu_custom_call.1} parent=47 // pred_region
          %393 = dma.done [#allocation14], 64
        $region72: #{tpu_custom_call.1} parent=47 // pred_fallthru
          _
        // Predicated region
        $region73: #{tpu_custom_call.1} parent=47 // pred_check
          %p394 = pneg %p184
        $region74: #{tpu_custom_call.1} parent=47 // pred_check_branch
          %396 = sbr.rel (%p394) target = $region76
        $region75: #{tpu_custom_call.1} parent=47 // pred_region
          %397 = dma.done [#allocation14], 16
        $region76: #{tpu_custom_call.1} parent=47 // pred_fallthru
          _
        %s398 = sand.u32 %s40, 1
        %s399 = scalar_lea.sflag [#allocation5], %s398
        %s400 = sand.u32 %s40, 1
        %s401 = smul.addr %s400, 128
        %s402 = scalar_lea.vmem [#allocation4], %s401
        %p403 = pneg %p53
        %p404 = pneg %p50
        %s405 = sand.u32 %s32, 1
        %s406 = scalar_lea.sflag [#allocation8], %s405
        %s407 = sand.u32 %s66, 1
        %s408 = smul.addr %s407, 128
        %s409 = scalar_lea.vmem [#allocation7], %s408
        %p410 = pneg %p79
        %p411 = pneg %p76
        %p412 = pneg %p100
        %p413 = pneg %p97
        %p414 = pneg %p121
        %p415 = pneg %p118
        %p416 = pneg %p142
        %p417 = pneg %p139
        %p418 = pneg %p163
        %p419 = pneg %p160
        %p420 = pneg %p184
        %p421 = pneg %p181
        %p422 = pneg %p210
        %p423 = pneg %p207
        %s424 = sand.u32 %s197, 1
        %s425 = scalar_lea.sflag [#allocation6], %s424
        %s426 = sand.u32 %s197, 1
        %s427 = smul.addr %s426, 128
        %s428 = scalar_lea.vmem [#allocation16], %s427
        %p429 = pneg %p231
        %p430 = pneg %p228
        %s431 = smul.u32 16, %s32
        %s432 = smul.u32 16, %s32
        %s433 = smul.u32 16, %s32
        %p434 = scmp.eq.s32.totalorder %s32, 0
        // Predicated region
        $region77: #{tpu_custom_call.1} parent=47 // pred_check
          %p435 = pneg %p434
        $region78: #{tpu_custom_call.1} parent=47 // pred_check_branch
          %437 = sbr.rel (%p435) target = $region80
        $region79: #{tpu_custom_call.1} parent=47 // pred_region
          %438 = vst [vmem:[#allocation2] sm:$0xff] 0.0
          %439 = vst [vmem:[#allocation2 + $0x8] sm:$0xff] 0.0
        $region80: #{tpu_custom_call.1} parent=47 // pred_fallthru
          _
        %v440 = vld [vmem:[%s364] sm:$0xff]
        %v441 = vld [vmem:[%s364 + $0x8] sm:$0xff]
        %v442 = vld [vmem:[%s364 + $0x10] sm:$0xff]
        %v443 = vld [vmem:[%s364 + $0x18] sm:$0xff]
        %v444 = vld [vmem:[%s364 + $0x20] sm:$0xff]
        %v445 = vld [vmem:[%s364 + $0x28] sm:$0xff]
        %v446 = vld [vmem:[%s364 + $0x30] sm:$0xff]
        %v447 = vld [vmem:[%s364 + $0x38] sm:$0xff]
        %v448 = vld [vmem:[%s364 + $0x40] sm:$0xff]
        %v449 = vld [vmem:[%s364 + $0x48] sm:$0xff]
        %v450 = vld [vmem:[%s364 + $0x50] sm:$0xff]
        %v451 = vld [vmem:[%s364 + $0x58] sm:$0xff]
        %v452 = vld [vmem:[%s364 + $0x60] sm:$0xff]
        %v453 = vld [vmem:[%s364 + $0x68] sm:$0xff]
        %v454 = vld [vmem:[%s364 + $0x70] sm:$0xff]
        %v455 = vld [vmem:[%s364 + $0x78] sm:$0xff]
        %v456 = vld [vmem:[#allocation9] sm:$0xff]
        %v457 = vld [vmem:[#allocation9 + $0x8] sm:$0xff]
        %v458 = vld [vmem:[#allocation9 + $0x10] sm:$0xff]
        %v459 = vld [vmem:[#allocation9 + $0x18] sm:$0xff]
        %v460 = vld [vmem:[#allocation9 + $0x20] sm:$0xff]
        %v461 = vld [vmem:[#allocation9 + $0x28] sm:$0xff]
        %v462 = vld [vmem:[#allocation9 + $0x30] sm:$0xff]
        %v463 = vld [vmem:[#allocation9 + $0x38] sm:$0xff]
        %v464 = vld [vmem:[#allocation9 + $0x40] sm:$0xff]
        %v465 = vld [vmem:[#allocation9 + $0x48] sm:$0xff]
        %v466 = vld [vmem:[#allocation9 + $0x50] sm:$0xff]
        %v467 = vld [vmem:[#allocation9 + $0x58] sm:$0xff]
        %v468 = vld [vmem:[#allocation9 + $0x60] sm:$0xff]
        %v469 = vld [vmem:[#allocation9 + $0x68] sm:$0xff]
        %v470 = vld [vmem:[#allocation9 + $0x70] sm:$0xff]
        %v471 = vld [vmem:[#allocation9 + $0x78] sm:$0xff]
        %v472 = vld [vmem:[#allocation9 + $0x80] sm:$0xff]
        %v473 = vld [vmem:[#allocation9 + $0x88] sm:$0xff]
        %v474 = vld [vmem:[#allocation9 + $0x90] sm:$0xff]
        %v475 = vld [vmem:[#allocation9 + $0x98] sm:$0xff]
        %v476 = vld [vmem:[#allocation9 + $0xa0] sm:$0xff]
        %v477 = vld [vmem:[#allocation9 + $0xa8] sm:$0xff]
        %v478 = vld [vmem:[#allocation9 + $0xb0] sm:$0xff]
        %v479 = vld [vmem:[#allocation9 + $0xb8] sm:$0xff]
        %v480 = vld [vmem:[#allocation9 + $0xc0] sm:$0xff]
        %v481 = vld [vmem:[#allocation9 + $0xc8] sm:$0xff]
        %v482 = vld [vmem:[#allocation9 + $0xd0] sm:$0xff]
        %v483 = vld [vmem:[#allocation9 + $0xd8] sm:$0xff]
        %v484 = vld [vmem:[#allocation9 + $0xe0] sm:$0xff]
        %v485 = vld [vmem:[#allocation9 + $0xe8] sm:$0xff]
        %v486 = vld [vmem:[#allocation9 + $0xf0] sm:$0xff]
        %v487 = vld [vmem:[#allocation9 + $0xf8] sm:$0xff]
        %v488 = vld [vmem:[#allocation9 + $0x100] sm:$0xff]
        %v489 = vld [vmem:[#allocation9 + $0x108] sm:$0xff]
        %v490 = vld [vmem:[#allocation9 + $0x110] sm:$0xff]
        %v491 = vld [vmem:[#allocation9 + $0x118] sm:$0xff]
        %v492 = vld [vmem:[#allocation9 + $0x120] sm:$0xff]
        %v493 = vld [vmem:[#allocation9 + $0x128] sm:$0xff]
        %v494 = vld [vmem:[#allocation9 + $0x130] sm:$0xff]
        %v495 = vld [vmem:[#allocation9 + $0x138] sm:$0xff]
        %v496 = vld [vmem:[#allocation9 + $0x140] sm:$0xff]
        %v497 = vld [vmem:[#allocation9 + $0x148] sm:$0xff]
        %v498 = vld [vmem:[#allocation9 + $0x150] sm:$0xff]
        %v499 = vld [vmem:[#allocation9 + $0x158] sm:$0xff]
        %v500 = vld [vmem:[#allocation9 + $0x160] sm:$0xff]
        %v501 = vld [vmem:[#allocation9 + $0x168] sm:$0xff]
        %v502 = vld [vmem:[#allocation9 + $0x170] sm:$0xff]
        %v503 = vld [vmem:[#allocation9 + $0x178] sm:$0xff]
        %v504 = vld [vmem:[#allocation9 + $0x180] sm:$0xff]
        %v505 = vld [vmem:[#allocation9 + $0x188] sm:$0xff]
        %v506 = vld [vmem:[#allocation9 + $0x190] sm:$0xff]
        %v507 = vld [vmem:[#allocation9 + $0x198] sm:$0xff]
        %v508 = vld [vmem:[#allocation9 + $0x1a0] sm:$0xff]
        %v509 = vld [vmem:[#allocation9 + $0x1a8] sm:$0xff]
        %v510 = vld [vmem:[#allocation9 + $0x1b0] sm:$0xff]
        %v511 = vld [vmem:[#allocation9 + $0x1b8] sm:$0xff]
        %v512 = vld [vmem:[#allocation9 + $0x1c0] sm:$0xff]
        %v513 = vld [vmem:[#allocation9 + $0x1c8] sm:$0xff]
        %v514 = vld [vmem:[#allocation9 + $0x1d0] sm:$0xff]
        %v515 = vld [vmem:[#allocation9 + $0x1d8] sm:$0xff]
        %v516 = vld [vmem:[#allocation9 + $0x1e0] sm:$0xff]
        %v517 = vld [vmem:[#allocation9 + $0x1e8] sm:$0xff]
        %v518 = vld [vmem:[#allocation9 + $0x1f0] sm:$0xff]
        %v519 = vld [vmem:[#allocation9 + $0x1f8] sm:$0xff]
        %v520 = vld [vmem:[#allocation13] sm:$0xf]
        %v522 = vlaneseq
        %v523 = vshrl.u32 %v522, 7
        %v524 = vsub.s32 0, %v523
        %v525 = vrot.slane %v520, %v524
        %v526 = vlaneseq
        %v527 = vshrl.u32 %v526, 7
        %v528 = vsub.s32 1, %v527
        %v529 = vrot.slane %v520, %v528
        %v530 = vlaneseq
        %v531 = vshrl.u32 %v530, 7
        %v532 = vsub.s32 2, %v531
        %v533 = vrot.slane %v520, %v532
        %v534 = vlaneseq
        %v535 = vshrl.u32 %v534, 7
        %v536 = vsub.s32 3, %v535
        %v537 = vrot.slane %v520, %v536
        %542 = vmatprep.subr.mxu0 %v457
        %543 = vmatpush1.msra.mxu0 %v456
        %544 = vmatprep.subr.mxu0 %v461
        %545 = vmatpush1.msra.mxu0 %v460
        %546 = vmatprep.subr.mxu0 %v465
        %547 = vmatpush1.msra.mxu0 %v464
        %548 = vmatprep.subr.mxu0 %v469
        %549 = vmatpush1.msra.mxu0 %v468
        %550 = vmatprep.subr.mxu0 %v473
        %551 = vmatpush1.msra.mxu0 %v472
        %552 = vmatprep.subr.mxu0 %v477
        %553 = vmatpush1.msra.mxu0 %v476
        %554 = vmatprep.subr.mxu0 %v481
        %555 = vmatpush1.msra.mxu0 %v480
        %556 = vmatprep.subr.mxu0 %v485
        %557 = vmatpush1.msra.mxu0 %v484
        %558 = vmatprep.subr.mxu0 %v489
        %559 = vmatpush1.msra.mxu0 %v488
        %560 = vmatprep.subr.mxu0 %v493
        %561 = vmatpush1.msra.mxu0 %v492
        %562 = vmatprep.subr.mxu0 %v497
        %563 = vmatpush1.msra.mxu0 %v496
        %564 = vmatprep.subr.mxu0 %v501
        %565 = vmatpush1.msra.mxu0 %v500
        %566 = vmatprep.subr.mxu0 %v505
        %567 = vmatpush1.msra.mxu0 %v504
        %568 = vmatprep.subr.mxu0 %v509
        %569 = vmatpush1.msra.mxu0 %v508
        %570 = vmatprep.subr.mxu0 %v513
        %571 = vmatpush1.msra.mxu0 %v512
        %572 = vmatprep.subr.mxu0 %v517
        %573 = vmatpush1.msra.mxu0 %v516
        %574 = vmatprep.subr.mxu0 0.0
        %575 = vmatpush1.msra.mxu0 0.0
        %576 = vmatprep.subr.mxu0 0.0
        %577 = vmatpush1.msra.mxu0 0.0
        %578 = vmatprep.subr.mxu0 0.0
        %579 = vmatpush1.msra.mxu0 0.0
        %580 = vmatprep.subr.mxu0 0.0
        %581 = vmatpush1.msra.mxu0 0.0
        %582 = vmatprep.subr.mxu0 0.0
        %583 = vmatpush1.msra.mxu0 0.0
        %584 = vmatprep.subr.mxu0 0.0
        %585 = vmatpush1.msra.mxu0 0.0
        %586 = vmatprep.subr.mxu0 0.0
        %587 = vmatpush1.msra.mxu0 0.0
        %588 = vmatprep.subr.mxu0 0.0
        %589 = vmatpush1.msra.mxu0 0.0
        %590 = vmatprep.subr.mxu0 0.0
        %591 = vmatpush1.msra.mxu0 0.0
        %592 = vmatprep.subr.mxu0 0.0
        %593 = vmatpush1.msra.mxu0 0.0
        %594 = vmatprep.subr.mxu0 0.0
        %595 = vmatpush1.msra.mxu0 0.0
        %596 = vmatprep.subr.mxu0 0.0
        %597 = vmatpush1.msra.mxu0 0.0
        %598 = vmatprep.subr.mxu0 0.0
        %599 = vmatpush1.msra.mxu0 0.0
        %600 = vmatprep.subr.mxu0 0.0
        %601 = vmatpush1.msra.mxu0 0.0
        %602 = vmatprep.subr.mxu0 0.0
        %603 = vmatpush1.msra.mxu0 0.0
        %604 = vmatprep.subr.mxu0 0.0
        %605 = vmatpush1.msra.mxu0 0.0
        %606 = vmatprep.mubr.f32.mxu0 0.0
        %607 = vmatmul.mubr.f32.gmra.mrb[0].mxu0 %v440
        %v608 = vpop.f32.mrb[0].mxu0
        %v609 = vadd.f32 %v525, %v608
        %v610 = vpop.f32.mrb[0].mxu0
        %v611 = vadd.f32 %v529, %v610
        %612 = vmatprep.mubr.f32.mxu0 0.0
        %613 = vmatmul.mubr.f32.gmra.mrb[0].mxu0 %v441
        %v614 = vpop.f32.mrb[0].mxu0
        %v615 = vadd.f32 %v525, %v614
        %v616 = vpop.f32.mrb[0].mxu0
        %v617 = vadd.f32 %v529, %v616
        %618 = vmatprep.mubr.f32.mxu0 0.0
        %619 = vmatmul.mubr.f32.gmra.mrb[0].mxu0 %v442
        %v620 = vpop.f32.mrb[0].mxu0
        %v621 = vadd.f32 %v525, %v620
        %v622 = vpop.f32.mrb[0].mxu0
        %v623 = vadd.f32 %v529, %v622
        %624 = vmatprep.mubr.f32.mxu0 0.0
        %625 = vmatmul.mubr.f32.gmra.mrb[0].mxu0 %v443
        %v626 = vpop.f32.mrb[0].mxu0
        %v627 = vadd.f32 %v525, %v626
        %v628 = vpop.f32.mrb[0].mxu0
        %v629 = vadd.f32 %v529, %v628
        %630 = vmatprep.mubr.f32.mxu0 0.0
        %631 = vmatmul.mubr.f32.gmra.mrb[0].mxu0 %v444
        %v632 = vpop.f32.mrb[0].mxu0
        %v633 = vadd.f32 %v525, %v632
        %v634 = vpop.f32.mrb[0].mxu0
        %v635 = vadd.f32 %v529, %v634
        %636 = vmatprep.mubr.f32.mxu0 0.0
        %637 = vmatmul.mubr.f32.gmra.mrb[0].mxu0 %v445
        %v638 = vpop.f32.mrb[0].mxu0
        %v639 = vadd.f32 %v525, %v638
        %v640 = vpop.f32.mrb[0].mxu0
        %v641 = vadd.f32 %v529, %v640
        %642 = vmatprep.mubr.f32.mxu0 0.0
        %643 = vmatmul.mubr.f32.gmra.mrb[0].mxu0 %v446
        %v644 = vpop.f32.mrb[0].mxu0
        %v645 = vadd.f32 %v525, %v644
        %v646 = vpop.f32.mrb[0].mxu0
        %v647 = vadd.f32 %v529, %v646
        %648 = vmatprep.mubr.f32.mxu0 0.0
        %649 = vmatmul.mubr.f32.gmra.mrb[0].mxu0 %v447
        %v650 = vpop.f32.mrb[0].mxu0
        %v651 = vadd.f32 %v525, %v650
        %v652 = vpop.f32.mrb[0].mxu0
        %v653 = vadd.f32 %v529, %v652
        %654 = vmatprep.mubr.f32.mxu0 0.0
        %655 = vmatmul.mubr.f32.gmra.mrb[0].mxu0 %v448
        %v656 = vpop.f32.mrb[0].mxu0
        %v657 = vadd.f32 %v525, %v656
        %v658 = vpop.f32.mrb[0].mxu0
        %v659 = vadd.f32 %v529, %v658
        %660 = vmatprep.mubr.f32.mxu0 0.0
        %661 = vmatmul.mubr.f32.gmra.mrb[0].mxu0 %v449
        %v662 = vpop.f32.mrb[0].mxu0
        %v663 = vadd.f32 %v525, %v662
        %v664 = vpop.f32.mrb[0].mxu0
        %v665 = vadd.f32 %v529, %v664
        %666 = vmatprep.mubr.f32.mxu0 0.0
        %667 = vmatmul.mubr.f32.gmra.mrb[0].mxu0 %v450
        %v668 = vpop.f32.mrb[0].mxu0
        %v669 = vadd.f32 %v525, %v668
        %v670 = vpop.f32.mrb[0].mxu0
        %v671 = vadd.f32 %v529, %v670
        %672 = vmatprep.mubr.f32.mxu0 0.0
        %673 = vmatmul.mubr.f32.gmra.mrb[0].mxu0 %v451
        %v674 = vpop.f32.mrb[0].mxu0
        %v675 = vadd.f32 %v525, %v674
        %v676 = vpop.f32.mrb[0].mxu0
        %v677 = vadd.f32 %v529, %v676
        %678 = vmatprep.mubr.f32.mxu0 0.0
        %679 = vmatmul.mubr.f32.gmra.mrb[0].mxu0 %v452
        %v680 = vpop.f32.mrb[0].mxu0
        %v681 = vadd.f32 %v525, %v680
        %v682 = vpop.f32.mrb[0].mxu0
        %v683 = vadd.f32 %v529, %v682
        %684 = vmatprep.mubr.f32.mxu0 0.0
        %685 = vmatmul.mubr.f32.gmra.mrb[0].mxu0 %v453
        %v686 = vpop.f32.mrb[0].mxu0
        %v687 = vadd.f32 %v525, %v686
        %v688 = vpop.f32.mrb[0].mxu0
        %v689 = vadd.f32 %v529, %v688
        %690 = vmatprep.mubr.f32.mxu0 0.0
        %691 = vmatmul.mubr.f32.gmra.mrb[0].mxu0 %v454
        %v692 = vpop.f32.mrb[0].mxu0
        %v693 = vadd.f32 %v525, %v692
        %v694 = vpop.f32.mrb[0].mxu0
        %v695 = vadd.f32 %v529, %v694
        %696 = vmatprep.mubr.f32.mxu0 0.0
        %697 = vmatmul.mubr.f32.gmra.mrb[0].mxu0 %v455
        %v698 = vpop.f32.mrb[0].mxu0
        %v699 = vadd.f32 %v525, %v698
        %v700 = vpop.f32.mrb[0].mxu0
        %v701 = vadd.f32 %v529, %v700
        %702 = vdwg.mxu0
        %703 = vmatprep.subr.mxu0 %v459
        %704 = vmatpush1.msra.mxu0 %v458
        %705 = vmatprep.subr.mxu0 %v463
        %706 = vmatpush1.msra.mxu0 %v462
        %707 = vmatprep.subr.mxu0 %v467
        %708 = vmatpush1.msra.mxu0 %v466
        %709 = vmatprep.subr.mxu0 %v471
        %710 = vmatpush1.msra.mxu0 %v470
        %711 = vmatprep.subr.mxu0 %v475
        %712 = vmatpush1.msra.mxu0 %v474
        %713 = vmatprep.subr.mxu0 %v479
        %714 = vmatpush1.msra.mxu0 %v478
        %715 = vmatprep.subr.mxu0 %v483
        %716 = vmatpush1.msra.mxu0 %v482
        %717 = vmatprep.subr.mxu0 %v487
        %718 = vmatpush1.msra.mxu0 %v486
        %719 = vmatprep.subr.mxu0 %v491
        %720 = vmatpush1.msra.mxu0 %v490
        %721 = vmatprep.subr.mxu0 %v495
        %722 = vmatpush1.msra.mxu0 %v494
        %723 = vmatprep.subr.mxu0 %v499
        %724 = vmatpush1.msra.mxu0 %v498
        %725 = vmatprep.subr.mxu0 %v503
        %726 = vmatpush1.msra.mxu0 %v502
        %727 = vmatprep.subr.mxu0 %v507
        %728 = vmatpush1.msra.mxu0 %v506
        %729 = vmatprep.subr.mxu0 %v511
        %730 = vmatpush1.msra.mxu0 %v510
        %731 = vmatprep.subr.mxu0 %v515
        %732 = vmatpush1.msra.mxu0 %v514
        %733 = vmatprep.subr.mxu0 %v519
        %734 = vmatpush1.msra.mxu0 %v518
        %735 = vmatprep.subr.mxu0 0.0
        %736 = vmatpush1.msra.mxu0 0.0
        %737 = vmatprep.subr.mxu0 0.0
        %738 = vmatpush1.msra.mxu0 0.0
        %739 = vmatprep.subr.mxu0 0.0
        %740 = vmatpush1.msra.mxu0 0.0
        %741 = vmatprep.subr.mxu0 0.0
        %742 = vmatpush1.msra.mxu0 0.0
        %743 = vmatprep.subr.mxu0 0.0
        %744 = vmatpush1.msra.mxu0 0.0
        %745 = vmatprep.subr.mxu0 0.0
        %746 = vmatpush1.msra.mxu0 0.0
        %747 = vmatprep.subr.mxu0 0.0
        %748 = vmatpush1.msra.mxu0 0.0
        %749 = vmatprep.subr.mxu0 0.0
        %750 = vmatpush1.msra.mxu0 0.0
        %751 = vmatprep.subr.mxu0 0.0
        %752 = vmatpush1.msra.mxu0 0.0
        %753 = vmatprep.subr.mxu0 0.0
        %754 = vmatpush1.msra.mxu0 0.0
        %755 = vmatprep.subr.mxu0 0.0
        %756 = vmatpush1.msra.mxu0 0.0
        %757 = vmatprep.subr.mxu0 0.0
        %758 = vmatpush1.msra.mxu0 0.0
        %759 = vmatprep.subr.mxu0 0.0
        %760 = vmatpush1.msra.mxu0 0.0
        %761 = vmatprep.subr.mxu0 0.0
        %762 = vmatpush1.msra.mxu0 0.0
        %763 = vmatprep.subr.mxu0 0.0
        %764 = vmatpush1.msra.mxu0 0.0
        %765 = vmatprep.subr.mxu0 0.0
        %766 = vmatpush1.msra.mxu0 0.0
        %767 = vmatprep.mubr.f32.mxu0 0.0
        %768 = vmatmul.mubr.f32.gmra.mrb[0].mxu0 %v440
        %v769 = vpop.f32.mrb[0].mxu0
        %v770 = vadd.f32 %v533, %v769
        %v771 = vpop.f32.mrb[0].mxu0
        %v772 = vadd.f32 %v537, %v771
        %773 = vmatprep.mubr.f32.mxu0 0.0
        %774 = vmatmul.mubr.f32.gmra.mrb[0].mxu0 %v441
        %v775 = vpop.f32.mrb[0].mxu0
        %v776 = vadd.f32 %v533, %v775
        %v777 = vpop.f32.mrb[0].mxu0
        %v778 = vadd.f32 %v537, %v777
        %779 = vmatprep.mubr.f32.mxu0 0.0
        %780 = vmatmul.mubr.f32.gmra.mrb[0].mxu0 %v442
        %v781 = vpop.f32.mrb[0].mxu0
        %v782 = vadd.f32 %v533, %v781
        %v783 = vpop.f32.mrb[0].mxu0
        %v784 = vadd.f32 %v537, %v783
        %785 = vmatprep.mubr.f32.mxu0 0.0
        %786 = vmatmul.mubr.f32.gmra.mrb[0].mxu0 %v443
        %v787 = vpop.f32.mrb[0].mxu0
        %v788 = vadd.f32 %v533, %v787
        %v789 = vpop.f32.mrb[0].mxu0
        %v790 = vadd.f32 %v537, %v789
        %791 = vmatprep.mubr.f32.mxu0 0.0
        %792 = vmatmul.mubr.f32.gmra.mrb[0].mxu0 %v444
        %v793 = vpop.f32.mrb[0].mxu0
        %v794 = vadd.f32 %v533, %v793
        %v795 = vpop.f32.mrb[0].mxu0
        %v796 = vadd.f32 %v537, %v795
        %797 = vmatprep.mubr.f32.mxu0 0.0
        %798 = vmatmul.mubr.f32.gmra.mrb[0].mxu0 %v445
        %v799 = vpop.f32.mrb[0].mxu0
        %v800 = vadd.f32 %v533, %v799
        %v801 = vpop.f32.mrb[0].mxu0
        %v802 = vadd.f32 %v537, %v801
        %803 = vmatprep.mubr.f32.mxu0 0.0
        %804 = vmatmul.mubr.f32.gmra.mrb[0].mxu0 %v446
        %v805 = vpop.f32.mrb[0].mxu0
        %v806 = vadd.f32 %v533, %v805
        %v807 = vpop.f32.mrb[0].mxu0
        %v808 = vadd.f32 %v537, %v807
        %809 = vmatprep.mubr.f32.mxu0 0.0
        %810 = vmatmul.mubr.f32.gmra.mrb[0].mxu0 %v447
        %v811 = vpop.f32.mrb[0].mxu0
        %v812 = vadd.f32 %v533, %v811
        %v813 = vpop.f32.mrb[0].mxu0
        %v814 = vadd.f32 %v537, %v813
        %815 = vmatprep.mubr.f32.mxu0 0.0
        %816 = vmatmul.mubr.f32.gmra.mrb[0].mxu0 %v448
        %v817 = vpop.f32.mrb[0].mxu0
        %v818 = vadd.f32 %v533, %v817
        %v819 = vpop.f32.mrb[0].mxu0
        %v820 = vadd.f32 %v537, %v819
        %821 = vmatprep.mubr.f32.mxu0 0.0
        %822 = vmatmul.mubr.f32.gmra.mrb[0].mxu0 %v449
        %v823 = vpop.f32.mrb[0].mxu0
        %v824 = vadd.f32 %v533, %v823
        %v825 = vpop.f32.mrb[0].mxu0
        %v826 = vadd.f32 %v537, %v825
        %827 = vmatprep.mubr.f32.mxu0 0.0
        %828 = vmatmul.mubr.f32.gmra.mrb[0].mxu0 %v450
        %v829 = vpop.f32.mrb[0].mxu0
        %v830 = vadd.f32 %v533, %v829
        %v831 = vpop.f32.mrb[0].mxu0
        %v832 = vadd.f32 %v537, %v831
        %833 = vmatprep.mubr.f32.mxu0 0.0
        %834 = vmatmul.mubr.f32.gmra.mrb[0].mxu0 %v451
        %v835 = vpop.f32.mrb[0].mxu0
        %v836 = vadd.f32 %v533, %v835
        %v837 = vpop.f32.mrb[0].mxu0
        %v838 = vadd.f32 %v537, %v837
        %839 = vmatprep.mubr.f32.mxu0 0.0
        %840 = vmatmul.mubr.f32.gmra.mrb[0].mxu0 %v452
        %v841 = vpop.f32.mrb[0].mxu0
        %v842 = vadd.f32 %v533, %v841
        %v843 = vpop.f32.mrb[0].mxu0
        %v844 = vadd.f32 %v537, %v843
        %845 = vmatprep.mubr.f32.mxu0 0.0
        %846 = vmatmul.mubr.f32.gmra.mrb[0].mxu0 %v453
        %v847 = vpop.f32.mrb[0].mxu0
        %v848 = vadd.f32 %v533, %v847
        %v849 = vpop.f32.mrb[0].mxu0
        %v850 = vadd.f32 %v537, %v849
        %851 = vmatprep.mubr.f32.mxu0 0.0
        %852 = vmatmul.mubr.f32.gmra.mrb[0].mxu0 %v454
        %v853 = vpop.f32.mrb[0].mxu0
        %v854 = vadd.f32 %v533, %v853
        %v855 = vpop.f32.mrb[0].mxu0
        %v856 = vadd.f32 %v537, %v855
        %857 = vmatprep.mubr.f32.mxu0 0.0
        %858 = vmatmul.mubr.f32.gmra.mrb[0].mxu0 %v455
        %v859 = vpop.f32.mrb[0].mxu0
        %v860 = vadd.f32 %v533, %v859
        %v861 = vpop.f32.mrb[0].mxu0
        %v862 = vadd.f32 %v537, %v861
        %863 = vdwg.mxu0
        %864 = vst [vmem:[#allocation3] sm:$0xff] %v609
        %865 = vst [vmem:[#allocation3 + $0x8] sm:$0xff] %v611
        %866 = vst [vmem:[#allocation3 + $0x10] sm:$0xff] %v770
        %867 = vst [vmem:[#allocation3 + $0x18] sm:$0xff] %v772
        %868 = vst [vmem:[#allocation3 + $0x20] sm:$0xff] %v615
        %869 = vst [vmem:[#allocation3 + $0x28] sm:$0xff] %v617
        %870 = vst [vmem:[#allocation3 + $0x30] sm:$0xff] %v776
        %871 = vst [vmem:[#allocation3 + $0x38] sm:$0xff] %v778
        %872 = vst [vmem:[#allocation3 + $0x40] sm:$0xff] %v621
        %873 = vst [vmem:[#allocation3 + $0x48] sm:$0xff] %v623
        %874 = vst [vmem:[#allocation3 + $0x50] sm:$0xff] %v782
        %875 = vst [vmem:[#allocation3 + $0x58] sm:$0xff] %v784
        %876 = vst [vmem:[#allocation3 + $0x60] sm:$0xff] %v627
        %877 = vst [vmem:[#allocation3 + $0x68] sm:$0xff] %v629
        %878 = vst [vmem:[#allocation3 + $0x70] sm:$0xff] %v788
        %879 = vst [vmem:[#allocation3 + $0x78] sm:$0xff] %v790
        %880 = vst [vmem:[#allocation3 + $0x80] sm:$0xff] %v633
        %881 = vst [vmem:[#allocation3 + $0x88] sm:$0xff] %v635
        %882 = vst [vmem:[#allocation3 + $0x90] sm:$0xff] %v794
        %883 = vst [vmem:[#allocation3 + $0x98] sm:$0xff] %v796
        %884 = vst [vmem:[#allocation3 + $0xa0] sm:$0xff] %v639
        %885 = vst [vmem:[#allocation3 + $0xa8] sm:$0xff] %v641
        %886 = vst [vmem:[#allocation3 + $0xb0] sm:$0xff] %v800
        %887 = vst [vmem:[#allocation3 + $0xb8] sm:$0xff] %v802
        %888 = vst [vmem:[#allocation3 + $0xc0] sm:$0xff] %v645
        %889 = vst [vmem:[#allocation3 + $0xc8] sm:$0xff] %v647
        %890 = vst [vmem:[#allocation3 + $0xd0] sm:$0xff] %v806
        %891 = vst [vmem:[#allocation3 + $0xd8] sm:$0xff] %v808
        %892 = vst [vmem:[#allocation3 + $0xe0] sm:$0xff] %v651
        %893 = vst [vmem:[#allocation3 + $0xe8] sm:$0xff] %v653
        %894 = vst [vmem:[#allocation3 + $0xf0] sm:$0xff] %v812
        %895 = vst [vmem:[#allocation3 + $0xf8] sm:$0xff] %v814
        %896 = vst [vmem:[#allocation3 + $0x100] sm:$0xff] %v657
        %897 = vst [vmem:[#allocation3 + $0x108] sm:$0xff] %v659
        %898 = vst [vmem:[#allocation3 + $0x110] sm:$0xff] %v818
        %899 = vst [vmem:[#allocation3 + $0x118] sm:$0xff] %v820
        %900 = vst [vmem:[#allocation3 + $0x120] sm:$0xff] %v663
        %901 = vst [vmem:[#allocation3 + $0x128] sm:$0xff] %v665
        %902 = vst [vmem:[#allocation3 + $0x130] sm:$0xff] %v824
        %903 = vst [vmem:[#allocation3 + $0x138] sm:$0xff] %v826
        %904 = vst [vmem:[#allocation3 + $0x140] sm:$0xff] %v669
        %905 = vst [vmem:[#allocation3 + $0x148] sm:$0xff] %v671
        %906 = vst [vmem:[#allocation3 + $0x150] sm:$0xff] %v830
        %907 = vst [vmem:[#allocation3 + $0x158] sm:$0xff] %v832
        %908 = vst [vmem:[#allocation3 + $0x160] sm:$0xff] %v675
        %909 = vst [vmem:[#allocation3 + $0x168] sm:$0xff] %v677
        %910 = vst [vmem:[#allocation3 + $0x170] sm:$0xff] %v836
        %911 = vst [vmem:[#allocation3 + $0x178] sm:$0xff] %v838
        %912 = vst [vmem:[#allocation3 + $0x180] sm:$0xff] %v681
        %913 = vst [vmem:[#allocation3 + $0x188] sm:$0xff] %v683
        %914 = vst [vmem:[#allocation3 + $0x190] sm:$0xff] %v842
        %915 = vst [vmem:[#allocation3 + $0x198] sm:$0xff] %v844
        %916 = vst [vmem:[#allocation3 + $0x1a0] sm:$0xff] %v687
        %917 = vst [vmem:[#allocation3 + $0x1a8] sm:$0xff] %v689
        %918 = vst [vmem:[#allocation3 + $0x1b0] sm:$0xff] %v848
        %919 = vst [vmem:[#allocation3 + $0x1b8] sm:$0xff] %v850
        %920 = vst [vmem:[#allocation3 + $0x1c0] sm:$0xff] %v693
        %921 = vst [vmem:[#allocation3 + $0x1c8] sm:$0xff] %v695
        %922 = vst [vmem:[#allocation3 + $0x1d0] sm:$0xff] %v854
        %923 = vst [vmem:[#allocation3 + $0x1d8] sm:$0xff] %v856
        %924 = vst [vmem:[#allocation3 + $0x1e0] sm:$0xff] %v699
        %925 = vst [vmem:[#allocation3 + $0x1e8] sm:$0xff] %v701
        %926 = vst [vmem:[#allocation3 + $0x1f0] sm:$0xff] %v860
        %927 = vst [vmem:[#allocation3 + $0x1f8] sm:$0xff] %v862
        %v928 = vld [vmem:[#allocation2] sm:$0xff]
        %v929 = vld [vmem:[#allocation2 + $0x8] sm:$0xff]
        %v930 = vld [vmem:[#allocation10] sm:$0xff]
        %v931 = vld [vmem:[#allocation10 + $0x8] sm:$0xff]
        %v932 = vld [vmem:[#allocation10 + $0x10] sm:$0xff]
        %v933 = vld [vmem:[#allocation10 + $0x18] sm:$0xff]
        %v934 = vld [vmem:[#allocation10 + $0x20] sm:$0xff]
        %v935 = vld [vmem:[#allocation10 + $0x28] sm:$0xff]
        %v936 = vld [vmem:[#allocation10 + $0x30] sm:$0xff]
        %v937 = vld [vmem:[#allocation10 + $0x38] sm:$0xff]
        %v938 = vld [vmem:[#allocation10 + $0x40] sm:$0xff]
        %v939 = vld [vmem:[#allocation10 + $0x48] sm:$0xff]
        %v940 = vld [vmem:[#allocation10 + $0x50] sm:$0xff]
        %v941 = vld [vmem:[#allocation10 + $0x58] sm:$0xff]
        %v942 = vld [vmem:[#allocation10 + $0x60] sm:$0xff]
        %v943 = vld [vmem:[#allocation10 + $0x68] sm:$0xff]
        %v944 = vld [vmem:[#allocation10 + $0x70] sm:$0xff]
        %v945 = vld [vmem:[#allocation10 + $0x78] sm:$0xff]
        %v946 = vld [vmem:[#allocation10 + $0x80] sm:$0xff]
        %v947 = vld [vmem:[#allocation10 + $0x88] sm:$0xff]
        %v948 = vld [vmem:[#allocation10 + $0x90] sm:$0xff]
        %v949 = vld [vmem:[#allocation10 + $0x98] sm:$0xff]
        %v950 = vld [vmem:[#allocation10 + $0xa0] sm:$0xff]
        %v951 = vld [vmem:[#allocation10 + $0xa8] sm:$0xff]
        %v952 = vld [vmem:[#allocation10 + $0xb0] sm:$0xff]
        %v953 = vld [vmem:[#allocation10 + $0xb8] sm:$0xff]
        %v954 = vld [vmem:[#allocation10 + $0xc0] sm:$0xff]
        %v955 = vld [vmem:[#allocation10 + $0xc8] sm:$0xff]
        %v956 = vld [vmem:[#allocation10 + $0xd0] sm:$0xff]
        %v957 = vld [vmem:[#allocation10 + $0xd8] sm:$0xff]
        %v958 = vld [vmem:[#allocation10 + $0xe0] sm:$0xff]
        %v959 = vld [vmem:[#allocation10 + $0xe8] sm:$0xff]
        %v960 = vld [vmem:[#allocation10 + $0xf0] sm:$0xff]
        %v961 = vld [vmem:[#allocation10 + $0xf8] sm:$0xff]
        %v962 = vld [vmem:[#allocation10 + $0x100] sm:$0xff]
        %v963 = vld [vmem:[#allocation10 + $0x108] sm:$0xff]
        %v964 = vld [vmem:[#allocation10 + $0x110] sm:$0xff]
        %v965 = vld [vmem:[#allocation10 + $0x118] sm:$0xff]
        %v966 = vld [vmem:[#allocation10 + $0x120] sm:$0xff]
        %v967 = vld [vmem:[#allocation10 + $0x128] sm:$0xff]
        %v968 = vld [vmem:[#allocation10 + $0x130] sm:$0xff]
        %v969 = vld [vmem:[#allocation10 + $0x138] sm:$0xff]
        %v970 = vld [vmem:[#allocation10 + $0x140] sm:$0xff]
        %v971 = vld [vmem:[#allocation10 + $0x148] sm:$0xff]
        %v972 = vld [vmem:[#allocation10 + $0x150] sm:$0xff]
        %v973 = vld [vmem:[#allocation10 + $0x158] sm:$0xff]
        %v974 = vld [vmem:[#allocation10 + $0x160] sm:$0xff]
        %v975 = vld [vmem:[#allocation10 + $0x168] sm:$0xff]
        %v976 = vld [vmem:[#allocation10 + $0x170] sm:$0xff]
        %v977 = vld [vmem:[#allocation10 + $0x178] sm:$0xff]
        %v978 = vld [vmem:[#allocation10 + $0x180] sm:$0xff]
        %v979 = vld [vmem:[#allocation10 + $0x188] sm:$0xff]
        %v980 = vld [vmem:[#allocation10 + $0x190] sm:$0xff]
        %v981 = vld [vmem:[#allocation10 + $0x198] sm:$0xff]
        %v982 = vld [vmem:[#allocation10 + $0x1a0] sm:$0xff]
        %v983 = vld [vmem:[#allocation10 + $0x1a8] sm:$0xff]
        %v984 = vld [vmem:[#allocation10 + $0x1b0] sm:$0xff]
        %v985 = vld [vmem:[#allocation10 + $0x1b8] sm:$0xff]
        %v986 = vld [vmem:[#allocation10 + $0x1c0] sm:$0xff]
        %v987 = vld [vmem:[#allocation10 + $0x1c8] sm:$0xff]
        %v988 = vld [vmem:[#allocation10 + $0x1d0] sm:$0xff]
        %v989 = vld [vmem:[#allocation10 + $0x1d8] sm:$0xff]
        %v990 = vld [vmem:[#allocation10 + $0x1e0] sm:$0xff]
        %v991 = vld [vmem:[#allocation10 + $0x1e8] sm:$0xff]
        %v992 = vld [vmem:[#allocation10 + $0x1f0] sm:$0xff]
        %v993 = vld [vmem:[#allocation10 + $0x1f8] sm:$0xff]
        %v994 = vld [vmem:[#allocation12] sm:$0xff]
        %v995 = vld [vmem:[#allocation12 + $0x8] sm:$0xff]
        %v996 = vld [vmem:[#allocation12 + $0x10] sm:$0xff]
        %v997 = vld [vmem:[#allocation12 + $0x18] sm:$0xff]
        %v998 = vld [vmem:[#allocation12 + $0x20] sm:$0xff]
        %v999 = vld [vmem:[#allocation12 + $0x28] sm:$0xff]
        %v1000 = vld [vmem:[#allocation12 + $0x30] sm:$0xff]
        %v1001 = vld [vmem:[#allocation12 + $0x38] sm:$0xff]
        %v1002 = vld [vmem:[#allocation12 + $0x40] sm:$0xff]
        %v1003 = vld [vmem:[#allocation12 + $0x48] sm:$0xff]
        %v1004 = vld [vmem:[#allocation12 + $0x50] sm:$0xff]
        %v1005 = vld [vmem:[#allocation12 + $0x58] sm:$0xff]
        %v1006 = vld [vmem:[#allocation12 + $0x60] sm:$0xff]
        %v1007 = vld [vmem:[#allocation12 + $0x68] sm:$0xff]
        %v1008 = vld [vmem:[#allocation12 + $0x70] sm:$0xff]
        %v1009 = vld [vmem:[#allocation12 + $0x78] sm:$0xff]
        %v1010 = vld [vmem:[#allocation15] sm:$0x1]
        %1011 = vmatprep.subr.mxu0 %v931
        %1012 = vmatpush1.msra.mxu0 %v930
        %1013 = vmatprep.subr.mxu0 %v935
        %1014 = vmatpush1.msra.mxu0 %v934
        %1015 = vmatprep.subr.mxu0 %v939
        %1016 = vmatpush1.msra.mxu0 %v938
        %1017 = vmatprep.subr.mxu0 %v943
        %1018 = vmatpush1.msra.mxu0 %v942
        %1019 = vmatprep.subr.mxu0 %v947
        %1020 = vmatpush1.msra.mxu0 %v946
        %1021 = vmatprep.subr.mxu0 %v951
        %1022 = vmatpush1.msra.mxu0 %v950
        %1023 = vmatprep.subr.mxu0 %v955
        %1024 = vmatpush1.msra.mxu0 %v954
        %1025 = vmatprep.subr.mxu0 %v959
        %1026 = vmatpush1.msra.mxu0 %v958
        %1027 = vmatprep.subr.mxu0 %v963
        %1028 = vmatpush1.msra.mxu0 %v962
        %1029 = vmatprep.subr.mxu0 %v967
        %1030 = vmatpush1.msra.mxu0 %v966
        %1031 = vmatprep.subr.mxu0 %v971
        %1032 = vmatpush1.msra.mxu0 %v970
        %1033 = vmatprep.subr.mxu0 %v975
        %1034 = vmatpush1.msra.mxu0 %v974
        %1035 = vmatprep.subr.mxu0 %v979
        %1036 = vmatpush1.msra.mxu0 %v978
        %1037 = vmatprep.subr.mxu0 %v983
        %1038 = vmatpush1.msra.mxu0 %v982
        %1039 = vmatprep.subr.mxu0 %v987
        %1040 = vmatpush1.msra.mxu0 %v986
        %1041 = vmatprep.subr.mxu0 %v991
        %1042 = vmatpush1.msra.mxu0 %v990
        %1043 = vmatprep.subr.mxu0 0.0
        %1044 = vmatpush1.msra.mxu0 0.0
        %1045 = vmatprep.subr.mxu0 0.0
        %1046 = vmatpush1.msra.mxu0 0.0
        %1047 = vmatprep.subr.mxu0 0.0
        %1048 = vmatpush1.msra.mxu0 0.0
        %1049 = vmatprep.subr.mxu0 0.0
        %1050 = vmatpush1.msra.mxu0 0.0
        %1051 = vmatprep.subr.mxu0 0.0
        %1052 = vmatpush1.msra.mxu0 0.0
        %1053 = vmatprep.subr.mxu0 0.0
        %1054 = vmatpush1.msra.mxu0 0.0
        %1055 = vmatprep.subr.mxu0 0.0
        %1056 = vmatpush1.msra.mxu0 0.0
        %1057 = vmatprep.subr.mxu0 0.0
        %1058 = vmatpush1.msra.mxu0 0.0
        %1059 = vmatprep.subr.mxu0 0.0
        %1060 = vmatpush1.msra.mxu0 0.0
        %1061 = vmatprep.subr.mxu0 0.0
        %1062 = vmatpush1.msra.mxu0 0.0
        %1063 = vmatprep.subr.mxu0 0.0
        %1064 = vmatpush1.msra.mxu0 0.0
        %1065 = vmatprep.subr.mxu0 0.0
        %1066 = vmatpush1.msra.mxu0 0.0
        %1067 = vmatprep.subr.mxu0 0.0
        %1068 = vmatpush1.msra.mxu0 0.0
        %1069 = vmatprep.subr.mxu0 0.0
        %1070 = vmatpush1.msra.mxu0 0.0
        %1071 = vmatprep.subr.mxu0 0.0
        %1072 = vmatpush1.msra.mxu0 0.0
        %1073 = vmatprep.subr.mxu0 0.0
        %1074 = vmatpush1.msra.mxu0 0.0
        %1075 = vmatprep.mubr.f32.mxu0 0.0
        %1076 = vmatmul.mubr.f32.gmra.mrb[0].mxu0 %v928
        %v1077 = vpop.f32.mrb[0].mxu0
        %v1078 = vadd.f32 0.0, %v1077
        %v1079 = vpop.f32.mrb[0].mxu0
        %v1080 = vadd.f32 0.0, %v1079
        %1081 = vdwg.mxu0
        %1082 = vmatprep.subr.mxu0 %v933
        %1083 = vmatpush1.msra.mxu0 %v932
        %1084 = vmatprep.subr.mxu0 %v937
        %1085 = vmatpush1.msra.mxu0 %v936
        %1086 = vmatprep.subr.mxu0 %v941
        %1087 = vmatpush1.msra.mxu0 %v940
        %1088 = vmatprep.subr.mxu0 %v945
        %1089 = vmatpush1.msra.mxu0 %v944
        %1090 = vmatprep.subr.mxu0 %v949
        %1091 = vmatpush1.msra.mxu0 %v948
        %1092 = vmatprep.subr.mxu0 %v953
        %1093 = vmatpush1.msra.mxu0 %v952
        %1094 = vmatprep.subr.mxu0 %v957
        %1095 = vmatpush1.msra.mxu0 %v956
        %1096 = vmatprep.subr.mxu0 %v961
        %1097 = vmatpush1.msra.mxu0 %v960
        %1098 = vmatprep.subr.mxu0 %v965
        %1099 = vmatpush1.msra.mxu0 %v964
        %1100 = vmatprep.subr.mxu0 %v969
        %1101 = vmatpush1.msra.mxu0 %v968
        %1102 = vmatprep.subr.mxu0 %v973
        %1103 = vmatpush1.msra.mxu0 %v972
        %1104 = vmatprep.subr.mxu0 %v977
        %1105 = vmatpush1.msra.mxu0 %v976
        %1106 = vmatprep.subr.mxu0 %v981
        %1107 = vmatpush1.msra.mxu0 %v980
        %1108 = vmatprep.subr.mxu0 %v985
        %1109 = vmatpush1.msra.mxu0 %v984
        %1110 = vmatprep.subr.mxu0 %v989
        %1111 = vmatpush1.msra.mxu0 %v988
        %1112 = vmatprep.subr.mxu0 %v993
        %1113 = vmatpush1.msra.mxu0 %v992
        %1114 = vmatprep.subr.mxu0 0.0
        %1115 = vmatpush1.msra.mxu0 0.0
        %1116 = vmatprep.subr.mxu0 0.0
        %1117 = vmatpush1.msra.mxu0 0.0
        %1118 = vmatprep.subr.mxu0 0.0
        %1119 = vmatpush1.msra.mxu0 0.0
        %1120 = vmatprep.subr.mxu0 0.0
        %1121 = vmatpush1.msra.mxu0 0.0
        %1122 = vmatprep.subr.mxu0 0.0
        %1123 = vmatpush1.msra.mxu0 0.0
        %1124 = vmatprep.subr.mxu0 0.0
        %1125 = vmatpush1.msra.mxu0 0.0
        %1126 = vmatprep.subr.mxu0 0.0
        %1127 = vmatpush1.msra.mxu0 0.0
        %1128 = vmatprep.subr.mxu0 0.0
        %1129 = vmatpush1.msra.mxu0 0.0
        %1130 = vmatprep.subr.mxu0 0.0
        %1131 = vmatpush1.msra.mxu0 0.0
        %1132 = vmatprep.subr.mxu0 0.0
        %1133 = vmatpush1.msra.mxu0 0.0
        %1134 = vmatprep.subr.mxu0 0.0
        %1135 = vmatpush1.msra.mxu0 0.0
        %1136 = vmatprep.subr.mxu0 0.0
        %1137 = vmatpush1.msra.mxu0 0.0
        %1138 = vmatprep.subr.mxu0 0.0
        %1139 = vmatpush1.msra.mxu0 0.0
        %1140 = vmatprep.subr.mxu0 0.0
        %1141 = vmatpush1.msra.mxu0 0.0
        %1142 = vmatprep.subr.mxu0 0.0
        %1143 = vmatpush1.msra.mxu0 0.0
        %1144 = vmatprep.subr.mxu0 0.0
        %1145 = vmatpush1.msra.mxu0 0.0
        %1146 = vmatprep.mubr.f32.mxu0 0.0
        %1147 = vmatmul.mubr.f32.gmra.mrb[0].mxu0 %v928
        %v1148 = vpop.f32.mrb[0].mxu0
        %v1149 = vadd.f32 0.0, %v1148
        %v1150 = vpop.f32.mrb[0].mxu0
        %v1151 = vadd.f32 0.0, %v1150
        %1152 = vdwg.mxu0
        %v1154 = vlaneseq
        %v1155 = vshrl.u32 %v1154, 7
        %v1156 = vsub.s32 0, %v1155
        %v1157 = vrot.slane %v1010, %v1156
        %1159 = vmatprep.subr.mxu0 0.0
        %1160 = vmatpush1.msra.mxu0 %v994
        %1161 = vmatprep.subr.mxu0 0.0
        %1162 = vmatpush1.msra.mxu0 %v995
        %1163 = vmatprep.subr.mxu0 0.0
        %1164 = vmatpush1.msra.mxu0 %v996
        %1165 = vmatprep.subr.mxu0 0.0
        %1166 = vmatpush1.msra.mxu0 %v997
        %1167 = vmatprep.subr.mxu0 0.0
        %1168 = vmatpush1.msra.mxu0 %v998
        %1169 = vmatprep.subr.mxu0 0.0
        %1170 = vmatpush1.msra.mxu0 %v999
        %1171 = vmatprep.subr.mxu0 0.0
        %1172 = vmatpush1.msra.mxu0 %v1000
        %1173 = vmatprep.subr.mxu0 0.0
        %1174 = vmatpush1.msra.mxu0 %v1001
        %1175 = vmatprep.subr.mxu0 0.0
        %1176 = vmatpush1.msra.mxu0 %v1002
        %1177 = vmatprep.subr.mxu0 0.0
        %1178 = vmatpush1.msra.mxu0 %v1003
        %1179 = vmatprep.subr.mxu0 0.0
        %1180 = vmatpush1.msra.mxu0 %v1004
        %1181 = vmatprep.subr.mxu0 0.0
        %1182 = vmatpush1.msra.mxu0 %v1005
        %1183 = vmatprep.subr.mxu0 0.0
        %1184 = vmatpush1.msra.mxu0 %v1006
        %1185 = vmatprep.subr.mxu0 0.0
        %1186 = vmatpush1.msra.mxu0 %v1007
        %1187 = vmatprep.subr.mxu0 0.0
        %1188 = vmatpush1.msra.mxu0 %v1008
        %1189 = vmatprep.subr.mxu0 0.0
        %1190 = vmatpush1.msra.mxu0 %v1009
        %1191 = vmatprep.subr.mxu0 0.0
        %1192 = vmatpush1.msra.mxu0 0.0
        %1193 = vmatprep.subr.mxu0 0.0
        %1194 = vmatpush1.msra.mxu0 0.0
        %1195 = vmatprep.subr.mxu0 0.0
        %1196 = vmatpush1.msra.mxu0 0.0
        %1197 = vmatprep.subr.mxu0 0.0
        %1198 = vmatpush1.msra.mxu0 0.0
        %1199 = vmatprep.subr.mxu0 0.0
        %1200 = vmatpush1.msra.mxu0 0.0
        %1201 = vmatprep.subr.mxu0 0.0
        %1202 = vmatpush1.msra.mxu0 0.0
        %1203 = vmatprep.subr.mxu0 0.0
        %1204 = vmatpush1.msra.mxu0 0.0
        %1205 = vmatprep.subr.mxu0 0.0
        %1206 = vmatpush1.msra.mxu0 0.0
        %1207 = vmatprep.subr.mxu0 0.0
        %1208 = vmatpush1.msra.mxu0 0.0
        %1209 = vmatprep.subr.mxu0 0.0
        %1210 = vmatpush1.msra.mxu0 0.0
        %1211 = vmatprep.subr.mxu0 0.0
        %1212 = vmatpush1.msra.mxu0 0.0
        %1213 = vmatprep.subr.mxu0 0.0
        %1214 = vmatpush1.msra.mxu0 0.0
        %1215 = vmatprep.subr.mxu0 0.0
        %1216 = vmatpush1.msra.mxu0 0.0
        %1217 = vmatprep.subr.mxu0 0.0
        %1218 = vmatpush1.msra.mxu0 0.0
        %1219 = vmatprep.subr.mxu0 0.0
        %1220 = vmatpush1.msra.mxu0 0.0
        %1221 = vmatprep.subr.mxu0 0.0
        %1222 = vmatpush1.msra.mxu0 0.0
        %1223 = vmatprep.mubr.f32.mxu0 0.0
        %1224 = vmatmul.mubr.f32.gmra.mrb[0].mxu0 %v929
        %v1225 = vpop.f32.mrb[0].mxu0
        %v1226 = vadd.f32 %v1157, %v1225
        %v1227 = vpop.f32.mrb[0].mxu0
        %1228 = vdwg.mxu0
        %v1229 = vtanh.pop %v1226
        %v1230 = vld [vmem:[%s373] sm:$0xff]
        %1232 = vset.pattern.permute.xlu0 0
        %1233 = vperm.xlu0 %1232, %v1230
        %v1234 = vpop.permute.xlu0 %1233
        %v1236 = vmul.f32 %v1229, %v1234
        %v1237 = vadd.f32 %v929, %v1236
        %v1238 = vld [vmem:[#allocation3] sm:$0xff]
        %v1239 = vld [vmem:[#allocation3 + $0x8] sm:$0xff]
        %v1240 = vld [vmem:[#allocation3 + $0x10] sm:$0xff]
        %v1241 = vld [vmem:[#allocation3 + $0x18] sm:$0xff]
        %v1242 = vadd.f32 %v1238, %v1078
        %v1243 = vadd.f32 %v1239, %v1080
        %v1244 = vadd.f32 %v1240, %v1149
        %v1245 = vadd.f32 %v1241, %v1151
        %v1246 = vxor.u32 %v1242, 2147483648
        %v1247 = vxor.u32 %v1243, 2147483648
        %v1248 = vxor.u32 %v1244, 2147483648
        %v1249 = vxor.u32 %v1245, 2147483648
        %v1250 = vmul.f32 %v1246, 1.442695
        %v1251 = vpow.pop %v1250
        %v1252 = vmul.f32 %v1247, 1.442695
        %v1253 = vpow.pop %v1252
        %v1254 = vmul.f32 %v1248, 1.442695
        %v1255 = vpow.pop %v1254
        %v1256 = vmul.f32 %v1249, 1.442695
        %v1257 = vpow.pop %v1256
        %v1258 = vadd.f32 %v1251, 1.0
        %v1259 = vadd.f32 %v1253, 1.0
        %v1260 = vadd.f32 %v1255, 1.0
        %v1261 = vadd.f32 %v1257, 1.0
        %v1262 = vrcp.pop %v1258
        %v1263 = vmul.f32 1.0, %v1262
        %v1264 = vrcp.pop %v1259
        %v1265 = vmul.f32 1.0, %v1264
        %v1266 = vrcp.pop %v1260
        %v1267 = vmul.f32 1.0, %v1266
        %v1268 = vrcp.pop %v1261
        %v1269 = vmul.f32 1.0, %v1268
        %v1270 = vmul.f32 %v1263, %v1237
        %v1271 = vmul.f32 %v1265, %v1269
        %v1272 = vadd.f32 %v1270, %v1271
        %v1273 = vtanh.pop %v1272
        %v1274 = vmul.f32 %v1267, %v1273
        %1275 = vst [vmem:[%s428] sm:$0xff] %v1274
        %s1276 = smul.u32 %s32, 16
        %p1277 = scmp.lt.s32.totalorder %s1276, 20
        %s1278 = scalar_select %p1277, 1, 0
        %v1279 = vstv %s1278
        %vm1280 = vcmp.eq.s32.totalorder %v1279, 1
        %v1281 = vsel %vm1280, %v1274, %v928
        %v1282 = vsel %vm1280, %v1272, %v929
        %1283 = vmatprep.subr.mxu0 %v931
        %1284 = vmatpush1.msra.mxu0 %v930
        %1285 = vmatprep.subr.mxu0 %v935
        %1286 = vmatpush1.msra.mxu0 %v934
        %1287 = vmatprep.subr.mxu0 %v939
        %1288 = vmatpush1.msra.mxu0 %v938
        %1289 = vmatprep.subr.mxu0 %v943
        %1290 = vmatpush1.msra.mxu0 %v942
        %1291 = vmatprep.subr.mxu0 %v947
        %1292 = vmatpush1.msra.mxu0 %v946
        %1293 = vmatprep.subr.mxu0 %v951
        %1294 = vmatpush1.msra.mxu0 %v950
        %1295 = vmatprep.subr.mxu0 %v955
        %1296 = vmatpush1.msra.mxu0 %v954
        %1297 = vmatprep.subr.mxu0 %v959
        %1298 = vmatpush1.msra.mxu0 %v958
        %1299 = vmatprep.subr.mxu0 %v963
        %1300 = vmatpush1.msra.mxu0 %v962
        %1301 = vmatprep.subr.mxu0 %v967
        %1302 = vmatpush1.msra.mxu0 %v966
        %1303 = vmatprep.subr.mxu0 %v971
        %1304 = vmatpush1.msra.mxu0 %v970
        %1305 = vmatprep.subr.mxu0 %v975
        %1306 = vmatpush1.msra.mxu0 %v974
        %1307 = vmatprep.subr.mxu0 %v979
        %1308 = vmatpush1.msra.mxu0 %v978
        %1309 = vmatprep.subr.mxu0 %v983
        %1310 = vmatpush1.msra.mxu0 %v982
        %1311 = vmatprep.subr.mxu0 %v987
        %1312 = vmatpush1.msra.mxu0 %v986
        %1313 = vmatprep.subr.mxu0 %v991
        %1314 = vmatpush1.msra.mxu0 %v990
        %1315 = vmatprep.subr.mxu0 0.0
        %1316 = vmatpush1.msra.mxu0 0.0
        %1317 = vmatprep.subr.mxu0 0.0
        %1318 = vmatpush1.msra.mxu0 0.0
        %1319 = vmatprep.subr.mxu0 0.0
        %1320 = vmatpush1.msra.mxu0 0.0
        %1321 = vmatprep.subr.mxu0 0.0
        %1322 = vmatpush1.msra.mxu0 0.0
        %1323 = vmatprep.subr.mxu0 0.0
        %1324 = vmatpush1.msra.mxu0 0.0
        %1325 = vmatprep.subr.mxu0 0.0
        %1326 = vmatpush1.msra.mxu0 0.0
        %1327 = vmatprep.subr.mxu0 0.0
        %1328 = vmatpush1.msra.mxu0 0.0
        %1329 = vmatprep.subr.mxu0 0.0
        %1330 = vmatpush1.msra.mxu0 0.0
        %1331 = vmatprep.subr.mxu0 0.0
        %1332 = vmatpush1.msra.mxu0 0.0
        %1333 = vmatprep.subr.mxu0 0.0
        %1334 = vmatpush1.msra.mxu0 0.0
        %1335 = vmatprep.subr.mxu0 0.0
        %1336 = vmatpush1.msra.mxu0 0.0
        %1337 = vmatprep.subr.mxu0 0.0
        %1338 = vmatpush1.msra.mxu0 0.0
        %1339 = vmatprep.subr.mxu0 0.0
        %1340 = vmatpush1.msra.mxu0 0.0
        %1341 = vmatprep.subr.mxu0 0.0
        %1342 = vmatpush1.msra.mxu0 0.0
        %1343 = vmatprep.subr.mxu0 0.0
        %1344 = vmatpush1.msra.mxu0 0.0
        %1345 = vmatprep.subr.mxu0 0.0
        %1346 = vmatpush1.msra.mxu0 0.0
        %1347 = vmatprep.mubr.f32.mxu0 0.0
        %1348 = vmatmul.mubr.f32.gmra.mrb[0].mxu0 %v1281
        %v1349 = vpop.f32.mrb[0].mxu0
        %v1350 = vadd.f32 0.0, %v1349
        %v1351 = vpop.f32.mrb[0].mxu0
        %v1352 = vadd.f32 0.0, %v1351
        %1353 = vdwg.mxu0
        %1354 = vmatprep.subr.mxu0 %v933
        %1355 = vmatpush1.msra.mxu0 %v932
        %1356 = vmatprep.subr.mxu0 %v937
        %1357 = vmatpush1.msra.mxu0 %v936
        %1358 = vmatprep.subr.mxu0 %v941
        %1359 = vmatpush1.msra.mxu0 %v940
        %1360 = vmatprep.subr.mxu0 %v945
        %1361 = vmatpush1.msra.mxu0 %v944
        %1362 = vmatprep.subr.mxu0 %v949
        %1363 = vmatpush1.msra.mxu0 %v948
        %1364 = vmatprep.subr.mxu0 %v953
        %1365 = vmatpush1.msra.mxu0 %v952
        %1366 = vmatprep.subr.mxu0 %v957
        %1367 = vmatpush1.msra.mxu0 %v956
        %1368 = vmatprep.subr.mxu0 %v961
        %1369 = vmatpush1.msra.mxu0 %v960
        %1370 = vmatprep.subr.mxu0 %v965
        %1371 = vmatpush1.msra.mxu0 %v964
        %1372 = vmatprep.subr.mxu0 %v969
        %1373 = vmatpush1.msra.mxu0 %v968
        %1374 = vmatprep.subr.mxu0 %v973
        %1375 = vmatpush1.msra.mxu0 %v972
        %1376 = vmatprep.subr.mxu0 %v977
        %1377 = vmatpush1.msra.mxu0 %v976
        %1378 = vmatprep.subr.mxu0 %v981
        %1379 = vmatpush1.msra.mxu0 %v980
        %1380 = vmatprep.subr.mxu0 %v985
        %1381 = vmatpush1.msra.mxu0 %v984
        %1382 = vmatprep.subr.mxu0 %v989
        %1383 = vmatpush1.msra.mxu0 %v988
        %1384 = vmatprep.subr.mxu0 %v993
        %1385 = vmatpush1.msra.mxu0 %v992
        %1386 = vmatprep.subr.mxu0 0.0
        %1387 = vmatpush1.msra.mxu0 0.0
        %1388 = vmatprep.subr.mxu0 0.0
        %1389 = vmatpush1.msra.mxu0 0.0
        %1390 = vmatprep.subr.mxu0 0.0
        %1391 = vmatpush1.msra.mxu0 0.0
        %1392 = vmatprep.subr.mxu0 0.0
        %1393 = vmatpush1.msra.mxu0 0.0
        %1394 = vmatprep.subr.mxu0 0.0
        %1395 = vmatpush1.msra.mxu0 0.0
        %1396 = vmatprep.subr.mxu0 0.0
        %1397 = vmatpush1.msra.mxu0 0.0
        %1398 = vmatprep.subr.mxu0 0.0
        %1399 = vmatpush1.msra.mxu0 0.0
        %1400 = vmatprep.subr.mxu0 0.0
        %1401 = vmatpush1.msra.mxu0 0.0
        %1402 = vmatprep.subr.mxu0 0.0
        %1403 = vmatpush1.msra.mxu0 0.0
        %1404 = vmatprep.subr.mxu0 0.0
        %1405 = vmatpush1.msra.mxu0 0.0
        %1406 = vmatprep.subr.mxu0 0.0
        %1407 = vmatpush1.msra.mxu0 0.0
        %1408 = vmatprep.subr.mxu0 0.0
        %1409 = vmatpush1.msra.mxu0 0.0
        %1410 = vmatprep.subr.mxu0 0.0
        %1411 = vmatpush1.msra.mxu0 0.0
        %1412 = vmatprep.subr.mxu0 0.0
        %1413 = vmatpush1.msra.mxu0 0.0
        %1414 = vmatprep.subr.mxu0 0.0
        %1415 = vmatpush1.msra.mxu0 0.0
        %1416 = vmatprep.subr.mxu0 0.0
        %1417 = vmatpush1.msra.mxu0 0.0
        %1418 = vmatprep.mubr.f32.mxu0 0.0
        %1419 = vmatmul.mubr.f32.gmra.mrb[0].mxu0 %v1281
        %v1420 = vpop.f32.mrb[0].mxu0
        %v1421 = vadd.f32 0.0, %v1420
        %v1422 = vpop.f32.mrb[0].mxu0
        %v1423 = vadd.f32 0.0, %v1422
        %1424 = vdwg.mxu0
        %1425 = vmatprep.subr.mxu0 0.0
        %1426 = vmatpush1.msra.mxu0 %v994
        %1427 = vmatprep.subr.mxu0 0.0
        %1428 = vmatpush1.msra.mxu0 %v995
        %1429 = vmatprep.subr.mxu0 0.0
        %1430 = vmatpush1.msra.mxu0 %v996
        %1431 = vmatprep.subr.mxu0 0.0
        %1432 = vmatpush1.msra.mxu0 %v997
        %1433 = vmatprep.subr.mxu0 0.0
        %1434 = vmatpush1.msra.mxu0 %v998
        %1435 = vmatprep.subr.mxu0 0.0
        %1436 = vmatpush1.msra.mxu0 %v999
        %1437 = vmatprep.subr.mxu0 0.0
        %1438 = vmatpush1.msra.mxu0 %v1000
        %1439 = vmatprep.subr.mxu0 0.0
        %1440 = vmatpush1.msra.mxu0 %v1001
        %1441 = vmatprep.subr.mxu0 0.0
        %1442 = vmatpush1.msra.mxu0 %v1002
        %1443 = vmatprep.subr.mxu0 0.0
        %1444 = vmatpush1.msra.mxu0 %v1003
        %1445 = vmatprep.subr.mxu0 0.0
        %1446 = vmatpush1.msra.mxu0 %v1004
        %1447 = vmatprep.subr.mxu0 0.0
        %1448 = vmatpush1.msra.mxu0 %v1005
        %1449 = vmatprep.subr.mxu0 0.0
        %1450 = vmatpush1.msra.mxu0 %v1006
        %1451 = vmatprep.subr.mxu0 0.0
        %1452 = vmatpush1.msra.mxu0 %v1007
        %1453 = vmatprep.subr.mxu0 0.0
        %1454 = vmatpush1.msra.mxu0 %v1008
        %1455 = vmatprep.subr.mxu0 0.0
        %1456 = vmatpush1.msra.mxu0 %v1009
        %1457 = vmatprep.subr.mxu0 0.0
        %1458 = vmatpush1.msra.mxu0 0.0
        %1459 = vmatprep.subr.mxu0 0.0
        %1460 = vmatpush1.msra.mxu0 0.0
        %1461 = vmatprep.subr.mxu0 0.0
        %1462 = vmatpush1.msra.mxu0 0.0
        %1463 = vmatprep.subr.mxu0 0.0
        %1464 = vmatpush1.msra.mxu0 0.0
        %1465 = vmatprep.subr.mxu0 0.0
        %1466 = vmatpush1.msra.mxu0 0.0
        %1467 = vmatprep.subr.mxu0 0.0
        %1468 = vmatpush1.msra.mxu0 0.0
        %1469 = vmatprep.subr.mxu0 0.0
        %1470 = vmatpush1.msra.mxu0 0.0
        %1471 = vmatprep.subr.mxu0 0.0
        %1472 = vmatpush1.msra.mxu0 0.0
        %1473 = vmatprep.subr.mxu0 0.0
        %1474 = vmatpush1.msra.mxu0 0.0
        %1475 = vmatprep.subr.mxu0 0.0
        %1476 = vmatpush1.msra.mxu0 0.0
        %1477 = vmatprep.subr.mxu0 0.0
        %1478 = vmatpush1.msra.mxu0 0.0
        %1479 = vmatprep.subr.mxu0 0.0
        %1480 = vmatpush1.msra.mxu0 0.0
        %1481 = vmatprep.subr.mxu0 0.0
        %1482 = vmatpush1.msra.mxu0 0.0
        %1483 = vmatprep.subr.mxu0 0.0
        %1484 = vmatpush1.msra.mxu0 0.0
        %1485 = vmatprep.subr.mxu0 0.0
        %1486 = vmatpush1.msra.mxu0 0.0
        %1487 = vmatprep.subr.mxu0 0.0
        %1488 = vmatpush1.msra.mxu0 0.0
        %1489 = vmatprep.mubr.f32.mxu0 0.0
        %1490 = vmatmul.mubr.f32.gmra.mrb[0].mxu0 %v1282
        %v1491 = vpop.f32.mrb[0].mxu0
        %v1492 = vadd.f32 %v1157, %v1491
        %v1493 = vpop.f32.mrb[0].mxu0
        %1494 = vdwg.mxu0
        %v1495 = vtanh.pop %v1492
        %s1496 = scalar_lea.vmem %s373, 8 [#allocation7]
        %v1497 = vld [vmem:[%s1496] sm:$0xff]
        %1499 = vset.pattern.permute.xlu0 0
        %1500 = vperm.xlu0 %1499, %v1497
        %v1501 = vpop.permute.xlu0 %1500
        %v1503 = vmul.f32 %v1495, %v1501
        %v1504 = vadd.f32 %v1282, %v1503
        %v1505 = vld [vmem:[#allocation3 + $0x20] sm:$0xff]
        %v1506 = vld [vmem:[#allocation3 + $0x28] sm:$0xff]
        %v1507 = vld [vmem:[#allocation3 + $0x30] sm:$0xff]
        %v1508 = vld [vmem:[#allocation3 + $0x38] sm:$0xff]
        %v1509 = vadd.f32 %v1505, %v1350
        %v1510 = vadd.f32 %v1506, %v1352
        %v1511 = vadd.f32 %v1507, %v1421
        %v1512 = vadd.f32 %v1508, %v1423
        %v1513 = vxor.u32 %v1509, 2147483648
        %v1514 = vxor.u32 %v1510, 2147483648
        %v1515 = vxor.u32 %v1511, 2147483648
        %v1516 = vxor.u32 %v1512, 2147483648
        %v1517 = vmul.f32 %v1513, 1.442695
        %v1518 = vpow.pop %v1517
        %v1519 = vmul.f32 %v1514, 1.442695
        %v1520 = vpow.pop %v1519
        %v1521 = vmul.f32 %v1515, 1.442695
        %v1522 = vpow.pop %v1521
        %v1523 = vmul.f32 %v1516, 1.442695
        %v1524 = vpow.pop %v1523
        %v1525 = vadd.f32 %v1518, 1.0
        %v1526 = vadd.f32 %v1520, 1.0
        %v1527 = vadd.f32 %v1522, 1.0
        %v1528 = vadd.f32 %v1524, 1.0
        %v1529 = vrcp.pop %v1525
        %v1530 = vmul.f32 1.0, %v1529
        %v1531 = vrcp.pop %v1526
        %v1532 = vmul.f32 1.0, %v1531
        %v1533 = vrcp.pop %v1527
        %v1534 = vmul.f32 1.0, %v1533
        %v1535 = vrcp.pop %v1528
        %v1536 = vmul.f32 1.0, %v1535
        %v1537 = vmul.f32 %v1530, %v1504
        %v1538 = vmul.f32 %v1532, %v1536
        %v1539 = vadd.f32 %v1537, %v1538
        %v1540 = vtanh.pop %v1539
        %v1541 = vmul.f32 %v1534, %v1540
        %1542 = vst [vmem:[%s428 + $0x8] sm:$0xff] %v1541
        %s1543 = sadd.s32 %s1276, 1
        %p1544 = scmp.lt.s32.totalorder %s1543, 20
        %s1545 = scalar_select %p1544, 1, 0
        %v1546 = vstv %s1545
        %vm1547 = vcmp.eq.s32.totalorder %v1546, 1
        %v1548 = vsel %vm1547, %v1541, %v1281
        %v1549 = vsel %vm1547, %v1539, %v1282
        %1550 = vmatprep.subr.mxu0 %v931
        %1551 = vmatpush1.msra.mxu0 %v930
        %1552 = vmatprep.subr.mxu0 %v935
        %1553 = vmatpush1.msra.mxu0 %v934
        %1554 = vmatprep.subr.mxu0 %v939
        %1555 = vmatpush1.msra.mxu0 %v938
        %1556 = vmatprep.subr.mxu0 %v943
        %1557 = vmatpush1.msra.mxu0 %v942
        %1558 = vmatprep.subr.mxu0 %v947
        %1559 = vmatpush1.msra.mxu0 %v946
        %1560 = vmatprep.subr.mxu0 %v951
        %1561 = vmatpush1.msra.mxu0 %v950
        %1562 = vmatprep.subr.mxu0 %v955
        %1563 = vmatpush1.msra.mxu0 %v954
        %1564 = vmatprep.subr.mxu0 %v959
        %1565 = vmatpush1.msra.mxu0 %v958
        %1566 = vmatprep.subr.mxu0 %v963
        %1567 = vmatpush1.msra.mxu0 %v962
        %1568 = vmatprep.subr.mxu0 %v967
        %1569 = vmatpush1.msra.mxu0 %v966
        %1570 = vmatprep.subr.mxu0 %v971
        %1571 = vmatpush1.msra.mxu0 %v970
        %1572 = vmatprep.subr.mxu0 %v975
        %1573 = vmatpush1.msra.mxu0 %v974
        %1574 = vmatprep.subr.mxu0 %v979
        %1575 = vmatpush1.msra.mxu0 %v978
        %1576 = vmatprep.subr.mxu0 %v983
        %1577 = vmatpush1.msra.mxu0 %v982
        %1578 = vmatprep.subr.mxu0 %v987
        %1579 = vmatpush1.msra.mxu0 %v986
        %1580 = vmatprep.subr.mxu0 %v991
        %1581 = vmatpush1.msra.mxu0 %v990
        %1582 = vmatprep.subr.mxu0 0.0
        %1583 = vmatpush1.msra.mxu0 0.0
        %1584 = vmatprep.subr.mxu0 0.0
        %1585 = vmatpush1.msra.mxu0 0.0
        %1586 = vmatprep.subr.mxu0 0.0
        %1587 = vmatpush1.msra.mxu0 0.0
        %1588 = vmatprep.subr.mxu0 0.0
        %1589 = vmatpush1.msra.mxu0 0.0
        %1590 = vmatprep.subr.mxu0 0.0
        %1591 = vmatpush1.msra.mxu0 0.0
        %1592 = vmatprep.subr.mxu0 0.0
        %1593 = vmatpush1.msra.mxu0 0.0
        %1594 = vmatprep.subr.mxu0 0.0
        %1595 = vmatpush1.msra.mxu0 0.0
        %1596 = vmatprep.subr.mxu0 0.0
        %1597 = vmatpush1.msra.mxu0 0.0
        %1598 = vmatprep.subr.mxu0 0.0
        %1599 = vmatpush1.msra.mxu0 0.0
        %1600 = vmatprep.subr.mxu0 0.0
        %1601 = vmatpush1.msra.mxu0 0.0
        %1602 = vmatprep.subr.mxu0 0.0
        %1603 = vmatpush1.msra.mxu0 0.0
        %1604 = vmatprep.subr.mxu0 0.0
        %1605 = vmatpush1.msra.mxu0 0.0
        %1606 = vmatprep.subr.mxu0 0.0
        %1607 = vmatpush1.msra.mxu0 0.0
        %1608 = vmatprep.subr.mxu0 0.0
        %1609 = vmatpush1.msra.mxu0 0.0
        %1610 = vmatprep.subr.mxu0 0.0
        %1611 = vmatpush1.msra.mxu0 0.0
        %1612 = vmatprep.subr.mxu0 0.0
        %1613 = vmatpush1.msra.mxu0 0.0
        %1614 = vmatprep.mubr.f32.mxu0 0.0
        %1615 = vmatmul.mubr.f32.gmra.mrb[0].mxu0 %v1548
        %v1616 = vpop.f32.mrb[0].mxu0
        %v1617 = vadd.f32 0.0, %v1616
        %v1618 = vpop.f32.mrb[0].mxu0
        %v1619 = vadd.f32 0.0, %v1618
        %1620 = vdwg.mxu0
        %1621 = vmatprep.subr.mxu0 %v933
        %1622 = vmatpush1.msra.mxu0 %v932
        %1623 = vmatprep.subr.mxu0 %v937
        %1624 = vmatpush1.msra.mxu0 %v936
        %1625 = vmatprep.subr.mxu0 %v941
        %1626 = vmatpush1.msra.mxu0 %v940
        %1627 = vmatprep.subr.mxu0 %v945
        %1628 = vmatpush1.msra.mxu0 %v944
        %1629 = vmatprep.subr.mxu0 %v949
        %1630 = vmatpush1.msra.mxu0 %v948
        %1631 = vmatprep.subr.mxu0 %v953
        %1632 = vmatpush1.msra.mxu0 %v952
        %1633 = vmatprep.subr.mxu0 %v957
        %1634 = vmatpush1.msra.mxu0 %v956
        %1635 = vmatprep.subr.mxu0 %v961
        %1636 = vmatpush1.msra.mxu0 %v960
        %1637 = vmatprep.subr.mxu0 %v965
        %1638 = vmatpush1.msra.mxu0 %v964
        %1639 = vmatprep.subr.mxu0 %v969
        %1640 = vmatpush1.msra.mxu0 %v968
        %1641 = vmatprep.subr.mxu0 %v973
        %1642 = vmatpush1.msra.mxu0 %v972
        %1643 = vmatprep.subr.mxu0 %v977
        %1644 = vmatpush1.msra.mxu0 %v976
        %1645 = vmatprep.subr.mxu0 %v981
        %1646 = vmatpush1.msra.mxu0 %v980
        %1647 = vmatprep.subr.mxu0 %v985
        %1648 = vmatpush1.msra.mxu0 %v984
        %1649 = vmatprep.subr.mxu0 %v989
        %1650 = vmatpush1.msra.mxu0 %v988
        %1651 = vmatprep.subr.mxu0 %v993
        %1652 = vmatpush1.msra.mxu0 %v992
        %1653 = vmatprep.subr.mxu0 0.0
        %1654 = vmatpush1.msra.mxu0 0.0
        %1655 = vmatprep.subr.mxu0 0.0
        %1656 = vmatpush1.msra.mxu0 0.0
        %1657 = vmatprep.subr.mxu0 0.0
        %1658 = vmatpush1.msra.mxu0 0.0
        %1659 = vmatprep.subr.mxu0 0.0
        %1660 = vmatpush1.msra.mxu0 0.0
        %1661 = vmatprep.subr.mxu0 0.0
        %1662 = vmatpush1.msra.mxu0 0.0
        %1663 = vmatprep.subr.mxu0 0.0
        %1664 = vmatpush1.msra.mxu0 0.0
        %1665 = vmatprep.subr.mxu0 0.0
        %1666 = vmatpush1.msra.mxu0 0.0
        %1667 = vmatprep.subr.mxu0 0.0
        %1668 = vmatpush1.msra.mxu0 0.0
        %1669 = vmatprep.subr.mxu0 0.0
        %1670 = vmatpush1.msra.mxu0 0.0
        %1671 = vmatprep.subr.mxu0 0.0
        %1672 = vmatpush1.msra.mxu0 0.0
        %1673 = vmatprep.subr.mxu0 0.0
        %1674 = vmatpush1.msra.mxu0 0.0
        %1675 = vmatprep.subr.mxu0 0.0
        %1676 = vmatpush1.msra.mxu0 0.0
        %1677 = vmatprep.subr.mxu0 0.0
        %1678 = vmatpush1.msra.mxu0 0.0
        %1679 = vmatprep.subr.mxu0 0.0
        %1680 = vmatpush1.msra.mxu0 0.0
        %1681 = vmatprep.subr.mxu0 0.0
        %1682 = vmatpush1.msra.mxu0 0.0
        %1683 = vmatprep.subr.mxu0 0.0
        %1684 = vmatpush1.msra.mxu0 0.0
        %1685 = vmatprep.mubr.f32.mxu0 0.0
        %1686 = vmatmul.mubr.f32.gmra.mrb[0].mxu0 %v1548
        %v1687 = vpop.f32.mrb[0].mxu0
        %v1688 = vadd.f32 0.0, %v1687
        %v1689 = vpop.f32.mrb[0].mxu0
        %v1690 = vadd.f32 0.0, %v1689
        %1691 = vdwg.mxu0
        %1692 = vmatprep.subr.mxu0 0.0
        %1693 = vmatpush1.msra.mxu0 %v994
        %1694 = vmatprep.subr.mxu0 0.0
        %1695 = vmatpush1.msra.mxu0 %v995
        %1696 = vmatprep.subr.mxu0 0.0
        %1697 = vmatpush1.msra.mxu0 %v996
        %1698 = vmatprep.subr.mxu0 0.0
        %1699 = vmatpush1.msra.mxu0 %v997
        %1700 = vmatprep.subr.mxu0 0.0
        %1701 = vmatpush1.msra.mxu0 %v998
        %1702 = vmatprep.subr.mxu0 0.0
        %1703 = vmatpush1.msra.mxu0 %v999
        %1704 = vmatprep.subr.mxu0 0.0
        %1705 = vmatpush1.msra.mxu0 %v1000
        %1706 = vmatprep.subr.mxu0 0.0
        %1707 = vmatpush1.msra.mxu0 %v1001
        %1708 = vmatprep.subr.mxu0 0.0
        %1709 = vmatpush1.msra.mxu0 %v1002
        %1710 = vmatprep.subr.mxu0 0.0
        %1711 = vmatpush1.msra.mxu0 %v1003
        %1712 = vmatprep.subr.mxu0 0.0
        %1713 = vmatpush1.msra.mxu0 %v1004
        %1714 = vmatprep.subr.mxu0 0.0
        %1715 = vmatpush1.msra.mxu0 %v1005
        %1716 = vmatprep.subr.mxu0 0.0
        %1717 = vmatpush1.msra.mxu0 %v1006
        %1718 = vmatprep.subr.mxu0 0.0
        %1719 = vmatpush1.msra.mxu0 %v1007
        %1720 = vmatprep.subr.mxu0 0.0
        %1721 = vmatpush1.msra.mxu0 %v1008
        %1722 = vmatprep.subr.mxu0 0.0
        %1723 = vmatpush1.msra.mxu0 %v1009
        %1724 = vmatprep.subr.mxu0 0.0
        %1725 = vmatpush1.msra.mxu0 0.0
        %1726 = vmatprep.subr.mxu0 0.0
        %1727 = vmatpush1.msra.mxu0 0.0
        %1728 = vmatprep.subr.mxu0 0.0
        %1729 = vmatpush1.msra.mxu0 0.0
        %1730 = vmatprep.subr.mxu0 0.0
        %1731 = vmatpush1.msra.mxu0 0.0
        %1732 = vmatprep.subr.mxu0 0.0
        %1733 = vmatpush1.msra.mxu0 0.0
        %1734 = vmatprep.subr.mxu0 0.0
        %1735 = vmatpush1.msra.mxu0 0.0
        %1736 = vmatprep.subr.mxu0 0.0
        %1737 = vmatpush1.msra.mxu0 0.0
        %1738 = vmatprep.subr.mxu0 0.0
        %1739 = vmatpush1.msra.mxu0 0.0
        %1740 = vmatprep.subr.mxu0 0.0
        %1741 = vmatpush1.msra.mxu0 0.0
        %1742 = vmatprep.subr.mxu0 0.0
        %1743 = vmatpush1.msra.mxu0 0.0
        %1744 = vmatprep.subr.mxu0 0.0
        %1745 = vmatpush1.msra.mxu0 0.0
        %1746 = vmatprep.subr.mxu0 0.0
        %1747 = vmatpush1.msra.mxu0 0.0
        %1748 = vmatprep.subr.mxu0 0.0
        %1749 = vmatpush1.msra.mxu0 0.0
        %1750 = vmatprep.subr.mxu0 0.0
        %1751 = vmatpush1.msra.mxu0 0.0
        %1752 = vmatprep.subr.mxu0 0.0
        %1753 = vmatpush1.msra.mxu0 0.0
        %1754 = vmatprep.subr.mxu0 0.0
        %1755 = vmatpush1.msra.mxu0 0.0
        %1756 = vmatprep.mubr.f32.mxu0 0.0
        %1757 = vmatmul.mubr.f32.gmra.mrb[0].mxu0 %v1549
        %v1758 = vpop.f32.mrb[0].mxu0
        %v1759 = vadd.f32 %v1157, %v1758
        %v1760 = vpop.f32.mrb[0].mxu0
        %1761 = vdwg.mxu0
        %v1762 = vtanh.pop %v1759
        %s1763 = scalar_lea.vmem %s373, 16 [#allocation7]
        %v1764 = vld [vmem:[%s1763] sm:$0xff]
        %1766 = vset.pattern.permute.xlu0 0
        %1767 = vperm.xlu0 %1766, %v1764
        %v1768 = vpop.permute.xlu0 %1767
        %v1770 = vmul.f32 %v1762, %v1768
        %v1771 = vadd.f32 %v1549, %v1770
        %v1772 = vld [vmem:[#allocation3 + $0x40] sm:$0xff]
        %v1773 = vld [vmem:[#allocation3 + $0x48] sm:$0xff]
        %v1774 = vld [vmem:[#allocation3 + $0x50] sm:$0xff]
        %v1775 = vld [vmem:[#allocation3 + $0x58] sm:$0xff]
        %v1776 = vadd.f32 %v1772, %v1617
        %v1777 = vadd.f32 %v1773, %v1619
        %v1778 = vadd.f32 %v1774, %v1688
        %v1779 = vadd.f32 %v1775, %v1690
        %v1780 = vxor.u32 %v1776, 2147483648
        %v1781 = vxor.u32 %v1777, 2147483648
        %v1782 = vxor.u32 %v1778, 2147483648
        %v1783 = vxor.u32 %v1779, 2147483648
        %v1784 = vmul.f32 %v1780, 1.442695
        %v1785 = vpow.pop %v1784
        %v1786 = vmul.f32 %v1781, 1.442695
        %v1787 = vpow.pop %v1786
        %v1788 = vmul.f32 %v1782, 1.442695
        %v1789 = vpow.pop %v1788
        %v1790 = vmul.f32 %v1783, 1.442695
        %v1791 = vpow.pop %v1790
        %v1792 = vadd.f32 %v1785, 1.0
        %v1793 = vadd.f32 %v1787, 1.0
        %v1794 = vadd.f32 %v1789, 1.0
        %v1795 = vadd.f32 %v1791, 1.0
        %v1796 = vrcp.pop %v1792
        %v1797 = vmul.f32 1.0, %v1796
        %v1798 = vrcp.pop %v1793
        %v1799 = vmul.f32 1.0, %v1798
        %v1800 = vrcp.pop %v1794
        %v1801 = vmul.f32 1.0, %v1800
        %v1802 = vrcp.pop %v1795
        %v1803 = vmul.f32 1.0, %v1802
        %v1804 = vmul.f32 %v1797, %v1771
        %v1805 = vmul.f32 %v1799, %v1803
        %v1806 = vadd.f32 %v1804, %v1805
        %v1807 = vtanh.pop %v1806
        %v1808 = vmul.f32 %v1801, %v1807
        %1809 = vst [vmem:[%s428 + $0x10] sm:$0xff] %v1808
        %s1810 = sadd.s32 %s1276, 2
        %p1811 = scmp.lt.s32.totalorder %s1810, 20
        %s1812 = scalar_select %p1811, 1, 0
        %v1813 = vstv %s1812
        %vm1814 = vcmp.eq.s32.totalorder %v1813, 1
        %v1815 = vsel %vm1814, %v1808, %v1548
        %v1816 = vsel %vm1814, %v1806, %v1549
        %1817 = vmatprep.subr.mxu0 %v931
        %1818 = vmatpush1.msra.mxu0 %v930
        %1819 = vmatprep.subr.mxu0 %v935
        %1820 = vmatpush1.msra.mxu0 %v934
        %1821 = vmatprep.subr.mxu0 %v939
        %1822 = vmatpush1.msra.mxu0 %v938
        %1823 = vmatprep.subr.mxu0 %v943
        %1824 = vmatpush1.msra.mxu0 %v942
        %1825 = vmatprep.subr.mxu0 %v947
        %1826 = vmatpush1.msra.mxu0 %v946
        %1827 = vmatprep.subr.mxu0 %v951
        %1828 = vmatpush1.msra.mxu0 %v950
        %1829 = vmatprep.subr.mxu0 %v955
        %1830 = vmatpush1.msra.mxu0 %v954
        %1831 = vmatprep.subr.mxu0 %v959
        %1832 = vmatpush1.msra.mxu0 %v958
        %1833 = vmatprep.subr.mxu0 %v963
        %1834 = vmatpush1.msra.mxu0 %v962
        %1835 = vmatprep.subr.mxu0 %v967
        %1836 = vmatpush1.msra.mxu0 %v966
        %1837 = vmatprep.subr.mxu0 %v971
        %1838 = vmatpush1.msra.mxu0 %v970
        %1839 = vmatprep.subr.mxu0 %v975
        %1840 = vmatpush1.msra.mxu0 %v974
        %1841 = vmatprep.subr.mxu0 %v979
        %1842 = vmatpush1.msra.mxu0 %v978
        %1843 = vmatprep.subr.mxu0 %v983
        %1844 = vmatpush1.msra.mxu0 %v982
        %1845 = vmatprep.subr.mxu0 %v987
        %1846 = vmatpush1.msra.mxu0 %v986
        %1847 = vmatprep.subr.mxu0 %v991
        %1848 = vmatpush1.msra.mxu0 %v990
        %1849 = vmatprep.subr.mxu0 0.0
        %1850 = vmatpush1.msra.mxu0 0.0
        %1851 = vmatprep.subr.mxu0 0.0
        %1852 = vmatpush1.msra.mxu0 0.0
        %1853 = vmatprep.subr.mxu0 0.0
        %1854 = vmatpush1.msra.mxu0 0.0
        %1855 = vmatprep.subr.mxu0 0.0
        %1856 = vmatpush1.msra.mxu0 0.0
        %1857 = vmatprep.subr.mxu0 0.0
        %1858 = vmatpush1.msra.mxu0 0.0
        %1859 = vmatprep.subr.mxu0 0.0
        %1860 = vmatpush1.msra.mxu0 0.0
        %1861 = vmatprep.subr.mxu0 0.0
        %1862 = vmatpush1.msra.mxu0 0.0
        %1863 = vmatprep.subr.mxu0 0.0
        %1864 = vmatpush1.msra.mxu0 0.0
        %1865 = vmatprep.subr.mxu0 0.0
        %1866 = vmatpush1.msra.mxu0 0.0
        %1867 = vmatprep.subr.mxu0 0.0
        %1868 = vmatpush1.msra.mxu0 0.0
        %1869 = vmatprep.subr.mxu0 0.0
        %1870 = vmatpush1.msra.mxu0 0.0
        %1871 = vmatprep.subr.mxu0 0.0
        %1872 = vmatpush1.msra.mxu0 0.0
        %1873 = vmatprep.subr.mxu0 0.0
        %1874 = vmatpush1.msra.mxu0 0.0
        %1875 = vmatprep.subr.mxu0 0.0
        %1876 = vmatpush1.msra.mxu0 0.0
        %1877 = vmatprep.subr.mxu0 0.0
        %1878 = vmatpush1.msra.mxu0 0.0
        %1879 = vmatprep.subr.mxu0 0.0
        %1880 = vmatpush1.msra.mxu0 0.0
        %1881 = vmatprep.mubr.f32.mxu0 0.0
        %1882 = vmatmul.mubr.f32.gmra.mrb[0].mxu0 %v1815
        %v1883 = vpop.f32.mrb[0].mxu0
        %v1884 = vadd.f32 0.0, %v1883
        %v1885 = vpop.f32.mrb[0].mxu0
        %v1886 = vadd.f32 0.0, %v1885
        %1887 = vdwg.mxu0
        %1888 = vmatprep.subr.mxu0 %v933
        %1889 = vmatpush1.msra.mxu0 %v932
        %1890 = vmatprep.subr.mxu0 %v937
        %1891 = vmatpush1.msra.mxu0 %v936
        %1892 = vmatprep.subr.mxu0 %v941
        %1893 = vmatpush1.msra.mxu0 %v940
        %1894 = vmatprep.subr.mxu0 %v945
        %1895 = vmatpush1.msra.mxu0 %v944
        %1896 = vmatprep.subr.mxu0 %v949
        %1897 = vmatpush1.msra.mxu0 %v948
        %1898 = vmatprep.subr.mxu0 %v953
        %1899 = vmatpush1.msra.mxu0 %v952
        %1900 = vmatprep.subr.mxu0 %v957
        %1901 = vmatpush1.msra.mxu0 %v956
        %1902 = vmatprep.subr.mxu0 %v961
        %1903 = vmatpush1.msra.mxu0 %v960
        %1904 = vmatprep.subr.mxu0 %v965
        %1905 = vmatpush1.msra.mxu0 %v964
        %1906 = vmatprep.subr.mxu0 %v969
        %1907 = vmatpush1.msra.mxu0 %v968
        %1908 = vmatprep.subr.mxu0 %v973
        %1909 = vmatpush1.msra.mxu0 %v972
        %1910 = vmatprep.subr.mxu0 %v977
        %1911 = vmatpush1.msra.mxu0 %v976
        %1912 = vmatprep.subr.mxu0 %v981
        %1913 = vmatpush1.msra.mxu0 %v980
        %1914 = vmatprep.subr.mxu0 %v985
        %1915 = vmatpush1.msra.mxu0 %v984
        %1916 = vmatprep.subr.mxu0 %v989
        %1917 = vmatpush1.msra.mxu0 %v988
        %1918 = vmatprep.subr.mxu0 %v993
        %1919 = vmatpush1.msra.mxu0 %v992
        %1920 = vmatprep.subr.mxu0 0.0
        %1921 = vmatpush1.msra.mxu0 0.0
        %1922 = vmatprep.subr.mxu0 0.0
        %1923 = vmatpush1.msra.mxu0 0.0
        %1924 = vmatprep.subr.mxu0 0.0
        %1925 = vmatpush1.msra.mxu0 0.0
        %1926 = vmatprep.subr.mxu0 0.0
        %1927 = vmatpush1.msra.mxu0 0.0
        %1928 = vmatprep.subr.mxu0 0.0
        %1929 = vmatpush1.msra.mxu0 0.0
        %1930 = vmatprep.subr.mxu0 0.0
        %1931 = vmatpush1.msra.mxu0 0.0
        %1932 = vmatprep.subr.mxu0 0.0
        %1933 = vmatpush1.msra.mxu0 0.0
        %1934 = vmatprep.subr.mxu0 0.0
        %1935 = vmatpush1.msra.mxu0 0.0
        %1936 = vmatprep.subr.mxu0 0.0
        %1937 = vmatpush1.msra.mxu0 0.0
        %1938 = vmatprep.subr.mxu0 0.0
        %1939 = vmatpush1.msra.mxu0 0.0
        %1940 = vmatprep.subr.mxu0 0.0
        %1941 = vmatpush1.msra.mxu0 0.0
        %1942 = vmatprep.subr.mxu0 0.0
        %1943 = vmatpush1.msra.mxu0 0.0
        %1944 = vmatprep.subr.mxu0 0.0
        %1945 = vmatpush1.msra.mxu0 0.0
        %1946 = vmatprep.subr.mxu0 0.0
        %1947 = vmatpush1.msra.mxu0 0.0
        %1948 = vmatprep.subr.mxu0 0.0
        %1949 = vmatpush1.msra.mxu0 0.0
        %1950 = vmatprep.subr.mxu0 0.0
        %1951 = vmatpush1.msra.mxu0 0.0
        %1952 = vmatprep.mubr.f32.mxu0 0.0
        %1953 = vmatmul.mubr.f32.gmra.mrb[0].mxu0 %v1815
        %v1954 = vpop.f32.mrb[0].mxu0
        %v1955 = vadd.f32 0.0, %v1954
        %v1956 = vpop.f32.mrb[0].mxu0
        %v1957 = vadd.f32 0.0, %v1956
        %1958 = vdwg.mxu0
        %1959 = vmatprep.subr.mxu0 0.0
        %1960 = vmatpush1.msra.mxu0 %v994
        %1961 = vmatprep.subr.mxu0 0.0
        %1962 = vmatpush1.msra.mxu0 %v995
        %1963 = vmatprep.subr.mxu0 0.0
        %1964 = vmatpush1.msra.mxu0 %v996
        %1965 = vmatprep.subr.mxu0 0.0
        %1966 = vmatpush1.msra.mxu0 %v997
        %1967 = vmatprep.subr.mxu0 0.0
        %1968 = vmatpush1.msra.mxu0 %v998
        %1969 = vmatprep.subr.mxu0 0.0
        %1970 = vmatpush1.msra.mxu0 %v999
        %1971 = vmatprep.subr.mxu0 0.0
        %1972 = vmatpush1.msra.mxu0 %v1000
        %1973 = vmatprep.subr.mxu0 0.0
        %1974 = vmatpush1.msra.mxu0 %v1001
        %1975 = vmatprep.subr.mxu0 0.0
        %1976 = vmatpush1.msra.mxu0 %v1002
        %1977 = vmatprep.subr.mxu0 0.0
        %1978 = vmatpush1.msra.mxu0 %v1003
        %1979 = vmatprep.subr.mxu0 0.0
        %1980 = vmatpush1.msra.mxu0 %v1004
        %1981 = vmatprep.subr.mxu0 0.0
        %1982 = vmatpush1.msra.mxu0 %v1005
        %1983 = vmatprep.subr.mxu0 0.0
        %1984 = vmatpush1.msra.mxu0 %v1006
        %1985 = vmatprep.subr.mxu0 0.0
        %1986 = vmatpush1.msra.mxu0 %v1007
        %1987 = vmatprep.subr.mxu0 0.0
        %1988 = vmatpush1.msra.mxu0 %v1008
        %1989 = vmatprep.subr.mxu0 0.0
        %1990 = vmatpush1.msra.mxu0 %v1009
        %1991 = vmatprep.subr.mxu0 0.0
        %1992 = vmatpush1.msra.mxu0 0.0
        %1993 = vmatprep.subr.mxu0 0.0
        %1994 = vmatpush1.msra.mxu0 0.0
        %1995 = vmatprep.subr.mxu0 0.0
        %1996 = vmatpush1.msra.mxu0 0.0
        %1997 = vmatprep.subr.mxu0 0.0
        %1998 = vmatpush1.msra.mxu0 0.0
        %1999 = vmatprep.subr.mxu0 0.0
        %2000 = vmatpush1.msra.mxu0 0.0
        %2001 = vmatprep.subr.mxu0 0.0
        %2002 = vmatpush1.msra.mxu0 0.0
        %2003 = vmatprep.subr.mxu0 0.0
        %2004 = vmatpush1.msra.mxu0 0.0
        %2005 = vmatprep.subr.mxu0 0.0
        %2006 = vmatpush1.msra.mxu0 0.0
        %2007 = vmatprep.subr.mxu0 0.0
        %2008 = vmatpush1.msra.mxu0 0.0
        %2009 = vmatprep.subr.mxu0 0.0
        %2010 = vmatpush1.msra.mxu0 0.0
        %2011 = vmatprep.subr.mxu0 0.0
        %2012 = vmatpush1.msra.mxu0 0.0
        %2013 = vmatprep.subr.mxu0 0.0
        %2014 = vmatpush1.msra.mxu0 0.0
        %2015 = vmatprep.subr.mxu0 0.0
        %2016 = vmatpush1.msra.mxu0 0.0
        %2017 = vmatprep.subr.mxu0 0.0
        %2018 = vmatpush1.msra.mxu0 0.0
        %2019 = vmatprep.subr.mxu0 0.0
        %2020 = vmatpush1.msra.mxu0 0.0
        %2021 = vmatprep.subr.mxu0 0.0
        %2022 = vmatpush1.msra.mxu0 0.0
        %2023 = vmatprep.mubr.f32.mxu0 0.0
        %2024 = vmatmul.mubr.f32.gmra.mrb[0].mxu0 %v1816
        %v2025 = vpop.f32.mrb[0].mxu0
        %v2026 = vadd.f32 %v1157, %v2025
        %v2027 = vpop.f32.mrb[0].mxu0
        %2028 = vdwg.mxu0
        %v2029 = vtanh.pop %v2026
        %s2030 = scalar_lea.vmem %s373, 24 [#allocation7]
        %v2031 = vld [vmem:[%s2030] sm:$0xff]
        %2033 = vset.pattern.permute.xlu0 0
        %2034 = vperm.xlu0 %2033, %v2031
        %v2035 = vpop.permute.xlu0 %2034
        %v2037 = vmul.f32 %v2029, %v2035
        %v2038 = vadd.f32 %v1816, %v2037
        %v2039 = vld [vmem:[#allocation3 + $0x60] sm:$0xff]
        %v2040 = vld [vmem:[#allocation3 + $0x68] sm:$0xff]
        %v2041 = vld [vmem:[#allocation3 + $0x70] sm:$0xff]
        %v2042 = vld [vmem:[#allocation3 + $0x78] sm:$0xff]
        %v2043 = vadd.f32 %v2039, %v1884
        %v2044 = vadd.f32 %v2040, %v1886
        %v2045 = vadd.f32 %v2041, %v1955
        %v2046 = vadd.f32 %v2042, %v1957
        %v2047 = vxor.u32 %v2043, 2147483648
        %v2048 = vxor.u32 %v2044, 2147483648
        %v2049 = vxor.u32 %v2045, 2147483648
        %v2050 = vxor.u32 %v2046, 2147483648
        %v2051 = vmul.f32 %v2047, 1.442695
        %v2052 = vpow.pop %v2051
        %v2053 = vmul.f32 %v2048, 1.442695
        %v2054 = vpow.pop %v2053
        %v2055 = vmul.f32 %v2049, 1.442695
        %v2056 = vpow.pop %v2055
        %v2057 = vmul.f32 %v2050, 1.442695
        %v2058 = vpow.pop %v2057
        %v2059 = vadd.f32 %v2052, 1.0
        %v2060 = vadd.f32 %v2054, 1.0
        %v2061 = vadd.f32 %v2056, 1.0
        %v2062 = vadd.f32 %v2058, 1.0
        %v2063 = vrcp.pop %v2059
        %v2064 = vmul.f32 1.0, %v2063
        %v2065 = vrcp.pop %v2060
        %v2066 = vmul.f32 1.0, %v2065
        %v2067 = vrcp.pop %v2061
        %v2068 = vmul.f32 1.0, %v2067
        %v2069 = vrcp.pop %v2062
        %v2070 = vmul.f32 1.0, %v2069
        %v2071 = vmul.f32 %v2064, %v2038
        %v2072 = vmul.f32 %v2066, %v2070
        %v2073 = vadd.f32 %v2071, %v2072
        %v2074 = vtanh.pop %v2073
        %v2075 = vmul.f32 %v2068, %v2074
        %2076 = vst [vmem:[%s428 + $0x18] sm:$0xff] %v2075
        %s2077 = sadd.s32 %s1276, 3
        %p2078 = scmp.lt.s32.totalorder %s2077, 20
        %s2079 = scalar_select %p2078, 1, 0
        %v2080 = vstv %s2079
        %vm2081 = vcmp.eq.s32.totalorder %v2080, 1
        %v2082 = vsel %vm2081, %v2075, %v1815
        %v2083 = vsel %vm2081, %v2073, %v1816
        %2084 = vmatprep.subr.mxu0 %v931
        %2085 = vmatpush1.msra.mxu0 %v930
        %2086 = vmatprep.subr.mxu0 %v935
        %2087 = vmatpush1.msra.mxu0 %v934
        %2088 = vmatprep.subr.mxu0 %v939
        %2089 = vmatpush1.msra.mxu0 %v938
        %2090 = vmatprep.subr.mxu0 %v943
        %2091 = vmatpush1.msra.mxu0 %v942
        %2092 = vmatprep.subr.mxu0 %v947
        %2093 = vmatpush1.msra.mxu0 %v946
        %2094 = vmatprep.subr.mxu0 %v951
        %2095 = vmatpush1.msra.mxu0 %v950
        %2096 = vmatprep.subr.mxu0 %v955
        %2097 = vmatpush1.msra.mxu0 %v954
        %2098 = vmatprep.subr.mxu0 %v959
        %2099 = vmatpush1.msra.mxu0 %v958
        %2100 = vmatprep.subr.mxu0 %v963
        %2101 = vmatpush1.msra.mxu0 %v962
        %2102 = vmatprep.subr.mxu0 %v967
        %2103 = vmatpush1.msra.mxu0 %v966
        %2104 = vmatprep.subr.mxu0 %v971
        %2105 = vmatpush1.msra.mxu0 %v970
        %2106 = vmatprep.subr.mxu0 %v975
        %2107 = vmatpush1.msra.mxu0 %v974
        %2108 = vmatprep.subr.mxu0 %v979
        %2109 = vmatpush1.msra.mxu0 %v978
        %2110 = vmatprep.subr.mxu0 %v983
        %2111 = vmatpush1.msra.mxu0 %v982
        %2112 = vmatprep.subr.mxu0 %v987
        %2113 = vmatpush1.msra.mxu0 %v986
        %2114 = vmatprep.subr.mxu0 %v991
        %2115 = vmatpush1.msra.mxu0 %v990
        %2116 = vmatprep.subr.mxu0 0.0
        %2117 = vmatpush1.msra.mxu0 0.0
        %2118 = vmatprep.subr.mxu0 0.0
        %2119 = vmatpush1.msra.mxu0 0.0
        %2120 = vmatprep.subr.mxu0 0.0
        %2121 = vmatpush1.msra.mxu0 0.0
        %2122 = vmatprep.subr.mxu0 0.0
        %2123 = vmatpush1.msra.mxu0 0.0
        %2124 = vmatprep.subr.mxu0 0.0
        %2125 = vmatpush1.msra.mxu0 0.0
        %2126 = vmatprep.subr.mxu0 0.0
        %2127 = vmatpush1.msra.mxu0 0.0
        %2128 = vmatprep.subr.mxu0 0.0
        %2129 = vmatpush1.msra.mxu0 0.0
        %2130 = vmatprep.subr.mxu0 0.0
        %2131 = vmatpush1.msra.mxu0 0.0
        %2132 = vmatprep.subr.mxu0 0.0
        %2133 = vmatpush1.msra.mxu0 0.0
        %2134 = vmatprep.subr.mxu0 0.0
        %2135 = vmatpush1.msra.mxu0 0.0
        %2136 = vmatprep.subr.mxu0 0.0
        %2137 = vmatpush1.msra.mxu0 0.0
        %2138 = vmatprep.subr.mxu0 0.0
        %2139 = vmatpush1.msra.mxu0 0.0
        %2140 = vmatprep.subr.mxu0 0.0
        %2141 = vmatpush1.msra.mxu0 0.0
        %2142 = vmatprep.subr.mxu0 0.0
        %2143 = vmatpush1.msra.mxu0 0.0
        %2144 = vmatprep.subr.mxu0 0.0
        %2145 = vmatpush1.msra.mxu0 0.0
        %2146 = vmatprep.subr.mxu0 0.0
        %2147 = vmatpush1.msra.mxu0 0.0
        %2148 = vmatprep.mubr.f32.mxu0 0.0
        %2149 = vmatmul.mubr.f32.gmra.mrb[0].mxu0 %v2082
        %v2150 = vpop.f32.mrb[0].mxu0
        %v2151 = vadd.f32 0.0, %v2150
        %v2152 = vpop.f32.mrb[0].mxu0
        %v2153 = vadd.f32 0.0, %v2152
        %2154 = vdwg.mxu0
        %2155 = vmatprep.subr.mxu0 %v933
        %2156 = vmatpush1.msra.mxu0 %v932
        %2157 = vmatprep.subr.mxu0 %v937
        %2158 = vmatpush1.msra.mxu0 %v936
        %2159 = vmatprep.subr.mxu0 %v941
        %2160 = vmatpush1.msra.mxu0 %v940
        %2161 = vmatprep.subr.mxu0 %v945
        %2162 = vmatpush1.msra.mxu0 %v944
        %2163 = vmatprep.subr.mxu0 %v949
        %2164 = vmatpush1.msra.mxu0 %v948
        %2165 = vmatprep.subr.mxu0 %v953
        %2166 = vmatpush1.msra.mxu0 %v952
        %2167 = vmatprep.subr.mxu0 %v957
        %2168 = vmatpush1.msra.mxu0 %v956
        %2169 = vmatprep.subr.mxu0 %v961
        %2170 = vmatpush1.msra.mxu0 %v960
        %2171 = vmatprep.subr.mxu0 %v965
        %2172 = vmatpush1.msra.mxu0 %v964
        %2173 = vmatprep.subr.mxu0 %v969
        %2174 = vmatpush1.msra.mxu0 %v968
        %2175 = vmatprep.subr.mxu0 %v973
        %2176 = vmatpush1.msra.mxu0 %v972
        %2177 = vmatprep.subr.mxu0 %v977
        %2178 = vmatpush1.msra.mxu0 %v976
        %2179 = vmatprep.subr.mxu0 %v981
        %2180 = vmatpush1.msra.mxu0 %v980
        %2181 = vmatprep.subr.mxu0 %v985
        %2182 = vmatpush1.msra.mxu0 %v984
        %2183 = vmatprep.subr.mxu0 %v989
        %2184 = vmatpush1.msra.mxu0 %v988
        %2185 = vmatprep.subr.mxu0 %v993
        %2186 = vmatpush1.msra.mxu0 %v992
        %2187 = vmatprep.subr.mxu0 0.0
        %2188 = vmatpush1.msra.mxu0 0.0
        %2189 = vmatprep.subr.mxu0 0.0
        %2190 = vmatpush1.msra.mxu0 0.0
        %2191 = vmatprep.subr.mxu0 0.0
        %2192 = vmatpush1.msra.mxu0 0.0
        %2193 = vmatprep.subr.mxu0 0.0
        %2194 = vmatpush1.msra.mxu0 0.0
        %2195 = vmatprep.subr.mxu0 0.0
        %2196 = vmatpush1.msra.mxu0 0.0
        %2197 = vmatprep.subr.mxu0 0.0
        %2198 = vmatpush1.msra.mxu0 0.0
        %2199 = vmatprep.subr.mxu0 0.0
        %2200 = vmatpush1.msra.mxu0 0.0
        %2201 = vmatprep.subr.mxu0 0.0
        %2202 = vmatpush1.msra.mxu0 0.0
        %2203 = vmatprep.subr.mxu0 0.0
        %2204 = vmatpush1.msra.mxu0 0.0
        %2205 = vmatprep.subr.mxu0 0.0
        %2206 = vmatpush1.msra.mxu0 0.0
        %2207 = vmatprep.subr.mxu0 0.0
        %2208 = vmatpush1.msra.mxu0 0.0
        %2209 = vmatprep.subr.mxu0 0.0
        %2210 = vmatpush1.msra.mxu0 0.0
        %2211 = vmatprep.subr.mxu0 0.0
        %2212 = vmatpush1.msra.mxu0 0.0
        %2213 = vmatprep.subr.mxu0 0.0
        %2214 = vmatpush1.msra.mxu0 0.0
        %2215 = vmatprep.subr.mxu0 0.0
        %2216 = vmatpush1.msra.mxu0 0.0
        %2217 = vmatprep.subr.mxu0 0.0
        %2218 = vmatpush1.msra.mxu0 0.0
        %2219 = vmatprep.mubr.f32.mxu0 0.0
        %2220 = vmatmul.mubr.f32.gmra.mrb[0].mxu0 %v2082
        %v2221 = vpop.f32.mrb[0].mxu0
        %v2222 = vadd.f32 0.0, %v2221
        %v2223 = vpop.f32.mrb[0].mxu0
        %v2224 = vadd.f32 0.0, %v2223
        %2225 = vdwg.mxu0
        %2226 = vmatprep.subr.mxu0 0.0
        %2227 = vmatpush1.msra.mxu0 %v994
        %2228 = vmatprep.subr.mxu0 0.0
        %2229 = vmatpush1.msra.mxu0 %v995
        %2230 = vmatprep.subr.mxu0 0.0
        %2231 = vmatpush1.msra.mxu0 %v996
        %2232 = vmatprep.subr.mxu0 0.0
        %2233 = vmatpush1.msra.mxu0 %v997
        %2234 = vmatprep.subr.mxu0 0.0
        %2235 = vmatpush1.msra.mxu0 %v998
        %2236 = vmatprep.subr.mxu0 0.0
        %2237 = vmatpush1.msra.mxu0 %v999
        %2238 = vmatprep.subr.mxu0 0.0
        %2239 = vmatpush1.msra.mxu0 %v1000
        %2240 = vmatprep.subr.mxu0 0.0
        %2241 = vmatpush1.msra.mxu0 %v1001
        %2242 = vmatprep.subr.mxu0 0.0
        %2243 = vmatpush1.msra.mxu0 %v1002
        %2244 = vmatprep.subr.mxu0 0.0
        %2245 = vmatpush1.msra.mxu0 %v1003
        %2246 = vmatprep.subr.mxu0 0.0
        %2247 = vmatpush1.msra.mxu0 %v1004
        %2248 = vmatprep.subr.mxu0 0.0
        %2249 = vmatpush1.msra.mxu0 %v1005
        %2250 = vmatprep.subr.mxu0 0.0
        %2251 = vmatpush1.msra.mxu0 %v1006
        %2252 = vmatprep.subr.mxu0 0.0
        %2253 = vmatpush1.msra.mxu0 %v1007
        %2254 = vmatprep.subr.mxu0 0.0
        %2255 = vmatpush1.msra.mxu0 %v1008
        %2256 = vmatprep.subr.mxu0 0.0
        %2257 = vmatpush1.msra.mxu0 %v1009
        %2258 = vmatprep.subr.mxu0 0.0
        %2259 = vmatpush1.msra.mxu0 0.0
        %2260 = vmatprep.subr.mxu0 0.0
        %2261 = vmatpush1.msra.mxu0 0.0
        %2262 = vmatprep.subr.mxu0 0.0
        %2263 = vmatpush1.msra.mxu0 0.0
        %2264 = vmatprep.subr.mxu0 0.0
        %2265 = vmatpush1.msra.mxu0 0.0
        %2266 = vmatprep.subr.mxu0 0.0
        %2267 = vmatpush1.msra.mxu0 0.0
        %2268 = vmatprep.subr.mxu0 0.0
        %2269 = vmatpush1.msra.mxu0 0.0
        %2270 = vmatprep.subr.mxu0 0.0
        %2271 = vmatpush1.msra.mxu0 0.0
        %2272 = vmatprep.subr.mxu0 0.0
        %2273 = vmatpush1.msra.mxu0 0.0
        %2274 = vmatprep.subr.mxu0 0.0
        %2275 = vmatpush1.msra.mxu0 0.0
        %2276 = vmatprep.subr.mxu0 0.0
        %2277 = vmatpush1.msra.mxu0 0.0
        %2278 = vmatprep.subr.mxu0 0.0
        %2279 = vmatpush1.msra.mxu0 0.0
        %2280 = vmatprep.subr.mxu0 0.0
        %2281 = vmatpush1.msra.mxu0 0.0
        %2282 = vmatprep.subr.mxu0 0.0
        %2283 = vmatpush1.msra.mxu0 0.0
        %2284 = vmatprep.subr.mxu0 0.0
        %2285 = vmatpush1.msra.mxu0 0.0
        %2286 = vmatprep.subr.mxu0 0.0
        %2287 = vmatpush1.msra.mxu0 0.0
        %2288 = vmatprep.subr.mxu0 0.0
        %2289 = vmatpush1.msra.mxu0 0.0
        %2290 = vmatprep.mubr.f32.mxu0 0.0
        %2291 = vmatmul.mubr.f32.gmra.mrb[0].mxu0 %v2083
        %v2292 = vpop.f32.mrb[0].mxu0
        %v2293 = vadd.f32 %v1157, %v2292
        %v2294 = vpop.f32.mrb[0].mxu0
        %2295 = vdwg.mxu0
        %v2296 = vtanh.pop %v2293
        %s2297 = scalar_lea.vmem %s373, 32 [#allocation7]
        %v2298 = vld [vmem:[%s2297] sm:$0xff]
        %2300 = vset.pattern.permute.xlu0 0
        %2301 = vperm.xlu0 %2300, %v2298
        %v2302 = vpop.permute.xlu0 %2301
        %v2304 = vmul.f32 %v2296, %v2302
        %v2305 = vadd.f32 %v2083, %v2304
        %v2306 = vld [vmem:[#allocation3 + $0x80] sm:$0xff]
        %v2307 = vld [vmem:[#allocation3 + $0x88] sm:$0xff]
        %v2308 = vld [vmem:[#allocation3 + $0x90] sm:$0xff]
        %v2309 = vld [vmem:[#allocation3 + $0x98] sm:$0xff]
        %v2310 = vadd.f32 %v2306, %v2151
        %v2311 = vadd.f32 %v2307, %v2153
        %v2312 = vadd.f32 %v2308, %v2222
        %v2313 = vadd.f32 %v2309, %v2224
        %v2314 = vxor.u32 %v2310, 2147483648
        %v2315 = vxor.u32 %v2311, 2147483648
        %v2316 = vxor.u32 %v2312, 2147483648
        %v2317 = vxor.u32 %v2313, 2147483648
        %v2318 = vmul.f32 %v2314, 1.442695
        %v2319 = vpow.pop %v2318
        %v2320 = vmul.f32 %v2315, 1.442695
        %v2321 = vpow.pop %v2320
        %v2322 = vmul.f32 %v2316, 1.442695
        %v2323 = vpow.pop %v2322
        %v2324 = vmul.f32 %v2317, 1.442695
        %v2325 = vpow.pop %v2324
        %v2326 = vadd.f32 %v2319, 1.0
        %v2327 = vadd.f32 %v2321, 1.0
        %v2328 = vadd.f32 %v2323, 1.0
        %v2329 = vadd.f32 %v2325, 1.0
        %v2330 = vrcp.pop %v2326
        %v2331 = vmul.f32 1.0, %v2330
        %v2332 = vrcp.pop %v2327
        %v2333 = vmul.f32 1.0, %v2332
        %v2334 = vrcp.pop %v2328
        %v2335 = vmul.f32 1.0, %v2334
        %v2336 = vrcp.pop %v2329
        %v2337 = vmul.f32 1.0, %v2336
        %v2338 = vmul.f32 %v2331, %v2305
        %v2339 = vmul.f32 %v2333, %v2337
        %v2340 = vadd.f32 %v2338, %v2339
        %v2341 = vtanh.pop %v2340
        %v2342 = vmul.f32 %v2335, %v2341
        %2343 = vst [vmem:[%s428 + $0x20] sm:$0xff] %v2342
        %s2344 = sadd.s32 %s1276, 4
        %p2345 = scmp.lt.s32.totalorder %s2344, 20
        %s2346 = scalar_select %p2345, 1, 0
        %v2347 = vstv %s2346
        %vm2348 = vcmp.eq.s32.totalorder %v2347, 1
        %v2349 = vsel %vm2348, %v2342, %v2082
        %v2350 = vsel %vm2348, %v2340, %v2083
        %2351 = vmatprep.subr.mxu0 %v931
        %2352 = vmatpush1.msra.mxu0 %v930
        %2353 = vmatprep.subr.mxu0 %v935
        %2354 = vmatpush1.msra.mxu0 %v934
        %2355 = vmatprep.subr.mxu0 %v939
        %2356 = vmatpush1.msra.mxu0 %v938
        %2357 = vmatprep.subr.mxu0 %v943
        %2358 = vmatpush1.msra.mxu0 %v942
        %2359 = vmatprep.subr.mxu0 %v947
        %2360 = vmatpush1.msra.mxu0 %v946
        %2361 = vmatprep.subr.mxu0 %v951
        %2362 = vmatpush1.msra.mxu0 %v950
        %2363 = vmatprep.subr.mxu0 %v955
        %2364 = vmatpush1.msra.mxu0 %v954
        %2365 = vmatprep.subr.mxu0 %v959
        %2366 = vmatpush1.msra.mxu0 %v958
        %2367 = vmatprep.subr.mxu0 %v963
        %2368 = vmatpush1.msra.mxu0 %v962
        %2369 = vmatprep.subr.mxu0 %v967
        %2370 = vmatpush1.msra.mxu0 %v966
        %2371 = vmatprep.subr.mxu0 %v971
        %2372 = vmatpush1.msra.mxu0 %v970
        %2373 = vmatprep.subr.mxu0 %v975
        %2374 = vmatpush1.msra.mxu0 %v974
        %2375 = vmatprep.subr.mxu0 %v979
        %2376 = vmatpush1.msra.mxu0 %v978
        %2377 = vmatprep.subr.mxu0 %v983
        %2378 = vmatpush1.msra.mxu0 %v982
        %2379 = vmatprep.subr.mxu0 %v987
        %2380 = vmatpush1.msra.mxu0 %v986
        %2381 = vmatprep.subr.mxu0 %v991
        %2382 = vmatpush1.msra.mxu0 %v990
        %2383 = vmatprep.subr.mxu0 0.0
        %2384 = vmatpush1.msra.mxu0 0.0
        %2385 = vmatprep.subr.mxu0 0.0
        %2386 = vmatpush1.msra.mxu0 0.0
        %2387 = vmatprep.subr.mxu0 0.0
        %2388 = vmatpush1.msra.mxu0 0.0
        %2389 = vmatprep.subr.mxu0 0.0
        %2390 = vmatpush1.msra.mxu0 0.0
        %2391 = vmatprep.subr.mxu0 0.0
        %2392 = vmatpush1.msra.mxu0 0.0
        %2393 = vmatprep.subr.mxu0 0.0
        %2394 = vmatpush1.msra.mxu0 0.0
        %2395 = vmatprep.subr.mxu0 0.0
        %2396 = vmatpush1.msra.mxu0 0.0
        %2397 = vmatprep.subr.mxu0 0.0
        %2398 = vmatpush1.msra.mxu0 0.0
        %2399 = vmatprep.subr.mxu0 0.0
        %2400 = vmatpush1.msra.mxu0 0.0
        %2401 = vmatprep.subr.mxu0 0.0
        %2402 = vmatpush1.msra.mxu0 0.0
        %2403 = vmatprep.subr.mxu0 0.0
        %2404 = vmatpush1.msra.mxu0 0.0
        %2405 = vmatprep.subr.mxu0 0.0
        %2406 = vmatpush1.msra.mxu0 0.0
        %2407 = vmatprep.subr.mxu0 0.0
        %2408 = vmatpush1.msra.mxu0 0.0
        %2409 = vmatprep.subr.mxu0 0.0
        %2410 = vmatpush1.msra.mxu0 0.0
        %2411 = vmatprep.subr.mxu0 0.0
        %2412 = vmatpush1.msra.mxu0 0.0
        %2413 = vmatprep.subr.mxu0 0.0
        %2414 = vmatpush1.msra.mxu0 0.0
        %2415 = vmatprep.mubr.f32.mxu0 0.0
        %2416 = vmatmul.mubr.f32.gmra.mrb[0].mxu0 %v2349
        %v2417 = vpop.f32.mrb[0].mxu0
        %v2418 = vadd.f32 0.0, %v2417
        %v2419 = vpop.f32.mrb[0].mxu0
        %v2420 = vadd.f32 0.0, %v2419
        %2421 = vdwg.mxu0
        %2422 = vmatprep.subr.mxu0 %v933
        %2423 = vmatpush1.msra.mxu0 %v932
        %2424 = vmatprep.subr.mxu0 %v937
        %2425 = vmatpush1.msra.mxu0 %v936
        %2426 = vmatprep.subr.mxu0 %v941
        %2427 = vmatpush1.msra.mxu0 %v940
        %2428 = vmatprep.subr.mxu0 %v945
        %2429 = vmatpush1.msra.mxu0 %v944
        %2430 = vmatprep.subr.mxu0 %v949
        %2431 = vmatpush1.msra.mxu0 %v948
        %2432 = vmatprep.subr.mxu0 %v953
        %2433 = vmatpush1.msra.mxu0 %v952
        %2434 = vmatprep.subr.mxu0 %v957
        %2435 = vmatpush1.msra.mxu0 %v956
        %2436 = vmatprep.subr.mxu0 %v961
        %2437 = vmatpush1.msra.mxu0 %v960
        %2438 = vmatprep.subr.mxu0 %v965
        %2439 = vmatpush1.msra.mxu0 %v964
        %2440 = vmatprep.subr.mxu0 %v969
        %2441 = vmatpush1.msra.mxu0 %v968
        %2442 = vmatprep.subr.mxu0 %v973
        %2443 = vmatpush1.msra.mxu0 %v972
        %2444 = vmatprep.subr.mxu0 %v977
        %2445 = vmatpush1.msra.mxu0 %v976
        %2446 = vmatprep.subr.mxu0 %v981
        %2447 = vmatpush1.msra.mxu0 %v980
        %2448 = vmatprep.subr.mxu0 %v985
        %2449 = vmatpush1.msra.mxu0 %v984
        %2450 = vmatprep.subr.mxu0 %v989
        %2451 = vmatpush1.msra.mxu0 %v988
        %2452 = vmatprep.subr.mxu0 %v993
        %2453 = vmatpush1.msra.mxu0 %v992
        %2454 = vmatprep.subr.mxu0 0.0
        %2455 = vmatpush1.msra.mxu0 0.0
        %2456 = vmatprep.subr.mxu0 0.0
        %2457 = vmatpush1.msra.mxu0 0.0
        %2458 = vmatprep.subr.mxu0 0.0
        %2459 = vmatpush1.msra.mxu0 0.0
        %2460 = vmatprep.subr.mxu0 0.0
        %2461 = vmatpush1.msra.mxu0 0.0
        %2462 = vmatprep.subr.mxu0 0.0
        %2463 = vmatpush1.msra.mxu0 0.0
        %2464 = vmatprep.subr.mxu0 0.0
        %2465 = vmatpush1.msra.mxu0 0.0
        %2466 = vmatprep.subr.mxu0 0.0
        %2467 = vmatpush1.msra.mxu0 0.0
        %2468 = vmatprep.subr.mxu0 0.0
        %2469 = vmatpush1.msra.mxu0 0.0
        %2470 = vmatprep.subr.mxu0 0.0
        %2471 = vmatpush1.msra.mxu0 0.0
        %2472 = vmatprep.subr.mxu0 0.0
        %2473 = vmatpush1.msra.mxu0 0.0
        %2474 = vmatprep.subr.mxu0 0.0
        %2475 = vmatpush1.msra.mxu0 0.0
        %2476 = vmatprep.subr.mxu0 0.0
        %2477 = vmatpush1.msra.mxu0 0.0
        %2478 = vmatprep.subr.mxu0 0.0
        %2479 = vmatpush1.msra.mxu0 0.0
        %2480 = vmatprep.subr.mxu0 0.0
        %2481 = vmatpush1.msra.mxu0 0.0
        %2482 = vmatprep.subr.mxu0 0.0
        %2483 = vmatpush1.msra.mxu0 0.0
        %2484 = vmatprep.subr.mxu0 0.0
        %2485 = vmatpush1.msra.mxu0 0.0
        %2486 = vmatprep.mubr.f32.mxu0 0.0
        %2487 = vmatmul.mubr.f32.gmra.mrb[0].mxu0 %v2349
        %v2488 = vpop.f32.mrb[0].mxu0
        %v2489 = vadd.f32 0.0, %v2488
        %v2490 = vpop.f32.mrb[0].mxu0
        %v2491 = vadd.f32 0.0, %v2490
        %2492 = vdwg.mxu0
        %2493 = vmatprep.subr.mxu0 0.0
        %2494 = vmatpush1.msra.mxu0 %v994
        %2495 = vmatprep.subr.mxu0 0.0
        %2496 = vmatpush1.msra.mxu0 %v995
        %2497 = vmatprep.subr.mxu0 0.0
        %2498 = vmatpush1.msra.mxu0 %v996
        %2499 = vmatprep.subr.mxu0 0.0
        %2500 = vmatpush1.msra.mxu0 %v997
        %2501 = vmatprep.subr.mxu0 0.0
        %2502 = vmatpush1.msra.mxu0 %v998
        %2503 = vmatprep.subr.mxu0 0.0
        %2504 = vmatpush1.msra.mxu0 %v999
        %2505 = vmatprep.subr.mxu0 0.0
        %2506 = vmatpush1.msra.mxu0 %v1000
        %2507 = vmatprep.subr.mxu0 0.0
        %2508 = vmatpush1.msra.mxu0 %v1001
        %2509 = vmatprep.subr.mxu0 0.0
        %2510 = vmatpush1.msra.mxu0 %v1002
        %2511 = vmatprep.subr.mxu0 0.0
        %2512 = vmatpush1.msra.mxu0 %v1003
        %2513 = vmatprep.subr.mxu0 0.0
        %2514 = vmatpush1.msra.mxu0 %v1004
        %2515 = vmatprep.subr.mxu0 0.0
        %2516 = vmatpush1.msra.mxu0 %v1005
        %2517 = vmatprep.subr.mxu0 0.0
        %2518 = vmatpush1.msra.mxu0 %v1006
        %2519 = vmatprep.subr.mxu0 0.0
        %2520 = vmatpush1.msra.mxu0 %v1007
        %2521 = vmatprep.subr.mxu0 0.0
        %2522 = vmatpush1.msra.mxu0 %v1008
        %2523 = vmatprep.subr.mxu0 0.0
        %2524 = vmatpush1.msra.mxu0 %v1009
        %2525 = vmatprep.subr.mxu0 0.0
        %2526 = vmatpush1.msra.mxu0 0.0
        %2527 = vmatprep.subr.mxu0 0.0
        %2528 = vmatpush1.msra.mxu0 0.0
        %2529 = vmatprep.subr.mxu0 0.0
        %2530 = vmatpush1.msra.mxu0 0.0
        %2531 = vmatprep.subr.mxu0 0.0
        %2532 = vmatpush1.msra.mxu0 0.0
        %2533 = vmatprep.subr.mxu0 0.0
        %2534 = vmatpush1.msra.mxu0 0.0
        %2535 = vmatprep.subr.mxu0 0.0
        %2536 = vmatpush1.msra.mxu0 0.0
        %2537 = vmatprep.subr.mxu0 0.0
        %2538 = vmatpush1.msra.mxu0 0.0
        %2539 = vmatprep.subr.mxu0 0.0
        %2540 = vmatpush1.msra.mxu0 0.0
        %2541 = vmatprep.subr.mxu0 0.0
        %2542 = vmatpush1.msra.mxu0 0.0
        %2543 = vmatprep.subr.mxu0 0.0
        %2544 = vmatpush1.msra.mxu0 0.0
        %2545 = vmatprep.subr.mxu0 0.0
        %2546 = vmatpush1.msra.mxu0 0.0
        %2547 = vmatprep.subr.mxu0 0.0
        %2548 = vmatpush1.msra.mxu0 0.0
        %2549 = vmatprep.subr.mxu0 0.0
        %2550 = vmatpush1.msra.mxu0 0.0
        %2551 = vmatprep.subr.mxu0 0.0
        %2552 = vmatpush1.msra.mxu0 0.0
        %2553 = vmatprep.subr.mxu0 0.0
        %2554 = vmatpush1.msra.mxu0 0.0
        %2555 = vmatprep.subr.mxu0 0.0
        %2556 = vmatpush1.msra.mxu0 0.0
        %2557 = vmatprep.mubr.f32.mxu0 0.0
        %2558 = vmatmul.mubr.f32.gmra.mrb[0].mxu0 %v2350
        %v2559 = vpop.f32.mrb[0].mxu0
        %v2560 = vadd.f32 %v1157, %v2559
        %v2561 = vpop.f32.mrb[0].mxu0
        %2562 = vdwg.mxu0
        %v2563 = vtanh.pop %v2560
        %s2564 = scalar_lea.vmem %s373, 40 [#allocation7]
        %v2565 = vld [vmem:[%s2564] sm:$0xff]
        %2567 = vset.pattern.permute.xlu0 0
        %2568 = vperm.xlu0 %2567, %v2565
        %v2569 = vpop.permute.xlu0 %2568
        %v2571 = vmul.f32 %v2563, %v2569
        %v2572 = vadd.f32 %v2350, %v2571
        %v2573 = vld [vmem:[#allocation3 + $0xa0] sm:$0xff]
        %v2574 = vld [vmem:[#allocation3 + $0xa8] sm:$0xff]
        %v2575 = vld [vmem:[#allocation3 + $0xb0] sm:$0xff]
        %v2576 = vld [vmem:[#allocation3 + $0xb8] sm:$0xff]
        %v2577 = vadd.f32 %v2573, %v2418
        %v2578 = vadd.f32 %v2574, %v2420
        %v2579 = vadd.f32 %v2575, %v2489
        %v2580 = vadd.f32 %v2576, %v2491
        %v2581 = vxor.u32 %v2577, 2147483648
        %v2582 = vxor.u32 %v2578, 2147483648
        %v2583 = vxor.u32 %v2579, 2147483648
        %v2584 = vxor.u32 %v2580, 2147483648
        %v2585 = vmul.f32 %v2581, 1.442695
        %v2586 = vpow.pop %v2585
        %v2587 = vmul.f32 %v2582, 1.442695
        %v2588 = vpow.pop %v2587
        %v2589 = vmul.f32 %v2583, 1.442695
        %v2590 = vpow.pop %v2589
        %v2591 = vmul.f32 %v2584, 1.442695
        %v2592 = vpow.pop %v2591
        %v2593 = vadd.f32 %v2586, 1.0
        %v2594 = vadd.f32 %v2588, 1.0
        %v2595 = vadd.f32 %v2590, 1.0
        %v2596 = vadd.f32 %v2592, 1.0
        %v2597 = vrcp.pop %v2593
        %v2598 = vmul.f32 1.0, %v2597
        %v2599 = vrcp.pop %v2594
        %v2600 = vmul.f32 1.0, %v2599
        %v2601 = vrcp.pop %v2595
        %v2602 = vmul.f32 1.0, %v2601
        %v2603 = vrcp.pop %v2596
        %v2604 = vmul.f32 1.0, %v2603
        %v2605 = vmul.f32 %v2598, %v2572
        %v2606 = vmul.f32 %v2600, %v2604
        %v2607 = vadd.f32 %v2605, %v2606
        %v2608 = vtanh.pop %v2607
        %v2609 = vmul.f32 %v2602, %v2608
        %2610 = vst [vmem:[%s428 + $0x28] sm:$0xff] %v2609
        %s2611 = sadd.s32 %s1276, 5
        %p2612 = scmp.lt.s32.totalorder %s2611, 20
        %s2613 = scalar_select %p2612, 1, 0
        %v2614 = vstv %s2613
        %vm2615 = vcmp.eq.s32.totalorder %v2614, 1
        %v2616 = vsel %vm2615, %v2609, %v2349
        %v2617 = vsel %vm2615, %v2607, %v2350
        %2618 = vmatprep.subr.mxu0 %v931
        %2619 = vmatpush1.msra.mxu0 %v930
        %2620 = vmatprep.subr.mxu0 %v935
        %2621 = vmatpush1.msra.mxu0 %v934
        %2622 = vmatprep.subr.mxu0 %v939
        %2623 = vmatpush1.msra.mxu0 %v938
        %2624 = vmatprep.subr.mxu0 %v943
        %2625 = vmatpush1.msra.mxu0 %v942
        %2626 = vmatprep.subr.mxu0 %v947
        %2627 = vmatpush1.msra.mxu0 %v946
        %2628 = vmatprep.subr.mxu0 %v951
        %2629 = vmatpush1.msra.mxu0 %v950
        %2630 = vmatprep.subr.mxu0 %v955
        %2631 = vmatpush1.msra.mxu0 %v954
        %2632 = vmatprep.subr.mxu0 %v959
        %2633 = vmatpush1.msra.mxu0 %v958
        %2634 = vmatprep.subr.mxu0 %v963
        %2635 = vmatpush1.msra.mxu0 %v962
        %2636 = vmatprep.subr.mxu0 %v967
        %2637 = vmatpush1.msra.mxu0 %v966
        %2638 = vmatprep.subr.mxu0 %v971
        %2639 = vmatpush1.msra.mxu0 %v970
        %2640 = vmatprep.subr.mxu0 %v975
        %2641 = vmatpush1.msra.mxu0 %v974
        %2642 = vmatprep.subr.mxu0 %v979
        %2643 = vmatpush1.msra.mxu0 %v978
        %2644 = vmatprep.subr.mxu0 %v983
        %2645 = vmatpush1.msra.mxu0 %v982
        %2646 = vmatprep.subr.mxu0 %v987
        %2647 = vmatpush1.msra.mxu0 %v986
        %2648 = vmatprep.subr.mxu0 %v991
        %2649 = vmatpush1.msra.mxu0 %v990
        %2650 = vmatprep.subr.mxu0 0.0
        %2651 = vmatpush1.msra.mxu0 0.0
        %2652 = vmatprep.subr.mxu0 0.0
        %2653 = vmatpush1.msra.mxu0 0.0
        %2654 = vmatprep.subr.mxu0 0.0
        %2655 = vmatpush1.msra.mxu0 0.0
        %2656 = vmatprep.subr.mxu0 0.0
        %2657 = vmatpush1.msra.mxu0 0.0
        %2658 = vmatprep.subr.mxu0 0.0
        %2659 = vmatpush1.msra.mxu0 0.0
        %2660 = vmatprep.subr.mxu0 0.0
        %2661 = vmatpush1.msra.mxu0 0.0
        %2662 = vmatprep.subr.mxu0 0.0
        %2663 = vmatpush1.msra.mxu0 0.0
        %2664 = vmatprep.subr.mxu0 0.0
        %2665 = vmatpush1.msra.mxu0 0.0
        %2666 = vmatprep.subr.mxu0 0.0
        %2667 = vmatpush1.msra.mxu0 0.0
        %2668 = vmatprep.subr.mxu0 0.0
        %2669 = vmatpush1.msra.mxu0 0.0
        %2670 = vmatprep.subr.mxu0 0.0
        %2671 = vmatpush1.msra.mxu0 0.0
        %2672 = vmatprep.subr.mxu0 0.0
        %2673 = vmatpush1.msra.mxu0 0.0
        %2674 = vmatprep.subr.mxu0 0.0
        %2675 = vmatpush1.msra.mxu0 0.0
        %2676 = vmatprep.subr.mxu0 0.0
        %2677 = vmatpush1.msra.mxu0 0.0
        %2678 = vmatprep.subr.mxu0 0.0
        %2679 = vmatpush1.msra.mxu0 0.0
        %2680 = vmatprep.subr.mxu0 0.0
        %2681 = vmatpush1.msra.mxu0 0.0
        %2682 = vmatprep.mubr.f32.mxu0 0.0
        %2683 = vmatmul.mubr.f32.gmra.mrb[0].mxu0 %v2616
        %v2684 = vpop.f32.mrb[0].mxu0
        %v2685 = vadd.f32 0.0, %v2684
        %v2686 = vpop.f32.mrb[0].mxu0
        %v2687 = vadd.f32 0.0, %v2686
        %2688 = vdwg.mxu0
        %2689 = vmatprep.subr.mxu0 %v933
        %2690 = vmatpush1.msra.mxu0 %v932
        %2691 = vmatprep.subr.mxu0 %v937
        %2692 = vmatpush1.msra.mxu0 %v936
        %2693 = vmatprep.subr.mxu0 %v941
        %2694 = vmatpush1.msra.mxu0 %v940
        %2695 = vmatprep.subr.mxu0 %v945
        %2696 = vmatpush1.msra.mxu0 %v944
        %2697 = vmatprep.subr.mxu0 %v949
        %2698 = vmatpush1.msra.mxu0 %v948
        %2699 = vmatprep.subr.mxu0 %v953
        %2700 = vmatpush1.msra.mxu0 %v952
        %2701 = vmatprep.subr.mxu0 %v957
        %2702 = vmatpush1.msra.mxu0 %v956
        %2703 = vmatprep.subr.mxu0 %v961
        %2704 = vmatpush1.msra.mxu0 %v960
        %2705 = vmatprep.subr.mxu0 %v965
        %2706 = vmatpush1.msra.mxu0 %v964
        %2707 = vmatprep.subr.mxu0 %v969
        %2708 = vmatpush1.msra.mxu0 %v968
        %2709 = vmatprep.subr.mxu0 %v973
        %2710 = vmatpush1.msra.mxu0 %v972
        %2711 = vmatprep.subr.mxu0 %v977
        %2712 = vmatpush1.msra.mxu0 %v976
        %2713 = vmatprep.subr.mxu0 %v981
        %2714 = vmatpush1.msra.mxu0 %v980
        %2715 = vmatprep.subr.mxu0 %v985
        %2716 = vmatpush1.msra.mxu0 %v984
        %2717 = vmatprep.subr.mxu0 %v989
        %2718 = vmatpush1.msra.mxu0 %v988
        %2719 = vmatprep.subr.mxu0 %v993
        %2720 = vmatpush1.msra.mxu0 %v992
        %2721 = vmatprep.subr.mxu0 0.0
        %2722 = vmatpush1.msra.mxu0 0.0
        %2723 = vmatprep.subr.mxu0 0.0
        %2724 = vmatpush1.msra.mxu0 0.0
        %2725 = vmatprep.subr.mxu0 0.0
        %2726 = vmatpush1.msra.mxu0 0.0
        %2727 = vmatprep.subr.mxu0 0.0
        %2728 = vmatpush1.msra.mxu0 0.0
        %2729 = vmatprep.subr.mxu0 0.0
        %2730 = vmatpush1.msra.mxu0 0.0
        %2731 = vmatprep.subr.mxu0 0.0
        %2732 = vmatpush1.msra.mxu0 0.0
        %2733 = vmatprep.subr.mxu0 0.0
        %2734 = vmatpush1.msra.mxu0 0.0
        %2735 = vmatprep.subr.mxu0 0.0
        %2736 = vmatpush1.msra.mxu0 0.0
        %2737 = vmatprep.subr.mxu0 0.0
        %2738 = vmatpush1.msra.mxu0 0.0
        %2739 = vmatprep.subr.mxu0 0.0
        %2740 = vmatpush1.msra.mxu0 0.0
        %2741 = vmatprep.subr.mxu0 0.0
        %2742 = vmatpush1.msra.mxu0 0.0
        %2743 = vmatprep.subr.mxu0 0.0
        %2744 = vmatpush1.msra.mxu0 0.0
        %2745 = vmatprep.subr.mxu0 0.0
        %2746 = vmatpush1.msra.mxu0 0.0
        %2747 = vmatprep.subr.mxu0 0.0
        %2748 = vmatpush1.msra.mxu0 0.0
        %2749 = vmatprep.subr.mxu0 0.0
        %2750 = vmatpush1.msra.mxu0 0.0
        %2751 = vmatprep.subr.mxu0 0.0
        %2752 = vmatpush1.msra.mxu0 0.0
        %2753 = vmatprep.mubr.f32.mxu0 0.0
        %2754 = vmatmul.mubr.f32.gmra.mrb[0].mxu0 %v2616
        %v2755 = vpop.f32.mrb[0].mxu0
        %v2756 = vadd.f32 0.0, %v2755
        %v2757 = vpop.f32.mrb[0].mxu0
        %v2758 = vadd.f32 0.0, %v2757
        %2759 = vdwg.mxu0
        %2760 = vmatprep.subr.mxu0 0.0
        %2761 = vmatpush1.msra.mxu0 %v994
        %2762 = vmatprep.subr.mxu0 0.0
        %2763 = vmatpush1.msra.mxu0 %v995
        %2764 = vmatprep.subr.mxu0 0.0
        %2765 = vmatpush1.msra.mxu0 %v996
        %2766 = vmatprep.subr.mxu0 0.0
        %2767 = vmatpush1.msra.mxu0 %v997
        %2768 = vmatprep.subr.mxu0 0.0
        %2769 = vmatpush1.msra.mxu0 %v998
        %2770 = vmatprep.subr.mxu0 0.0
        %2771 = vmatpush1.msra.mxu0 %v999
        %2772 = vmatprep.subr.mxu0 0.0
        %2773 = vmatpush1.msra.mxu0 %v1000
        %2774 = vmatprep.subr.mxu0 0.0
        %2775 = vmatpush1.msra.mxu0 %v1001
        %2776 = vmatprep.subr.mxu0 0.0
        %2777 = vmatpush1.msra.mxu0 %v1002
        %2778 = vmatprep.subr.mxu0 0.0
        %2779 = vmatpush1.msra.mxu0 %v1003
        %2780 = vmatprep.subr.mxu0 0.0
        %2781 = vmatpush1.msra.mxu0 %v1004
        %2782 = vmatprep.subr.mxu0 0.0
        %2783 = vmatpush1.msra.mxu0 %v1005
        %2784 = vmatprep.subr.mxu0 0.0
        %2785 = vmatpush1.msra.mxu0 %v1006
        %2786 = vmatprep.subr.mxu0 0.0
        %2787 = vmatpush1.msra.mxu0 %v1007
        %2788 = vmatprep.subr.mxu0 0.0
        %2789 = vmatpush1.msra.mxu0 %v1008
        %2790 = vmatprep.subr.mxu0 0.0
        %2791 = vmatpush1.msra.mxu0 %v1009
        %2792 = vmatprep.subr.mxu0 0.0
        %2793 = vmatpush1.msra.mxu0 0.0
        %2794 = vmatprep.subr.mxu0 0.0
        %2795 = vmatpush1.msra.mxu0 0.0
        %2796 = vmatprep.subr.mxu0 0.0
        %2797 = vmatpush1.msra.mxu0 0.0
        %2798 = vmatprep.subr.mxu0 0.0
        %2799 = vmatpush1.msra.mxu0 0.0
        %2800 = vmatprep.subr.mxu0 0.0
        %2801 = vmatpush1.msra.mxu0 0.0
        %2802 = vmatprep.subr.mxu0 0.0
        %2803 = vmatpush1.msra.mxu0 0.0
        %2804 = vmatprep.subr.mxu0 0.0
        %2805 = vmatpush1.msra.mxu0 0.0
        %2806 = vmatprep.subr.mxu0 0.0
        %2807 = vmatpush1.msra.mxu0 0.0
        %2808 = vmatprep.subr.mxu0 0.0
        %2809 = vmatpush1.msra.mxu0 0.0
        %2810 = vmatprep.subr.mxu0 0.0
        %2811 = vmatpush1.msra.mxu0 0.0
        %2812 = vmatprep.subr.mxu0 0.0
        %2813 = vmatpush1.msra.mxu0 0.0
        %2814 = vmatprep.subr.mxu0 0.0
        %2815 = vmatpush1.msra.mxu0 0.0
        %2816 = vmatprep.subr.mxu0 0.0
        %2817 = vmatpush1.msra.mxu0 0.0
        %2818 = vmatprep.subr.mxu0 0.0
        %2819 = vmatpush1.msra.mxu0 0.0
        %2820 = vmatprep.subr.mxu0 0.0
        %2821 = vmatpush1.msra.mxu0 0.0
        %2822 = vmatprep.subr.mxu0 0.0
        %2823 = vmatpush1.msra.mxu0 0.0
        %2824 = vmatprep.mubr.f32.mxu0 0.0
        %2825 = vmatmul.mubr.f32.gmra.mrb[0].mxu0 %v2617
        %v2826 = vpop.f32.mrb[0].mxu0
        %v2827 = vadd.f32 %v1157, %v2826
        %v2828 = vpop.f32.mrb[0].mxu0
        %2829 = vdwg.mxu0
        %v2830 = vtanh.pop %v2827
        %s2831 = scalar_lea.vmem %s373, 48 [#allocation7]
        %v2832 = vld [vmem:[%s2831] sm:$0xff]
        %2834 = vset.pattern.permute.xlu0 0
        %2835 = vperm.xlu0 %2834, %v2832
        %v2836 = vpop.permute.xlu0 %2835
        %v2838 = vmul.f32 %v2830, %v2836
        %v2839 = vadd.f32 %v2617, %v2838
        %v2840 = vld [vmem:[#allocation3 + $0xc0] sm:$0xff]
        %v2841 = vld [vmem:[#allocation3 + $0xc8] sm:$0xff]
        %v2842 = vld [vmem:[#allocation3 + $0xd0] sm:$0xff]
        %v2843 = vld [vmem:[#allocation3 + $0xd8] sm:$0xff]
        %v2844 = vadd.f32 %v2840, %v2685
        %v2845 = vadd.f32 %v2841, %v2687
        %v2846 = vadd.f32 %v2842, %v2756
        %v2847 = vadd.f32 %v2843, %v2758
        %v2848 = vxor.u32 %v2844, 2147483648
        %v2849 = vxor.u32 %v2845, 2147483648
        %v2850 = vxor.u32 %v2846, 2147483648
        %v2851 = vxor.u32 %v2847, 2147483648
        %v2852 = vmul.f32 %v2848, 1.442695
        %v2853 = vpow.pop %v2852
        %v2854 = vmul.f32 %v2849, 1.442695
        %v2855 = vpow.pop %v2854
        %v2856 = vmul.f32 %v2850, 1.442695
        %v2857 = vpow.pop %v2856
        %v2858 = vmul.f32 %v2851, 1.442695
        %v2859 = vpow.pop %v2858
        %v2860 = vadd.f32 %v2853, 1.0
        %v2861 = vadd.f32 %v2855, 1.0
        %v2862 = vadd.f32 %v2857, 1.0
        %v2863 = vadd.f32 %v2859, 1.0
        %v2864 = vrcp.pop %v2860
        %v2865 = vmul.f32 1.0, %v2864
        %v2866 = vrcp.pop %v2861
        %v2867 = vmul.f32 1.0, %v2866
        %v2868 = vrcp.pop %v2862
        %v2869 = vmul.f32 1.0, %v2868
        %v2870 = vrcp.pop %v2863
        %v2871 = vmul.f32 1.0, %v2870
        %v2872 = vmul.f32 %v2865, %v2839
        %v2873 = vmul.f32 %v2867, %v2871
        %v2874 = vadd.f32 %v2872, %v2873
        %v2875 = vtanh.pop %v2874
        %v2876 = vmul.f32 %v2869, %v2875
        %2877 = vst [vmem:[%s428 + $0x30] sm:$0xff] %v2876
        %s2878 = sadd.s32 %s1276, 6
        %p2879 = scmp.lt.s32.totalorder %s2878, 20
        %s2880 = scalar_select %p2879, 1, 0
        %v2881 = vstv %s2880
        %vm2882 = vcmp.eq.s32.totalorder %v2881, 1
        %v2883 = vsel %vm2882, %v2876, %v2616
        %v2884 = vsel %vm2882, %v2874, %v2617
        %2885 = vmatprep.subr.mxu0 %v931
        %2886 = vmatpush1.msra.mxu0 %v930
        %2887 = vmatprep.subr.mxu0 %v935
        %2888 = vmatpush1.msra.mxu0 %v934
        %2889 = vmatprep.subr.mxu0 %v939
        %2890 = vmatpush1.msra.mxu0 %v938
        %2891 = vmatprep.subr.mxu0 %v943
        %2892 = vmatpush1.msra.mxu0 %v942
        %2893 = vmatprep.subr.mxu0 %v947
        %2894 = vmatpush1.msra.mxu0 %v946
        %2895 = vmatprep.subr.mxu0 %v951
        %2896 = vmatpush1.msra.mxu0 %v950
        %2897 = vmatprep.subr.mxu0 %v955
        %2898 = vmatpush1.msra.mxu0 %v954
        %2899 = vmatprep.subr.mxu0 %v959
        %2900 = vmatpush1.msra.mxu0 %v958
        %2901 = vmatprep.subr.mxu0 %v963
        %2902 = vmatpush1.msra.mxu0 %v962
        %2903 = vmatprep.subr.mxu0 %v967
        %2904 = vmatpush1.msra.mxu0 %v966
        %2905 = vmatprep.subr.mxu0 %v971
        %2906 = vmatpush1.msra.mxu0 %v970
        %2907 = vmatprep.subr.mxu0 %v975
        %2908 = vmatpush1.msra.mxu0 %v974
        %2909 = vmatprep.subr.mxu0 %v979
        %2910 = vmatpush1.msra.mxu0 %v978
        %2911 = vmatprep.subr.mxu0 %v983
        %2912 = vmatpush1.msra.mxu0 %v982
        %2913 = vmatprep.subr.mxu0 %v987
        %2914 = vmatpush1.msra.mxu0 %v986
        %2915 = vmatprep.subr.mxu0 %v991
        %2916 = vmatpush1.msra.mxu0 %v990
        %2917 = vmatprep.subr.mxu0 0.0
        %2918 = vmatpush1.msra.mxu0 0.0
        %2919 = vmatprep.subr.mxu0 0.0
        %2920 = vmatpush1.msra.mxu0 0.0
        %2921 = vmatprep.subr.mxu0 0.0
        %2922 = vmatpush1.msra.mxu0 0.0
        %2923 = vmatprep.subr.mxu0 0.0
        %2924 = vmatpush1.msra.mxu0 0.0
        %2925 = vmatprep.subr.mxu0 0.0
        %2926 = vmatpush1.msra.mxu0 0.0
        %2927 = vmatprep.subr.mxu0 0.0
        %2928 = vmatpush1.msra.mxu0 0.0
        %2929 = vmatprep.subr.mxu0 0.0
        %2930 = vmatpush1.msra.mxu0 0.0
        %2931 = vmatprep.subr.mxu0 0.0
        %2932 = vmatpush1.msra.mxu0 0.0
        %2933 = vmatprep.subr.mxu0 0.0
        %2934 = vmatpush1.msra.mxu0 0.0
        %2935 = vmatprep.subr.mxu0 0.0
        %2936 = vmatpush1.msra.mxu0 0.0
        %2937 = vmatprep.subr.mxu0 0.0
        %2938 = vmatpush1.msra.mxu0 0.0
        %2939 = vmatprep.subr.mxu0 0.0
        %2940 = vmatpush1.msra.mxu0 0.0
        %2941 = vmatprep.subr.mxu0 0.0
        %2942 = vmatpush1.msra.mxu0 0.0
        %2943 = vmatprep.subr.mxu0 0.0
        %2944 = vmatpush1.msra.mxu0 0.0
        %2945 = vmatprep.subr.mxu0 0.0
        %2946 = vmatpush1.msra.mxu0 0.0
        %2947 = vmatprep.subr.mxu0 0.0
        %2948 = vmatpush1.msra.mxu0 0.0
        %2949 = vmatprep.mubr.f32.mxu0 0.0
        %2950 = vmatmul.mubr.f32.gmra.mrb[0].mxu0 %v2883
        %v2951 = vpop.f32.mrb[0].mxu0
        %v2952 = vadd.f32 0.0, %v2951
        %v2953 = vpop.f32.mrb[0].mxu0
        %v2954 = vadd.f32 0.0, %v2953
        %2955 = vdwg.mxu0
        %2956 = vmatprep.subr.mxu0 %v933
        %2957 = vmatpush1.msra.mxu0 %v932
        %2958 = vmatprep.subr.mxu0 %v937
        %2959 = vmatpush1.msra.mxu0 %v936
        %2960 = vmatprep.subr.mxu0 %v941
        %2961 = vmatpush1.msra.mxu0 %v940
        %2962 = vmatprep.subr.mxu0 %v945
        %2963 = vmatpush1.msra.mxu0 %v944
        %2964 = vmatprep.subr.mxu0 %v949
        %2965 = vmatpush1.msra.mxu0 %v948
        %2966 = vmatprep.subr.mxu0 %v953
        %2967 = vmatpush1.msra.mxu0 %v952
        %2968 = vmatprep.subr.mxu0 %v957
        %2969 = vmatpush1.msra.mxu0 %v956
        %2970 = vmatprep.subr.mxu0 %v961
        %2971 = vmatpush1.msra.mxu0 %v960
        %2972 = vmatprep.subr.mxu0 %v965
        %2973 = vmatpush1.msra.mxu0 %v964
        %2974 = vmatprep.subr.mxu0 %v969
        %2975 = vmatpush1.msra.mxu0 %v968
        %2976 = vmatprep.subr.mxu0 %v973
        %2977 = vmatpush1.msra.mxu0 %v972
        %2978 = vmatprep.subr.mxu0 %v977
        %2979 = vmatpush1.msra.mxu0 %v976
        %2980 = vmatprep.subr.mxu0 %v981
        %2981 = vmatpush1.msra.mxu0 %v980
        %2982 = vmatprep.subr.mxu0 %v985
        %2983 = vmatpush1.msra.mxu0 %v984
        %2984 = vmatprep.subr.mxu0 %v989
        %2985 = vmatpush1.msra.mxu0 %v988
        %2986 = vmatprep.subr.mxu0 %v993
        %2987 = vmatpush1.msra.mxu0 %v992
        %2988 = vmatprep.subr.mxu0 0.0
        %2989 = vmatpush1.msra.mxu0 0.0
        %2990 = vmatprep.subr.mxu0 0.0
        %2991 = vmatpush1.msra.mxu0 0.0
        %2992 = vmatprep.subr.mxu0 0.0
        %2993 = vmatpush1.msra.mxu0 0.0
        %2994 = vmatprep.subr.mxu0 0.0
        %2995 = vmatpush1.msra.mxu0 0.0
        %2996 = vmatprep.subr.mxu0 0.0
        %2997 = vmatpush1.msra.mxu0 0.0
        %2998 = vmatprep.subr.mxu0 0.0
        %2999 = vmatpush1.msra.mxu0 0.0
        %3000 = vmatprep.subr.mxu0 0.0
        %3001 = vmatpush1.msra.mxu0 0.0
        %3002 = vmatprep.subr.mxu0 0.0
        %3003 = vmatpush1.msra.mxu0 0.0
        %3004 = vmatprep.subr.mxu0 0.0
        %3005 = vmatpush1.msra.mxu0 0.0
        %3006 = vmatprep.subr.mxu0 0.0
        %3007 = vmatpush1.msra.mxu0 0.0
        %3008 = vmatprep.subr.mxu0 0.0
        %3009 = vmatpush1.msra.mxu0 0.0
        %3010 = vmatprep.subr.mxu0 0.0
        %3011 = vmatpush1.msra.mxu0 0.0
        %3012 = vmatprep.subr.mxu0 0.0
        %3013 = vmatpush1.msra.mxu0 0.0
        %3014 = vmatprep.subr.mxu0 0.0
        %3015 = vmatpush1.msra.mxu0 0.0
        %3016 = vmatprep.subr.mxu0 0.0
        %3017 = vmatpush1.msra.mxu0 0.0
        %3018 = vmatprep.subr.mxu0 0.0
        %3019 = vmatpush1.msra.mxu0 0.0
        %3020 = vmatprep.mubr.f32.mxu0 0.0
        %3021 = vmatmul.mubr.f32.gmra.mrb[0].mxu0 %v2883
        %v3022 = vpop.f32.mrb[0].mxu0
        %v3023 = vadd.f32 0.0, %v3022
        %v3024 = vpop.f32.mrb[0].mxu0
        %v3025 = vadd.f32 0.0, %v3024
        %3026 = vdwg.mxu0
        %3027 = vmatprep.subr.mxu0 0.0
        %3028 = vmatpush1.msra.mxu0 %v994
        %3029 = vmatprep.subr.mxu0 0.0
        %3030 = vmatpush1.msra.mxu0 %v995
        %3031 = vmatprep.subr.mxu0 0.0
        %3032 = vmatpush1.msra.mxu0 %v996
        %3033 = vmatprep.subr.mxu0 0.0
        %3034 = vmatpush1.msra.mxu0 %v997
        %3035 = vmatprep.subr.mxu0 0.0
        %3036 = vmatpush1.msra.mxu0 %v998
        %3037 = vmatprep.subr.mxu0 0.0
        %3038 = vmatpush1.msra.mxu0 %v999
        %3039 = vmatprep.subr.mxu0 0.0
        %3040 = vmatpush1.msra.mxu0 %v1000
        %3041 = vmatprep.subr.mxu0 0.0
        %3042 = vmatpush1.msra.mxu0 %v1001
        %3043 = vmatprep.subr.mxu0 0.0
        %3044 = vmatpush1.msra.mxu0 %v1002
        %3045 = vmatprep.subr.mxu0 0.0
        %3046 = vmatpush1.msra.mxu0 %v1003
        %3047 = vmatprep.subr.mxu0 0.0
        %3048 = vmatpush1.msra.mxu0 %v1004
        %3049 = vmatprep.subr.mxu0 0.0
        %3050 = vmatpush1.msra.mxu0 %v1005
        %3051 = vmatprep.subr.mxu0 0.0
        %3052 = vmatpush1.msra.mxu0 %v1006
        %3053 = vmatprep.subr.mxu0 0.0
        %3054 = vmatpush1.msra.mxu0 %v1007
        %3055 = vmatprep.subr.mxu0 0.0
        %3056 = vmatpush1.msra.mxu0 %v1008
        %3057 = vmatprep.subr.mxu0 0.0
        %3058 = vmatpush1.msra.mxu0 %v1009
        %3059 = vmatprep.subr.mxu0 0.0
        %3060 = vmatpush1.msra.mxu0 0.0
        %3061 = vmatprep.subr.mxu0 0.0
        %3062 = vmatpush1.msra.mxu0 0.0
        %3063 = vmatprep.subr.mxu0 0.0
        %3064 = vmatpush1.msra.mxu0 0.0
        %3065 = vmatprep.subr.mxu0 0.0
        %3066 = vmatpush1.msra.mxu0 0.0
        %3067 = vmatprep.subr.mxu0 0.0
        %3068 = vmatpush1.msra.mxu0 0.0
        %3069 = vmatprep.subr.mxu0 0.0
        %3070 = vmatpush1.msra.mxu0 0.0
        %3071 = vmatprep.subr.mxu0 0.0
        %3072 = vmatpush1.msra.mxu0 0.0
        %3073 = vmatprep.subr.mxu0 0.0
        %3074 = vmatpush1.msra.mxu0 0.0
        %3075 = vmatprep.subr.mxu0 0.0
        %3076 = vmatpush1.msra.mxu0 0.0
        %3077 = vmatprep.subr.mxu0 0.0
        %3078 = vmatpush1.msra.mxu0 0.0
        %3079 = vmatprep.subr.mxu0 0.0
        %3080 = vmatpush1.msra.mxu0 0.0
        %3081 = vmatprep.subr.mxu0 0.0
        %3082 = vmatpush1.msra.mxu0 0.0
        %3083 = vmatprep.subr.mxu0 0.0
        %3084 = vmatpush1.msra.mxu0 0.0
        %3085 = vmatprep.subr.mxu0 0.0
        %3086 = vmatpush1.msra.mxu0 0.0
        %3087 = vmatprep.subr.mxu0 0.0
        %3088 = vmatpush1.msra.mxu0 0.0
        %3089 = vmatprep.subr.mxu0 0.0
        %3090 = vmatpush1.msra.mxu0 0.0
        %3091 = vmatprep.mubr.f32.mxu0 0.0
        %3092 = vmatmul.mubr.f32.gmra.mrb[0].mxu0 %v2884
        %v3093 = vpop.f32.mrb[0].mxu0
        %v3094 = vadd.f32 %v1157, %v3093
        %v3095 = vpop.f32.mrb[0].mxu0
        %3096 = vdwg.mxu0
        %v3097 = vtanh.pop %v3094
        %s3098 = scalar_lea.vmem %s373, 56 [#allocation7]
        %v3099 = vld [vmem:[%s3098] sm:$0xff]
        %3101 = vset.pattern.permute.xlu0 0
        %3102 = vperm.xlu0 %3101, %v3099
        %v3103 = vpop.permute.xlu0 %3102
        %v3105 = vmul.f32 %v3097, %v3103
        %v3106 = vadd.f32 %v2884, %v3105
        %v3107 = vld [vmem:[#allocation3 + $0xe0] sm:$0xff]
        %v3108 = vld [vmem:[#allocation3 + $0xe8] sm:$0xff]
        %v3109 = vld [vmem:[#allocation3 + $0xf0] sm:$0xff]
        %v3110 = vld [vmem:[#allocation3 + $0xf8] sm:$0xff]
        %v3111 = vadd.f32 %v3107, %v2952
        %v3112 = vadd.f32 %v3108, %v2954
        %v3113 = vadd.f32 %v3109, %v3023
        %v3114 = vadd.f32 %v3110, %v3025
        %v3115 = vxor.u32 %v3111, 2147483648
        %v3116 = vxor.u32 %v3112, 2147483648
        %v3117 = vxor.u32 %v3113, 2147483648
        %v3118 = vxor.u32 %v3114, 2147483648
        %v3119 = vmul.f32 %v3115, 1.442695
        %v3120 = vpow.pop %v3119
        %v3121 = vmul.f32 %v3116, 1.442695
        %v3122 = vpow.pop %v3121
        %v3123 = vmul.f32 %v3117, 1.442695
        %v3124 = vpow.pop %v3123
        %v3125 = vmul.f32 %v3118, 1.442695
        %v3126 = vpow.pop %v3125
        %v3127 = vadd.f32 %v3120, 1.0
        %v3128 = vadd.f32 %v3122, 1.0
        %v3129 = vadd.f32 %v3124, 1.0
        %v3130 = vadd.f32 %v3126, 1.0
        %v3131 = vrcp.pop %v3127
        %v3132 = vmul.f32 1.0, %v3131
        %v3133 = vrcp.pop %v3128
        %v3134 = vmul.f32 1.0, %v3133
        %v3135 = vrcp.pop %v3129
        %v3136 = vmul.f32 1.0, %v3135
        %v3137 = vrcp.pop %v3130
        %v3138 = vmul.f32 1.0, %v3137
        %v3139 = vmul.f32 %v3132, %v3106
        %v3140 = vmul.f32 %v3134, %v3138
        %v3141 = vadd.f32 %v3139, %v3140
        %v3142 = vtanh.pop %v3141
        %v3143 = vmul.f32 %v3136, %v3142
        %3144 = vst [vmem:[%s428 + $0x38] sm:$0xff] %v3143
        %s3145 = sadd.s32 %s1276, 7
        %p3146 = scmp.lt.s32.totalorder %s3145, 20
        %s3147 = scalar_select %p3146, 1, 0
        %v3148 = vstv %s3147
        %vm3149 = vcmp.eq.s32.totalorder %v3148, 1
        %v3150 = vsel %vm3149, %v3143, %v2883
        %v3151 = vsel %vm3149, %v3141, %v2884
        %3152 = vmatprep.subr.mxu0 %v931
        %3153 = vmatpush1.msra.mxu0 %v930
        %3154 = vmatprep.subr.mxu0 %v935
        %3155 = vmatpush1.msra.mxu0 %v934
        %3156 = vmatprep.subr.mxu0 %v939
        %3157 = vmatpush1.msra.mxu0 %v938
        %3158 = vmatprep.subr.mxu0 %v943
        %3159 = vmatpush1.msra.mxu0 %v942
        %3160 = vmatprep.subr.mxu0 %v947
        %3161 = vmatpush1.msra.mxu0 %v946
        %3162 = vmatprep.subr.mxu0 %v951
        %3163 = vmatpush1.msra.mxu0 %v950
        %3164 = vmatprep.subr.mxu0 %v955
        %3165 = vmatpush1.msra.mxu0 %v954
        %3166 = vmatprep.subr.mxu0 %v959
        %3167 = vmatpush1.msra.mxu0 %v958
        %3168 = vmatprep.subr.mxu0 %v963
        %3169 = vmatpush1.msra.mxu0 %v962
        %3170 = vmatprep.subr.mxu0 %v967
        %3171 = vmatpush1.msra.mxu0 %v966
        %3172 = vmatprep.subr.mxu0 %v971
        %3173 = vmatpush1.msra.mxu0 %v970
        %3174 = vmatprep.subr.mxu0 %v975
        %3175 = vmatpush1.msra.mxu0 %v974
        %3176 = vmatprep.subr.mxu0 %v979
        %3177 = vmatpush1.msra.mxu0 %v978
        %3178 = vmatprep.subr.mxu0 %v983
        %3179 = vmatpush1.msra.mxu0 %v982
        %3180 = vmatprep.subr.mxu0 %v987
        %3181 = vmatpush1.msra.mxu0 %v986
        %3182 = vmatprep.subr.mxu0 %v991
        %3183 = vmatpush1.msra.mxu0 %v990
        %3184 = vmatprep.subr.mxu0 0.0
        %3185 = vmatpush1.msra.mxu0 0.0
        %3186 = vmatprep.subr.mxu0 0.0
        %3187 = vmatpush1.msra.mxu0 0.0
        %3188 = vmatprep.subr.mxu0 0.0
        %3189 = vmatpush1.msra.mxu0 0.0
        %3190 = vmatprep.subr.mxu0 0.0
        %3191 = vmatpush1.msra.mxu0 0.0
        %3192 = vmatprep.subr.mxu0 0.0
        %3193 = vmatpush1.msra.mxu0 0.0
        %3194 = vmatprep.subr.mxu0 0.0
        %3195 = vmatpush1.msra.mxu0 0.0
        %3196 = vmatprep.subr.mxu0 0.0
        %3197 = vmatpush1.msra.mxu0 0.0
        %3198 = vmatprep.subr.mxu0 0.0
        %3199 = vmatpush1.msra.mxu0 0.0
        %3200 = vmatprep.subr.mxu0 0.0
        %3201 = vmatpush1.msra.mxu0 0.0
        %3202 = vmatprep.subr.mxu0 0.0
        %3203 = vmatpush1.msra.mxu0 0.0
        %3204 = vmatprep.subr.mxu0 0.0
        %3205 = vmatpush1.msra.mxu0 0.0
        %3206 = vmatprep.subr.mxu0 0.0
        %3207 = vmatpush1.msra.mxu0 0.0
        %3208 = vmatprep.subr.mxu0 0.0
        %3209 = vmatpush1.msra.mxu0 0.0
        %3210 = vmatprep.subr.mxu0 0.0
        %3211 = vmatpush1.msra.mxu0 0.0
        %3212 = vmatprep.subr.mxu0 0.0
        %3213 = vmatpush1.msra.mxu0 0.0
        %3214 = vmatprep.subr.mxu0 0.0
        %3215 = vmatpush1.msra.mxu0 0.0
        %3216 = vmatprep.mubr.f32.mxu0 0.0
        %3217 = vmatmul.mubr.f32.gmra.mrb[0].mxu0 %v3150
        %v3218 = vpop.f32.mrb[0].mxu0
        %v3219 = vadd.f32 0.0, %v3218
        %v3220 = vpop.f32.mrb[0].mxu0
        %v3221 = vadd.f32 0.0, %v3220
        %3222 = vdwg.mxu0
        %3223 = vmatprep.subr.mxu0 %v933
        %3224 = vmatpush1.msra.mxu0 %v932
        %3225 = vmatprep.subr.mxu0 %v937
        %3226 = vmatpush1.msra.mxu0 %v936
        %3227 = vmatprep.subr.mxu0 %v941
        %3228 = vmatpush1.msra.mxu0 %v940
        %3229 = vmatprep.subr.mxu0 %v945
        %3230 = vmatpush1.msra.mxu0 %v944
        %3231 = vmatprep.subr.mxu0 %v949
        %3232 = vmatpush1.msra.mxu0 %v948
        %3233 = vmatprep.subr.mxu0 %v953
        %3234 = vmatpush1.msra.mxu0 %v952
        %3235 = vmatprep.subr.mxu0 %v957
        %3236 = vmatpush1.msra.mxu0 %v956
        %3237 = vmatprep.subr.mxu0 %v961
        %3238 = vmatpush1.msra.mxu0 %v960
        %3239 = vmatprep.subr.mxu0 %v965
        %3240 = vmatpush1.msra.mxu0 %v964
        %3241 = vmatprep.subr.mxu0 %v969
        %3242 = vmatpush1.msra.mxu0 %v968
        %3243 = vmatprep.subr.mxu0 %v973
        %3244 = vmatpush1.msra.mxu0 %v972
        %3245 = vmatprep.subr.mxu0 %v977
        %3246 = vmatpush1.msra.mxu0 %v976
        %3247 = vmatprep.subr.mxu0 %v981
        %3248 = vmatpush1.msra.mxu0 %v980
        %3249 = vmatprep.subr.mxu0 %v985
        %3250 = vmatpush1.msra.mxu0 %v984
        %3251 = vmatprep.subr.mxu0 %v989
        %3252 = vmatpush1.msra.mxu0 %v988
        %3253 = vmatprep.subr.mxu0 %v993
        %3254 = vmatpush1.msra.mxu0 %v992
        %3255 = vmatprep.subr.mxu0 0.0
        %3256 = vmatpush1.msra.mxu0 0.0
        %3257 = vmatprep.subr.mxu0 0.0
        %3258 = vmatpush1.msra.mxu0 0.0
        %3259 = vmatprep.subr.mxu0 0.0
        %3260 = vmatpush1.msra.mxu0 0.0
        %3261 = vmatprep.subr.mxu0 0.0
        %3262 = vmatpush1.msra.mxu0 0.0
        %3263 = vmatprep.subr.mxu0 0.0
        %3264 = vmatpush1.msra.mxu0 0.0
        %3265 = vmatprep.subr.mxu0 0.0
        %3266 = vmatpush1.msra.mxu0 0.0
        %3267 = vmatprep.subr.mxu0 0.0
        %3268 = vmatpush1.msra.mxu0 0.0
        %3269 = vmatprep.subr.mxu0 0.0
        %3270 = vmatpush1.msra.mxu0 0.0
        %3271 = vmatprep.subr.mxu0 0.0
        %3272 = vmatpush1.msra.mxu0 0.0
        %3273 = vmatprep.subr.mxu0 0.0
        %3274 = vmatpush1.msra.mxu0 0.0
        %3275 = vmatprep.subr.mxu0 0.0
        %3276 = vmatpush1.msra.mxu0 0.0
        %3277 = vmatprep.subr.mxu0 0.0
        %3278 = vmatpush1.msra.mxu0 0.0
        %3279 = vmatprep.subr.mxu0 0.0
        %3280 = vmatpush1.msra.mxu0 0.0
        %3281 = vmatprep.subr.mxu0 0.0
        %3282 = vmatpush1.msra.mxu0 0.0
        %3283 = vmatprep.subr.mxu0 0.0
        %3284 = vmatpush1.msra.mxu0 0.0
        %3285 = vmatprep.subr.mxu0 0.0
        %3286 = vmatpush1.msra.mxu0 0.0
        %3287 = vmatprep.mubr.f32.mxu0 0.0
        %3288 = vmatmul.mubr.f32.gmra.mrb[0].mxu0 %v3150
        %v3289 = vpop.f32.mrb[0].mxu0
        %v3290 = vadd.f32 0.0, %v3289
        %v3291 = vpop.f32.mrb[0].mxu0
        %v3292 = vadd.f32 0.0, %v3291
        %3293 = vdwg.mxu0
        %3294 = vmatprep.subr.mxu0 0.0
        %3295 = vmatpush1.msra.mxu0 %v994
        %3296 = vmatprep.subr.mxu0 0.0
        %3297 = vmatpush1.msra.mxu0 %v995
        %3298 = vmatprep.subr.mxu0 0.0
        %3299 = vmatpush1.msra.mxu0 %v996
        %3300 = vmatprep.subr.mxu0 0.0
        %3301 = vmatpush1.msra.mxu0 %v997
        %3302 = vmatprep.subr.mxu0 0.0
        %3303 = vmatpush1.msra.mxu0 %v998
        %3304 = vmatprep.subr.mxu0 0.0
        %3305 = vmatpush1.msra.mxu0 %v999
        %3306 = vmatprep.subr.mxu0 0.0
        %3307 = vmatpush1.msra.mxu0 %v1000
        %3308 = vmatprep.subr.mxu0 0.0
        %3309 = vmatpush1.msra.mxu0 %v1001
        %3310 = vmatprep.subr.mxu0 0.0
        %3311 = vmatpush1.msra.mxu0 %v1002
        %3312 = vmatprep.subr.mxu0 0.0
        %3313 = vmatpush1.msra.mxu0 %v1003
        %3314 = vmatprep.subr.mxu0 0.0
        %3315 = vmatpush1.msra.mxu0 %v1004
        %3316 = vmatprep.subr.mxu0 0.0
        %3317 = vmatpush1.msra.mxu0 %v1005
        %3318 = vmatprep.subr.mxu0 0.0
        %3319 = vmatpush1.msra.mxu0 %v1006
        %3320 = vmatprep.subr.mxu0 0.0
        %3321 = vmatpush1.msra.mxu0 %v1007
        %3322 = vmatprep.subr.mxu0 0.0
        %3323 = vmatpush1.msra.mxu0 %v1008
        %3324 = vmatprep.subr.mxu0 0.0
        %3325 = vmatpush1.msra.mxu0 %v1009
        %3326 = vmatprep.subr.mxu0 0.0
        %3327 = vmatpush1.msra.mxu0 0.0
        %3328 = vmatprep.subr.mxu0 0.0
        %3329 = vmatpush1.msra.mxu0 0.0
        %3330 = vmatprep.subr.mxu0 0.0
        %3331 = vmatpush1.msra.mxu0 0.0
        %3332 = vmatprep.subr.mxu0 0.0
        %3333 = vmatpush1.msra.mxu0 0.0
        %3334 = vmatprep.subr.mxu0 0.0
        %3335 = vmatpush1.msra.mxu0 0.0
        %3336 = vmatprep.subr.mxu0 0.0
        %3337 = vmatpush1.msra.mxu0 0.0
        %3338 = vmatprep.subr.mxu0 0.0
        %3339 = vmatpush1.msra.mxu0 0.0
        %3340 = vmatprep.subr.mxu0 0.0
        %3341 = vmatpush1.msra.mxu0 0.0
        %3342 = vmatprep.subr.mxu0 0.0
        %3343 = vmatpush1.msra.mxu0 0.0
        %3344 = vmatprep.subr.mxu0 0.0
        %3345 = vmatpush1.msra.mxu0 0.0
        %3346 = vmatprep.subr.mxu0 0.0
        %3347 = vmatpush1.msra.mxu0 0.0
        %3348 = vmatprep.subr.mxu0 0.0
        %3349 = vmatpush1.msra.mxu0 0.0
        %3350 = vmatprep.subr.mxu0 0.0
        %3351 = vmatpush1.msra.mxu0 0.0
        %3352 = vmatprep.subr.mxu0 0.0
        %3353 = vmatpush1.msra.mxu0 0.0
        %3354 = vmatprep.subr.mxu0 0.0
        %3355 = vmatpush1.msra.mxu0 0.0
        %3356 = vmatprep.subr.mxu0 0.0
        %3357 = vmatpush1.msra.mxu0 0.0
        %3358 = vmatprep.mubr.f32.mxu0 0.0
        %3359 = vmatmul.mubr.f32.gmra.mrb[0].mxu0 %v3151
        %v3360 = vpop.f32.mrb[0].mxu0
        %v3361 = vadd.f32 %v1157, %v3360
        %v3362 = vpop.f32.mrb[0].mxu0
        %3363 = vdwg.mxu0
        %v3364 = vtanh.pop %v3361
        %s3365 = scalar_lea.vmem %s373, 64 [#allocation7]
        %v3366 = vld [vmem:[%s3365] sm:$0xff]
        %3368 = vset.pattern.permute.xlu0 0
        %3369 = vperm.xlu0 %3368, %v3366
        %v3370 = vpop.permute.xlu0 %3369
        %v3372 = vmul.f32 %v3364, %v3370
        %v3373 = vadd.f32 %v3151, %v3372
        %v3374 = vld [vmem:[#allocation3 + $0x100] sm:$0xff]
        %v3375 = vld [vmem:[#allocation3 + $0x108] sm:$0xff]
        %v3376 = vld [vmem:[#allocation3 + $0x110] sm:$0xff]
        %v3377 = vld [vmem:[#allocation3 + $0x118] sm:$0xff]
        %v3378 = vadd.f32 %v3374, %v3219
        %v3379 = vadd.f32 %v3375, %v3221
        %v3380 = vadd.f32 %v3376, %v3290
        %v3381 = vadd.f32 %v3377, %v3292
        %v3382 = vxor.u32 %v3378, 2147483648
        %v3383 = vxor.u32 %v3379, 2147483648
        %v3384 = vxor.u32 %v3380, 2147483648
        %v3385 = vxor.u32 %v3381, 2147483648
        %v3386 = vmul.f32 %v3382, 1.442695
        %v3387 = vpow.pop %v3386
        %v3388 = vmul.f32 %v3383, 1.442695
        %v3389 = vpow.pop %v3388
        %v3390 = vmul.f32 %v3384, 1.442695
        %v3391 = vpow.pop %v3390
        %v3392 = vmul.f32 %v3385, 1.442695
        %v3393 = vpow.pop %v3392
        %v3394 = vadd.f32 %v3387, 1.0
        %v3395 = vadd.f32 %v3389, 1.0
        %v3396 = vadd.f32 %v3391, 1.0
        %v3397 = vadd.f32 %v3393, 1.0
        %v3398 = vrcp.pop %v3394
        %v3399 = vmul.f32 1.0, %v3398
        %v3400 = vrcp.pop %v3395
        %v3401 = vmul.f32 1.0, %v3400
        %v3402 = vrcp.pop %v3396
        %v3403 = vmul.f32 1.0, %v3402
        %v3404 = vrcp.pop %v3397
        %v3405 = vmul.f32 1.0, %v3404
        %v3406 = vmul.f32 %v3399, %v3373
        %v3407 = vmul.f32 %v3401, %v3405
        %v3408 = vadd.f32 %v3406, %v3407
        %v3409 = vtanh.pop %v3408
        %v3410 = vmul.f32 %v3403, %v3409
        %3411 = vst [vmem:[%s428 + $0x40] sm:$0xff] %v3410
        %s3412 = sadd.s32 %s1276, 8
        %p3413 = scmp.lt.s32.totalorder %s3412, 20
        %s3414 = scalar_select %p3413, 1, 0
        %v3415 = vstv %s3414
        %vm3416 = vcmp.eq.s32.totalorder %v3415, 1
        %v3417 = vsel %vm3416, %v3410, %v3150
        %v3418 = vsel %vm3416, %v3408, %v3151
        %3419 = vmatprep.subr.mxu0 %v931
        %3420 = vmatpush1.msra.mxu0 %v930
        %3421 = vmatprep.subr.mxu0 %v935
        %3422 = vmatpush1.msra.mxu0 %v934
        %3423 = vmatprep.subr.mxu0 %v939
        %3424 = vmatpush1.msra.mxu0 %v938
        %3425 = vmatprep.subr.mxu0 %v943
        %3426 = vmatpush1.msra.mxu0 %v942
        %3427 = vmatprep.subr.mxu0 %v947
        %3428 = vmatpush1.msra.mxu0 %v946
        %3429 = vmatprep.subr.mxu0 %v951
        %3430 = vmatpush1.msra.mxu0 %v950
        %3431 = vmatprep.subr.mxu0 %v955
        %3432 = vmatpush1.msra.mxu0 %v954
        %3433 = vmatprep.subr.mxu0 %v959
        %3434 = vmatpush1.msra.mxu0 %v958
        %3435 = vmatprep.subr.mxu0 %v963
        %3436 = vmatpush1.msra.mxu0 %v962
        %3437 = vmatprep.subr.mxu0 %v967
        %3438 = vmatpush1.msra.mxu0 %v966
        %3439 = vmatprep.subr.mxu0 %v971
        %3440 = vmatpush1.msra.mxu0 %v970
        %3441 = vmatprep.subr.mxu0 %v975
        %3442 = vmatpush1.msra.mxu0 %v974
        %3443 = vmatprep.subr.mxu0 %v979
        %3444 = vmatpush1.msra.mxu0 %v978
        %3445 = vmatprep.subr.mxu0 %v983
        %3446 = vmatpush1.msra.mxu0 %v982
        %3447 = vmatprep.subr.mxu0 %v987
        %3448 = vmatpush1.msra.mxu0 %v986
        %3449 = vmatprep.subr.mxu0 %v991
        %3450 = vmatpush1.msra.mxu0 %v990
        %3451 = vmatprep.subr.mxu0 0.0
        %3452 = vmatpush1.msra.mxu0 0.0
        %3453 = vmatprep.subr.mxu0 0.0
        %3454 = vmatpush1.msra.mxu0 0.0
        %3455 = vmatprep.subr.mxu0 0.0
        %3456 = vmatpush1.msra.mxu0 0.0
        %3457 = vmatprep.subr.mxu0 0.0
        %3458 = vmatpush1.msra.mxu0 0.0
        %3459 = vmatprep.subr.mxu0 0.0
        %3460 = vmatpush1.msra.mxu0 0.0
        %3461 = vmatprep.subr.mxu0 0.0
        %3462 = vmatpush1.msra.mxu0 0.0
        %3463 = vmatprep.subr.mxu0 0.0
        %3464 = vmatpush1.msra.mxu0 0.0
        %3465 = vmatprep.subr.mxu0 0.0
        %3466 = vmatpush1.msra.mxu0 0.0
        %3467 = vmatprep.subr.mxu0 0.0
        %3468 = vmatpush1.msra.mxu0 0.0
        %3469 = vmatprep.subr.mxu0 0.0
        %3470 = vmatpush1.msra.mxu0 0.0
        %3471 = vmatprep.subr.mxu0 0.0
        %3472 = vmatpush1.msra.mxu0 0.0
        %3473 = vmatprep.subr.mxu0 0.0
        %3474 = vmatpush1.msra.mxu0 0.0
        %3475 = vmatprep.subr.mxu0 0.0
        %3476 = vmatpush1.msra.mxu0 0.0
        %3477 = vmatprep.subr.mxu0 0.0
        %3478 = vmatpush1.msra.mxu0 0.0
        %3479 = vmatprep.subr.mxu0 0.0
        %3480 = vmatpush1.msra.mxu0 0.0
        %3481 = vmatprep.subr.mxu0 0.0
        %3482 = vmatpush1.msra.mxu0 0.0
        %3483 = vmatprep.mubr.f32.mxu0 0.0
        %3484 = vmatmul.mubr.f32.gmra.mrb[0].mxu0 %v3417
        %v3485 = vpop.f32.mrb[0].mxu0
        %v3486 = vadd.f32 0.0, %v3485
        %v3487 = vpop.f32.mrb[0].mxu0
        %v3488 = vadd.f32 0.0, %v3487
        %3489 = vdwg.mxu0
        %3490 = vmatprep.subr.mxu0 %v933
        %3491 = vmatpush1.msra.mxu0 %v932
        %3492 = vmatprep.subr.mxu0 %v937
        %3493 = vmatpush1.msra.mxu0 %v936
        %3494 = vmatprep.subr.mxu0 %v941
        %3495 = vmatpush1.msra.mxu0 %v940
        %3496 = vmatprep.subr.mxu0 %v945
        %3497 = vmatpush1.msra.mxu0 %v944
        %3498 = vmatprep.subr.mxu0 %v949
        %3499 = vmatpush1.msra.mxu0 %v948
        %3500 = vmatprep.subr.mxu0 %v953
        %3501 = vmatpush1.msra.mxu0 %v952
        %3502 = vmatprep.subr.mxu0 %v957
        %3503 = vmatpush1.msra.mxu0 %v956
        %3504 = vmatprep.subr.mxu0 %v961
        %3505 = vmatpush1.msra.mxu0 %v960
        %3506 = vmatprep.subr.mxu0 %v965
        %3507 = vmatpush1.msra.mxu0 %v964
        %3508 = vmatprep.subr.mxu0 %v969
        %3509 = vmatpush1.msra.mxu0 %v968
        %3510 = vmatprep.subr.mxu0 %v973
        %3511 = vmatpush1.msra.mxu0 %v972
        %3512 = vmatprep.subr.mxu0 %v977
        %3513 = vmatpush1.msra.mxu0 %v976
        %3514 = vmatprep.subr.mxu0 %v981
        %3515 = vmatpush1.msra.mxu0 %v980
        %3516 = vmatprep.subr.mxu0 %v985
        %3517 = vmatpush1.msra.mxu0 %v984
        %3518 = vmatprep.subr.mxu0 %v989
        %3519 = vmatpush1.msra.mxu0 %v988
        %3520 = vmatprep.subr.mxu0 %v993
        %3521 = vmatpush1.msra.mxu0 %v992
        %3522 = vmatprep.subr.mxu0 0.0
        %3523 = vmatpush1.msra.mxu0 0.0
        %3524 = vmatprep.subr.mxu0 0.0
        %3525 = vmatpush1.msra.mxu0 0.0
        %3526 = vmatprep.subr.mxu0 0.0
        %3527 = vmatpush1.msra.mxu0 0.0
        %3528 = vmatprep.subr.mxu0 0.0
        %3529 = vmatpush1.msra.mxu0 0.0
        %3530 = vmatprep.subr.mxu0 0.0
        %3531 = vmatpush1.msra.mxu0 0.0
        %3532 = vmatprep.subr.mxu0 0.0
        %3533 = vmatpush1.msra.mxu0 0.0
        %3534 = vmatprep.subr.mxu0 0.0
        %3535 = vmatpush1.msra.mxu0 0.0
        %3536 = vmatprep.subr.mxu0 0.0
        %3537 = vmatpush1.msra.mxu0 0.0
        %3538 = vmatprep.subr.mxu0 0.0
        %3539 = vmatpush1.msra.mxu0 0.0
        %3540 = vmatprep.subr.mxu0 0.0
        %3541 = vmatpush1.msra.mxu0 0.0
        %3542 = vmatprep.subr.mxu0 0.0
        %3543 = vmatpush1.msra.mxu0 0.0
        %3544 = vmatprep.subr.mxu0 0.0
        %3545 = vmatpush1.msra.mxu0 0.0
        %3546 = vmatprep.subr.mxu0 0.0
        %3547 = vmatpush1.msra.mxu0 0.0
        %3548 = vmatprep.subr.mxu0 0.0
        %3549 = vmatpush1.msra.mxu0 0.0
        %3550 = vmatprep.subr.mxu0 0.0
        %3551 = vmatpush1.msra.mxu0 0.0
        %3552 = vmatprep.subr.mxu0 0.0
        %3553 = vmatpush1.msra.mxu0 0.0
        %3554 = vmatprep.mubr.f32.mxu0 0.0
        %3555 = vmatmul.mubr.f32.gmra.mrb[0].mxu0 %v3417
        %v3556 = vpop.f32.mrb[0].mxu0
        %v3557 = vadd.f32 0.0, %v3556
        %v3558 = vpop.f32.mrb[0].mxu0
        %v3559 = vadd.f32 0.0, %v3558
        %3560 = vdwg.mxu0
        %3561 = vmatprep.subr.mxu0 0.0
        %3562 = vmatpush1.msra.mxu0 %v994
        %3563 = vmatprep.subr.mxu0 0.0
        %3564 = vmatpush1.msra.mxu0 %v995
        %3565 = vmatprep.subr.mxu0 0.0
        %3566 = vmatpush1.msra.mxu0 %v996
        %3567 = vmatprep.subr.mxu0 0.0
        %3568 = vmatpush1.msra.mxu0 %v997
        %3569 = vmatprep.subr.mxu0 0.0
        %3570 = vmatpush1.msra.mxu0 %v998
        %3571 = vmatprep.subr.mxu0 0.0
        %3572 = vmatpush1.msra.mxu0 %v999
        %3573 = vmatprep.subr.mxu0 0.0
        %3574 = vmatpush1.msra.mxu0 %v1000
        %3575 = vmatprep.subr.mxu0 0.0
        %3576 = vmatpush1.msra.mxu0 %v1001
        %3577 = vmatprep.subr.mxu0 0.0
        %3578 = vmatpush1.msra.mxu0 %v1002
        %3579 = vmatprep.subr.mxu0 0.0
        %3580 = vmatpush1.msra.mxu0 %v1003
        %3581 = vmatprep.subr.mxu0 0.0
        %3582 = vmatpush1.msra.mxu0 %v1004
        %3583 = vmatprep.subr.mxu0 0.0
        %3584 = vmatpush1.msra.mxu0 %v1005
        %3585 = vmatprep.subr.mxu0 0.0
        %3586 = vmatpush1.msra.mxu0 %v1006
        %3587 = vmatprep.subr.mxu0 0.0
        %3588 = vmatpush1.msra.mxu0 %v1007
        %3589 = vmatprep.subr.mxu0 0.0
        %3590 = vmatpush1.msra.mxu0 %v1008
        %3591 = vmatprep.subr.mxu0 0.0
        %3592 = vmatpush1.msra.mxu0 %v1009
        %3593 = vmatprep.subr.mxu0 0.0
        %3594 = vmatpush1.msra.mxu0 0.0
        %3595 = vmatprep.subr.mxu0 0.0
        %3596 = vmatpush1.msra.mxu0 0.0
        %3597 = vmatprep.subr.mxu0 0.0
        %3598 = vmatpush1.msra.mxu0 0.0
        %3599 = vmatprep.subr.mxu0 0.0
        %3600 = vmatpush1.msra.mxu0 0.0
        %3601 = vmatprep.subr.mxu0 0.0
        %3602 = vmatpush1.msra.mxu0 0.0
        %3603 = vmatprep.subr.mxu0 0.0
        %3604 = vmatpush1.msra.mxu0 0.0
        %3605 = vmatprep.subr.mxu0 0.0
        %3606 = vmatpush1.msra.mxu0 0.0
        %3607 = vmatprep.subr.mxu0 0.0
        %3608 = vmatpush1.msra.mxu0 0.0
        %3609 = vmatprep.subr.mxu0 0.0
        %3610 = vmatpush1.msra.mxu0 0.0
        %3611 = vmatprep.subr.mxu0 0.0
        %3612 = vmatpush1.msra.mxu0 0.0
        %3613 = vmatprep.subr.mxu0 0.0
        %3614 = vmatpush1.msra.mxu0 0.0
        %3615 = vmatprep.subr.mxu0 0.0
        %3616 = vmatpush1.msra.mxu0 0.0
        %3617 = vmatprep.subr.mxu0 0.0
        %3618 = vmatpush1.msra.mxu0 0.0
        %3619 = vmatprep.subr.mxu0 0.0
        %3620 = vmatpush1.msra.mxu0 0.0
        %3621 = vmatprep.subr.mxu0 0.0
        %3622 = vmatpush1.msra.mxu0 0.0
        %3623 = vmatprep.subr.mxu0 0.0
        %3624 = vmatpush1.msra.mxu0 0.0
        %3625 = vmatprep.mubr.f32.mxu0 0.0
        %3626 = vmatmul.mubr.f32.gmra.mrb[0].mxu0 %v3418
        %v3627 = vpop.f32.mrb[0].mxu0
        %v3628 = vadd.f32 %v1157, %v3627
        %v3629 = vpop.f32.mrb[0].mxu0
        %3630 = vdwg.mxu0
        %v3631 = vtanh.pop %v3628
        %s3632 = scalar_lea.vmem %s373, 72 [#allocation7]
        %v3633 = vld [vmem:[%s3632] sm:$0xff]
        %3635 = vset.pattern.permute.xlu0 0
        %3636 = vperm.xlu0 %3635, %v3633
        %v3637 = vpop.permute.xlu0 %3636
        %v3639 = vmul.f32 %v3631, %v3637
        %v3640 = vadd.f32 %v3418, %v3639
        %v3641 = vld [vmem:[#allocation3 + $0x120] sm:$0xff]
        %v3642 = vld [vmem:[#allocation3 + $0x128] sm:$0xff]
        %v3643 = vld [vmem:[#allocation3 + $0x130] sm:$0xff]
        %v3644 = vld [vmem:[#allocation3 + $0x138] sm:$0xff]
        %v3645 = vadd.f32 %v3641, %v3486
        %v3646 = vadd.f32 %v3642, %v3488
        %v3647 = vadd.f32 %v3643, %v3557
        %v3648 = vadd.f32 %v3644, %v3559
        %v3649 = vxor.u32 %v3645, 2147483648
        %v3650 = vxor.u32 %v3646, 2147483648
        %v3651 = vxor.u32 %v3647, 2147483648
        %v3652 = vxor.u32 %v3648, 2147483648
        %v3653 = vmul.f32 %v3649, 1.442695
        %v3654 = vpow.pop %v3653
        %v3655 = vmul.f32 %v3650, 1.442695
        %v3656 = vpow.pop %v3655
        %v3657 = vmul.f32 %v3651, 1.442695
        %v3658 = vpow.pop %v3657
        %v3659 = vmul.f32 %v3652, 1.442695
        %v3660 = vpow.pop %v3659
        %v3661 = vadd.f32 %v3654, 1.0
        %v3662 = vadd.f32 %v3656, 1.0
        %v3663 = vadd.f32 %v3658, 1.0
        %v3664 = vadd.f32 %v3660, 1.0
        %v3665 = vrcp.pop %v3661
        %v3666 = vmul.f32 1.0, %v3665
        %v3667 = vrcp.pop %v3662
        %v3668 = vmul.f32 1.0, %v3667
        %v3669 = vrcp.pop %v3663
        %v3670 = vmul.f32 1.0, %v3669
        %v3671 = vrcp.pop %v3664
        %v3672 = vmul.f32 1.0, %v3671
        %v3673 = vmul.f32 %v3666, %v3640
        %v3674 = vmul.f32 %v3668, %v3672
        %v3675 = vadd.f32 %v3673, %v3674
        %v3676 = vtanh.pop %v3675
        %v3677 = vmul.f32 %v3670, %v3676
        %3678 = vst [vmem:[%s428 + $0x48] sm:$0xff] %v3677
        %s3679 = sadd.s32 %s1276, 9
        %p3680 = scmp.lt.s32.totalorder %s3679, 20
        %s3681 = scalar_select %p3680, 1, 0
        %v3682 = vstv %s3681
        %vm3683 = vcmp.eq.s32.totalorder %v3682, 1
        %v3684 = vsel %vm3683, %v3677, %v3417
        %v3685 = vsel %vm3683, %v3675, %v3418
        %3686 = vmatprep.subr.mxu0 %v931
        %3687 = vmatpush1.msra.mxu0 %v930
        %3688 = vmatprep.subr.mxu0 %v935
        %3689 = vmatpush1.msra.mxu0 %v934
        %3690 = vmatprep.subr.mxu0 %v939
        %3691 = vmatpush1.msra.mxu0 %v938
        %3692 = vmatprep.subr.mxu0 %v943
        %3693 = vmatpush1.msra.mxu0 %v942
        %3694 = vmatprep.subr.mxu0 %v947
        %3695 = vmatpush1.msra.mxu0 %v946
        %3696 = vmatprep.subr.mxu0 %v951
        %3697 = vmatpush1.msra.mxu0 %v950
        %3698 = vmatprep.subr.mxu0 %v955
        %3699 = vmatpush1.msra.mxu0 %v954
        %3700 = vmatprep.subr.mxu0 %v959
        %3701 = vmatpush1.msra.mxu0 %v958
        %3702 = vmatprep.subr.mxu0 %v963
        %3703 = vmatpush1.msra.mxu0 %v962
        %3704 = vmatprep.subr.mxu0 %v967
        %3705 = vmatpush1.msra.mxu0 %v966
        %3706 = vmatprep.subr.mxu0 %v971
        %3707 = vmatpush1.msra.mxu0 %v970
        %3708 = vmatprep.subr.mxu0 %v975
        %3709 = vmatpush1.msra.mxu0 %v974
        %3710 = vmatprep.subr.mxu0 %v979
        %3711 = vmatpush1.msra.mxu0 %v978
        %3712 = vmatprep.subr.mxu0 %v983
        %3713 = vmatpush1.msra.mxu0 %v982
        %3714 = vmatprep.subr.mxu0 %v987
        %3715 = vmatpush1.msra.mxu0 %v986
        %3716 = vmatprep.subr.mxu0 %v991
        %3717 = vmatpush1.msra.mxu0 %v990
        %3718 = vmatprep.subr.mxu0 0.0
        %3719 = vmatpush1.msra.mxu0 0.0
        %3720 = vmatprep.subr.mxu0 0.0
        %3721 = vmatpush1.msra.mxu0 0.0
        %3722 = vmatprep.subr.mxu0 0.0
        %3723 = vmatpush1.msra.mxu0 0.0
        %3724 = vmatprep.subr.mxu0 0.0
        %3725 = vmatpush1.msra.mxu0 0.0
        %3726 = vmatprep.subr.mxu0 0.0
        %3727 = vmatpush1.msra.mxu0 0.0
        %3728 = vmatprep.subr.mxu0 0.0
        %3729 = vmatpush1.msra.mxu0 0.0
        %3730 = vmatprep.subr.mxu0 0.0
        %3731 = vmatpush1.msra.mxu0 0.0
        %3732 = vmatprep.subr.mxu0 0.0
        %3733 = vmatpush1.msra.mxu0 0.0
        %3734 = vmatprep.subr.mxu0 0.0
        %3735 = vmatpush1.msra.mxu0 0.0
        %3736 = vmatprep.subr.mxu0 0.0
        %3737 = vmatpush1.msra.mxu0 0.0
        %3738 = vmatprep.subr.mxu0 0.0
        %3739 = vmatpush1.msra.mxu0 0.0
        %3740 = vmatprep.subr.mxu0 0.0
        %3741 = vmatpush1.msra.mxu0 0.0
        %3742 = vmatprep.subr.mxu0 0.0
        %3743 = vmatpush1.msra.mxu0 0.0
        %3744 = vmatprep.subr.mxu0 0.0
        %3745 = vmatpush1.msra.mxu0 0.0
        %3746 = vmatprep.subr.mxu0 0.0
        %3747 = vmatpush1.msra.mxu0 0.0
        %3748 = vmatprep.subr.mxu0 0.0
        %3749 = vmatpush1.msra.mxu0 0.0
        %3750 = vmatprep.mubr.f32.mxu0 0.0
        %3751 = vmatmul.mubr.f32.gmra.mrb[0].mxu0 %v3684
        %v3752 = vpop.f32.mrb[0].mxu0
        %v3753 = vadd.f32 0.0, %v3752
        %v3754 = vpop.f32.mrb[0].mxu0
        %v3755 = vadd.f32 0.0, %v3754
        %3756 = vdwg.mxu0
        %3757 = vmatprep.subr.mxu0 %v933
        %3758 = vmatpush1.msra.mxu0 %v932
        %3759 = vmatprep.subr.mxu0 %v937
        %3760 = vmatpush1.msra.mxu0 %v936
        %3761 = vmatprep.subr.mxu0 %v941
        %3762 = vmatpush1.msra.mxu0 %v940
        %3763 = vmatprep.subr.mxu0 %v945
        %3764 = vmatpush1.msra.mxu0 %v944
        %3765 = vmatprep.subr.mxu0 %v949
        %3766 = vmatpush1.msra.mxu0 %v948
        %3767 = vmatprep.subr.mxu0 %v953
        %3768 = vmatpush1.msra.mxu0 %v952
        %3769 = vmatprep.subr.mxu0 %v957
        %3770 = vmatpush1.msra.mxu0 %v956
        %3771 = vmatprep.subr.mxu0 %v961
        %3772 = vmatpush1.msra.mxu0 %v960
        %3773 = vmatprep.subr.mxu0 %v965
        %3774 = vmatpush1.msra.mxu0 %v964
        %3775 = vmatprep.subr.mxu0 %v969
        %3776 = vmatpush1.msra.mxu0 %v968
        %3777 = vmatprep.subr.mxu0 %v973
        %3778 = vmatpush1.msra.mxu0 %v972
        %3779 = vmatprep.subr.mxu0 %v977
        %3780 = vmatpush1.msra.mxu0 %v976
        %3781 = vmatprep.subr.mxu0 %v981
        %3782 = vmatpush1.msra.mxu0 %v980
        %3783 = vmatprep.subr.mxu0 %v985
        %3784 = vmatpush1.msra.mxu0 %v984
        %3785 = vmatprep.subr.mxu0 %v989
        %3786 = vmatpush1.msra.mxu0 %v988
        %3787 = vmatprep.subr.mxu0 %v993
        %3788 = vmatpush1.msra.mxu0 %v992
        %3789 = vmatprep.subr.mxu0 0.0
        %3790 = vmatpush1.msra.mxu0 0.0
        %3791 = vmatprep.subr.mxu0 0.0
        %3792 = vmatpush1.msra.mxu0 0.0
        %3793 = vmatprep.subr.mxu0 0.0
        %3794 = vmatpush1.msra.mxu0 0.0
        %3795 = vmatprep.subr.mxu0 0.0
        %3796 = vmatpush1.msra.mxu0 0.0
        %3797 = vmatprep.subr.mxu0 0.0
        %3798 = vmatpush1.msra.mxu0 0.0
        %3799 = vmatprep.subr.mxu0 0.0
        %3800 = vmatpush1.msra.mxu0 0.0
        %3801 = vmatprep.subr.mxu0 0.0
        %3802 = vmatpush1.msra.mxu0 0.0
        %3803 = vmatprep.subr.mxu0 0.0
        %3804 = vmatpush1.msra.mxu0 0.0
        %3805 = vmatprep.subr.mxu0 0.0
        %3806 = vmatpush1.msra.mxu0 0.0
        %3807 = vmatprep.subr.mxu0 0.0
        %3808 = vmatpush1.msra.mxu0 0.0
        %3809 = vmatprep.subr.mxu0 0.0
        %3810 = vmatpush1.msra.mxu0 0.0
        %3811 = vmatprep.subr.mxu0 0.0
        %3812 = vmatpush1.msra.mxu0 0.0
        %3813 = vmatprep.subr.mxu0 0.0
        %3814 = vmatpush1.msra.mxu0 0.0
        %3815 = vmatprep.subr.mxu0 0.0
        %3816 = vmatpush1.msra.mxu0 0.0
        %3817 = vmatprep.subr.mxu0 0.0
        %3818 = vmatpush1.msra.mxu0 0.0
        %3819 = vmatprep.subr.mxu0 0.0
        %3820 = vmatpush1.msra.mxu0 0.0
        %3821 = vmatprep.mubr.f32.mxu0 0.0
        %3822 = vmatmul.mubr.f32.gmra.mrb[0].mxu0 %v3684
        %v3823 = vpop.f32.mrb[0].mxu0
        %v3824 = vadd.f32 0.0, %v3823
        %v3825 = vpop.f32.mrb[0].mxu0
        %v3826 = vadd.f32 0.0, %v3825
        %3827 = vdwg.mxu0
        %3828 = vmatprep.subr.mxu0 0.0
        %3829 = vmatpush1.msra.mxu0 %v994
        %3830 = vmatprep.subr.mxu0 0.0
        %3831 = vmatpush1.msra.mxu0 %v995
        %3832 = vmatprep.subr.mxu0 0.0
        %3833 = vmatpush1.msra.mxu0 %v996
        %3834 = vmatprep.subr.mxu0 0.0
        %3835 = vmatpush1.msra.mxu0 %v997
        %3836 = vmatprep.subr.mxu0 0.0
        %3837 = vmatpush1.msra.mxu0 %v998
        %3838 = vmatprep.subr.mxu0 0.0
        %3839 = vmatpush1.msra.mxu0 %v999
        %3840 = vmatprep.subr.mxu0 0.0
        %3841 = vmatpush1.msra.mxu0 %v1000
        %3842 = vmatprep.subr.mxu0 0.0
        %3843 = vmatpush1.msra.mxu0 %v1001
        %3844 = vmatprep.subr.mxu0 0.0
        %3845 = vmatpush1.msra.mxu0 %v1002
        %3846 = vmatprep.subr.mxu0 0.0
        %3847 = vmatpush1.msra.mxu0 %v1003
        %3848 = vmatprep.subr.mxu0 0.0
        %3849 = vmatpush1.msra.mxu0 %v1004
        %3850 = vmatprep.subr.mxu0 0.0
        %3851 = vmatpush1.msra.mxu0 %v1005
        %3852 = vmatprep.subr.mxu0 0.0
        %3853 = vmatpush1.msra.mxu0 %v1006
        %3854 = vmatprep.subr.mxu0 0.0
        %3855 = vmatpush1.msra.mxu0 %v1007
        %3856 = vmatprep.subr.mxu0 0.0
        %3857 = vmatpush1.msra.mxu0 %v1008
        %3858 = vmatprep.subr.mxu0 0.0
        %3859 = vmatpush1.msra.mxu0 %v1009
        %3860 = vmatprep.subr.mxu0 0.0
        %3861 = vmatpush1.msra.mxu0 0.0
        %3862 = vmatprep.subr.mxu0 0.0
        %3863 = vmatpush1.msra.mxu0 0.0
        %3864 = vmatprep.subr.mxu0 0.0
        %3865 = vmatpush1.msra.mxu0 0.0
        %3866 = vmatprep.subr.mxu0 0.0
        %3867 = vmatpush1.msra.mxu0 0.0
        %3868 = vmatprep.subr.mxu0 0.0
        %3869 = vmatpush1.msra.mxu0 0.0
        %3870 = vmatprep.subr.mxu0 0.0
        %3871 = vmatpush1.msra.mxu0 0.0
        %3872 = vmatprep.subr.mxu0 0.0
        %3873 = vmatpush1.msra.mxu0 0.0
        %3874 = vmatprep.subr.mxu0 0.0
        %3875 = vmatpush1.msra.mxu0 0.0
        %3876 = vmatprep.subr.mxu0 0.0
        %3877 = vmatpush1.msra.mxu0 0.0
        %3878 = vmatprep.subr.mxu0 0.0
        %3879 = vmatpush1.msra.mxu0 0.0
        %3880 = vmatprep.subr.mxu0 0.0
        %3881 = vmatpush1.msra.mxu0 0.0
        %3882 = vmatprep.subr.mxu0 0.0
        %3883 = vmatpush1.msra.mxu0 0.0
        %3884 = vmatprep.subr.mxu0 0.0
        %3885 = vmatpush1.msra.mxu0 0.0
        %3886 = vmatprep.subr.mxu0 0.0
        %3887 = vmatpush1.msra.mxu0 0.0
        %3888 = vmatprep.subr.mxu0 0.0
        %3889 = vmatpush1.msra.mxu0 0.0
        %3890 = vmatprep.subr.mxu0 0.0
        %3891 = vmatpush1.msra.mxu0 0.0
        %3892 = vmatprep.mubr.f32.mxu0 0.0
        %3893 = vmatmul.mubr.f32.gmra.mrb[0].mxu0 %v3685
        %v3894 = vpop.f32.mrb[0].mxu0
        %v3895 = vadd.f32 %v1157, %v3894
        %v3896 = vpop.f32.mrb[0].mxu0
        %3897 = vdwg.mxu0
        %v3898 = vtanh.pop %v3895
        %s3899 = scalar_lea.vmem %s373, 80 [#allocation7]
        %v3900 = vld [vmem:[%s3899] sm:$0xff]
        %3902 = vset.pattern.permute.xlu0 0
        %3903 = vperm.xlu0 %3902, %v3900
        %v3904 = vpop.permute.xlu0 %3903
        %v3906 = vmul.f32 %v3898, %v3904
        %v3907 = vadd.f32 %v3685, %v3906
        %v3908 = vld [vmem:[#allocation3 + $0x140] sm:$0xff]
        %v3909 = vld [vmem:[#allocation3 + $0x148] sm:$0xff]
        %v3910 = vld [vmem:[#allocation3 + $0x150] sm:$0xff]
        %v3911 = vld [vmem:[#allocation3 + $0x158] sm:$0xff]
        %v3912 = vadd.f32 %v3908, %v3753
        %v3913 = vadd.f32 %v3909, %v3755
        %v3914 = vadd.f32 %v3910, %v3824
        %v3915 = vadd.f32 %v3911, %v3826
        %v3916 = vxor.u32 %v3912, 2147483648
        %v3917 = vxor.u32 %v3913, 2147483648
        %v3918 = vxor.u32 %v3914, 2147483648
        %v3919 = vxor.u32 %v3915, 2147483648
        %v3920 = vmul.f32 %v3916, 1.442695
        %v3921 = vpow.pop %v3920
        %v3922 = vmul.f32 %v3917, 1.442695
        %v3923 = vpow.pop %v3922
        %v3924 = vmul.f32 %v3918, 1.442695
        %v3925 = vpow.pop %v3924
        %v3926 = vmul.f32 %v3919, 1.442695
        %v3927 = vpow.pop %v3926
        %v3928 = vadd.f32 %v3921, 1.0
        %v3929 = vadd.f32 %v3923, 1.0
        %v3930 = vadd.f32 %v3925, 1.0
        %v3931 = vadd.f32 %v3927, 1.0
        %v3932 = vrcp.pop %v3928
        %v3933 = vmul.f32 1.0, %v3932
        %v3934 = vrcp.pop %v3929
        %v3935 = vmul.f32 1.0, %v3934
        %v3936 = vrcp.pop %v3930
        %v3937 = vmul.f32 1.0, %v3936
        %v3938 = vrcp.pop %v3931
        %v3939 = vmul.f32 1.0, %v3938
        %v3940 = vmul.f32 %v3933, %v3907
        %v3941 = vmul.f32 %v3935, %v3939
        %v3942 = vadd.f32 %v3940, %v3941
        %v3943 = vtanh.pop %v3942
        %v3944 = vmul.f32 %v3937, %v3943
        %3945 = vst [vmem:[%s428 + $0x50] sm:$0xff] %v3944
        %s3946 = sadd.s32 %s1276, 10
        %p3947 = scmp.lt.s32.totalorder %s3946, 20
        %s3948 = scalar_select %p3947, 1, 0
        %v3949 = vstv %s3948
        %vm3950 = vcmp.eq.s32.totalorder %v3949, 1
        %v3951 = vsel %vm3950, %v3944, %v3684
        %v3952 = vsel %vm3950, %v3942, %v3685
        %3953 = vmatprep.subr.mxu0 %v931
        %3954 = vmatpush1.msra.mxu0 %v930
        %3955 = vmatprep.subr.mxu0 %v935
        %3956 = vmatpush1.msra.mxu0 %v934
        %3957 = vmatprep.subr.mxu0 %v939
        %3958 = vmatpush1.msra.mxu0 %v938
        %3959 = vmatprep.subr.mxu0 %v943
        %3960 = vmatpush1.msra.mxu0 %v942
        %3961 = vmatprep.subr.mxu0 %v947
        %3962 = vmatpush1.msra.mxu0 %v946
        %3963 = vmatprep.subr.mxu0 %v951
        %3964 = vmatpush1.msra.mxu0 %v950
        %3965 = vmatprep.subr.mxu0 %v955
        %3966 = vmatpush1.msra.mxu0 %v954
        %3967 = vmatprep.subr.mxu0 %v959
        %3968 = vmatpush1.msra.mxu0 %v958
        %3969 = vmatprep.subr.mxu0 %v963
        %3970 = vmatpush1.msra.mxu0 %v962
        %3971 = vmatprep.subr.mxu0 %v967
        %3972 = vmatpush1.msra.mxu0 %v966
        %3973 = vmatprep.subr.mxu0 %v971
        %3974 = vmatpush1.msra.mxu0 %v970
        %3975 = vmatprep.subr.mxu0 %v975
        %3976 = vmatpush1.msra.mxu0 %v974
        %3977 = vmatprep.subr.mxu0 %v979
        %3978 = vmatpush1.msra.mxu0 %v978
        %3979 = vmatprep.subr.mxu0 %v983
        %3980 = vmatpush1.msra.mxu0 %v982
        %3981 = vmatprep.subr.mxu0 %v987
        %3982 = vmatpush1.msra.mxu0 %v986
        %3983 = vmatprep.subr.mxu0 %v991
        %3984 = vmatpush1.msra.mxu0 %v990
        %3985 = vmatprep.subr.mxu0 0.0
        %3986 = vmatpush1.msra.mxu0 0.0
        %3987 = vmatprep.subr.mxu0 0.0
        %3988 = vmatpush1.msra.mxu0 0.0
        %3989 = vmatprep.subr.mxu0 0.0
        %3990 = vmatpush1.msra.mxu0 0.0
        %3991 = vmatprep.subr.mxu0 0.0
        %3992 = vmatpush1.msra.mxu0 0.0
        %3993 = vmatprep.subr.mxu0 0.0
        %3994 = vmatpush1.msra.mxu0 0.0
        %3995 = vmatprep.subr.mxu0 0.0
        %3996 = vmatpush1.msra.mxu0 0.0
        %3997 = vmatprep.subr.mxu0 0.0
        %3998 = vmatpush1.msra.mxu0 0.0
        %3999 = vmatprep.subr.mxu0 0.0
        %4000 = vmatpush1.msra.mxu0 0.0
        %4001 = vmatprep.subr.mxu0 0.0
        %4002 = vmatpush1.msra.mxu0 0.0
        %4003 = vmatprep.subr.mxu0 0.0
        %4004 = vmatpush1.msra.mxu0 0.0
        %4005 = vmatprep.subr.mxu0 0.0
        %4006 = vmatpush1.msra.mxu0 0.0
        %4007 = vmatprep.subr.mxu0 0.0
        %4008 = vmatpush1.msra.mxu0 0.0
        %4009 = vmatprep.subr.mxu0 0.0
        %4010 = vmatpush1.msra.mxu0 0.0
        %4011 = vmatprep.subr.mxu0 0.0
        %4012 = vmatpush1.msra.mxu0 0.0
        %4013 = vmatprep.subr.mxu0 0.0
        %4014 = vmatpush1.msra.mxu0 0.0
        %4015 = vmatprep.subr.mxu0 0.0
        %4016 = vmatpush1.msra.mxu0 0.0
        %4017 = vmatprep.mubr.f32.mxu0 0.0
        %4018 = vmatmul.mubr.f32.gmra.mrb[0].mxu0 %v3951
        %v4019 = vpop.f32.mrb[0].mxu0
        %v4020 = vadd.f32 0.0, %v4019
        %v4021 = vpop.f32.mrb[0].mxu0
        %v4022 = vadd.f32 0.0, %v4021
        %4023 = vdwg.mxu0
        %4024 = vmatprep.subr.mxu0 %v933
        %4025 = vmatpush1.msra.mxu0 %v932
        %4026 = vmatprep.subr.mxu0 %v937
        %4027 = vmatpush1.msra.mxu0 %v936
        %4028 = vmatprep.subr.mxu0 %v941
        %4029 = vmatpush1.msra.mxu0 %v940
        %4030 = vmatprep.subr.mxu0 %v945
        %4031 = vmatpush1.msra.mxu0 %v944
        %4032 = vmatprep.subr.mxu0 %v949
        %4033 = vmatpush1.msra.mxu0 %v948
        %4034 = vmatprep.subr.mxu0 %v953
        %4035 = vmatpush1.msra.mxu0 %v952
        %4036 = vmatprep.subr.mxu0 %v957
        %4037 = vmatpush1.msra.mxu0 %v956
        %4038 = vmatprep.subr.mxu0 %v961
        %4039 = vmatpush1.msra.mxu0 %v960
        %4040 = vmatprep.subr.mxu0 %v965
        %4041 = vmatpush1.msra.mxu0 %v964
        %4042 = vmatprep.subr.mxu0 %v969
        %4043 = vmatpush1.msra.mxu0 %v968
        %4044 = vmatprep.subr.mxu0 %v973
        %4045 = vmatpush1.msra.mxu0 %v972
        %4046 = vmatprep.subr.mxu0 %v977
        %4047 = vmatpush1.msra.mxu0 %v976
        %4048 = vmatprep.subr.mxu0 %v981
        %4049 = vmatpush1.msra.mxu0 %v980
        %4050 = vmatprep.subr.mxu0 %v985
        %4051 = vmatpush1.msra.mxu0 %v984
        %4052 = vmatprep.subr.mxu0 %v989
        %4053 = vmatpush1.msra.mxu0 %v988
        %4054 = vmatprep.subr.mxu0 %v993
        %4055 = vmatpush1.msra.mxu0 %v992
        %4056 = vmatprep.subr.mxu0 0.0
        %4057 = vmatpush1.msra.mxu0 0.0
        %4058 = vmatprep.subr.mxu0 0.0
        %4059 = vmatpush1.msra.mxu0 0.0
        %4060 = vmatprep.subr.mxu0 0.0
        %4061 = vmatpush1.msra.mxu0 0.0
        %4062 = vmatprep.subr.mxu0 0.0
        %4063 = vmatpush1.msra.mxu0 0.0
        %4064 = vmatprep.subr.mxu0 0.0
        %4065 = vmatpush1.msra.mxu0 0.0
        %4066 = vmatprep.subr.mxu0 0.0
        %4067 = vmatpush1.msra.mxu0 0.0
        %4068 = vmatprep.subr.mxu0 0.0
        %4069 = vmatpush1.msra.mxu0 0.0
        %4070 = vmatprep.subr.mxu0 0.0
        %4071 = vmatpush1.msra.mxu0 0.0
        %4072 = vmatprep.subr.mxu0 0.0
        %4073 = vmatpush1.msra.mxu0 0.0
        %4074 = vmatprep.subr.mxu0 0.0
        %4075 = vmatpush1.msra.mxu0 0.0
        %4076 = vmatprep.subr.mxu0 0.0
        %4077 = vmatpush1.msra.mxu0 0.0
        %4078 = vmatprep.subr.mxu0 0.0
        %4079 = vmatpush1.msra.mxu0 0.0
        %4080 = vmatprep.subr.mxu0 0.0
        %4081 = vmatpush1.msra.mxu0 0.0
        %4082 = vmatprep.subr.mxu0 0.0
        %4083 = vmatpush1.msra.mxu0 0.0
        %4084 = vmatprep.subr.mxu0 0.0
        %4085 = vmatpush1.msra.mxu0 0.0
        %4086 = vmatprep.subr.mxu0 0.0
        %4087 = vmatpush1.msra.mxu0 0.0
        %4088 = vmatprep.mubr.f32.mxu0 0.0
        %4089 = vmatmul.mubr.f32.gmra.mrb[0].mxu0 %v3951
        %v4090 = vpop.f32.mrb[0].mxu0
        %v4091 = vadd.f32 0.0, %v4090
        %v4092 = vpop.f32.mrb[0].mxu0
        %v4093 = vadd.f32 0.0, %v4092
        %4094 = vdwg.mxu0
        %4095 = vmatprep.subr.mxu0 0.0
        %4096 = vmatpush1.msra.mxu0 %v994
        %4097 = vmatprep.subr.mxu0 0.0
        %4098 = vmatpush1.msra.mxu0 %v995
        %4099 = vmatprep.subr.mxu0 0.0
        %4100 = vmatpush1.msra.mxu0 %v996
        %4101 = vmatprep.subr.mxu0 0.0
        %4102 = vmatpush1.msra.mxu0 %v997
        %4103 = vmatprep.subr.mxu0 0.0
        %4104 = vmatpush1.msra.mxu0 %v998
        %4105 = vmatprep.subr.mxu0 0.0
        %4106 = vmatpush1.msra.mxu0 %v999
        %4107 = vmatprep.subr.mxu0 0.0
        %4108 = vmatpush1.msra.mxu0 %v1000
        %4109 = vmatprep.subr.mxu0 0.0
        %4110 = vmatpush1.msra.mxu0 %v1001
        %4111 = vmatprep.subr.mxu0 0.0
        %4112 = vmatpush1.msra.mxu0 %v1002
        %4113 = vmatprep.subr.mxu0 0.0
        %4114 = vmatpush1.msra.mxu0 %v1003
        %4115 = vmatprep.subr.mxu0 0.0
        %4116 = vmatpush1.msra.mxu0 %v1004
        %4117 = vmatprep.subr.mxu0 0.0
        %4118 = vmatpush1.msra.mxu0 %v1005
        %4119 = vmatprep.subr.mxu0 0.0
        %4120 = vmatpush1.msra.mxu0 %v1006
        %4121 = vmatprep.subr.mxu0 0.0
        %4122 = vmatpush1.msra.mxu0 %v1007
        %4123 = vmatprep.subr.mxu0 0.0
        %4124 = vmatpush1.msra.mxu0 %v1008
        %4125 = vmatprep.subr.mxu0 0.0
        %4126 = vmatpush1.msra.mxu0 %v1009
        %4127 = vmatprep.subr.mxu0 0.0
        %4128 = vmatpush1.msra.mxu0 0.0
        %4129 = vmatprep.subr.mxu0 0.0
        %4130 = vmatpush1.msra.mxu0 0.0
        %4131 = vmatprep.subr.mxu0 0.0
        %4132 = vmatpush1.msra.mxu0 0.0
        %4133 = vmatprep.subr.mxu0 0.0
        %4134 = vmatpush1.msra.mxu0 0.0
        %4135 = vmatprep.subr.mxu0 0.0
        %4136 = vmatpush1.msra.mxu0 0.0
        %4137 = vmatprep.subr.mxu0 0.0
        %4138 = vmatpush1.msra.mxu0 0.0
        %4139 = vmatprep.subr.mxu0 0.0
        %4140 = vmatpush1.msra.mxu0 0.0
        %4141 = vmatprep.subr.mxu0 0.0
        %4142 = vmatpush1.msra.mxu0 0.0
        %4143 = vmatprep.subr.mxu0 0.0
        %4144 = vmatpush1.msra.mxu0 0.0
        %4145 = vmatprep.subr.mxu0 0.0
        %4146 = vmatpush1.msra.mxu0 0.0
        %4147 = vmatprep.subr.mxu0 0.0
        %4148 = vmatpush1.msra.mxu0 0.0
        %4149 = vmatprep.subr.mxu0 0.0
        %4150 = vmatpush1.msra.mxu0 0.0
        %4151 = vmatprep.subr.mxu0 0.0
        %4152 = vmatpush1.msra.mxu0 0.0
        %4153 = vmatprep.subr.mxu0 0.0
        %4154 = vmatpush1.msra.mxu0 0.0
        %4155 = vmatprep.subr.mxu0 0.0
        %4156 = vmatpush1.msra.mxu0 0.0
        %4157 = vmatprep.subr.mxu0 0.0
        %4158 = vmatpush1.msra.mxu0 0.0
        %4159 = vmatprep.mubr.f32.mxu0 0.0
        %4160 = vmatmul.mubr.f32.gmra.mrb[0].mxu0 %v3952
        %v4161 = vpop.f32.mrb[0].mxu0
        %v4162 = vadd.f32 %v1157, %v4161
        %v4163 = vpop.f32.mrb[0].mxu0
        %4164 = vdwg.mxu0
        %v4165 = vtanh.pop %v4162
        %s4166 = scalar_lea.vmem %s373, 88 [#allocation7]
        %v4167 = vld [vmem:[%s4166] sm:$0xff]
        %4169 = vset.pattern.permute.xlu0 0
        %4170 = vperm.xlu0 %4169, %v4167
        %v4171 = vpop.permute.xlu0 %4170
        %v4173 = vmul.f32 %v4165, %v4171
        %v4174 = vadd.f32 %v3952, %v4173
        %v4175 = vld [vmem:[#allocation3 + $0x160] sm:$0xff]
        %v4176 = vld [vmem:[#allocation3 + $0x168] sm:$0xff]
        %v4177 = vld [vmem:[#allocation3 + $0x170] sm:$0xff]
        %v4178 = vld [vmem:[#allocation3 + $0x178] sm:$0xff]
        %v4179 = vadd.f32 %v4175, %v4020
        %v4180 = vadd.f32 %v4176, %v4022
        %v4181 = vadd.f32 %v4177, %v4091
        %v4182 = vadd.f32 %v4178, %v4093
        %v4183 = vxor.u32 %v4179, 2147483648
        %v4184 = vxor.u32 %v4180, 2147483648
        %v4185 = vxor.u32 %v4181, 2147483648
        %v4186 = vxor.u32 %v4182, 2147483648
        %v4187 = vmul.f32 %v4183, 1.442695
        %v4188 = vpow.pop %v4187
        %v4189 = vmul.f32 %v4184, 1.442695
        %v4190 = vpow.pop %v4189
        %v4191 = vmul.f32 %v4185, 1.442695
        %v4192 = vpow.pop %v4191
        %v4193 = vmul.f32 %v4186, 1.442695
        %v4194 = vpow.pop %v4193
        %v4195 = vadd.f32 %v4188, 1.0
        %v4196 = vadd.f32 %v4190, 1.0
        %v4197 = vadd.f32 %v4192, 1.0
        %v4198 = vadd.f32 %v4194, 1.0
        %v4199 = vrcp.pop %v4195
        %v4200 = vmul.f32 1.0, %v4199
        %v4201 = vrcp.pop %v4196
        %v4202 = vmul.f32 1.0, %v4201
        %v4203 = vrcp.pop %v4197
        %v4204 = vmul.f32 1.0, %v4203
        %v4205 = vrcp.pop %v4198
        %v4206 = vmul.f32 1.0, %v4205
        %v4207 = vmul.f32 %v4200, %v4174
        %v4208 = vmul.f32 %v4202, %v4206
        %v4209 = vadd.f32 %v4207, %v4208
        %v4210 = vtanh.pop %v4209
        %v4211 = vmul.f32 %v4204, %v4210
        %4212 = vst [vmem:[%s428 + $0x58] sm:$0xff] %v4211
        %s4213 = sadd.s32 %s1276, 11
        %p4214 = scmp.lt.s32.totalorder %s4213, 20
        %s4215 = scalar_select %p4214, 1, 0
        %v4216 = vstv %s4215
        %vm4217 = vcmp.eq.s32.totalorder %v4216, 1
        %v4218 = vsel %vm4217, %v4211, %v3951
        %v4219 = vsel %vm4217, %v4209, %v3952
        %4220 = vmatprep.subr.mxu0 %v931
        %4221 = vmatpush1.msra.mxu0 %v930
        %4222 = vmatprep.subr.mxu0 %v935
        %4223 = vmatpush1.msra.mxu0 %v934
        %4224 = vmatprep.subr.mxu0 %v939
        %4225 = vmatpush1.msra.mxu0 %v938
        %4226 = vmatprep.subr.mxu0 %v943
        %4227 = vmatpush1.msra.mxu0 %v942
        %4228 = vmatprep.subr.mxu0 %v947
        %4229 = vmatpush1.msra.mxu0 %v946
        %4230 = vmatprep.subr.mxu0 %v951
        %4231 = vmatpush1.msra.mxu0 %v950
        %4232 = vmatprep.subr.mxu0 %v955
        %4233 = vmatpush1.msra.mxu0 %v954
        %4234 = vmatprep.subr.mxu0 %v959
        %4235 = vmatpush1.msra.mxu0 %v958
        %4236 = vmatprep.subr.mxu0 %v963
        %4237 = vmatpush1.msra.mxu0 %v962
        %4238 = vmatprep.subr.mxu0 %v967
        %4239 = vmatpush1.msra.mxu0 %v966
        %4240 = vmatprep.subr.mxu0 %v971
        %4241 = vmatpush1.msra.mxu0 %v970
        %4242 = vmatprep.subr.mxu0 %v975
        %4243 = vmatpush1.msra.mxu0 %v974
        %4244 = vmatprep.subr.mxu0 %v979
        %4245 = vmatpush1.msra.mxu0 %v978
        %4246 = vmatprep.subr.mxu0 %v983
        %4247 = vmatpush1.msra.mxu0 %v982
        %4248 = vmatprep.subr.mxu0 %v987
        %4249 = vmatpush1.msra.mxu0 %v986
        %4250 = vmatprep.subr.mxu0 %v991
        %4251 = vmatpush1.msra.mxu0 %v990
        %4252 = vmatprep.subr.mxu0 0.0
        %4253 = vmatpush1.msra.mxu0 0.0
        %4254 = vmatprep.subr.mxu0 0.0
        %4255 = vmatpush1.msra.mxu0 0.0
        %4256 = vmatprep.subr.mxu0 0.0
        %4257 = vmatpush1.msra.mxu0 0.0
        %4258 = vmatprep.subr.mxu0 0.0
        %4259 = vmatpush1.msra.mxu0 0.0
        %4260 = vmatprep.subr.mxu0 0.0
        %4261 = vmatpush1.msra.mxu0 0.0
        %4262 = vmatprep.subr.mxu0 0.0
        %4263 = vmatpush1.msra.mxu0 0.0
        %4264 = vmatprep.subr.mxu0 0.0
        %4265 = vmatpush1.msra.mxu0 0.0
        %4266 = vmatprep.subr.mxu0 0.0
        %4267 = vmatpush1.msra.mxu0 0.0
        %4268 = vmatprep.subr.mxu0 0.0
        %4269 = vmatpush1.msra.mxu0 0.0
        %4270 = vmatprep.subr.mxu0 0.0
        %4271 = vmatpush1.msra.mxu0 0.0
        %4272 = vmatprep.subr.mxu0 0.0
        %4273 = vmatpush1.msra.mxu0 0.0
        %4274 = vmatprep.subr.mxu0 0.0
        %4275 = vmatpush1.msra.mxu0 0.0
        %4276 = vmatprep.subr.mxu0 0.0
        %4277 = vmatpush1.msra.mxu0 0.0
        %4278 = vmatprep.subr.mxu0 0.0
        %4279 = vmatpush1.msra.mxu0 0.0
        %4280 = vmatprep.subr.mxu0 0.0
        %4281 = vmatpush1.msra.mxu0 0.0
        %4282 = vmatprep.subr.mxu0 0.0
        %4283 = vmatpush1.msra.mxu0 0.0
        %4284 = vmatprep.mubr.f32.mxu0 0.0
        %4285 = vmatmul.mubr.f32.gmra.mrb[0].mxu0 %v4218
        %v4286 = vpop.f32.mrb[0].mxu0
        %v4287 = vadd.f32 0.0, %v4286
        %v4288 = vpop.f32.mrb[0].mxu0
        %v4289 = vadd.f32 0.0, %v4288
        %4290 = vdwg.mxu0
        %4291 = vmatprep.subr.mxu0 %v933
        %4292 = vmatpush1.msra.mxu0 %v932
        %4293 = vmatprep.subr.mxu0 %v937
        %4294 = vmatpush1.msra.mxu0 %v936
        %4295 = vmatprep.subr.mxu0 %v941
        %4296 = vmatpush1.msra.mxu0 %v940
        %4297 = vmatprep.subr.mxu0 %v945
        %4298 = vmatpush1.msra.mxu0 %v944
        %4299 = vmatprep.subr.mxu0 %v949
        %4300 = vmatpush1.msra.mxu0 %v948
        %4301 = vmatprep.subr.mxu0 %v953
        %4302 = vmatpush1.msra.mxu0 %v952
        %4303 = vmatprep.subr.mxu0 %v957
        %4304 = vmatpush1.msra.mxu0 %v956
        %4305 = vmatprep.subr.mxu0 %v961
        %4306 = vmatpush1.msra.mxu0 %v960
        %4307 = vmatprep.subr.mxu0 %v965
        %4308 = vmatpush1.msra.mxu0 %v964
        %4309 = vmatprep.subr.mxu0 %v969
        %4310 = vmatpush1.msra.mxu0 %v968
        %4311 = vmatprep.subr.mxu0 %v973
        %4312 = vmatpush1.msra.mxu0 %v972
        %4313 = vmatprep.subr.mxu0 %v977
        %4314 = vmatpush1.msra.mxu0 %v976
        %4315 = vmatprep.subr.mxu0 %v981
        %4316 = vmatpush1.msra.mxu0 %v980
        %4317 = vmatprep.subr.mxu0 %v985
        %4318 = vmatpush1.msra.mxu0 %v984
        %4319 = vmatprep.subr.mxu0 %v989
        %4320 = vmatpush1.msra.mxu0 %v988
        %4321 = vmatprep.subr.mxu0 %v993
        %4322 = vmatpush1.msra.mxu0 %v992
        %4323 = vmatprep.subr.mxu0 0.0
        %4324 = vmatpush1.msra.mxu0 0.0
        %4325 = vmatprep.subr.mxu0 0.0
        %4326 = vmatpush1.msra.mxu0 0.0
        %4327 = vmatprep.subr.mxu0 0.0
        %4328 = vmatpush1.msra.mxu0 0.0
        %4329 = vmatprep.subr.mxu0 0.0
        %4330 = vmatpush1.msra.mxu0 0.0
        %4331 = vmatprep.subr.mxu0 0.0
        %4332 = vmatpush1.msra.mxu0 0.0
        %4333 = vmatprep.subr.mxu0 0.0
        %4334 = vmatpush1.msra.mxu0 0.0
        %4335 = vmatprep.subr.mxu0 0.0
        %4336 = vmatpush1.msra.mxu0 0.0
        %4337 = vmatprep.subr.mxu0 0.0
        %4338 = vmatpush1.msra.mxu0 0.0
        %4339 = vmatprep.subr.mxu0 0.0
        %4340 = vmatpush1.msra.mxu0 0.0
        %4341 = vmatprep.subr.mxu0 0.0
        %4342 = vmatpush1.msra.mxu0 0.0
        %4343 = vmatprep.subr.mxu0 0.0
        %4344 = vmatpush1.msra.mxu0 0.0
        %4345 = vmatprep.subr.mxu0 0.0
        %4346 = vmatpush1.msra.mxu0 0.0
        %4347 = vmatprep.subr.mxu0 0.0
        %4348 = vmatpush1.msra.mxu0 0.0
        %4349 = vmatprep.subr.mxu0 0.0
        %4350 = vmatpush1.msra.mxu0 0.0
        %4351 = vmatprep.subr.mxu0 0.0
        %4352 = vmatpush1.msra.mxu0 0.0
        %4353 = vmatprep.subr.mxu0 0.0
        %4354 = vmatpush1.msra.mxu0 0.0
        %4355 = vmatprep.mubr.f32.mxu0 0.0
        %4356 = vmatmul.mubr.f32.gmra.mrb[0].mxu0 %v4218
        %v4357 = vpop.f32.mrb[0].mxu0
        %v4358 = vadd.f32 0.0, %v4357
        %v4359 = vpop.f32.mrb[0].mxu0
        %v4360 = vadd.f32 0.0, %v4359
        %4361 = vdwg.mxu0
        %4362 = vmatprep.subr.mxu0 0.0
        %4363 = vmatpush1.msra.mxu0 %v994
        %4364 = vmatprep.subr.mxu0 0.0
        %4365 = vmatpush1.msra.mxu0 %v995
        %4366 = vmatprep.subr.mxu0 0.0
        %4367 = vmatpush1.msra.mxu0 %v996
        %4368 = vmatprep.subr.mxu0 0.0
        %4369 = vmatpush1.msra.mxu0 %v997
        %4370 = vmatprep.subr.mxu0 0.0
        %4371 = vmatpush1.msra.mxu0 %v998
        %4372 = vmatprep.subr.mxu0 0.0
        %4373 = vmatpush1.msra.mxu0 %v999
        %4374 = vmatprep.subr.mxu0 0.0
        %4375 = vmatpush1.msra.mxu0 %v1000
        %4376 = vmatprep.subr.mxu0 0.0
        %4377 = vmatpush1.msra.mxu0 %v1001
        %4378 = vmatprep.subr.mxu0 0.0
        %4379 = vmatpush1.msra.mxu0 %v1002
        %4380 = vmatprep.subr.mxu0 0.0
        %4381 = vmatpush1.msra.mxu0 %v1003
        %4382 = vmatprep.subr.mxu0 0.0
        %4383 = vmatpush1.msra.mxu0 %v1004
        %4384 = vmatprep.subr.mxu0 0.0
        %4385 = vmatpush1.msra.mxu0 %v1005
        %4386 = vmatprep.subr.mxu0 0.0
        %4387 = vmatpush1.msra.mxu0 %v1006
        %4388 = vmatprep.subr.mxu0 0.0
        %4389 = vmatpush1.msra.mxu0 %v1007
        %4390 = vmatprep.subr.mxu0 0.0
        %4391 = vmatpush1.msra.mxu0 %v1008
        %4392 = vmatprep.subr.mxu0 0.0
        %4393 = vmatpush1.msra.mxu0 %v1009
        %4394 = vmatprep.subr.mxu0 0.0
        %4395 = vmatpush1.msra.mxu0 0.0
        %4396 = vmatprep.subr.mxu0 0.0
        %4397 = vmatpush1.msra.mxu0 0.0
        %4398 = vmatprep.subr.mxu0 0.0
        %4399 = vmatpush1.msra.mxu0 0.0
        %4400 = vmatprep.subr.mxu0 0.0
        %4401 = vmatpush1.msra.mxu0 0.0
        %4402 = vmatprep.subr.mxu0 0.0
        %4403 = vmatpush1.msra.mxu0 0.0
        %4404 = vmatprep.subr.mxu0 0.0
        %4405 = vmatpush1.msra.mxu0 0.0
        %4406 = vmatprep.subr.mxu0 0.0
        %4407 = vmatpush1.msra.mxu0 0.0
        %4408 = vmatprep.subr.mxu0 0.0
        %4409 = vmatpush1.msra.mxu0 0.0
        %4410 = vmatprep.subr.mxu0 0.0
        %4411 = vmatpush1.msra.mxu0 0.0
        %4412 = vmatprep.subr.mxu0 0.0
        %4413 = vmatpush1.msra.mxu0 0.0
        %4414 = vmatprep.subr.mxu0 0.0
        %4415 = vmatpush1.msra.mxu0 0.0
        %4416 = vmatprep.subr.mxu0 0.0
        %4417 = vmatpush1.msra.mxu0 0.0
        %4418 = vmatprep.subr.mxu0 0.0
        %4419 = vmatpush1.msra.mxu0 0.0
        %4420 = vmatprep.subr.mxu0 0.0
        %4421 = vmatpush1.msra.mxu0 0.0
        %4422 = vmatprep.subr.mxu0 0.0
        %4423 = vmatpush1.msra.mxu0 0.0
        %4424 = vmatprep.subr.mxu0 0.0
        %4425 = vmatpush1.msra.mxu0 0.0
        %4426 = vmatprep.mubr.f32.mxu0 0.0
        %4427 = vmatmul.mubr.f32.gmra.mrb[0].mxu0 %v4219
        %v4428 = vpop.f32.mrb[0].mxu0
        %v4429 = vadd.f32 %v1157, %v4428
        %v4430 = vpop.f32.mrb[0].mxu0
        %4431 = vdwg.mxu0
        %v4432 = vtanh.pop %v4429
        %s4433 = scalar_lea.vmem %s373, 96 [#allocation7]
        %v4434 = vld [vmem:[%s4433] sm:$0xff]
        %4436 = vset.pattern.permute.xlu0 0
        %4437 = vperm.xlu0 %4436, %v4434
        %v4438 = vpop.permute.xlu0 %4437
        %v4440 = vmul.f32 %v4432, %v4438
        %v4441 = vadd.f32 %v4219, %v4440
        %v4442 = vld [vmem:[#allocation3 + $0x180] sm:$0xff]
        %v4443 = vld [vmem:[#allocation3 + $0x188] sm:$0xff]
        %v4444 = vld [vmem:[#allocation3 + $0x190] sm:$0xff]
        %v4445 = vld [vmem:[#allocation3 + $0x198] sm:$0xff]
        %v4446 = vadd.f32 %v4442, %v4287
        %v4447 = vadd.f32 %v4443, %v4289
        %v4448 = vadd.f32 %v4444, %v4358
        %v4449 = vadd.f32 %v4445, %v4360
        %v4450 = vxor.u32 %v4446, 2147483648
        %v4451 = vxor.u32 %v4447, 2147483648
        %v4452 = vxor.u32 %v4448, 2147483648
        %v4453 = vxor.u32 %v4449, 2147483648
        %v4454 = vmul.f32 %v4450, 1.442695
        %v4455 = vpow.pop %v4454
        %v4456 = vmul.f32 %v4451, 1.442695
        %v4457 = vpow.pop %v4456
        %v4458 = vmul.f32 %v4452, 1.442695
        %v4459 = vpow.pop %v4458
        %v4460 = vmul.f32 %v4453, 1.442695
        %v4461 = vpow.pop %v4460
        %v4462 = vadd.f32 %v4455, 1.0
        %v4463 = vadd.f32 %v4457, 1.0
        %v4464 = vadd.f32 %v4459, 1.0
        %v4465 = vadd.f32 %v4461, 1.0
        %v4466 = vrcp.pop %v4462
        %v4467 = vmul.f32 1.0, %v4466
        %v4468 = vrcp.pop %v4463
        %v4469 = vmul.f32 1.0, %v4468
        %v4470 = vrcp.pop %v4464
        %v4471 = vmul.f32 1.0, %v4470
        %v4472 = vrcp.pop %v4465
        %v4473 = vmul.f32 1.0, %v4472
        %v4474 = vmul.f32 %v4467, %v4441
        %v4475 = vmul.f32 %v4469, %v4473
        %v4476 = vadd.f32 %v4474, %v4475
        %v4477 = vtanh.pop %v4476
        %v4478 = vmul.f32 %v4471, %v4477
        %4479 = vst [vmem:[%s428 + $0x60] sm:$0xff] %v4478
        %s4480 = sadd.s32 %s1276, 12
        %p4481 = scmp.lt.s32.totalorder %s4480, 20
        %s4482 = scalar_select %p4481, 1, 0
        %v4483 = vstv %s4482
        %vm4484 = vcmp.eq.s32.totalorder %v4483, 1
        %v4485 = vsel %vm4484, %v4478, %v4218
        %v4486 = vsel %vm4484, %v4476, %v4219
        %4487 = vmatprep.subr.mxu0 %v931
        %4488 = vmatpush1.msra.mxu0 %v930
        %4489 = vmatprep.subr.mxu0 %v935
        %4490 = vmatpush1.msra.mxu0 %v934
        %4491 = vmatprep.subr.mxu0 %v939
        %4492 = vmatpush1.msra.mxu0 %v938
        %4493 = vmatprep.subr.mxu0 %v943
        %4494 = vmatpush1.msra.mxu0 %v942
        %4495 = vmatprep.subr.mxu0 %v947
        %4496 = vmatpush1.msra.mxu0 %v946
        %4497 = vmatprep.subr.mxu0 %v951
        %4498 = vmatpush1.msra.mxu0 %v950
        %4499 = vmatprep.subr.mxu0 %v955
        %4500 = vmatpush1.msra.mxu0 %v954
        %4501 = vmatprep.subr.mxu0 %v959
        %4502 = vmatpush1.msra.mxu0 %v958
        %4503 = vmatprep.subr.mxu0 %v963
        %4504 = vmatpush1.msra.mxu0 %v962
        %4505 = vmatprep.subr.mxu0 %v967
        %4506 = vmatpush1.msra.mxu0 %v966
        %4507 = vmatprep.subr.mxu0 %v971
        %4508 = vmatpush1.msra.mxu0 %v970
        %4509 = vmatprep.subr.mxu0 %v975
        %4510 = vmatpush1.msra.mxu0 %v974
        %4511 = vmatprep.subr.mxu0 %v979
        %4512 = vmatpush1.msra.mxu0 %v978
        %4513 = vmatprep.subr.mxu0 %v983
        %4514 = vmatpush1.msra.mxu0 %v982
        %4515 = vmatprep.subr.mxu0 %v987
        %4516 = vmatpush1.msra.mxu0 %v986
        %4517 = vmatprep.subr.mxu0 %v991
        %4518 = vmatpush1.msra.mxu0 %v990
        %4519 = vmatprep.subr.mxu0 0.0
        %4520 = vmatpush1.msra.mxu0 0.0
        %4521 = vmatprep.subr.mxu0 0.0
        %4522 = vmatpush1.msra.mxu0 0.0
        %4523 = vmatprep.subr.mxu0 0.0
        %4524 = vmatpush1.msra.mxu0 0.0
        %4525 = vmatprep.subr.mxu0 0.0
        %4526 = vmatpush1.msra.mxu0 0.0
        %4527 = vmatprep.subr.mxu0 0.0
        %4528 = vmatpush1.msra.mxu0 0.0
        %4529 = vmatprep.subr.mxu0 0.0
        %4530 = vmatpush1.msra.mxu0 0.0
        %4531 = vmatprep.subr.mxu0 0.0
        %4532 = vmatpush1.msra.mxu0 0.0
        %4533 = vmatprep.subr.mxu0 0.0
        %4534 = vmatpush1.msra.mxu0 0.0
        %4535 = vmatprep.subr.mxu0 0.0
        %4536 = vmatpush1.msra.mxu0 0.0
        %4537 = vmatprep.subr.mxu0 0.0
        %4538 = vmatpush1.msra.mxu0 0.0
        %4539 = vmatprep.subr.mxu0 0.0
        %4540 = vmatpush1.msra.mxu0 0.0
        %4541 = vmatprep.subr.mxu0 0.0
        %4542 = vmatpush1.msra.mxu0 0.0
        %4543 = vmatprep.subr.mxu0 0.0
        %4544 = vmatpush1.msra.mxu0 0.0
        %4545 = vmatprep.subr.mxu0 0.0
        %4546 = vmatpush1.msra.mxu0 0.0
        %4547 = vmatprep.subr.mxu0 0.0
        %4548 = vmatpush1.msra.mxu0 0.0
        %4549 = vmatprep.subr.mxu0 0.0
        %4550 = vmatpush1.msra.mxu0 0.0
        %4551 = vmatprep.mubr.f32.mxu0 0.0
        %4552 = vmatmul.mubr.f32.gmra.mrb[0].mxu0 %v4485
        %v4553 = vpop.f32.mrb[0].mxu0
        %v4554 = vadd.f32 0.0, %v4553
        %v4555 = vpop.f32.mrb[0].mxu0
        %v4556 = vadd.f32 0.0, %v4555
        %4557 = vdwg.mxu0
        %4558 = vmatprep.subr.mxu0 %v933
        %4559 = vmatpush1.msra.mxu0 %v932
        %4560 = vmatprep.subr.mxu0 %v937
        %4561 = vmatpush1.msra.mxu0 %v936
        %4562 = vmatprep.subr.mxu0 %v941
        %4563 = vmatpush1.msra.mxu0 %v940
        %4564 = vmatprep.subr.mxu0 %v945
        %4565 = vmatpush1.msra.mxu0 %v944
        %4566 = vmatprep.subr.mxu0 %v949
        %4567 = vmatpush1.msra.mxu0 %v948
        %4568 = vmatprep.subr.mxu0 %v953
        %4569 = vmatpush1.msra.mxu0 %v952
        %4570 = vmatprep.subr.mxu0 %v957
        %4571 = vmatpush1.msra.mxu0 %v956
        %4572 = vmatprep.subr.mxu0 %v961
        %4573 = vmatpush1.msra.mxu0 %v960
        %4574 = vmatprep.subr.mxu0 %v965
        %4575 = vmatpush1.msra.mxu0 %v964
        %4576 = vmatprep.subr.mxu0 %v969
        %4577 = vmatpush1.msra.mxu0 %v968
        %4578 = vmatprep.subr.mxu0 %v973
        %4579 = vmatpush1.msra.mxu0 %v972
        %4580 = vmatprep.subr.mxu0 %v977
        %4581 = vmatpush1.msra.mxu0 %v976
        %4582 = vmatprep.subr.mxu0 %v981
        %4583 = vmatpush1.msra.mxu0 %v980
        %4584 = vmatprep.subr.mxu0 %v985
        %4585 = vmatpush1.msra.mxu0 %v984
        %4586 = vmatprep.subr.mxu0 %v989
        %4587 = vmatpush1.msra.mxu0 %v988
        %4588 = vmatprep.subr.mxu0 %v993
        %4589 = vmatpush1.msra.mxu0 %v992
        %4590 = vmatprep.subr.mxu0 0.0
        %4591 = vmatpush1.msra.mxu0 0.0
        %4592 = vmatprep.subr.mxu0 0.0
        %4593 = vmatpush1.msra.mxu0 0.0
        %4594 = vmatprep.subr.mxu0 0.0
        %4595 = vmatpush1.msra.mxu0 0.0
        %4596 = vmatprep.subr.mxu0 0.0
        %4597 = vmatpush1.msra.mxu0 0.0
        %4598 = vmatprep.subr.mxu0 0.0
        %4599 = vmatpush1.msra.mxu0 0.0
        %4600 = vmatprep.subr.mxu0 0.0
        %4601 = vmatpush1.msra.mxu0 0.0
        %4602 = vmatprep.subr.mxu0 0.0
        %4603 = vmatpush1.msra.mxu0 0.0
        %4604 = vmatprep.subr.mxu0 0.0
        %4605 = vmatpush1.msra.mxu0 0.0
        %4606 = vmatprep.subr.mxu0 0.0
        %4607 = vmatpush1.msra.mxu0 0.0
        %4608 = vmatprep.subr.mxu0 0.0
        %4609 = vmatpush1.msra.mxu0 0.0
        %4610 = vmatprep.subr.mxu0 0.0
        %4611 = vmatpush1.msra.mxu0 0.0
        %4612 = vmatprep.subr.mxu0 0.0
        %4613 = vmatpush1.msra.mxu0 0.0
        %4614 = vmatprep.subr.mxu0 0.0
        %4615 = vmatpush1.msra.mxu0 0.0
        %4616 = vmatprep.subr.mxu0 0.0
        %4617 = vmatpush1.msra.mxu0 0.0
        %4618 = vmatprep.subr.mxu0 0.0
        %4619 = vmatpush1.msra.mxu0 0.0
        %4620 = vmatprep.subr.mxu0 0.0
        %4621 = vmatpush1.msra.mxu0 0.0
        %4622 = vmatprep.mubr.f32.mxu0 0.0
        %4623 = vmatmul.mubr.f32.gmra.mrb[0].mxu0 %v4485
        %v4624 = vpop.f32.mrb[0].mxu0
        %v4625 = vadd.f32 0.0, %v4624
        %v4626 = vpop.f32.mrb[0].mxu0
        %v4627 = vadd.f32 0.0, %v4626
        %4628 = vdwg.mxu0
        %4629 = vmatprep.subr.mxu0 0.0
        %4630 = vmatpush1.msra.mxu0 %v994
        %4631 = vmatprep.subr.mxu0 0.0
        %4632 = vmatpush1.msra.mxu0 %v995
        %4633 = vmatprep.subr.mxu0 0.0
        %4634 = vmatpush1.msra.mxu0 %v996
        %4635 = vmatprep.subr.mxu0 0.0
        %4636 = vmatpush1.msra.mxu0 %v997
        %4637 = vmatprep.subr.mxu0 0.0
        %4638 = vmatpush1.msra.mxu0 %v998
        %4639 = vmatprep.subr.mxu0 0.0
        %4640 = vmatpush1.msra.mxu0 %v999
        %4641 = vmatprep.subr.mxu0 0.0
        %4642 = vmatpush1.msra.mxu0 %v1000
        %4643 = vmatprep.subr.mxu0 0.0
        %4644 = vmatpush1.msra.mxu0 %v1001
        %4645 = vmatprep.subr.mxu0 0.0
        %4646 = vmatpush1.msra.mxu0 %v1002
        %4647 = vmatprep.subr.mxu0 0.0
        %4648 = vmatpush1.msra.mxu0 %v1003
        %4649 = vmatprep.subr.mxu0 0.0
        %4650 = vmatpush1.msra.mxu0 %v1004
        %4651 = vmatprep.subr.mxu0 0.0
        %4652 = vmatpush1.msra.mxu0 %v1005
        %4653 = vmatprep.subr.mxu0 0.0
        %4654 = vmatpush1.msra.mxu0 %v1006
        %4655 = vmatprep.subr.mxu0 0.0
        %4656 = vmatpush1.msra.mxu0 %v1007
        %4657 = vmatprep.subr.mxu0 0.0
        %4658 = vmatpush1.msra.mxu0 %v1008
        %4659 = vmatprep.subr.mxu0 0.0
        %4660 = vmatpush1.msra.mxu0 %v1009
        %4661 = vmatprep.subr.mxu0 0.0
        %4662 = vmatpush1.msra.mxu0 0.0
        %4663 = vmatprep.subr.mxu0 0.0
        %4664 = vmatpush1.msra.mxu0 0.0
        %4665 = vmatprep.subr.mxu0 0.0
        %4666 = vmatpush1.msra.mxu0 0.0
        %4667 = vmatprep.subr.mxu0 0.0
        %4668 = vmatpush1.msra.mxu0 0.0
        %4669 = vmatprep.subr.mxu0 0.0
        %4670 = vmatpush1.msra.mxu0 0.0
        %4671 = vmatprep.subr.mxu0 0.0
        %4672 = vmatpush1.msra.mxu0 0.0
        %4673 = vmatprep.subr.mxu0 0.0
        %4674 = vmatpush1.msra.mxu0 0.0
        %4675 = vmatprep.subr.mxu0 0.0
        %4676 = vmatpush1.msra.mxu0 0.0
        %4677 = vmatprep.subr.mxu0 0.0
        %4678 = vmatpush1.msra.mxu0 0.0
        %4679 = vmatprep.subr.mxu0 0.0
        %4680 = vmatpush1.msra.mxu0 0.0
        %4681 = vmatprep.subr.mxu0 0.0
        %4682 = vmatpush1.msra.mxu0 0.0
        %4683 = vmatprep.subr.mxu0 0.0
        %4684 = vmatpush1.msra.mxu0 0.0
        %4685 = vmatprep.subr.mxu0 0.0
        %4686 = vmatpush1.msra.mxu0 0.0
        %4687 = vmatprep.subr.mxu0 0.0
        %4688 = vmatpush1.msra.mxu0 0.0
        %4689 = vmatprep.subr.mxu0 0.0
        %4690 = vmatpush1.msra.mxu0 0.0
        %4691 = vmatprep.subr.mxu0 0.0
        %4692 = vmatpush1.msra.mxu0 0.0
        %4693 = vmatprep.mubr.f32.mxu0 0.0
        %4694 = vmatmul.mubr.f32.gmra.mrb[0].mxu0 %v4486
        %v4695 = vpop.f32.mrb[0].mxu0
        %v4696 = vadd.f32 %v1157, %v4695
        %v4697 = vpop.f32.mrb[0].mxu0
        %4698 = vdwg.mxu0
        %v4699 = vtanh.pop %v4696
        %s4700 = scalar_lea.vmem %s373, 104 [#allocation7]
        %v4701 = vld [vmem:[%s4700] sm:$0xff]
        %4703 = vset.pattern.permute.xlu0 0
        %4704 = vperm.xlu0 %4703, %v4701
        %v4705 = vpop.permute.xlu0 %4704
        %v4707 = vmul.f32 %v4699, %v4705
        %v4708 = vadd.f32 %v4486, %v4707
        %v4709 = vld [vmem:[#allocation3 + $0x1a0] sm:$0xff]
        %v4710 = vld [vmem:[#allocation3 + $0x1a8] sm:$0xff]
        %v4711 = vld [vmem:[#allocation3 + $0x1b0] sm:$0xff]
        %v4712 = vld [vmem:[#allocation3 + $0x1b8] sm:$0xff]
        %v4713 = vadd.f32 %v4709, %v4554
        %v4714 = vadd.f32 %v4710, %v4556
        %v4715 = vadd.f32 %v4711, %v4625
        %v4716 = vadd.f32 %v4712, %v4627
        %v4717 = vxor.u32 %v4713, 2147483648
        %v4718 = vxor.u32 %v4714, 2147483648
        %v4719 = vxor.u32 %v4715, 2147483648
        %v4720 = vxor.u32 %v4716, 2147483648
        %v4721 = vmul.f32 %v4717, 1.442695
        %v4722 = vpow.pop %v4721
        %v4723 = vmul.f32 %v4718, 1.442695
        %v4724 = vpow.pop %v4723
        %v4725 = vmul.f32 %v4719, 1.442695
        %v4726 = vpow.pop %v4725
        %v4727 = vmul.f32 %v4720, 1.442695
        %v4728 = vpow.pop %v4727
        %v4729 = vadd.f32 %v4722, 1.0
        %v4730 = vadd.f32 %v4724, 1.0
        %v4731 = vadd.f32 %v4726, 1.0
        %v4732 = vadd.f32 %v4728, 1.0
        %v4733 = vrcp.pop %v4729
        %v4734 = vmul.f32 1.0, %v4733
        %v4735 = vrcp.pop %v4730
        %v4736 = vmul.f32 1.0, %v4735
        %v4737 = vrcp.pop %v4731
        %v4738 = vmul.f32 1.0, %v4737
        %v4739 = vrcp.pop %v4732
        %v4740 = vmul.f32 1.0, %v4739
        %v4741 = vmul.f32 %v4734, %v4708
        %v4742 = vmul.f32 %v4736, %v4740
        %v4743 = vadd.f32 %v4741, %v4742
        %v4744 = vtanh.pop %v4743
        %v4745 = vmul.f32 %v4738, %v4744
        %4746 = vst [vmem:[%s428 + $0x68] sm:$0xff] %v4745
        %s4747 = sadd.s32 %s1276, 13
        %p4748 = scmp.lt.s32.totalorder %s4747, 20
        %s4749 = scalar_select %p4748, 1, 0
        %v4750 = vstv %s4749
        %vm4751 = vcmp.eq.s32.totalorder %v4750, 1
        %v4752 = vsel %vm4751, %v4745, %v4485
        %v4753 = vsel %vm4751, %v4743, %v4486
        %4754 = vmatprep.subr.mxu0 %v931
        %4755 = vmatpush1.msra.mxu0 %v930
        %4756 = vmatprep.subr.mxu0 %v935
        %4757 = vmatpush1.msra.mxu0 %v934
        %4758 = vmatprep.subr.mxu0 %v939
        %4759 = vmatpush1.msra.mxu0 %v938
        %4760 = vmatprep.subr.mxu0 %v943
        %4761 = vmatpush1.msra.mxu0 %v942
        %4762 = vmatprep.subr.mxu0 %v947
        %4763 = vmatpush1.msra.mxu0 %v946
        %4764 = vmatprep.subr.mxu0 %v951
        %4765 = vmatpush1.msra.mxu0 %v950
        %4766 = vmatprep.subr.mxu0 %v955
        %4767 = vmatpush1.msra.mxu0 %v954
        %4768 = vmatprep.subr.mxu0 %v959
        %4769 = vmatpush1.msra.mxu0 %v958
        %4770 = vmatprep.subr.mxu0 %v963
        %4771 = vmatpush1.msra.mxu0 %v962
        %4772 = vmatprep.subr.mxu0 %v967
        %4773 = vmatpush1.msra.mxu0 %v966
        %4774 = vmatprep.subr.mxu0 %v971
        %4775 = vmatpush1.msra.mxu0 %v970
        %4776 = vmatprep.subr.mxu0 %v975
        %4777 = vmatpush1.msra.mxu0 %v974
        %4778 = vmatprep.subr.mxu0 %v979
        %4779 = vmatpush1.msra.mxu0 %v978
        %4780 = vmatprep.subr.mxu0 %v983
        %4781 = vmatpush1.msra.mxu0 %v982
        %4782 = vmatprep.subr.mxu0 %v987
        %4783 = vmatpush1.msra.mxu0 %v986
        %4784 = vmatprep.subr.mxu0 %v991
        %4785 = vmatpush1.msra.mxu0 %v990
        %4786 = vmatprep.subr.mxu0 0.0
        %4787 = vmatpush1.msra.mxu0 0.0
        %4788 = vmatprep.subr.mxu0 0.0
        %4789 = vmatpush1.msra.mxu0 0.0
        %4790 = vmatprep.subr.mxu0 0.0
        %4791 = vmatpush1.msra.mxu0 0.0
        %4792 = vmatprep.subr.mxu0 0.0
        %4793 = vmatpush1.msra.mxu0 0.0
        %4794 = vmatprep.subr.mxu0 0.0
        %4795 = vmatpush1.msra.mxu0 0.0
        %4796 = vmatprep.subr.mxu0 0.0
        %4797 = vmatpush1.msra.mxu0 0.0
        %4798 = vmatprep.subr.mxu0 0.0
        %4799 = vmatpush1.msra.mxu0 0.0
        %4800 = vmatprep.subr.mxu0 0.0
        %4801 = vmatpush1.msra.mxu0 0.0
        %4802 = vmatprep.subr.mxu0 0.0
        %4803 = vmatpush1.msra.mxu0 0.0
        %4804 = vmatprep.subr.mxu0 0.0
        %4805 = vmatpush1.msra.mxu0 0.0
        %4806 = vmatprep.subr.mxu0 0.0
        %4807 = vmatpush1.msra.mxu0 0.0
        %4808 = vmatprep.subr.mxu0 0.0
        %4809 = vmatpush1.msra.mxu0 0.0
        %4810 = vmatprep.subr.mxu0 0.0
        %4811 = vmatpush1.msra.mxu0 0.0
        %4812 = vmatprep.subr.mxu0 0.0
        %4813 = vmatpush1.msra.mxu0 0.0
        %4814 = vmatprep.subr.mxu0 0.0
        %4815 = vmatpush1.msra.mxu0 0.0
        %4816 = vmatprep.subr.mxu0 0.0
        %4817 = vmatpush1.msra.mxu0 0.0
        %4818 = vmatprep.mubr.f32.mxu0 0.0
        %4819 = vmatmul.mubr.f32.gmra.mrb[0].mxu0 %v4752
        %v4820 = vpop.f32.mrb[0].mxu0
        %v4821 = vadd.f32 0.0, %v4820
        %v4822 = vpop.f32.mrb[0].mxu0
        %v4823 = vadd.f32 0.0, %v4822
        %4824 = vdwg.mxu0
        %4825 = vmatprep.subr.mxu0 %v933
        %4826 = vmatpush1.msra.mxu0 %v932
        %4827 = vmatprep.subr.mxu0 %v937
        %4828 = vmatpush1.msra.mxu0 %v936
        %4829 = vmatprep.subr.mxu0 %v941
        %4830 = vmatpush1.msra.mxu0 %v940
        %4831 = vmatprep.subr.mxu0 %v945
        %4832 = vmatpush1.msra.mxu0 %v944
        %4833 = vmatprep.subr.mxu0 %v949
        %4834 = vmatpush1.msra.mxu0 %v948
        %4835 = vmatprep.subr.mxu0 %v953
        %4836 = vmatpush1.msra.mxu0 %v952
        %4837 = vmatprep.subr.mxu0 %v957
        %4838 = vmatpush1.msra.mxu0 %v956
        %4839 = vmatprep.subr.mxu0 %v961
        %4840 = vmatpush1.msra.mxu0 %v960
        %4841 = vmatprep.subr.mxu0 %v965
        %4842 = vmatpush1.msra.mxu0 %v964
        %4843 = vmatprep.subr.mxu0 %v969
        %4844 = vmatpush1.msra.mxu0 %v968
        %4845 = vmatprep.subr.mxu0 %v973
        %4846 = vmatpush1.msra.mxu0 %v972
        %4847 = vmatprep.subr.mxu0 %v977
        %4848 = vmatpush1.msra.mxu0 %v976
        %4849 = vmatprep.subr.mxu0 %v981
        %4850 = vmatpush1.msra.mxu0 %v980
        %4851 = vmatprep.subr.mxu0 %v985
        %4852 = vmatpush1.msra.mxu0 %v984
        %4853 = vmatprep.subr.mxu0 %v989
        %4854 = vmatpush1.msra.mxu0 %v988
        %4855 = vmatprep.subr.mxu0 %v993
        %4856 = vmatpush1.msra.mxu0 %v992
        %4857 = vmatprep.subr.mxu0 0.0
        %4858 = vmatpush1.msra.mxu0 0.0
        %4859 = vmatprep.subr.mxu0 0.0
        %4860 = vmatpush1.msra.mxu0 0.0
        %4861 = vmatprep.subr.mxu0 0.0
        %4862 = vmatpush1.msra.mxu0 0.0
        %4863 = vmatprep.subr.mxu0 0.0
        %4864 = vmatpush1.msra.mxu0 0.0
        %4865 = vmatprep.subr.mxu0 0.0
        %4866 = vmatpush1.msra.mxu0 0.0
        %4867 = vmatprep.subr.mxu0 0.0
        %4868 = vmatpush1.msra.mxu0 0.0
        %4869 = vmatprep.subr.mxu0 0.0
        %4870 = vmatpush1.msra.mxu0 0.0
        %4871 = vmatprep.subr.mxu0 0.0
        %4872 = vmatpush1.msra.mxu0 0.0
        %4873 = vmatprep.subr.mxu0 0.0
        %4874 = vmatpush1.msra.mxu0 0.0
        %4875 = vmatprep.subr.mxu0 0.0
        %4876 = vmatpush1.msra.mxu0 0.0
        %4877 = vmatprep.subr.mxu0 0.0
        %4878 = vmatpush1.msra.mxu0 0.0
        %4879 = vmatprep.subr.mxu0 0.0
        %4880 = vmatpush1.msra.mxu0 0.0
        %4881 = vmatprep.subr.mxu0 0.0
        %4882 = vmatpush1.msra.mxu0 0.0
        %4883 = vmatprep.subr.mxu0 0.0
        %4884 = vmatpush1.msra.mxu0 0.0
        %4885 = vmatprep.subr.mxu0 0.0
        %4886 = vmatpush1.msra.mxu0 0.0
        %4887 = vmatprep.subr.mxu0 0.0
        %4888 = vmatpush1.msra.mxu0 0.0
        %4889 = vmatprep.mubr.f32.mxu0 0.0
        %4890 = vmatmul.mubr.f32.gmra.mrb[0].mxu0 %v4752
        %v4891 = vpop.f32.mrb[0].mxu0
        %v4892 = vadd.f32 0.0, %v4891
        %v4893 = vpop.f32.mrb[0].mxu0
        %v4894 = vadd.f32 0.0, %v4893
        %4895 = vdwg.mxu0
        %4896 = vmatprep.subr.mxu0 0.0
        %4897 = vmatpush1.msra.mxu0 %v994
        %4898 = vmatprep.subr.mxu0 0.0
        %4899 = vmatpush1.msra.mxu0 %v995
        %4900 = vmatprep.subr.mxu0 0.0
        %4901 = vmatpush1.msra.mxu0 %v996
        %4902 = vmatprep.subr.mxu0 0.0
        %4903 = vmatpush1.msra.mxu0 %v997
        %4904 = vmatprep.subr.mxu0 0.0
        %4905 = vmatpush1.msra.mxu0 %v998
        %4906 = vmatprep.subr.mxu0 0.0
        %4907 = vmatpush1.msra.mxu0 %v999
        %4908 = vmatprep.subr.mxu0 0.0
        %4909 = vmatpush1.msra.mxu0 %v1000
        %4910 = vmatprep.subr.mxu0 0.0
        %4911 = vmatpush1.msra.mxu0 %v1001
        %4912 = vmatprep.subr.mxu0 0.0
        %4913 = vmatpush1.msra.mxu0 %v1002
        %4914 = vmatprep.subr.mxu0 0.0
        %4915 = vmatpush1.msra.mxu0 %v1003
        %4916 = vmatprep.subr.mxu0 0.0
        %4917 = vmatpush1.msra.mxu0 %v1004
        %4918 = vmatprep.subr.mxu0 0.0
        %4919 = vmatpush1.msra.mxu0 %v1005
        %4920 = vmatprep.subr.mxu0 0.0
        %4921 = vmatpush1.msra.mxu0 %v1006
        %4922 = vmatprep.subr.mxu0 0.0
        %4923 = vmatpush1.msra.mxu0 %v1007
        %4924 = vmatprep.subr.mxu0 0.0
        %4925 = vmatpush1.msra.mxu0 %v1008
        %4926 = vmatprep.subr.mxu0 0.0
        %4927 = vmatpush1.msra.mxu0 %v1009
        %4928 = vmatprep.subr.mxu0 0.0
        %4929 = vmatpush1.msra.mxu0 0.0
        %4930 = vmatprep.subr.mxu0 0.0
        %4931 = vmatpush1.msra.mxu0 0.0
        %4932 = vmatprep.subr.mxu0 0.0
        %4933 = vmatpush1.msra.mxu0 0.0
        %4934 = vmatprep.subr.mxu0 0.0
        %4935 = vmatpush1.msra.mxu0 0.0
        %4936 = vmatprep.subr.mxu0 0.0
        %4937 = vmatpush1.msra.mxu0 0.0
        %4938 = vmatprep.subr.mxu0 0.0
        %4939 = vmatpush1.msra.mxu0 0.0
        %4940 = vmatprep.subr.mxu0 0.0
        %4941 = vmatpush1.msra.mxu0 0.0
        %4942 = vmatprep.subr.mxu0 0.0
        %4943 = vmatpush1.msra.mxu0 0.0
        %4944 = vmatprep.subr.mxu0 0.0
        %4945 = vmatpush1.msra.mxu0 0.0
        %4946 = vmatprep.subr.mxu0 0.0
        %4947 = vmatpush1.msra.mxu0 0.0
        %4948 = vmatprep.subr.mxu0 0.0
        %4949 = vmatpush1.msra.mxu0 0.0
        %4950 = vmatprep.subr.mxu0 0.0
        %4951 = vmatpush1.msra.mxu0 0.0
        %4952 = vmatprep.subr.mxu0 0.0
        %4953 = vmatpush1.msra.mxu0 0.0
        %4954 = vmatprep.subr.mxu0 0.0
        %4955 = vmatpush1.msra.mxu0 0.0
        %4956 = vmatprep.subr.mxu0 0.0
        %4957 = vmatpush1.msra.mxu0 0.0
        %4958 = vmatprep.subr.mxu0 0.0
        %4959 = vmatpush1.msra.mxu0 0.0
        %4960 = vmatprep.mubr.f32.mxu0 0.0
        %4961 = vmatmul.mubr.f32.gmra.mrb[0].mxu0 %v4753
        %v4962 = vpop.f32.mrb[0].mxu0
        %v4963 = vadd.f32 %v1157, %v4962
        %v4964 = vpop.f32.mrb[0].mxu0
        %4965 = vdwg.mxu0
        %v4966 = vtanh.pop %v4963
        %s4967 = scalar_lea.vmem %s373, 112 [#allocation7]
        %v4968 = vld [vmem:[%s4967] sm:$0xff]
        %4970 = vset.pattern.permute.xlu0 0
        %4971 = vperm.xlu0 %4970, %v4968
        %v4972 = vpop.permute.xlu0 %4971
        %v4974 = vmul.f32 %v4966, %v4972
        %v4975 = vadd.f32 %v4753, %v4974
        %v4976 = vld [vmem:[#allocation3 + $0x1c0] sm:$0xff]
        %v4977 = vld [vmem:[#allocation3 + $0x1c8] sm:$0xff]
        %v4978 = vld [vmem:[#allocation3 + $0x1d0] sm:$0xff]
        %v4979 = vld [vmem:[#allocation3 + $0x1d8] sm:$0xff]
        %v4980 = vadd.f32 %v4976, %v4821
        %v4981 = vadd.f32 %v4977, %v4823
        %v4982 = vadd.f32 %v4978, %v4892
        %v4983 = vadd.f32 %v4979, %v4894
        %v4984 = vxor.u32 %v4980, 2147483648
        %v4985 = vxor.u32 %v4981, 2147483648
        %v4986 = vxor.u32 %v4982, 2147483648
        %v4987 = vxor.u32 %v4983, 2147483648
        %v4988 = vmul.f32 %v4984, 1.442695
        %v4989 = vpow.pop %v4988
        %v4990 = vmul.f32 %v4985, 1.442695
        %v4991 = vpow.pop %v4990
        %v4992 = vmul.f32 %v4986, 1.442695
        %v4993 = vpow.pop %v4992
        %v4994 = vmul.f32 %v4987, 1.442695
        %v4995 = vpow.pop %v4994
        %v4996 = vadd.f32 %v4989, 1.0
        %v4997 = vadd.f32 %v4991, 1.0
        %v4998 = vadd.f32 %v4993, 1.0
        %v4999 = vadd.f32 %v4995, 1.0
        %v5000 = vrcp.pop %v4996
        %v5001 = vmul.f32 1.0, %v5000
        %v5002 = vrcp.pop %v4997
        %v5003 = vmul.f32 1.0, %v5002
        %v5004 = vrcp.pop %v4998
        %v5005 = vmul.f32 1.0, %v5004
        %v5006 = vrcp.pop %v4999
        %v5007 = vmul.f32 1.0, %v5006
        %v5008 = vmul.f32 %v5001, %v4975
        %v5009 = vmul.f32 %v5003, %v5007
        %v5010 = vadd.f32 %v5008, %v5009
        %v5011 = vtanh.pop %v5010
        %v5012 = vmul.f32 %v5005, %v5011
        %5013 = vst [vmem:[%s428 + $0x70] sm:$0xff] %v5012
        %s5014 = sadd.s32 %s1276, 14
        %p5015 = scmp.lt.s32.totalorder %s5014, 20
        %s5016 = scalar_select %p5015, 1, 0
        %v5017 = vstv %s5016
        %vm5018 = vcmp.eq.s32.totalorder %v5017, 1
        %v5019 = vsel %vm5018, %v5012, %v4752
        %v5020 = vsel %vm5018, %v5010, %v4753
        %5021 = vmatprep.subr.mxu0 %v931
        %5022 = vmatpush1.msra.mxu0 %v930
        %5023 = vmatprep.subr.mxu0 %v935
        %5024 = vmatpush1.msra.mxu0 %v934
        %5025 = vmatprep.subr.mxu0 %v939
        %5026 = vmatpush1.msra.mxu0 %v938
        %5027 = vmatprep.subr.mxu0 %v943
        %5028 = vmatpush1.msra.mxu0 %v942
        %5029 = vmatprep.subr.mxu0 %v947
        %5030 = vmatpush1.msra.mxu0 %v946
        %5031 = vmatprep.subr.mxu0 %v951
        %5032 = vmatpush1.msra.mxu0 %v950
        %5033 = vmatprep.subr.mxu0 %v955
        %5034 = vmatpush1.msra.mxu0 %v954
        %5035 = vmatprep.subr.mxu0 %v959
        %5036 = vmatpush1.msra.mxu0 %v958
        %5037 = vmatprep.subr.mxu0 %v963
        %5038 = vmatpush1.msra.mxu0 %v962
        %5039 = vmatprep.subr.mxu0 %v967
        %5040 = vmatpush1.msra.mxu0 %v966
        %5041 = vmatprep.subr.mxu0 %v971
        %5042 = vmatpush1.msra.mxu0 %v970
        %5043 = vmatprep.subr.mxu0 %v975
        %5044 = vmatpush1.msra.mxu0 %v974
        %5045 = vmatprep.subr.mxu0 %v979
        %5046 = vmatpush1.msra.mxu0 %v978
        %5047 = vmatprep.subr.mxu0 %v983
        %5048 = vmatpush1.msra.mxu0 %v982
        %5049 = vmatprep.subr.mxu0 %v987
        %5050 = vmatpush1.msra.mxu0 %v986
        %5051 = vmatprep.subr.mxu0 %v991
        %5052 = vmatpush1.msra.mxu0 %v990
        %5053 = vmatprep.subr.mxu0 0.0
        %5054 = vmatpush1.msra.mxu0 0.0
        %5055 = vmatprep.subr.mxu0 0.0
        %5056 = vmatpush1.msra.mxu0 0.0
        %5057 = vmatprep.subr.mxu0 0.0
        %5058 = vmatpush1.msra.mxu0 0.0
        %5059 = vmatprep.subr.mxu0 0.0
        %5060 = vmatpush1.msra.mxu0 0.0
        %5061 = vmatprep.subr.mxu0 0.0
        %5062 = vmatpush1.msra.mxu0 0.0
        %5063 = vmatprep.subr.mxu0 0.0
        %5064 = vmatpush1.msra.mxu0 0.0
        %5065 = vmatprep.subr.mxu0 0.0
        %5066 = vmatpush1.msra.mxu0 0.0
        %5067 = vmatprep.subr.mxu0 0.0
        %5068 = vmatpush1.msra.mxu0 0.0
        %5069 = vmatprep.subr.mxu0 0.0
        %5070 = vmatpush1.msra.mxu0 0.0
        %5071 = vmatprep.subr.mxu0 0.0
        %5072 = vmatpush1.msra.mxu0 0.0
        %5073 = vmatprep.subr.mxu0 0.0
        %5074 = vmatpush1.msra.mxu0 0.0
        %5075 = vmatprep.subr.mxu0 0.0
        %5076 = vmatpush1.msra.mxu0 0.0
        %5077 = vmatprep.subr.mxu0 0.0
        %5078 = vmatpush1.msra.mxu0 0.0
        %5079 = vmatprep.subr.mxu0 0.0
        %5080 = vmatpush1.msra.mxu0 0.0
        %5081 = vmatprep.subr.mxu0 0.0
        %5082 = vmatpush1.msra.mxu0 0.0
        %5083 = vmatprep.subr.mxu0 0.0
        %5084 = vmatpush1.msra.mxu0 0.0
        %5085 = vmatprep.mubr.f32.mxu0 0.0
        %5086 = vmatmul.mubr.f32.gmra.mrb[0].mxu0 %v5019
        %v5087 = vpop.f32.mrb[0].mxu0
        %v5088 = vadd.f32 0.0, %v5087
        %v5089 = vpop.f32.mrb[0].mxu0
        %v5090 = vadd.f32 0.0, %v5089
        %5091 = vdwg.mxu0
        %5092 = vmatprep.subr.mxu0 %v933
        %5093 = vmatpush1.msra.mxu0 %v932
        %5094 = vmatprep.subr.mxu0 %v937
        %5095 = vmatpush1.msra.mxu0 %v936
        %5096 = vmatprep.subr.mxu0 %v941
        %5097 = vmatpush1.msra.mxu0 %v940
        %5098 = vmatprep.subr.mxu0 %v945
        %5099 = vmatpush1.msra.mxu0 %v944
        %5100 = vmatprep.subr.mxu0 %v949
        %5101 = vmatpush1.msra.mxu0 %v948
        %5102 = vmatprep.subr.mxu0 %v953
        %5103 = vmatpush1.msra.mxu0 %v952
        %5104 = vmatprep.subr.mxu0 %v957
        %5105 = vmatpush1.msra.mxu0 %v956
        %5106 = vmatprep.subr.mxu0 %v961
        %5107 = vmatpush1.msra.mxu0 %v960
        %5108 = vmatprep.subr.mxu0 %v965
        %5109 = vmatpush1.msra.mxu0 %v964
        %5110 = vmatprep.subr.mxu0 %v969
        %5111 = vmatpush1.msra.mxu0 %v968
        %5112 = vmatprep.subr.mxu0 %v973
        %5113 = vmatpush1.msra.mxu0 %v972
        %5114 = vmatprep.subr.mxu0 %v977
        %5115 = vmatpush1.msra.mxu0 %v976
        %5116 = vmatprep.subr.mxu0 %v981
        %5117 = vmatpush1.msra.mxu0 %v980
        %5118 = vmatprep.subr.mxu0 %v985
        %5119 = vmatpush1.msra.mxu0 %v984
        %5120 = vmatprep.subr.mxu0 %v989
        %5121 = vmatpush1.msra.mxu0 %v988
        %5122 = vmatprep.subr.mxu0 %v993
        %5123 = vmatpush1.msra.mxu0 %v992
        %5124 = vmatprep.subr.mxu0 0.0
        %5125 = vmatpush1.msra.mxu0 0.0
        %5126 = vmatprep.subr.mxu0 0.0
        %5127 = vmatpush1.msra.mxu0 0.0
        %5128 = vmatprep.subr.mxu0 0.0
        %5129 = vmatpush1.msra.mxu0 0.0
        %5130 = vmatprep.subr.mxu0 0.0
        %5131 = vmatpush1.msra.mxu0 0.0
        %5132 = vmatprep.subr.mxu0 0.0
        %5133 = vmatpush1.msra.mxu0 0.0
        %5134 = vmatprep.subr.mxu0 0.0
        %5135 = vmatpush1.msra.mxu0 0.0
        %5136 = vmatprep.subr.mxu0 0.0
        %5137 = vmatpush1.msra.mxu0 0.0
        %5138 = vmatprep.subr.mxu0 0.0
        %5139 = vmatpush1.msra.mxu0 0.0
        %5140 = vmatprep.subr.mxu0 0.0
        %5141 = vmatpush1.msra.mxu0 0.0
        %5142 = vmatprep.subr.mxu0 0.0
        %5143 = vmatpush1.msra.mxu0 0.0
        %5144 = vmatprep.subr.mxu0 0.0
        %5145 = vmatpush1.msra.mxu0 0.0
        %5146 = vmatprep.subr.mxu0 0.0
        %5147 = vmatpush1.msra.mxu0 0.0
        %5148 = vmatprep.subr.mxu0 0.0
        %5149 = vmatpush1.msra.mxu0 0.0
        %5150 = vmatprep.subr.mxu0 0.0
        %5151 = vmatpush1.msra.mxu0 0.0
        %5152 = vmatprep.subr.mxu0 0.0
        %5153 = vmatpush1.msra.mxu0 0.0
        %5154 = vmatprep.subr.mxu0 0.0
        %5155 = vmatpush1.msra.mxu0 0.0
        %5156 = vmatprep.mubr.f32.mxu0 0.0
        %5157 = vmatmul.mubr.f32.gmra.mrb[0].mxu0 %v5019
        %v5158 = vpop.f32.mrb[0].mxu0
        %v5159 = vadd.f32 0.0, %v5158
        %v5160 = vpop.f32.mrb[0].mxu0
        %v5161 = vadd.f32 0.0, %v5160
        %5162 = vdwg.mxu0
        %5163 = vmatprep.subr.mxu0 0.0
        %5164 = vmatpush1.msra.mxu0 %v994
        %5165 = vmatprep.subr.mxu0 0.0
        %5166 = vmatpush1.msra.mxu0 %v995
        %5167 = vmatprep.subr.mxu0 0.0
        %5168 = vmatpush1.msra.mxu0 %v996
        %5169 = vmatprep.subr.mxu0 0.0
        %5170 = vmatpush1.msra.mxu0 %v997
        %5171 = vmatprep.subr.mxu0 0.0
        %5172 = vmatpush1.msra.mxu0 %v998
        %5173 = vmatprep.subr.mxu0 0.0
        %5174 = vmatpush1.msra.mxu0 %v999
        %5175 = vmatprep.subr.mxu0 0.0
        %5176 = vmatpush1.msra.mxu0 %v1000
        %5177 = vmatprep.subr.mxu0 0.0
        %5178 = vmatpush1.msra.mxu0 %v1001
        %5179 = vmatprep.subr.mxu0 0.0
        %5180 = vmatpush1.msra.mxu0 %v1002
        %5181 = vmatprep.subr.mxu0 0.0
        %5182 = vmatpush1.msra.mxu0 %v1003
        %5183 = vmatprep.subr.mxu0 0.0
        %5184 = vmatpush1.msra.mxu0 %v1004
        %5185 = vmatprep.subr.mxu0 0.0
        %5186 = vmatpush1.msra.mxu0 %v1005
        %5187 = vmatprep.subr.mxu0 0.0
        %5188 = vmatpush1.msra.mxu0 %v1006
        %5189 = vmatprep.subr.mxu0 0.0
        %5190 = vmatpush1.msra.mxu0 %v1007
        %5191 = vmatprep.subr.mxu0 0.0
        %5192 = vmatpush1.msra.mxu0 %v1008
        %5193 = vmatprep.subr.mxu0 0.0
        %5194 = vmatpush1.msra.mxu0 %v1009
        %5195 = vmatprep.subr.mxu0 0.0
        %5196 = vmatpush1.msra.mxu0 0.0
        %5197 = vmatprep.subr.mxu0 0.0
        %5198 = vmatpush1.msra.mxu0 0.0
        %5199 = vmatprep.subr.mxu0 0.0
        %5200 = vmatpush1.msra.mxu0 0.0
        %5201 = vmatprep.subr.mxu0 0.0
        %5202 = vmatpush1.msra.mxu0 0.0
        %5203 = vmatprep.subr.mxu0 0.0
        %5204 = vmatpush1.msra.mxu0 0.0
        %5205 = vmatprep.subr.mxu0 0.0
        %5206 = vmatpush1.msra.mxu0 0.0
        %5207 = vmatprep.subr.mxu0 0.0
        %5208 = vmatpush1.msra.mxu0 0.0
        %5209 = vmatprep.subr.mxu0 0.0
        %5210 = vmatpush1.msra.mxu0 0.0
        %5211 = vmatprep.subr.mxu0 0.0
        %5212 = vmatpush1.msra.mxu0 0.0
        %5213 = vmatprep.subr.mxu0 0.0
        %5214 = vmatpush1.msra.mxu0 0.0
        %5215 = vmatprep.subr.mxu0 0.0
        %5216 = vmatpush1.msra.mxu0 0.0
        %5217 = vmatprep.subr.mxu0 0.0
        %5218 = vmatpush1.msra.mxu0 0.0
        %5219 = vmatprep.subr.mxu0 0.0
        %5220 = vmatpush1.msra.mxu0 0.0
        %5221 = vmatprep.subr.mxu0 0.0
        %5222 = vmatpush1.msra.mxu0 0.0
        %5223 = vmatprep.subr.mxu0 0.0
        %5224 = vmatpush1.msra.mxu0 0.0
        %5225 = vmatprep.subr.mxu0 0.0
        %5226 = vmatpush1.msra.mxu0 0.0
        %5227 = vmatprep.mubr.f32.mxu0 0.0
        %5228 = vmatmul.mubr.f32.gmra.mrb[0].mxu0 %v5020
        %v5229 = vpop.f32.mrb[0].mxu0
        %v5230 = vadd.f32 %v1157, %v5229
        %v5231 = vpop.f32.mrb[0].mxu0
        %5232 = vdwg.mxu0
        %v5233 = vtanh.pop %v5230
        %s5234 = scalar_lea.vmem %s373, 120 [#allocation7]
        %v5235 = vld [vmem:[%s5234] sm:$0xff]
        %5237 = vset.pattern.permute.xlu0 0
        %5238 = vperm.xlu0 %5237, %v5235
        %v5239 = vpop.permute.xlu0 %5238
        %v5241 = vmul.f32 %v5233, %v5239
        %v5242 = vadd.f32 %v5020, %v5241
        %v5243 = vld [vmem:[#allocation3 + $0x1e0] sm:$0xff]
        %v5244 = vld [vmem:[#allocation3 + $0x1e8] sm:$0xff]
        %v5245 = vld [vmem:[#allocation3 + $0x1f0] sm:$0xff]
        %v5246 = vld [vmem:[#allocation3 + $0x1f8] sm:$0xff]
        %v5247 = vadd.f32 %v5243, %v5088
        %v5248 = vadd.f32 %v5244, %v5090
        %v5249 = vadd.f32 %v5245, %v5159
        %v5250 = vadd.f32 %v5246, %v5161
        %v5251 = vxor.u32 %v5247, 2147483648
        %v5252 = vxor.u32 %v5248, 2147483648
        %v5253 = vxor.u32 %v5249, 2147483648
        %v5254 = vxor.u32 %v5250, 2147483648
        %v5255 = vmul.f32 %v5251, 1.442695
        %v5256 = vpow.pop %v5255
        %v5257 = vmul.f32 %v5252, 1.442695
        %v5258 = vpow.pop %v5257
        %v5259 = vmul.f32 %v5253, 1.442695
        %v5260 = vpow.pop %v5259
        %v5261 = vmul.f32 %v5254, 1.442695
        %v5262 = vpow.pop %v5261
        %v5263 = vadd.f32 %v5256, 1.0
        %v5264 = vadd.f32 %v5258, 1.0
        %v5265 = vadd.f32 %v5260, 1.0
        %v5266 = vadd.f32 %v5262, 1.0
        %v5267 = vrcp.pop %v5263
        %v5268 = vmul.f32 1.0, %v5267
        %v5269 = vrcp.pop %v5264
        %v5270 = vmul.f32 1.0, %v5269
        %v5271 = vrcp.pop %v5265
        %v5272 = vmul.f32 1.0, %v5271
        %v5273 = vrcp.pop %v5266
        %v5274 = vmul.f32 1.0, %v5273
        %v5275 = vmul.f32 %v5268, %v5242
        %v5276 = vmul.f32 %v5270, %v5274
        %v5277 = vadd.f32 %v5275, %v5276
        %v5278 = vtanh.pop %v5277
        %v5279 = vmul.f32 %v5272, %v5278
        %5280 = vst [vmem:[%s428 + $0x78] sm:$0xff] %v5279
        %s5281 = sadd.s32 %s1276, 15
        %p5282 = scmp.lt.s32.totalorder %s5281, 20
        %s5283 = scalar_select %p5282, 1, 0
        %v5284 = vstv %s5283
        %vm5285 = vcmp.eq.s32.totalorder %v5284, 1
        %v5286 = vsel %vm5285, %v5279, %v5019
        %v5287 = vsel %vm5285, %v5277, %v5020
        %5288 = vst [vmem:[#allocation2] sm:$0xff] %v5286
        %5289 = vst [vmem:[#allocation2 + $0x8] sm:$0xff] %v5287
        %p5290 = scmp.eq.s32.totalorder %s32, 1
        // Predicated region
        $region81: #{tpu_custom_call.1} parent=47 // pred_check
          %p5291 = pneg %p5290
        $region82: #{tpu_custom_call.1} parent=47 // pred_check_branch
          %5293 = sbr.rel (%p5291) target = $region84
        $region83: #{tpu_custom_call.1} parent=47 // pred_region
          %5294 = vst [vmem:[#allocation17] sm:$0xff] %v5286
          %5295 = vst [vmem:[#allocation17 + $0x8] sm:$0xff] %v5287
        $region84: #{tpu_custom_call.1} parent=47 // pred_fallthru
          _
        %s5296 = sand.u32 %s197, 1
        %s5297 = scalar_lea.sflag [#allocation6], %s5296
        %s5298 = sand.u32 %s197, 1
        %s5299 = smul.addr %s5298, 128
        %s5300 = scalar_lea.vmem [#allocation16], %s5299
        // Predicated region
        $region85: #{tpu_custom_call.1} parent=47 // pred_check
          %p5301 = pneg %p207
        $region86: #{tpu_custom_call.1} parent=47 // pred_check_branch
          %5303 = sbr.rel (%p5301) target = $region88
        $region87: #{tpu_custom_call.1} parent=47 // pred_region
          %s5304 = smul.u32 16, %s32
          %s5306 = ssub.s32 2048, 2048
          %5307 = vsyncadd %s5297, %s5306
          %s5308 = smul.addr %s5304, 128
          %s5309 = scalar_lea.hbm %s7, %s5308
          %s5310 = sshll.u32 %s5300, 4
          %s5311 = int_to_ptr.vmem [resolvable:$true] %s5310
          %5316 = dma.vmem_to_hbm [thread:$0]  %s5311, 2048, %s5309, %s5297, 128, 128, 8
        $region88: #{tpu_custom_call.1} parent=47 // pred_fallthru
          _
        // Predicated region
        $region89: #{tpu_custom_call.1} parent=47 // pred_check
          %p5317 = pneg %p228
        $region90: #{tpu_custom_call.1} parent=47 // pred_check_branch
          %5319 = sbr.rel (%p5317) target = $region92
        $region91: #{tpu_custom_call.1} parent=47 // pred_region
          %s5321 = ssub.s32 256, 256
          %5322 = vsyncadd [#allocation18], %s5321
          %s5324 = sshll.u32 [#allocation17], 4
          %s5325 = int_to_ptr.vmem [resolvable:$true] %s5324
          %5327 = dma.vmem_to_hbm [thread:$0]  %s5325, 256, %s8, [#allocation18]
        $region92: #{tpu_custom_call.1} parent=47 // pred_fallthru
          _
        // Predicated region
        $region93: #{tpu_custom_call.1} parent=47 // pred_check
          %p5328 = pneg %p228
        $region94: #{tpu_custom_call.1} parent=47 // pred_check_branch
          %5330 = sbr.rel (%p5328) target = $region96
        $region95: #{tpu_custom_call.1} parent=47 // pred_region
          %5331 = dma.done [#allocation18], 256
        $region96: #{tpu_custom_call.1} parent=47 // pred_fallthru
          _
      $region48: #{tpu_custom_call.1} parent=5 // pred_fallthru
        _
      %p5332 = scmp.le.s32.totalorder 2, %s27
      // Predicated region
      $region97: #{tpu_custom_call.1} parent=5 // pred_check
        %p5333 = pneg %p5332
      $region98: #{tpu_custom_call.1} parent=5 // pred_check_branch
        %5335 = sbr.rel (%p5333) target = $region100
      $region99: #{tpu_custom_call.1} parent=5 // pred_region
        %s5336 = ssub.s32 %s27, 2
        // Predicated region
        $region101: #{tpu_custom_call.1} parent=99 // pred_check
          %p5337 = pneg %p213
        $region102: #{tpu_custom_call.1} parent=99 // pred_check_branch
          %5339 = sbr.rel (%p5337) target = $region104
        $region103: #{tpu_custom_call.1} parent=99 // pred_region
          %s5340 = sand.u32 %s198, 1
          %s5341 = scalar_lea.sflag [#allocation6], %s5340
          %s5342 = sand.u32 %s198, 1
          %s5343 = smul.addr %s5342, 128
          %s5344 = scalar_lea.vmem [#allocation16], %s5343
          %5345 = dma.done %s5341, 2048
        $region104: #{tpu_custom_call.1} parent=99 // pred_fallthru
          _
      $region100: #{tpu_custom_call.1} parent=5 // pred_fallthru
        _
    $region6: #{tpu_custom_call.1} parent=1 // loop_footer
      %s31 = sadd.s32 1, %s27
    $region7: #{tpu_custom_call.1} parent=1 // loop_footer_branch
      %26 = sbr.rel target = $region3
    $region8: #{tpu_custom_call.1} parent=1 // loop_exit
      _
    %5346 = vsyncpa [#allocation5], 1
    %s5347 = scalar_lea.sflag [#allocation5], 1
    %5348 = vsyncpa %s5347, 1
    %5349 = vsyncpa [#allocation8], 1
    %s5350 = scalar_lea.sflag [#allocation8], 1
    %5351 = vsyncpa %s5350, 1
    %5352 = vsyncpa [#allocation11], 1
    %5353 = vsyncpa [#allocation14], 1
    %5354 = vsyncpa [#allocation6], 1
    %s5355 = scalar_lea.sflag [#allocation6], 1
    %5356 = vsyncpa %s5355, 1
    %5357 = vsyncpa [#allocation18], 1

</llo_original>
